<compile_context>
chip_gen: v6e
topology: v6e:2x2x1
jax: 0.10.0
libtpu: 0.0.40
codegen_flags: <defaults>
</compile_context>

<pallas_src>
import jax
import jax.numpy as jnp
from jax.experimental import pallas as pl
from jax.experimental.pallas import tpu as pltpu


_C0 = 8  # 8-aligned column offset of the activation interior in the scratch


# ----------------------------------------------------------------------------
# Kernel: Bblk samples of the full residual block per grid step, VMEM-resident
# ----------------------------------------------------------------------------
def _residual_block_kernel(x_ref, w1_ref, b1_ref, w2_ref, b2_ref, o_ref, pad_ref):
    """Fused ResidualBlock for one batch block.

    x_ref:   (Bblk, H, W, C)        f32 NHWC activations
    w1_ref:  (9*C, C)               bf16, BN1 scale folded in, (ky, kx, cin) rows
    b1_ref:  (1, C)                 f32 folded conv1-bias + BN1 shift
    w2_ref:  (9*C, C)               bf16, BN2 scale folded in
    b2_ref:  (1, C)                 f32 folded conv2-bias + BN2 shift
    o_ref:   (Bblk, H, W, C)        f32 output
    pad_ref: (Bblk, H+2, WPAD, C)   bf16 scratch; interior at cols [_C0:_C0+W]
    """
    Bblk, H, W, C = x_ref.shape
    WP = pad_ref.shape[2]
    M = Bblk * H * W
    c0 = _C0
    bf16 = jnp.bfloat16

    # Zero only the halo cells the 9 taps actually read: top/bottom padded rows
    # and the single zero column on each side of the interior. The interior is
    # fully overwritten before each conv, so it never needs zeroing.
    zrow = jnp.zeros((Bblk, 1, WP, C), bf16)
    pad_ref[:, 0:1, :, :] = zrow
    pad_ref[:, H + 1:H + 2, :, :] = zrow
    zcol = jnp.zeros((Bblk, H + 2, 1, C), bf16)
    pad_ref[:, :, c0 - 1:c0, :] = zcol
    pad_ref[:, :, c0 + W:c0 + W + 1, :] = zcol

    def conv3x3(w_ref, b_ref):
        # 9 accumulated K=C dots (one per tap) — no im2col concat, no big
        # spilled patches tensor; f32 MXU accumulation of bf16 operands.
        acc = None
        for dy in range(3):
            for dx in range(3):
                k = dy * 3 + dx
                tap = pad_ref[:, dy:dy + H, c0 - 1 + dx:c0 - 1 + dx + W, :]
                p = jnp.dot(tap.reshape(M, C), w_ref[k * C:(k + 1) * C, :],
                            preferred_element_type=jnp.float32)
                acc = p if acc is None else acc + p
        return acc + b_ref[...]                                   # (M, C) f32

    # conv1 + bn1 + relu
    pad_ref[:, 1:H + 1, c0:c0 + W, :] = x_ref[...].astype(bf16)   # cast once
    h = jnp.maximum(conv3x3(w1_ref, b1_ref), 0.0)                 # (M, C) f32

    # conv2 + bn2 + residual + relu (residual kept in f32)
    pad_ref[:, 1:H + 1, c0:c0 + W, :] = h.reshape(Bblk, H, W, C).astype(bf16)
    y = conv3x3(w2_ref, b2_ref) + x_ref[...].reshape(M, C)
    o_ref[...] = jnp.maximum(y, 0.0).reshape(Bblk, H, W, C)


# ----------------------------------------------------------------------------
# NHWC entry point (preferred: no HBM relayout around the kernel)
# ----------------------------------------------------------------------------
def residual_block_nhwc(x, params, *, block_batch=None):
    B, H, W, C = x.shape

    if block_batch is None:
        # Target >= 256 MXU rows per step, but keep >= 2 grid steps when the
        # batch allows so both v7x TensorCores get work.
        block_batch = max(1, min(B, max(1, 256 // (H * W))))
        while B % block_batch:
            block_batch -= 1
        if B // block_batch < 2 and block_batch > 1:
            block_batch //= 2
            while B % block_batch:
                block_batch -= 1
    assert B % block_batch == 0

    grid = (B // block_batch,)
    wpad = ((_C0 + W + 1 + 7) // 8) * 8   # scratch width, multiple of 8

    return pl.pallas_call(
        _residual_block_kernel,
        out_shape=jax.ShapeDtypeStruct((B, H, W, C), jnp.float32),
        grid_spec=pltpu.PrefetchScalarGridSpec(
            num_scalar_prefetch=0,
            grid=grid,
            in_specs=[
                pl.BlockSpec((block_batch, H, W, C), lambda b: (b, 0, 0, 0)),
                pl.BlockSpec((9 * C, C), lambda b: (0, 0)),
                pl.BlockSpec((1, C), lambda b: (0, 0)),
                pl.BlockSpec((9 * C, C), lambda b: (0, 0)),
                pl.BlockSpec((1, C), lambda b: (0, 0)),
            ],
            out_specs=pl.BlockSpec((block_batch, H, W, C), lambda b: (b, 0, 0, 0)),
            scratch_shapes=[
                pltpu.VMEM((block_batch, H + 2, wpad, C), jnp.bfloat16),
            ],
        ),
        compiler_params=pltpu.CompilerParams(
            dimension_semantics=("parallel",),      # batch blocks across TCs (v7x)
            vmem_limit_bytes=32 * 1024 * 1024,      # ~2 MiB used; safe on 64 MiB v7x
        ),
    )(x.astype(jnp.float32), params['w1'], params['b1'], params['w2'], params['b2'])


# ----------------------------------------------------------------------------
# PyTorch-compatible NCHW wrapper
# ----------------------------------------------------------------------------
def residual_block(x_nchw, params, *, block_batch=None):
    # In a real network keep activations NHWC end-to-end and call
    # residual_block_nhwc directly: these two HBM relayouts move more bytes
    # than the kernel itself touches per sample.
    x = jnp.transpose(x_nchw, (0, 2, 3, 1))
    y = residual_block_nhwc(x, params, block_batch=block_batch)
    return jnp.transpose(y, (0, 3, 1, 2))


# ----------------------------------------------------------------------------
# Synthetic parameters with eval-mode BatchNorm folded into weight/bias
# ----------------------------------------------------------------------------
def init_params(key, channels, eps=1e-5):
    ks = jax.random.split(key, 12)

    def fold(kw, kb, kg, kbt, km, kv):
        c = channels
        w = 0.05 * jax.random.normal(kw, (3, 3, c, c), jnp.float32)
        b = 0.05 * jax.random.normal(kb, (c,), jnp.float32)
        gamma = 1.0 + 0.1 * jax.random.normal(kg, (c,), jnp.float32)
        beta = 0.1 * jax.random.normal(kbt, (c,), jnp.float32)
        rmean = 0.1 * jax.random.normal(km, (c,), jnp.float32)
        rvar = 1.0 + 0.1 * jax.random.uniform(kv, (c,), jnp.float32)
        scale = gamma / jnp.sqrt(rvar + eps)                          # (c,)
        w_folded = (w * scale[None, None, None, :]).reshape(9 * c, c)
        bias = (b - rmean) * scale + beta
        return w_folded.astype(jnp.bfloat16), bias.reshape(1, c).astype(jnp.float32)

    w1, b1 = fold(*ks[0:6])
    w2, b2 = fold(*ks[6:12])
    return dict(w1=w1, b1=b1, w2=w2, b2=b2)


# ----------------------------------------------------------------------------
# Pure-JAX reference (same folded bf16 weights / same casts as the kernel)
# ----------------------------------------------------------------------------
def reference_block(x_nchw, params):
    C = x_nchw.shape[1]
    x = jnp.transpose(x_nchw, (0, 2, 3, 1)).astype(jnp.float32)

    def conv_bn(a, w_flat, bias):
        w = w_flat.reshape(3, 3, C, C)
        y = jax.lax.conv_general_dilated(
            a.astype(jnp.bfloat16), w,
            window_strides=(1, 1), padding='SAME',
            dimension_numbers=('NHWC', 'HWIO', 'NHWC'),
            preferred_element_type=jnp.float32)
        return y + bias.reshape(1, 1, 1, C)

    h = jnp.maximum(conv_bn(x, params['w1'], params['b1']), 0.0)
    y = conv_bn(h, params['w2'], params['b2']) + x
    y = jnp.maximum(y, 0.0)
    return jnp.transpose(y, (0, 3, 1, 2))


if __name__ == "__main__":
    # Lane-dense config (C multiple of 128); B=8 so the batch-blocked kernel
    # gets M = 4*64 = 256 rows per MXU pass over a 2-step grid.
    B, C, H, W = 8, 128, 8, 8
    key = jax.random.PRNGKey(0)
    kp, kx = jax.random.split(key)
    params = init_params(kp, C)
    x = jax.random.normal(kx, (B, C, H, W), jnp.float32)

    out = jax.jit(residual_block)(x, params)
    jax.block_until_ready(out)

    ref = reference_block(x, params)

    assert out.shape == (B, C, H, W), out.shape
    assert bool(jnp.all(jnp.isfinite(out)))
    max_err = float(jnp.max(jnp.abs(out - ref)))
    assert max_err < 2e-2, f"max |kernel - ref| = {max_err}"
    print("KERNEL_OK")
</pallas_src>

<mosaic_0001>
module attributes {stable_mosaic.version = 11 : i64} {
  func.func @_residual_block_kernel(%arg0: i32, %arg1: memref<4x8x8x128xf32, #tpu.memory_space<vmem>>, %arg2: memref<1152x128xbf16, #tpu.memory_space<vmem>>, %arg3: memref<1x128xf32, #tpu.memory_space<vmem>>, %arg4: memref<1152x128xbf16, #tpu.memory_space<vmem>>, %arg5: memref<1x128xf32, #tpu.memory_space<vmem>>, %arg6: memref<4x8x8x128xf32, #tpu.memory_space<vmem>>, %arg7: memref<4x10x24x128xbf16, #tpu.memory_space<vmem>>) attributes {dimension_semantics = [#tpu.dimension_semantics<parallel>], iteration_bounds = array<i64: 2>, scalar_prefetch = 0 : i64, scratch_operands = 1 : i64, tpu.core_type = #tpu.core_type<tc>, window_params = [{transform_indices = @transform_0, window_bounds = array<i64: 4, 8, 8, 128>}, {pipeline_mode = #tpu.pipeline_mode<synchronous>, transform_indices = @transform_1, window_bounds = array<i64: 1152, 128>}, {pipeline_mode = #tpu.pipeline_mode<synchronous>, transform_indices = @transform_2, window_bounds = array<i64: 1, 128>}, {pipeline_mode = #tpu.pipeline_mode<synchronous>, transform_indices = @transform_3, window_bounds = array<i64: 1152, 128>}, {pipeline_mode = #tpu.pipeline_mode<synchronous>, transform_indices = @transform_4, window_bounds = array<i64: 1, 128>}, {transform_indices = @transform_5, window_bounds = array<i64: 4, 8, 8, 128>}]} {
    %cst = arith.constant 0.000000e+00 : bf16
    %0 = vector.broadcast %cst : bf16 to vector<4x1x24x128xbf16>
    %c0 = arith.constant 0 : index
    %c0_0 = arith.constant 0 : index
    %c0_1 = arith.constant 0 : index
    %c0_2 = arith.constant 0 : index
    %1 = vector.load %arg7[%c0, %c0_0, %c0_1, %c0_2] : memref<4x10x24x128xbf16, #tpu.memory_space<vmem>>, vector<4x1x24x128xbf16>
    tpu.vector_store %arg7[%c0, %c0_0, %c0_1, %c0_2], %0 {strides = array<i32>} : memref<4x10x24x128xbf16, #tpu.memory_space<vmem>>, vector<4x1x24x128xbf16>,
    %c0_3 = arith.constant 0 : index
    %c9 = arith.constant 9 : index
    %c0_4 = arith.constant 0 : index
    %c0_5 = arith.constant 0 : index
    %2 = vector.load %arg7[%c0_3, %c9, %c0_4, %c0_5] : memref<4x10x24x128xbf16, #tpu.memory_space<vmem>>, vector<4x1x24x128xbf16>
    tpu.vector_store %arg7[%c0_3, %c9, %c0_4, %c0_5], %0 {strides = array<i32>} : memref<4x10x24x128xbf16, #tpu.memory_space<vmem>>, vector<4x1x24x128xbf16>,
    %cst_6 = arith.constant 0.000000e+00 : bf16
    %3 = vector.broadcast %cst_6 : bf16 to vector<4x10x1x128xbf16>
    %c0_7 = arith.constant 0 : index
    %c0_8 = arith.constant 0 : index
    %c7 = arith.constant 7 : index
    %c0_9 = arith.constant 0 : index
    %4 = vector.load %arg7[%c0_7, %c0_8, %c7, %c0_9] : memref<4x10x24x128xbf16, #tpu.memory_space<vmem>>, vector<4x10x1x128xbf16>
    tpu.vector_store %arg7[%c0_7, %c0_8, %c7, %c0_9], %3 {strides = array<i32>} : memref<4x10x24x128xbf16, #tpu.memory_space<vmem>>, vector<4x10x1x128xbf16>,
    %c0_10 = arith.constant 0 : index
    %c0_11 = arith.constant 0 : index
    %c16 = arith.constant 16 : index
    %c0_12 = arith.constant 0 : index
    %5 = vector.load %arg7[%c0_10, %c0_11, %c16, %c0_12] : memref<4x10x24x128xbf16, #tpu.memory_space<vmem>>, vector<4x10x1x128xbf16>
    tpu.vector_store %arg7[%c0_10, %c0_11, %c16, %c0_12], %3 {strides = array<i32>} : memref<4x10x24x128xbf16, #tpu.memory_space<vmem>>, vector<4x10x1x128xbf16>,
    %c0_13 = arith.constant 0 : index
    %c0_14 = arith.constant 0 : index
    %c0_15 = arith.constant 0 : index
    %c0_16 = arith.constant 0 : index
    %6 = vector.load %arg1[%c0_13, %c0_14, %c0_15, %c0_16] : memref<4x8x8x128xf32, #tpu.memory_space<vmem>>, vector<4x8x8x128xf32>
    %7 = arith.truncf %6 : vector<4x8x8x128xf32> to vector<4x8x8x128xbf16>
    %c0_17 = arith.constant 0 : index
    %c1 = arith.constant 1 : index
    %c8 = arith.constant 8 : index
    %c0_18 = arith.constant 0 : index
    %8 = vector.load %arg7[%c0_17, %c1, %c8, %c0_18] : memref<4x10x24x128xbf16, #tpu.memory_space<vmem>>, vector<4x8x8x128xbf16>
    tpu.vector_store %arg7[%c0_17, %c1, %c8, %c0_18], %7 {strides = array<i32>} : memref<4x10x24x128xbf16, #tpu.memory_space<vmem>>, vector<4x8x8x128xbf16>,
    %c0_19 = arith.constant 0 : index
    %c0_20 = arith.constant 0 : index
    %c7_21 = arith.constant 7 : index
    %c0_22 = arith.constant 0 : index
    %9 = vector.load %arg7[%c0_19, %c0_20, %c7_21, %c0_22] : memref<4x10x24x128xbf16, #tpu.memory_space<vmem>>, vector<4x8x8x128xbf16>
    %10 = vector.shape_cast %9 : vector<4x8x8x128xbf16> to vector<256x128xbf16>
    %c0_23 = arith.constant 0 : index
    %c0_24 = arith.constant 0 : index
    %11 = vector.load %arg2[%c0_23, %c0_24] : memref<1152x128xbf16, #tpu.memory_space<vmem>>, vector<128x128xbf16>
    %cst_25 = arith.constant dense<0.000000e+00> : vector<256x128xf32>
    %12 = tpu.matmul %10, %11, %cst_25 {dimension_numbers = #tpu.dot_dimension_numbers<[1], [0], [0], [1], [0, 0, 1, 1], [], []>} : vector<256x128xbf16>, vector<128x128xbf16>, vector<256x128xf32> -> vector<256x128xf32>
    %c0_26 = arith.constant 0 : index
    %c0_27 = arith.constant 0 : index
    %c8_28 = arith.constant 8 : index
    %c0_29 = arith.constant 0 : index
    %13 = vector.load %arg7[%c0_26, %c0_27, %c8_28, %c0_29] : memref<4x10x24x128xbf16, #tpu.memory_space<vmem>>, vector<4x8x8x128xbf16>
    %14 = vector.shape_cast %13 : vector<4x8x8x128xbf16> to vector<256x128xbf16>
    %c128 = arith.constant 128 : index
    %c0_30 = arith.constant 0 : index
    %15 = vector.load %arg2[%c128, %c0_30] : memref<1152x128xbf16, #tpu.memory_space<vmem>>, vector<128x128xbf16>
    %cst_31 = arith.constant dense<0.000000e+00> : vector<256x128xf32>
    %16 = tpu.matmul %14, %15, %cst_31 {dimension_numbers = #tpu.dot_dimension_numbers<[1], [0], [0], [1], [0, 0, 1, 1], [], []>} : vector<256x128xbf16>, vector<128x128xbf16>, vector<256x128xf32> -> vector<256x128xf32>
    %17 = arith.addf %12, %16 : vector<256x128xf32>
    %c0_32 = arith.constant 0 : index
    %c0_33 = arith.constant 0 : index
    %c9_34 = arith.constant 9 : index
    %c0_35 = arith.constant 0 : index
    %18 = vector.load %arg7[%c0_32, %c0_33, %c9_34, %c0_35] : memref<4x10x24x128xbf16, #tpu.memory_space<vmem>>, vector<4x8x8x128xbf16>
    %19 = vector.shape_cast %18 : vector<4x8x8x128xbf16> to vector<256x128xbf16>
    %c256 = arith.constant 256 : index
    %c0_36 = arith.constant 0 : index
    %20 = vector.load %arg2[%c256, %c0_36] : memref<1152x128xbf16, #tpu.memory_space<vmem>>, vector<128x128xbf16>
    %cst_37 = arith.constant dense<0.000000e+00> : vector<256x128xf32>
    %21 = tpu.matmul %19, %20, %cst_37 {dimension_numbers = #tpu.dot_dimension_numbers<[1], [0], [0], [1], [0, 0, 1, 1], [], []>} : vector<256x128xbf16>, vector<128x128xbf16>, vector<256x128xf32> -> vector<256x128xf32>
    %22 = arith.addf %17, %21 : vector<256x128xf32>
    %c0_38 = arith.constant 0 : index
    %c1_39 = arith.constant 1 : index
    %c7_40 = arith.constant 7 : index
    %c0_41 = arith.constant 0 : index
    %23 = vector.load %arg7[%c0_38, %c1_39, %c7_40, %c0_41] : memref<4x10x24x128xbf16, #tpu.memory_space<vmem>>, vector<4x8x8x128xbf16>
    %24 = vector.shape_cast %23 : vector<4x8x8x128xbf16> to vector<256x128xbf16>
    %c384 = arith.constant 384 : index
    %c0_42 = arith.constant 0 : index
    %25 = vector.load %arg2[%c384, %c0_42] : memref<1152x128xbf16, #tpu.memory_space<vmem>>, vector<128x128xbf16>
    %cst_43 = arith.constant dense<0.000000e+00> : vector<256x128xf32>
    %26 = tpu.matmul %24, %25, %cst_43 {dimension_numbers = #tpu.dot_dimension_numbers<[1], [0], [0], [1], [0, 0, 1, 1], [], []>} : vector<256x128xbf16>, vector<128x128xbf16>, vector<256x128xf32> -> vector<256x128xf32>
    %27 = arith.addf %22, %26 : vector<256x128xf32>
    %c0_44 = arith.constant 0 : index
    %c1_45 = arith.constant 1 : index
    %c8_46 = arith.constant 8 : index
    %c0_47 = arith.constant 0 : index
    %28 = vector.load %arg7[%c0_44, %c1_45, %c8_46, %c0_47] : memref<4x10x24x128xbf16, #tpu.memory_space<vmem>>, vector<4x8x8x128xbf16>
    %29 = vector.shape_cast %28 : vector<4x8x8x128xbf16> to vector<256x128xbf16>
    %c512 = arith.constant 512 : index
    %c0_48 = arith.constant 0 : index
    %30 = vector.load %arg2[%c512, %c0_48] : memref<1152x128xbf16, #tpu.memory_space<vmem>>, vector<128x128xbf16>
    %cst_49 = arith.constant dense<0.000000e+00> : vector<256x128xf32>
    %31 = tpu.matmul %29, %30, %cst_49 {dimension_numbers = #tpu.dot_dimension_numbers<[1], [0], [0], [1], [0, 0, 1, 1], [], []>} : vector<256x128xbf16>, vector<128x128xbf16>, vector<256x128xf32> -> vector<256x128xf32>
    %32 = arith.addf %27, %31 : vector<256x128xf32>
    %c0_50 = arith.constant 0 : index
    %c1_51 = arith.constant 1 : index
    %c9_52 = arith.constant 9 : index
    %c0_53 = arith.constant 0 : index
    %33 = vector.load %arg7[%c0_50, %c1_51, %c9_52, %c0_53] : memref<4x10x24x128xbf16, #tpu.memory_space<vmem>>, vector<4x8x8x128xbf16>
    %34 = vector.shape_cast %33 : vector<4x8x8x128xbf16> to vector<256x128xbf16>
    %c640 = arith.constant 640 : index
    %c0_54 = arith.constant 0 : index
    %35 = vector.load %arg2[%c640, %c0_54] : memref<1152x128xbf16, #tpu.memory_space<vmem>>, vector<128x128xbf16>
    %cst_55 = arith.constant dense<0.000000e+00> : vector<256x128xf32>
    %36 = tpu.matmul %34, %35, %cst_55 {dimension_numbers = #tpu.dot_dimension_numbers<[1], [0], [0], [1], [0, 0, 1, 1], [], []>} : vector<256x128xbf16>, vector<128x128xbf16>, vector<256x128xf32> -> vector<256x128xf32>
    %37 = arith.addf %32, %36 : vector<256x128xf32>
    %c0_56 = arith.constant 0 : index
    %c2 = arith.constant 2 : index
    %c7_57 = arith.constant 7 : index
    %c0_58 = arith.constant 0 : index
    %38 = vector.load %arg7[%c0_56, %c2, %c7_57, %c0_58] : memref<4x10x24x128xbf16, #tpu.memory_space<vmem>>, vector<4x8x8x128xbf16>
    %39 = vector.shape_cast %38 : vector<4x8x8x128xbf16> to vector<256x128xbf16>
    %c768 = arith.constant 768 : index
    %c0_59 = arith.constant 0 : index
    %40 = vector.load %arg2[%c768, %c0_59] : memref<1152x128xbf16, #tpu.memory_space<vmem>>, vector<128x128xbf16>
    %cst_60 = arith.constant dense<0.000000e+00> : vector<256x128xf32>
    %41 = tpu.matmul %39, %40, %cst_60 {dimension_numbers = #tpu.dot_dimension_numbers<[1], [0], [0], [1], [0, 0, 1, 1], [], []>} : vector<256x128xbf16>, vector<128x128xbf16>, vector<256x128xf32> -> vector<256x128xf32>
    %42 = arith.addf %37, %41 : vector<256x128xf32>
    %c0_61 = arith.constant 0 : index
    %c2_62 = arith.constant 2 : index
    %c8_63 = arith.constant 8 : index
    %c0_64 = arith.constant 0 : index
    %43 = vector.load %arg7[%c0_61, %c2_62, %c8_63, %c0_64] : memref<4x10x24x128xbf16, #tpu.memory_space<vmem>>, vector<4x8x8x128xbf16>
    %44 = vector.shape_cast %43 : vector<4x8x8x128xbf16> to vector<256x128xbf16>
    %c896 = arith.constant 896 : index
    %c0_65 = arith.constant 0 : index
    %45 = vector.load %arg2[%c896, %c0_65] : memref<1152x128xbf16, #tpu.memory_space<vmem>>, vector<128x128xbf16>
    %cst_66 = arith.constant dense<0.000000e+00> : vector<256x128xf32>
    %46 = tpu.matmul %44, %45, %cst_66 {dimension_numbers = #tpu.dot_dimension_numbers<[1], [0], [0], [1], [0, 0, 1, 1], [], []>} : vector<256x128xbf16>, vector<128x128xbf16>, vector<256x128xf32> -> vector<256x128xf32>
    %47 = arith.addf %42, %46 : vector<256x128xf32>
    %c0_67 = arith.constant 0 : index
    %c2_68 = arith.constant 2 : index
    %c9_69 = arith.constant 9 : index
    %c0_70 = arith.constant 0 : index
    %48 = vector.load %arg7[%c0_67, %c2_68, %c9_69, %c0_70] : memref<4x10x24x128xbf16, #tpu.memory_space<vmem>>, vector<4x8x8x128xbf16>
    %49 = vector.shape_cast %48 : vector<4x8x8x128xbf16> to vector<256x128xbf16>
    %c1024 = arith.constant 1024 : index
    %c0_71 = arith.constant 0 : index
    %50 = vector.load %arg2[%c1024, %c0_71] : memref<1152x128xbf16, #tpu.memory_space<vmem>>, vector<128x128xbf16>
    %cst_72 = arith.constant dense<0.000000e+00> : vector<256x128xf32>
    %51 = tpu.matmul %49, %50, %cst_72 {dimension_numbers = #tpu.dot_dimension_numbers<[1], [0], [0], [1], [0, 0, 1, 1], [], []>} : vector<256x128xbf16>, vector<128x128xbf16>, vector<256x128xf32> -> vector<256x128xf32>
    %52 = arith.addf %47, %51 : vector<256x128xf32>
    %c0_73 = arith.constant 0 : index
    %c0_74 = arith.constant 0 : index
    %53 = vector.load %arg3[%c0_73, %c0_74] : memref<1x128xf32, #tpu.memory_space<vmem>>, vector<1x128xf32>
    %54 = vector.broadcast %53 : vector<1x128xf32> to vector<256x128xf32>
    %55 = arith.addf %52, %54 : vector<256x128xf32>
    %cst_75 = arith.constant 0.000000e+00 : f32
    %56 = vector.broadcast %cst_75 : f32 to vector<256x128xf32>
    %57 = arith.maximumf %55, %56 : vector<256x128xf32>
    %58 = vector.shape_cast %57 : vector<256x128xf32> to vector<4x8x8x128xf32>
    %59 = arith.truncf %58 : vector<4x8x8x128xf32> to vector<4x8x8x128xbf16>
    %c0_76 = arith.constant 0 : index
    %c1_77 = arith.constant 1 : index
    %c8_78 = arith.constant 8 : index
    %c0_79 = arith.constant 0 : index
    %60 = vector.load %arg7[%c0_76, %c1_77, %c8_78, %c0_79] : memref<4x10x24x128xbf16, #tpu.memory_space<vmem>>, vector<4x8x8x128xbf16>
    tpu.vector_store %arg7[%c0_76, %c1_77, %c8_78, %c0_79], %59 {strides = array<i32>} : memref<4x10x24x128xbf16, #tpu.memory_space<vmem>>, vector<4x8x8x128xbf16>,
    %c0_80 = arith.constant 0 : index
    %c0_81 = arith.constant 0 : index
    %c7_82 = arith.constant 7 : index
    %c0_83 = arith.constant 0 : index
    %61 = vector.load %arg7[%c0_80, %c0_81, %c7_82, %c0_83] : memref<4x10x24x128xbf16, #tpu.memory_space<vmem>>, vector<4x8x8x128xbf16>
    %62 = vector.shape_cast %61 : vector<4x8x8x128xbf16> to vector<256x128xbf16>
    %c0_84 = arith.constant 0 : index
    %c0_85 = arith.constant 0 : index
    %63 = vector.load %arg4[%c0_84, %c0_85] : memref<1152x128xbf16, #tpu.memory_space<vmem>>, vector<128x128xbf16>
    %cst_86 = arith.constant dense<0.000000e+00> : vector<256x128xf32>
    %64 = tpu.matmul %62, %63, %cst_86 {dimension_numbers = #tpu.dot_dimension_numbers<[1], [0], [0], [1], [0, 0, 1, 1], [], []>} : vector<256x128xbf16>, vector<128x128xbf16>, vector<256x128xf32> -> vector<256x128xf32>
    %c0_87 = arith.constant 0 : index
    %c0_88 = arith.constant 0 : index
    %c8_89 = arith.constant 8 : index
    %c0_90 = arith.constant 0 : index
    %65 = vector.load %arg7[%c0_87, %c0_88, %c8_89, %c0_90] : memref<4x10x24x128xbf16, #tpu.memory_space<vmem>>, vector<4x8x8x128xbf16>
    %66 = vector.shape_cast %65 : vector<4x8x8x128xbf16> to vector<256x128xbf16>
    %c128_91 = arith.constant 128 : index
    %c0_92 = arith.constant 0 : index
    %67 = vector.load %arg4[%c128_91, %c0_92] : memref<1152x128xbf16, #tpu.memory_space<vmem>>, vector<128x128xbf16>
    %cst_93 = arith.constant dense<0.000000e+00> : vector<256x128xf32>
    %68 = tpu.matmul %66, %67, %cst_93 {dimension_numbers = #tpu.dot_dimension_numbers<[1], [0], [0], [1], [0, 0, 1, 1], [], []>} : vector<256x128xbf16>, vector<128x128xbf16>, vector<256x128xf32> -> vector<256x128xf32>
    %69 = arith.addf %64, %68 : vector<256x128xf32>
    %c0_94 = arith.constant 0 : index
    %c0_95 = arith.constant 0 : index
    %c9_96 = arith.constant 9 : index
    %c0_97 = arith.constant 0 : index
    %70 = vector.load %arg7[%c0_94, %c0_95, %c9_96, %c0_97] : memref<4x10x24x128xbf16, #tpu.memory_space<vmem>>, vector<4x8x8x128xbf16>
    %71 = vector.shape_cast %70 : vector<4x8x8x128xbf16> to vector<256x128xbf16>
    %c256_98 = arith.constant 256 : index
    %c0_99 = arith.constant 0 : index
    %72 = vector.load %arg4[%c256_98, %c0_99] : memref<1152x128xbf16, #tpu.memory_space<vmem>>, vector<128x128xbf16>
    %cst_100 = arith.constant dense<0.000000e+00> : vector<256x128xf32>
    %73 = tpu.matmul %71, %72, %cst_100 {dimension_numbers = #tpu.dot_dimension_numbers<[1], [0], [0], [1], [0, 0, 1, 1], [], []>} : vector<256x128xbf16>, vector<128x128xbf16>, vector<256x128xf32> -> vector<256x128xf32>
    %74 = arith.addf %69, %73 : vector<256x128xf32>
    %c0_101 = arith.constant 0 : index
    %c1_102 = arith.constant 1 : index
    %c7_103 = arith.constant 7 : index
    %c0_104 = arith.constant 0 : index
    %75 = vector.load %arg7[%c0_101, %c1_102, %c7_103, %c0_104] : memref<4x10x24x128xbf16, #tpu.memory_space<vmem>>, vector<4x8x8x128xbf16>
    %76 = vector.shape_cast %75 : vector<4x8x8x128xbf16> to vector<256x128xbf16>
    %c384_105 = arith.constant 384 : index
    %c0_106 = arith.constant 0 : index
    %77 = vector.load %arg4[%c384_105, %c0_106] : memref<1152x128xbf16, #tpu.memory_space<vmem>>, vector<128x128xbf16>
    %cst_107 = arith.constant dense<0.000000e+00> : vector<256x128xf32>
    %78 = tpu.matmul %76, %77, %cst_107 {dimension_numbers = #tpu.dot_dimension_numbers<[1], [0], [0], [1], [0, 0, 1, 1], [], []>} : vector<256x128xbf16>, vector<128x128xbf16>, vector<256x128xf32> -> vector<256x128xf32>
    %79 = arith.addf %74, %78 : vector<256x128xf32>
    %c0_108 = arith.constant 0 : index
    %c1_109 = arith.constant 1 : index
    %c8_110 = arith.constant 8 : index
    %c0_111 = arith.constant 0 : index
    %80 = vector.load %arg7[%c0_108, %c1_109, %c8_110, %c0_111] : memref<4x10x24x128xbf16, #tpu.memory_space<vmem>>, vector<4x8x8x128xbf16>
    %81 = vector.shape_cast %80 : vector<4x8x8x128xbf16> to vector<256x128xbf16>
    %c512_112 = arith.constant 512 : index
    %c0_113 = arith.constant 0 : index
    %82 = vector.load %arg4[%c512_112, %c0_113] : memref<1152x128xbf16, #tpu.memory_space<vmem>>, vector<128x128xbf16>
    %cst_114 = arith.constant dense<0.000000e+00> : vector<256x128xf32>
    %83 = tpu.matmul %81, %82, %cst_114 {dimension_numbers = #tpu.dot_dimension_numbers<[1], [0], [0], [1], [0, 0, 1, 1], [], []>} : vector<256x128xbf16>, vector<128x128xbf16>, vector<256x128xf32> -> vector<256x128xf32>
    %84 = arith.addf %79, %83 : vector<256x128xf32>
    %c0_115 = arith.constant 0 : index
    %c1_116 = arith.constant 1 : index
    %c9_117 = arith.constant 9 : index
    %c0_118 = arith.constant 0 : index
    %85 = vector.load %arg7[%c0_115, %c1_116, %c9_117, %c0_118] : memref<4x10x24x128xbf16, #tpu.memory_space<vmem>>, vector<4x8x8x128xbf16>
    %86 = vector.shape_cast %85 : vector<4x8x8x128xbf16> to vector<256x128xbf16>
    %c640_119 = arith.constant 640 : index
    %c0_120 = arith.constant 0 : index
    %87 = vector.load %arg4[%c640_119, %c0_120] : memref<1152x128xbf16, #tpu.memory_space<vmem>>, vector<128x128xbf16>
    %cst_121 = arith.constant dense<0.000000e+00> : vector<256x128xf32>
    %88 = tpu.matmul %86, %87, %cst_121 {dimension_numbers = #tpu.dot_dimension_numbers<[1], [0], [0], [1], [0, 0, 1, 1], [], []>} : vector<256x128xbf16>, vector<128x128xbf16>, vector<256x128xf32> -> vector<256x128xf32>
    %89 = arith.addf %84, %88 : vector<256x128xf32>
    %c0_122 = arith.constant 0 : index
    %c2_123 = arith.constant 2 : index
    %c7_124 = arith.constant 7 : index
    %c0_125 = arith.constant 0 : index
    %90 = vector.load %arg7[%c0_122, %c2_123, %c7_124, %c0_125] : memref<4x10x24x128xbf16, #tpu.memory_space<vmem>>, vector<4x8x8x128xbf16>
    %91 = vector.shape_cast %90 : vector<4x8x8x128xbf16> to vector<256x128xbf16>
    %c768_126 = arith.constant 768 : index
    %c0_127 = arith.constant 0 : index
    %92 = vector.load %arg4[%c768_126, %c0_127] : memref<1152x128xbf16, #tpu.memory_space<vmem>>, vector<128x128xbf16>
    %cst_128 = arith.constant dense<0.000000e+00> : vector<256x128xf32>
    %93 = tpu.matmul %91, %92, %cst_128 {dimension_numbers = #tpu.dot_dimension_numbers<[1], [0], [0], [1], [0, 0, 1, 1], [], []>} : vector<256x128xbf16>, vector<128x128xbf16>, vector<256x128xf32> -> vector<256x128xf32>
    %94 = arith.addf %89, %93 : vector<256x128xf32>
    %c0_129 = arith.constant 0 : index
    %c2_130 = arith.constant 2 : index
    %c8_131 = arith.constant 8 : index
    %c0_132 = arith.constant 0 : index
    %95 = vector.load %arg7[%c0_129, %c2_130, %c8_131, %c0_132] : memref<4x10x24x128xbf16, #tpu.memory_space<vmem>>, vector<4x8x8x128xbf16>
    %96 = vector.shape_cast %95 : vector<4x8x8x128xbf16> to vector<256x128xbf16>
    %c896_133 = arith.constant 896 : index
    %c0_134 = arith.constant 0 : index
    %97 = vector.load %arg4[%c896_133, %c0_134] : memref<1152x128xbf16, #tpu.memory_space<vmem>>, vector<128x128xbf16>
    %cst_135 = arith.constant dense<0.000000e+00> : vector<256x128xf32>
    %98 = tpu.matmul %96, %97, %cst_135 {dimension_numbers = #tpu.dot_dimension_numbers<[1], [0], [0], [1], [0, 0, 1, 1], [], []>} : vector<256x128xbf16>, vector<128x128xbf16>, vector<256x128xf32> -> vector<256x128xf32>
    %99 = arith.addf %94, %98 : vector<256x128xf32>
    %c0_136 = arith.constant 0 : index
    %c2_137 = arith.constant 2 : index
    %c9_138 = arith.constant 9 : index
    %c0_139 = arith.constant 0 : index
    %100 = vector.load %arg7[%c0_136, %c2_137, %c9_138, %c0_139] : memref<4x10x24x128xbf16, #tpu.memory_space<vmem>>, vector<4x8x8x128xbf16>
    %101 = vector.shape_cast %100 : vector<4x8x8x128xbf16> to vector<256x128xbf16>
    %c1024_140 = arith.constant 1024 : index
    %c0_141 = arith.constant 0 : index
    %102 = vector.load %arg4[%c1024_140, %c0_141] : memref<1152x128xbf16, #tpu.memory_space<vmem>>, vector<128x128xbf16>
    %cst_142 = arith.constant dense<0.000000e+00> : vector<256x128xf32>
    %103 = tpu.matmul %101, %102, %cst_142 {dimension_numbers = #tpu.dot_dimension_numbers<[1], [0], [0], [1], [0, 0, 1, 1], [], []>} : vector<256x128xbf16>, vector<128x128xbf16>, vector<256x128xf32> -> vector<256x128xf32>
    %104 = arith.addf %99, %103 : vector<256x128xf32>
    %c0_143 = arith.constant 0 : index
    %c0_144 = arith.constant 0 : index
    %105 = vector.load %arg5[%c0_143, %c0_144] : memref<1x128xf32, #tpu.memory_space<vmem>>, vector<1x128xf32>
    %106 = vector.broadcast %105 : vector<1x128xf32> to vector<256x128xf32>
    %107 = arith.addf %104, %106 : vector<256x128xf32>
    %c0_145 = arith.constant 0 : index
    %c0_146 = arith.constant 0 : index
    %c0_147 = arith.constant 0 : index
    %c0_148 = arith.constant 0 : index
    %108 = vector.load %arg1[%c0_145, %c0_146, %c0_147, %c0_148] : memref<4x8x8x128xf32, #tpu.memory_space<vmem>>, vector<4x8x8x128xf32>
    %109 = vector.shape_cast %108 : vector<4x8x8x128xf32> to vector<256x128xf32>
    %110 = arith.addf %107, %109 : vector<256x128xf32>
    %cst_149 = arith.constant 0.000000e+00 : f32
    %111 = vector.broadcast %cst_149 : f32 to vector<256x128xf32>
    %112 = arith.maximumf %110, %111 : vector<256x128xf32>
    %113 = vector.shape_cast %112 : vector<256x128xf32> to vector<4x8x8x128xf32>
    %c0_150 = arith.constant 0 : index
    %c0_151 = arith.constant 0 : index
    %c0_152 = arith.constant 0 : index
    %c0_153 = arith.constant 0 : index
    %114 = vector.load %arg6[%c0_150, %c0_151, %c0_152, %c0_153] : memref<4x8x8x128xf32, #tpu.memory_space<vmem>>, vector<4x8x8x128xf32>
    tpu.vector_store %arg6[%c0_150, %c0_151, %c0_152, %c0_153], %113 {strides = array<i32>} : memref<4x8x8x128xf32, #tpu.memory_space<vmem>>, vector<4x8x8x128xf32>,
    return
  }
  func.func @transform_0(%arg0: i32) -> (i32, i32, i32, i32) {
    %c0_i32 = arith.constant 0 : i32
    %c0_i32_0 = arith.constant 0 : i32
    %c0_i32_1 = arith.constant 0 : i32
    %c0_i32_2 = arith.constant 0 : i32
    return %arg0, %c0_i32, %c0_i32_0, %c0_i32_1 : i32, i32, i32, i32
  }
  func.func @transform_1(%arg0: i32) -> (i32, i32) {
    %c0_i32 = arith.constant 0 : i32
    %c0_i32_0 = arith.constant 0 : i32
    %c0_i32_1 = arith.constant 0 : i32
    return %c0_i32, %c0_i32_0 : i32, i32
  }
  func.func @transform_2(%arg0: i32) -> (i32, i32) {
    %c0_i32 = arith.constant 0 : i32
    %c0_i32_0 = arith.constant 0 : i32
    %c0_i32_1 = arith.constant 0 : i32
    return %c0_i32, %c0_i32_0 : i32, i32
  }
  func.func @transform_3(%arg0: i32) -> (i32, i32) {
    %c0_i32 = arith.constant 0 : i32
    %c0_i32_0 = arith.constant 0 : i32
    %c0_i32_1 = arith.constant 0 : i32
    return %c0_i32, %c0_i32_0 : i32, i32
  }
  func.func @transform_4(%arg0: i32) -> (i32, i32) {
    %c0_i32 = arith.constant 0 : i32
    %c0_i32_0 = arith.constant 0 : i32
    %c0_i32_1 = arith.constant 0 : i32
    return %c0_i32, %c0_i32_0 : i32, i32
  }
  func.func @transform_5(%arg0: i32) -> (i32, i32, i32, i32) {
    %c0_i32 = arith.constant 0 : i32
    %c0_i32_0 = arith.constant 0 : i32
    %c0_i32_1 = arith.constant 0 : i32
    %c0_i32_2 = arith.constant 0 : i32
    return %arg0, %c0_i32, %c0_i32_0, %c0_i32_1 : i32, i32, i32, i32
  }
}

</mosaic_0001>

<llo_original>
// kernel: residual_block.1
$region0: #{residual_block.1}
  #allocation0 [shape = 'u32[]', space=smem, size = 0x4, offset = 0x4, fixed_abs, tag = 'smem constant byte address 0x4 - core index']
  #allocation1 [shape = 'u32[144,128]{1,0:T(1,128)}', space=vmem, size = 0x12000, scoped, tag = 'internal scratch']
  #allocation2 [shape = 'bf16[4,10,24,128]{3,2,1,0:T(8,128)(2,1)}', space=vmem, size = 0x3c000, scoped, tag = 'scratch operand']
  %s0 = inlined_call_operand.hbm [shape: f32[8,8,8,128], index: 0, kind: input, shape index: {}]
  %s1 = inlined_call_operand.hbm [shape: bf16[1152,128], index: 1, kind: input, shape index: {}]
  %s2 = inlined_call_operand.vmem [shape: f32[1,128], index: 2, kind: input, shape index: {}]
  %s3 = inlined_call_operand.hbm [shape: bf16[1152,128], index: 3, kind: input, shape index: {}]
  %s4 = inlined_call_operand.vmem [shape: f32[1,128], index: 4, kind: input, shape index: {}]
  %s5 = inlined_call_operand.hbm [shape: f32[8,8,8,128], index: 5, kind: output, shape index: {}]
  %s6 = sld [smem:[#allocation0]]
  $region65: #{residual_block.1} parent=0
    _
  %s8 = ssub.s32 1, %s6
  %s9 = scalar_select 0, %s8, %s6
  $region1: #{residual_block.1} parent=0
    #allocation3 [shape = 'u8[262144]{0}', space=vmem, size = 0x40000, scoped, tag = 'input window, operand 0']
    #allocation4 [shape = 's32[2]{0}', space=sflag, size = 0x8, scoped, tag = 'scoped memory for residual_block.1']
    #allocation5 [shape = 's32[2]{0}', space=sflag, size = 0x8, scoped, tag = 'scoped memory for residual_block.1']
    #allocation6 [shape = 'u8[294912]{0}', space=vmem, size = 0x48000, scoped, tag = 'input window, operand 1, single buffered']
    #allocation7 [shape = 's32[1]{0}', space=sflag, size = 0x4, scoped, tag = 'scoped memory for residual_block.1']
    #allocation8 [shape = 'u8[294912]{0}', space=vmem, size = 0x48000, scoped, tag = 'input window, operand 3, single buffered']
    #allocation9 [shape = 'u8[262144]{0}', space=vmem, size = 0x40000, scoped, tag = 'output window, operand 0']
    %10 = vsyncpa [#allocation4], 0
    %s11 = scalar_lea.sflag [#allocation4], 1
    %12 = vsyncpa %s11, 0
    %13 = vsyncpa [#allocation7], 0
    %14 = vsyncpa [#allocation5], 0
    %s15 = scalar_lea.sflag [#allocation5], 1
    %16 = vsyncpa %s15, 0
    loop: start=0, step=1, limit=4
    $region2: #{residual_block.1} parent=1 // loop_pre_header
      _
    $region3: #{residual_block.1} parent=1 // loop_header
      %s18 = sphi 0, %s22
      %p19 = scmp.ge.s32.totalorder %s18, 4
      %s28 = sphi 0, %s30
      %s31 = sphi 0, %s28
      %s32 = sphi 0, %s31
      %s48 = sphi 0, %s32
      %s52 = sphi 0, %s52
      %s54 = sphi 0, %s52
      %s55 = sphi 0, %s54
      %s69 = sphi 0, %s55
      %s73 = sphi 0, %s73
      %s75 = sphi 0, %s73
      %s76 = sphi 0, %s75
      %s90 = sphi 0, %s76
      %s94 = sphi 0, %s94
      %s96 = sphi 0, %s94
      %s97 = sphi 0, %s96
      %s111 = sphi 0, %s97
      %s115 = sphi 0, %s115
      %s117 = sphi 0, %s115
      %s118 = sphi 0, %s117
      %s132 = sphi 0, %s118
      %s138 = sphi 0, %s140
      %s141 = sphi 0, %s138
      %s142 = sphi 0, %s141
      %s158 = sphi 0, %s142
    $region4: #{residual_block.1} parent=1 // loop_header_branch
      %21 = sbr.rel (%p19) target = $region8
    $region5: #{residual_block.1} parent=1 // loop_body
      %s23 = ssub.s32 %s18, 1
      %s24 = ssub.s32 %s18, 2
      %s25 = sadd.s32 %s18, 1
      %s26 = ssub.s32 %s18, %s25
      %p27 = scmp.eq.s32.totalorder %s26, 0
      %s29 = sadd.s32 %s28, 1
      %s30 = scalar_select %p27, %s28, %s29
      %p33 = pneg %p27
      %p34 = scmp.eq.s32.totalorder %s18, 1
      %p35 = por %p33, %p34
      %p36 = scmp.ne.s32.totalorder %s28, %s31
      %p37 = scmp.eq.s32.totalorder %s18, 0
      %p38 = por %p36, %p37
      %p39 = scmp.ne.s32.totalorder %s28, %s31
      %p40 = scmp.eq.s32.totalorder %s23, 1
      %p41 = por %p39, %p40
      %p42 = scmp.ne.s32.totalorder %s31, %s32
      %p43 = scmp.eq.s32.totalorder %s23, 0
      %p44 = por %p42, %p43
      %p45 = scmp.ne.s32.totalorder %s31, %s32
      %p46 = scmp.eq.s32.totalorder %s24, 1
      %p47 = por %p45, %p46
      %p49 = scmp.ne.s32.totalorder %s32, %s48
      %p50 = scmp.eq.s32.totalorder %s24, 0
      %p51 = por %p49, %p50
      %s53 = sadd.s32 %s52, 1
      %p56 = scmp.eq.s32.totalorder %s18, 1
      %p57 = scmp.ne.s32.totalorder %s52, %s54
      %p58 = scmp.eq.s32.totalorder %s18, 0
      %p59 = por %p57, %p58
      %p60 = scmp.ne.s32.totalorder %s52, %s54
      %p61 = scmp.eq.s32.totalorder %s23, 1
      %p62 = por %p60, %p61
      %p63 = scmp.ne.s32.totalorder %s54, %s55
      %p64 = scmp.eq.s32.totalorder %s23, 0
      %p65 = por %p63, %p64
      %p66 = scmp.ne.s32.totalorder %s54, %s55
      %p67 = scmp.eq.s32.totalorder %s24, 1
      %p68 = por %p66, %p67
      %p70 = scmp.ne.s32.totalorder %s55, %s69
      %p71 = scmp.eq.s32.totalorder %s24, 0
      %p72 = por %p70, %p71
      %s74 = sadd.s32 %s73, 1
      %p77 = scmp.eq.s32.totalorder %s18, 1
      %p78 = scmp.ne.s32.totalorder %s73, %s75
      %p79 = scmp.eq.s32.totalorder %s18, 0
      %p80 = por %p78, %p79
      %p81 = scmp.ne.s32.totalorder %s73, %s75
      %p82 = scmp.eq.s32.totalorder %s23, 1
      %p83 = por %p81, %p82
      %p84 = scmp.ne.s32.totalorder %s75, %s76
      %p85 = scmp.eq.s32.totalorder %s23, 0
      %p86 = por %p84, %p85
      %p87 = scmp.ne.s32.totalorder %s75, %s76
      %p88 = scmp.eq.s32.totalorder %s24, 1
      %p89 = por %p87, %p88
      %p91 = scmp.ne.s32.totalorder %s76, %s90
      %p92 = scmp.eq.s32.totalorder %s24, 0
      %p93 = por %p91, %p92
      %s95 = sadd.s32 %s94, 1
      %p98 = scmp.eq.s32.totalorder %s18, 1
      %p99 = scmp.ne.s32.totalorder %s94, %s96
      %p100 = scmp.eq.s32.totalorder %s18, 0
      %p101 = por %p99, %p100
      %p102 = scmp.ne.s32.totalorder %s94, %s96
      %p103 = scmp.eq.s32.totalorder %s23, 1
      %p104 = por %p102, %p103
      %p105 = scmp.ne.s32.totalorder %s96, %s97
      %p106 = scmp.eq.s32.totalorder %s23, 0
      %p107 = por %p105, %p106
      %p108 = scmp.ne.s32.totalorder %s96, %s97
      %p109 = scmp.eq.s32.totalorder %s24, 1
      %p110 = por %p108, %p109
      %p112 = scmp.ne.s32.totalorder %s97, %s111
      %p113 = scmp.eq.s32.totalorder %s24, 0
      %p114 = por %p112, %p113
      %s116 = sadd.s32 %s115, 1
      %p119 = scmp.eq.s32.totalorder %s18, 1
      %p120 = scmp.ne.s32.totalorder %s115, %s117
      %p121 = scmp.eq.s32.totalorder %s18, 0
      %p122 = por %p120, %p121
      %p123 = scmp.ne.s32.totalorder %s115, %s117
      %p124 = scmp.eq.s32.totalorder %s23, 1
      %p125 = por %p123, %p124
      %p126 = scmp.ne.s32.totalorder %s117, %s118
      %p127 = scmp.eq.s32.totalorder %s23, 0
      %p128 = por %p126, %p127
      %p129 = scmp.ne.s32.totalorder %s117, %s118
      %p130 = scmp.eq.s32.totalorder %s24, 1
      %p131 = por %p129, %p130
      %p133 = scmp.ne.s32.totalorder %s118, %s132
      %p134 = scmp.eq.s32.totalorder %s24, 0
      %p135 = por %p133, %p134
      %s136 = ssub.s32 %s18, %s25
      %p137 = scmp.eq.s32.totalorder %s136, 0
      %s139 = sadd.s32 %s138, 1
      %s140 = scalar_select %p137, %s138, %s139
      %p143 = pneg %p137
      %p144 = scmp.eq.s32.totalorder %s18, 1
      %p145 = por %p143, %p144
      %p146 = scmp.ne.s32.totalorder %s138, %s141
      %p147 = scmp.eq.s32.totalorder %s18, 0
      %p148 = por %p146, %p147
      %p149 = scmp.ne.s32.totalorder %s138, %s141
      %p150 = scmp.eq.s32.totalorder %s23, 1
      %p151 = por %p149, %p150
      %p152 = scmp.ne.s32.totalorder %s141, %s142
      %p153 = scmp.eq.s32.totalorder %s23, 0
      %p154 = por %p152, %p153
      %p155 = scmp.ne.s32.totalorder %s141, %s142
      %p156 = scmp.eq.s32.totalorder %s24, 1
      %p157 = por %p155, %p156
      %p159 = scmp.ne.s32.totalorder %s142, %s158
      %p160 = scmp.eq.s32.totalorder %s24, 0
      %p161 = por %p159, %p160
      %p162 = scmp.le.s32.totalorder 1, %s18
      %p163 = scmp.lt.s32.totalorder %s18, 3
      %p164 = pnand %p162, %p163
      %p165 = pneg %p164
      // Predicated region
      $region9: #{residual_block.1} parent=5 // pred_check
        _
      $region10: #{residual_block.1} parent=5 // pred_check_branch
        %167 = sbr.rel (%p164) target = $region12
      $region11: #{residual_block.1} parent=5 // pred_region
        %s168 = ssub.s32 %s18, 1
        // Predicated region
        $region13: #{residual_block.1} parent=11 // pred_check
          %p169 = pneg %p65
        $region14: #{residual_block.1} parent=11 // pred_check_branch
          %171 = sbr.rel (%p169) target = $region16
        $region15: #{residual_block.1} parent=11 // pred_region
          %s173 = ssub.s32 9216, 9216
          %174 = vsyncadd [#allocation7], %s173
          %s175 = sshll.u32 [#allocation6], 4
          %s176 = int_to_ptr.vmem [resolvable:$true] %s175
          %181 = dma.hbm_to_vmem [thread:$0]  %s1, 9216, %s176, [#allocation7], 64, 64, 4
        $region16: #{residual_block.1} parent=11 // pred_fallthru
          _
        // Predicated region
        $region17: #{residual_block.1} parent=11 // pred_check
          %p182 = pneg %p86
        $region18: #{residual_block.1} parent=11 // pred_check_branch
          %184 = sbr.rel (%p182) target = $region20
        $region19: #{residual_block.1} parent=11 // pred_region
          _
        $region20: #{residual_block.1} parent=11 // pred_fallthru
          _
        // Predicated region
        $region21: #{residual_block.1} parent=11 // pred_check
          %p185 = pneg %p107
        $region22: #{residual_block.1} parent=11 // pred_check_branch
          %187 = sbr.rel (%p185) target = $region24
        $region23: #{residual_block.1} parent=11 // pred_region
          %s189 = ssub.s32 9216, 9216
          %190 = vsyncadd [#allocation7], %s189
          %s191 = sshll.u32 [#allocation8], 4
          %s192 = int_to_ptr.vmem [resolvable:$true] %s191
          %197 = dma.hbm_to_vmem [thread:$0]  %s3, 9216, %s192, [#allocation7], 64, 64, 4
        $region24: #{residual_block.1} parent=11 // pred_fallthru
          _
        // Predicated region
        $region25: #{residual_block.1} parent=11 // pred_check
          %p198 = pneg %p128
        $region26: #{residual_block.1} parent=11 // pred_check_branch
          %200 = sbr.rel (%p198) target = $region28
        $region27: #{residual_block.1} parent=11 // pred_region
          _
        $region28: #{residual_block.1} parent=11 // pred_fallthru
          _
      $region12: #{residual_block.1} parent=5 // pred_fallthru
        _
      %p201 = scmp.lt.s32.totalorder %s18, 2
      // Predicated region
      $region29: #{residual_block.1} parent=5 // pred_check
        %p202 = pneg %p201
      $region30: #{residual_block.1} parent=5 // pred_check_branch
        %204 = sbr.rel (%p202) target = $region32
      $region31: #{residual_block.1} parent=5 // pred_region
        // Predicated region
        $region33: #{residual_block.1} parent=31 // pred_check
          %p205 = pneg %p38
        $region34: #{residual_block.1} parent=31 // pred_check_branch
          %207 = sbr.rel (%p205) target = $region36
        $region35: #{residual_block.1} parent=31 // pred_region
          %s208 = sand.u32 %s28, 1
          %s209 = scalar_lea.sflag [#allocation4], %s208
          %s210 = sand.u32 %s28, 1
          %s211 = smul.addr %s210, 256
          %s212 = scalar_lea.vmem [#allocation3], %s211
          %s213 = smul.u32 4, %s18
          %s215 = ssub.s32 4096, 4096
          %216 = vsyncadd %s209, %s215
          %s217 = smul.addr %s213, 8
          %s218 = smul.addr %s217, 128
          %s219 = scalar_lea.hbm %s0, %s218
          %s220 = sshll.u32 %s212, 4
          %s221 = int_to_ptr.vmem [resolvable:$true] %s220
          %226 = dma.hbm_to_vmem [thread:$0]  %s219, 4096, %s221, %s209, 128, 128, 8
        $region36: #{residual_block.1} parent=31 // pred_fallthru
          _
      $region32: #{residual_block.1} parent=5 // pred_fallthru
        _
      %p227 = scmp.le.s32.totalorder 1, %s18
      %p228 = scmp.lt.s32.totalorder %s18, 3
      %p229 = pnand %p227, %p228
      %p230 = pneg %p229
      // Predicated region
      $region37: #{residual_block.1} parent=5 // pred_check
        _
      $region38: #{residual_block.1} parent=5 // pred_check_branch
        %232 = sbr.rel (%p229) target = $region40
      $region39: #{residual_block.1} parent=5 // pred_region
        %s233 = ssub.s32 %s18, 1
        %s234 = sand.u32 %s31, 1
        %s235 = scalar_lea.sflag [#allocation4], %s234
        %s236 = sand.u32 %s31, 1
        %s237 = smul.addr %s236, 256
        %s238 = scalar_lea.vmem [#allocation3], %s237
        // Predicated region
        $region41: #{residual_block.1} parent=39 // pred_check
          %p239 = pneg %p44
        $region42: #{residual_block.1} parent=39 // pred_check_branch
          %241 = sbr.rel (%p239) target = $region44
        $region43: #{residual_block.1} parent=39 // pred_region
          %242 = dma.done %s235, 4096
        $region44: #{residual_block.1} parent=39 // pred_fallthru
          _
        // Predicated region
        $region45: #{residual_block.1} parent=39 // pred_check
          %p243 = pneg %p65
        $region46: #{residual_block.1} parent=39 // pred_check_branch
          %245 = sbr.rel (%p243) target = $region48
        $region47: #{residual_block.1} parent=39 // pred_region
          %246 = dma.done [#allocation7], 9216
        $region48: #{residual_block.1} parent=39 // pred_fallthru
          _
        // Predicated region
        $region49: #{residual_block.1} parent=39 // pred_check
          %p247 = pneg %p107
        $region50: #{residual_block.1} parent=39 // pred_check_branch
          %249 = sbr.rel (%p247) target = $region52
        $region51: #{residual_block.1} parent=39 // pred_region
          %250 = dma.done [#allocation7], 9216
        $region52: #{residual_block.1} parent=39 // pred_fallthru
          _
        %s251 = sand.u32 %s31, 1
        %s252 = scalar_lea.sflag [#allocation4], %s251
        %s253 = sand.u32 %s31, 1
        %s254 = smul.addr %s253, 256
        %s255 = scalar_lea.vmem [#allocation3], %s254
        %p256 = pneg %p44
        %p257 = pneg %p41
        %p258 = pneg %p65
        %p259 = pneg %p62
        %p260 = pneg %p86
        %p261 = pneg %p83
        %p262 = pneg %p107
        %p263 = pneg %p104
        %p264 = pneg %p128
        %p265 = pneg %p125
        %p266 = pneg %p154
        %p267 = pneg %p151
        %s268 = sand.u32 %s141, 1
        %s269 = scalar_lea.sflag [#allocation5], %s268
        %s270 = sand.u32 %s141, 1
        %s271 = smul.addr %s270, 256
        %s272 = scalar_lea.vmem [#allocation9], %s271
        %s273 = smul.u32 4, %s23
        %s274 = smul.u32 4, %s23
        %276 = vst [vmem:[#allocation2] sm:$0xf] 0
        %277 = vst [vmem:[#allocation2 + $0x4] sm:$0xf] 0
        %278 = vst [vmem:[#allocation2 + $0x8] sm:$0xf] 0
        %279 = vst [vmem:[#allocation2 + $0x78] sm:$0xf] 0
        %280 = vst [vmem:[#allocation2 + $0x7c] sm:$0xf] 0
        %281 = vst [vmem:[#allocation2 + $0x80] sm:$0xf] 0
        %282 = vst [vmem:[#allocation2 + $0xf0] sm:$0xf] 0
        %283 = vst [vmem:[#allocation2 + $0xf4] sm:$0xf] 0
        %284 = vst [vmem:[#allocation2 + $0xf8] sm:$0xf] 0
        %285 = vst [vmem:[#allocation2 + $0x168] sm:$0xf] 0
        %286 = vst [vmem:[#allocation2 + $0x16c] sm:$0xf] 0
        %287 = vst [vmem:[#allocation2 + $0x170] sm:$0xf] 0
        %s288 = scalar_lea.vmem [#allocation2], 108
        %289 = vst [vmem:[%s288] sm:$0xf] 0
        %290 = vst [vmem:[%s288 + $0x4] sm:$0xf] 0
        %291 = vst [vmem:[%s288 + $0x8] sm:$0xf] 0
        %292 = vst [vmem:[%s288 + $0x78] sm:$0xf] 0
        %293 = vst [vmem:[%s288 + $0x7c] sm:$0xf] 0
        %294 = vst [vmem:[%s288 + $0x80] sm:$0xf] 0
        %295 = vst [vmem:[%s288 + $0xf0] sm:$0xf] 0
        %296 = vst [vmem:[%s288 + $0xf4] sm:$0xf] 0
        %297 = vst [vmem:[%s288 + $0xf8] sm:$0xf] 0
        %298 = vst [vmem:[%s288 + $0x168] sm:$0xf] 0
        %299 = vst [vmem:[%s288 + $0x16c] sm:$0xf] 0
        %300 = vst [vmem:[%s288 + $0x170] sm:$0xf] 0
        %vm301 = vcmask 1043459
        %vm302 = vsmask.f32 7950
        %vm303 = vmand %vm301, %vm302
        %v304 = vld [vmem:[#allocation2] sm:$0x8]
        %v305 = vsel %vm303, 0, %v304
        %306 = vst [vmem:[#allocation2] sm:$0x8] %v305
        %v307 = vld [vmem:[#allocation2 + $0xc] sm:$0x8]
        %v308 = vsel %vm303, 0, %v307
        %309 = vst [vmem:[#allocation2 + $0xc] sm:$0x8] %v308
        %v310 = vld [vmem:[#allocation2 + $0x18] sm:$0x8]
        %v311 = vsel %vm303, 0, %v310
        %312 = vst [vmem:[#allocation2 + $0x18] sm:$0x8] %v311
        %v313 = vld [vmem:[#allocation2 + $0x24] sm:$0x8]
        %v314 = vsel %vm303, 0, %v313
        %315 = vst [vmem:[#allocation2 + $0x24] sm:$0x8] %v314
        %v316 = vld [vmem:[#allocation2 + $0x30] sm:$0x8]
        %v317 = vsel %vm303, 0, %v316
        %318 = vst [vmem:[#allocation2 + $0x30] sm:$0x8] %v317
        %v319 = vld [vmem:[#allocation2 + $0x3c] sm:$0x8]
        %v320 = vsel %vm303, 0, %v319
        %321 = vst [vmem:[#allocation2 + $0x3c] sm:$0x8] %v320
        %v322 = vld [vmem:[#allocation2 + $0x48] sm:$0x8]
        %v323 = vsel %vm303, 0, %v322
        %324 = vst [vmem:[#allocation2 + $0x48] sm:$0x8] %v323
        %v325 = vld [vmem:[#allocation2 + $0x54] sm:$0x8]
        %v326 = vsel %vm303, 0, %v325
        %327 = vst [vmem:[#allocation2 + $0x54] sm:$0x8] %v326
        %v328 = vld [vmem:[#allocation2 + $0x60] sm:$0x8]
        %v329 = vsel %vm303, 0, %v328
        %330 = vst [vmem:[#allocation2 + $0x60] sm:$0x8] %v329
        %v331 = vld [vmem:[#allocation2 + $0x6c] sm:$0x8]
        %v332 = vsel %vm303, 0, %v331
        %333 = vst [vmem:[#allocation2 + $0x6c] sm:$0x8] %v332
        %v334 = vld [vmem:[#allocation2 + $0x78] sm:$0x8]
        %v335 = vsel %vm303, 0, %v334
        %336 = vst [vmem:[#allocation2 + $0x78] sm:$0x8] %v335
        %v337 = vld [vmem:[#allocation2 + $0x84] sm:$0x8]
        %v338 = vsel %vm303, 0, %v337
        %339 = vst [vmem:[#allocation2 + $0x84] sm:$0x8] %v338
        %v340 = vld [vmem:[#allocation2 + $0x90] sm:$0x8]
        %v341 = vsel %vm303, 0, %v340
        %342 = vst [vmem:[#allocation2 + $0x90] sm:$0x8] %v341
        %v343 = vld [vmem:[#allocation2 + $0x9c] sm:$0x8]
        %v344 = vsel %vm303, 0, %v343
        %345 = vst [vmem:[#allocation2 + $0x9c] sm:$0x8] %v344
        %v346 = vld [vmem:[#allocation2 + $0xa8] sm:$0x8]
        %v347 = vsel %vm303, 0, %v346
        %348 = vst [vmem:[#allocation2 + $0xa8] sm:$0x8] %v347
        %v349 = vld [vmem:[#allocation2 + $0xb4] sm:$0x8]
        %v350 = vsel %vm303, 0, %v349
        %351 = vst [vmem:[#allocation2 + $0xb4] sm:$0x8] %v350
        %v352 = vld [vmem:[#allocation2 + $0xc0] sm:$0x8]
        %v353 = vsel %vm303, 0, %v352
        %354 = vst [vmem:[#allocation2 + $0xc0] sm:$0x8] %v353
        %v355 = vld [vmem:[#allocation2 + $0xcc] sm:$0x8]
        %v356 = vsel %vm303, 0, %v355
        %357 = vst [vmem:[#allocation2 + $0xcc] sm:$0x8] %v356
        %v358 = vld [vmem:[#allocation2 + $0xd8] sm:$0x8]
        %v359 = vsel %vm303, 0, %v358
        %360 = vst [vmem:[#allocation2 + $0xd8] sm:$0x8] %v359
        %v361 = vld [vmem:[#allocation2 + $0xe4] sm:$0x8]
        %v362 = vsel %vm303, 0, %v361
        %363 = vst [vmem:[#allocation2 + $0xe4] sm:$0x8] %v362
        %v364 = vld [vmem:[#allocation2 + $0xf0] sm:$0x8]
        %v365 = vsel %vm303, 0, %v364
        %366 = vst [vmem:[#allocation2 + $0xf0] sm:$0x8] %v365
        %v367 = vld [vmem:[#allocation2 + $0xfc] sm:$0x8]
        %v368 = vsel %vm303, 0, %v367
        %369 = vst [vmem:[#allocation2 + $0xfc] sm:$0x8] %v368
        %v370 = vld [vmem:[#allocation2 + $0x108] sm:$0x8]
        %v371 = vsel %vm303, 0, %v370
        %372 = vst [vmem:[#allocation2 + $0x108] sm:$0x8] %v371
        %v373 = vld [vmem:[#allocation2 + $0x114] sm:$0x8]
        %v374 = vsel %vm303, 0, %v373
        %375 = vst [vmem:[#allocation2 + $0x114] sm:$0x8] %v374
        %v376 = vld [vmem:[#allocation2 + $0x120] sm:$0x8]
        %v377 = vsel %vm303, 0, %v376
        %378 = vst [vmem:[#allocation2 + $0x120] sm:$0x8] %v377
        %v379 = vld [vmem:[#allocation2 + $0x12c] sm:$0x8]
        %v380 = vsel %vm303, 0, %v379
        %381 = vst [vmem:[#allocation2 + $0x12c] sm:$0x8] %v380
        %v382 = vld [vmem:[#allocation2 + $0x138] sm:$0x8]
        %v383 = vsel %vm303, 0, %v382
        %384 = vst [vmem:[#allocation2 + $0x138] sm:$0x8] %v383
        %v385 = vld [vmem:[#allocation2 + $0x144] sm:$0x8]
        %v386 = vsel %vm303, 0, %v385
        %387 = vst [vmem:[#allocation2 + $0x144] sm:$0x8] %v386
        %v388 = vld [vmem:[#allocation2 + $0x150] sm:$0x8]
        %v389 = vsel %vm303, 0, %v388
        %390 = vst [vmem:[#allocation2 + $0x150] sm:$0x8] %v389
        %v391 = vld [vmem:[#allocation2 + $0x15c] sm:$0x8]
        %v392 = vsel %vm303, 0, %v391
        %393 = vst [vmem:[#allocation2 + $0x15c] sm:$0x8] %v392
        %v394 = vld [vmem:[#allocation2 + $0x168] sm:$0x8]
        %v395 = vsel %vm303, 0, %v394
        %396 = vst [vmem:[#allocation2 + $0x168] sm:$0x8] %v395
        %v397 = vld [vmem:[#allocation2 + $0x174] sm:$0x8]
        %v398 = vsel %vm303, 0, %v397
        %399 = vst [vmem:[#allocation2 + $0x174] sm:$0x8] %v398
        %v400 = vld [vmem:[#allocation2 + $0x180] sm:$0x8]
        %v401 = vsel %vm303, 0, %v400
        %402 = vst [vmem:[#allocation2 + $0x180] sm:$0x8] %v401
        %v403 = vld [vmem:[#allocation2 + $0x18c] sm:$0x8]
        %v404 = vsel %vm303, 0, %v403
        %405 = vst [vmem:[#allocation2 + $0x18c] sm:$0x8] %v404
        %v406 = vld [vmem:[#allocation2 + $0x198] sm:$0x8]
        %v407 = vsel %vm303, 0, %v406
        %408 = vst [vmem:[#allocation2 + $0x198] sm:$0x8] %v407
        %v409 = vld [vmem:[#allocation2 + $0x1a4] sm:$0x8]
        %v410 = vsel %vm303, 0, %v409
        %411 = vst [vmem:[#allocation2 + $0x1a4] sm:$0x8] %v410
        %v412 = vld [vmem:[#allocation2 + $0x1b0] sm:$0x8]
        %v413 = vsel %vm303, 0, %v412
        %414 = vst [vmem:[#allocation2 + $0x1b0] sm:$0x8] %v413
        %v415 = vld [vmem:[#allocation2 + $0x1bc] sm:$0x8]
        %v416 = vsel %vm303, 0, %v415
        %417 = vst [vmem:[#allocation2 + $0x1bc] sm:$0x8] %v416
        %v418 = vld [vmem:[#allocation2 + $0x1c8] sm:$0x8]
        %v419 = vsel %vm303, 0, %v418
        %420 = vst [vmem:[#allocation2 + $0x1c8] sm:$0x8] %v419
        %v421 = vld [vmem:[#allocation2 + $0x1d4] sm:$0x8]
        %v422 = vsel %vm303, 0, %v421
        %423 = vst [vmem:[#allocation2 + $0x1d4] sm:$0x8] %v422
        %vm424 = vcmask 1040384
        %vm425 = vsmask.f32 256
        %vm426 = vmand %vm424, %vm425
        %v427 = vld [vmem:[#allocation2 + $0x8] sm:$0x1]
        %v428 = vsel %vm426, 0, %v427
        %429 = vst [vmem:[#allocation2 + $0x8] sm:$0x1] %v428
        %v430 = vld [vmem:[#allocation2 + $0x14] sm:$0x1]
        %v431 = vsel %vm426, 0, %v430
        %432 = vst [vmem:[#allocation2 + $0x14] sm:$0x1] %v431
        %v433 = vld [vmem:[#allocation2 + $0x20] sm:$0x1]
        %v434 = vsel %vm426, 0, %v433
        %435 = vst [vmem:[#allocation2 + $0x20] sm:$0x1] %v434
        %v436 = vld [vmem:[#allocation2 + $0x2c] sm:$0x1]
        %v437 = vsel %vm426, 0, %v436
        %438 = vst [vmem:[#allocation2 + $0x2c] sm:$0x1] %v437
        %v439 = vld [vmem:[#allocation2 + $0x38] sm:$0x1]
        %v440 = vsel %vm426, 0, %v439
        %441 = vst [vmem:[#allocation2 + $0x38] sm:$0x1] %v440
        %v442 = vld [vmem:[#allocation2 + $0x44] sm:$0x1]
        %v443 = vsel %vm426, 0, %v442
        %444 = vst [vmem:[#allocation2 + $0x44] sm:$0x1] %v443
        %v445 = vld [vmem:[#allocation2 + $0x50] sm:$0x1]
        %v446 = vsel %vm426, 0, %v445
        %447 = vst [vmem:[#allocation2 + $0x50] sm:$0x1] %v446
        %v448 = vld [vmem:[#allocation2 + $0x5c] sm:$0x1]
        %v449 = vsel %vm426, 0, %v448
        %450 = vst [vmem:[#allocation2 + $0x5c] sm:$0x1] %v449
        %v451 = vld [vmem:[#allocation2 + $0x68] sm:$0x1]
        %v452 = vsel %vm426, 0, %v451
        %453 = vst [vmem:[#allocation2 + $0x68] sm:$0x1] %v452
        %v454 = vld [vmem:[#allocation2 + $0x74] sm:$0x1]
        %v455 = vsel %vm426, 0, %v454
        %456 = vst [vmem:[#allocation2 + $0x74] sm:$0x1] %v455
        %v457 = vld [vmem:[#allocation2 + $0x80] sm:$0x1]
        %v458 = vsel %vm426, 0, %v457
        %459 = vst [vmem:[#allocation2 + $0x80] sm:$0x1] %v458
        %v460 = vld [vmem:[#allocation2 + $0x8c] sm:$0x1]
        %v461 = vsel %vm426, 0, %v460
        %462 = vst [vmem:[#allocation2 + $0x8c] sm:$0x1] %v461
        %v463 = vld [vmem:[#allocation2 + $0x98] sm:$0x1]
        %v464 = vsel %vm426, 0, %v463
        %465 = vst [vmem:[#allocation2 + $0x98] sm:$0x1] %v464
        %v466 = vld [vmem:[#allocation2 + $0xa4] sm:$0x1]
        %v467 = vsel %vm426, 0, %v466
        %468 = vst [vmem:[#allocation2 + $0xa4] sm:$0x1] %v467
        %v469 = vld [vmem:[#allocation2 + $0xb0] sm:$0x1]
        %v470 = vsel %vm426, 0, %v469
        %471 = vst [vmem:[#allocation2 + $0xb0] sm:$0x1] %v470
        %v472 = vld [vmem:[#allocation2 + $0xbc] sm:$0x1]
        %v473 = vsel %vm426, 0, %v472
        %474 = vst [vmem:[#allocation2 + $0xbc] sm:$0x1] %v473
        %v475 = vld [vmem:[#allocation2 + $0xc8] sm:$0x1]
        %v476 = vsel %vm426, 0, %v475
        %477 = vst [vmem:[#allocation2 + $0xc8] sm:$0x1] %v476
        %v478 = vld [vmem:[#allocation2 + $0xd4] sm:$0x1]
        %v479 = vsel %vm426, 0, %v478
        %480 = vst [vmem:[#allocation2 + $0xd4] sm:$0x1] %v479
        %v481 = vld [vmem:[#allocation2 + $0xe0] sm:$0x1]
        %v482 = vsel %vm426, 0, %v481
        %483 = vst [vmem:[#allocation2 + $0xe0] sm:$0x1] %v482
        %v484 = vld [vmem:[#allocation2 + $0xec] sm:$0x1]
        %v485 = vsel %vm426, 0, %v484
        %486 = vst [vmem:[#allocation2 + $0xec] sm:$0x1] %v485
        %v487 = vld [vmem:[#allocation2 + $0xf8] sm:$0x1]
        %v488 = vsel %vm426, 0, %v487
        %489 = vst [vmem:[#allocation2 + $0xf8] sm:$0x1] %v488
        %v490 = vld [vmem:[#allocation2 + $0x104] sm:$0x1]
        %v491 = vsel %vm426, 0, %v490
        %492 = vst [vmem:[#allocation2 + $0x104] sm:$0x1] %v491
        %v493 = vld [vmem:[#allocation2 + $0x110] sm:$0x1]
        %v494 = vsel %vm426, 0, %v493
        %495 = vst [vmem:[#allocation2 + $0x110] sm:$0x1] %v494
        %v496 = vld [vmem:[#allocation2 + $0x11c] sm:$0x1]
        %v497 = vsel %vm426, 0, %v496
        %498 = vst [vmem:[#allocation2 + $0x11c] sm:$0x1] %v497
        %v499 = vld [vmem:[#allocation2 + $0x128] sm:$0x1]
        %v500 = vsel %vm426, 0, %v499
        %501 = vst [vmem:[#allocation2 + $0x128] sm:$0x1] %v500
        %v502 = vld [vmem:[#allocation2 + $0x134] sm:$0x1]
        %v503 = vsel %vm426, 0, %v502
        %504 = vst [vmem:[#allocation2 + $0x134] sm:$0x1] %v503
        %v505 = vld [vmem:[#allocation2 + $0x140] sm:$0x1]
        %v506 = vsel %vm426, 0, %v505
        %507 = vst [vmem:[#allocation2 + $0x140] sm:$0x1] %v506
        %v508 = vld [vmem:[#allocation2 + $0x14c] sm:$0x1]
        %v509 = vsel %vm426, 0, %v508
        %510 = vst [vmem:[#allocation2 + $0x14c] sm:$0x1] %v509
        %v511 = vld [vmem:[#allocation2 + $0x158] sm:$0x1]
        %v512 = vsel %vm426, 0, %v511
        %513 = vst [vmem:[#allocation2 + $0x158] sm:$0x1] %v512
        %v514 = vld [vmem:[#allocation2 + $0x164] sm:$0x1]
        %v515 = vsel %vm426, 0, %v514
        %516 = vst [vmem:[#allocation2 + $0x164] sm:$0x1] %v515
        %v517 = vld [vmem:[#allocation2 + $0x170] sm:$0x1]
        %v518 = vsel %vm426, 0, %v517
        %519 = vst [vmem:[#allocation2 + $0x170] sm:$0x1] %v518
        %v520 = vld [vmem:[#allocation2 + $0x17c] sm:$0x1]
        %v521 = vsel %vm426, 0, %v520
        %522 = vst [vmem:[#allocation2 + $0x17c] sm:$0x1] %v521
        %v523 = vld [vmem:[#allocation2 + $0x188] sm:$0x1]
        %v524 = vsel %vm426, 0, %v523
        %525 = vst [vmem:[#allocation2 + $0x188] sm:$0x1] %v524
        %v526 = vld [vmem:[#allocation2 + $0x194] sm:$0x1]
        %v527 = vsel %vm426, 0, %v526
        %528 = vst [vmem:[#allocation2 + $0x194] sm:$0x1] %v527
        %v529 = vld [vmem:[#allocation2 + $0x1a0] sm:$0x1]
        %v530 = vsel %vm426, 0, %v529
        %531 = vst [vmem:[#allocation2 + $0x1a0] sm:$0x1] %v530
        %v532 = vld [vmem:[#allocation2 + $0x1ac] sm:$0x1]
        %v533 = vsel %vm426, 0, %v532
        %534 = vst [vmem:[#allocation2 + $0x1ac] sm:$0x1] %v533
        %v535 = vld [vmem:[#allocation2 + $0x1b8] sm:$0x1]
        %v536 = vsel %vm426, 0, %v535
        %537 = vst [vmem:[#allocation2 + $0x1b8] sm:$0x1] %v536
        %v538 = vld [vmem:[#allocation2 + $0x1c4] sm:$0x1]
        %v539 = vsel %vm426, 0, %v538
        %540 = vst [vmem:[#allocation2 + $0x1c4] sm:$0x1] %v539
        %v541 = vld [vmem:[#allocation2 + $0x1d0] sm:$0x1]
        %v542 = vsel %vm426, 0, %v541
        %543 = vst [vmem:[#allocation2 + $0x1d0] sm:$0x1] %v542
        %v544 = vld [vmem:[#allocation2 + $0x1dc] sm:$0x1]
        %v545 = vsel %vm426, 0, %v544
        %546 = vst [vmem:[#allocation2 + $0x1dc] sm:$0x1] %v545
        %v547 = vld [vmem:[%s238] sm:$0xff]
        %v548 = vld [vmem:[%s238 + $0x8] sm:$0xff]
        %v549 = vld [vmem:[%s238 + $0x10] sm:$0xff]
        %v550 = vld [vmem:[%s238 + $0x18] sm:$0xff]
        %v551 = vld [vmem:[%s238 + $0x20] sm:$0xff]
        %v552 = vld [vmem:[%s238 + $0x28] sm:$0xff]
        %v553 = vld [vmem:[%s238 + $0x30] sm:$0xff]
        %v554 = vld [vmem:[%s238 + $0x38] sm:$0xff]
        %v555 = vld [vmem:[%s238 + $0x40] sm:$0xff]
        %v556 = vld [vmem:[%s238 + $0x48] sm:$0xff]
        %v557 = vld [vmem:[%s238 + $0x50] sm:$0xff]
        %v558 = vld [vmem:[%s238 + $0x58] sm:$0xff]
        %v559 = vld [vmem:[%s238 + $0x60] sm:$0xff]
        %v560 = vld [vmem:[%s238 + $0x68] sm:$0xff]
        %v561 = vld [vmem:[%s238 + $0x70] sm:$0xff]
        %v562 = vld [vmem:[%s238 + $0x78] sm:$0xff]
        %v563 = vld [vmem:[%s238 + $0x80] sm:$0xff]
        %v564 = vld [vmem:[%s238 + $0x88] sm:$0xff]
        %v565 = vld [vmem:[%s238 + $0x90] sm:$0xff]
        %v566 = vld [vmem:[%s238 + $0x98] sm:$0xff]
        %v567 = vld [vmem:[%s238 + $0xa0] sm:$0xff]
        %v568 = vld [vmem:[%s238 + $0xa8] sm:$0xff]
        %v569 = vld [vmem:[%s238 + $0xb0] sm:$0xff]
        %v570 = vld [vmem:[%s238 + $0xb8] sm:$0xff]
        %v571 = vld [vmem:[%s238 + $0xc0] sm:$0xff]
        %v572 = vld [vmem:[%s238 + $0xc8] sm:$0xff]
        %v573 = vld [vmem:[%s238 + $0xd0] sm:$0xff]
        %v574 = vld [vmem:[%s238 + $0xd8] sm:$0xff]
        %v575 = vld [vmem:[%s238 + $0xe0] sm:$0xff]
        %v576 = vld [vmem:[%s238 + $0xe8] sm:$0xff]
        %v577 = vld [vmem:[%s238 + $0xf0] sm:$0xff]
        %v578 = vld [vmem:[%s238 + $0xf8] sm:$0xff]
        %v579 = vpack.c.bf16 %v547, %v547
        %v580 = vpack.c.bf16 %v548, %v548
        %v581 = vpack.c.bf16 %v549, %v549
        %v582 = vpack.c.bf16 %v550, %v550
        %v583 = vpack.c.bf16 %v551, %v551
        %v584 = vpack.c.bf16 %v552, %v552
        %v585 = vpack.c.bf16 %v553, %v553
        %v586 = vpack.c.bf16 %v554, %v554
        %v587 = vpack.c.bf16 %v555, %v555
        %v588 = vpack.c.bf16 %v556, %v556
        %v589 = vpack.c.bf16 %v557, %v557
        %v590 = vpack.c.bf16 %v558, %v558
        %v591 = vpack.c.bf16 %v559, %v559
        %v592 = vpack.c.bf16 %v560, %v560
        %v593 = vpack.c.bf16 %v561, %v561
        %v594 = vpack.c.bf16 %v562, %v562
        %v595 = vpack.c.bf16 %v563, %v563
        %v596 = vpack.c.bf16 %v564, %v564
        %v597 = vpack.c.bf16 %v565, %v565
        %v598 = vpack.c.bf16 %v566, %v566
        %v599 = vpack.c.bf16 %v567, %v567
        %v600 = vpack.c.bf16 %v568, %v568
        %v601 = vpack.c.bf16 %v569, %v569
        %v602 = vpack.c.bf16 %v570, %v570
        %v603 = vpack.c.bf16 %v571, %v571
        %v604 = vpack.c.bf16 %v572, %v572
        %v605 = vpack.c.bf16 %v573, %v573
        %v606 = vpack.c.bf16 %v574, %v574
        %v607 = vpack.c.bf16 %v575, %v575
        %v608 = vpack.c.bf16 %v576, %v576
        %v609 = vpack.c.bf16 %v577, %v577
        %v610 = vpack.c.bf16 %v578, %v578
        %s611 = scalar_lea.vmem [#allocation2], 12
        %612 = vst [vmem:[%s611 + $0x4] sm:$0xf] %v579
        %613 = vst [vmem:[%s611 + $0x10] sm:$0xf] %v580
        %614 = vst [vmem:[%s611 + $0x1c] sm:$0xf] %v581
        %615 = vst [vmem:[%s611 + $0x28] sm:$0xf] %v582
        %616 = vst [vmem:[%s611 + $0x34] sm:$0xf] %v583
        %617 = vst [vmem:[%s611 + $0x40] sm:$0xf] %v584
        %618 = vst [vmem:[%s611 + $0x4c] sm:$0xf] %v585
        %619 = vst [vmem:[%s611 + $0x58] sm:$0xf] %v586
        %620 = vst [vmem:[%s611 + $0x7c] sm:$0xf] %v587
        %621 = vst [vmem:[%s611 + $0x88] sm:$0xf] %v588
        %622 = vst [vmem:[%s611 + $0x94] sm:$0xf] %v589
        %623 = vst [vmem:[%s611 + $0xa0] sm:$0xf] %v590
        %624 = vst [vmem:[%s611 + $0xac] sm:$0xf] %v591
        %625 = vst [vmem:[%s611 + $0xb8] sm:$0xf] %v592
        %626 = vst [vmem:[%s611 + $0xc4] sm:$0xf] %v593
        %627 = vst [vmem:[%s611 + $0xd0] sm:$0xf] %v594
        %628 = vst [vmem:[%s611 + $0xf4] sm:$0xf] %v595
        %629 = vst [vmem:[%s611 + $0x100] sm:$0xf] %v596
        %630 = vst [vmem:[%s611 + $0x10c] sm:$0xf] %v597
        %631 = vst [vmem:[%s611 + $0x118] sm:$0xf] %v598
        %632 = vst [vmem:[%s611 + $0x124] sm:$0xf] %v599
        %633 = vst [vmem:[%s611 + $0x130] sm:$0xf] %v600
        %634 = vst [vmem:[%s611 + $0x13c] sm:$0xf] %v601
        %635 = vst [vmem:[%s611 + $0x148] sm:$0xf] %v602
        %636 = vst [vmem:[%s611 + $0x16c] sm:$0xf] %v603
        %637 = vst [vmem:[%s611 + $0x178] sm:$0xf] %v604
        %638 = vst [vmem:[%s611 + $0x184] sm:$0xf] %v605
        %639 = vst [vmem:[%s611 + $0x190] sm:$0xf] %v606
        %640 = vst [vmem:[%s611 + $0x19c] sm:$0xf] %v607
        %641 = vst [vmem:[%s611 + $0x1a8] sm:$0xf] %v608
        %642 = vst [vmem:[%s611 + $0x1b4] sm:$0xf] %v609
        %643 = vst [vmem:[%s611 + $0x1c0] sm:$0xf] %v610
        %v644 = vld [vmem:[#allocation2] sm:$0x8]
        %v645 = vld [vmem:[#allocation2 + $0x4] sm:$0xf]
        %v646 = vld [vmem:[#allocation2 + $0xc] sm:$0x8]
        %v647 = vld [vmem:[#allocation2 + $0x10] sm:$0xf]
        %v648 = vld [vmem:[#allocation2 + $0x18] sm:$0x8]
        %v649 = vld [vmem:[#allocation2 + $0x1c] sm:$0xf]
        %v650 = vld [vmem:[#allocation2 + $0x24] sm:$0x8]
        %v651 = vld [vmem:[#allocation2 + $0x28] sm:$0xf]
        %v652 = vld [vmem:[#allocation2 + $0x30] sm:$0x8]
        %v653 = vld [vmem:[#allocation2 + $0x34] sm:$0xf]
        %v654 = vld [vmem:[#allocation2 + $0x3c] sm:$0x8]
        %v655 = vld [vmem:[#allocation2 + $0x40] sm:$0xf]
        %v656 = vld [vmem:[#allocation2 + $0x48] sm:$0x8]
        %v657 = vld [vmem:[#allocation2 + $0x4c] sm:$0xf]
        %v658 = vld [vmem:[#allocation2 + $0x54] sm:$0x8]
        %v659 = vld [vmem:[#allocation2 + $0x58] sm:$0xf]
        %v660 = vld [vmem:[#allocation2 + $0x78] sm:$0x8]
        %v661 = vld [vmem:[#allocation2 + $0x7c] sm:$0xf]
        %v662 = vld [vmem:[#allocation2 + $0x84] sm:$0x8]
        %v663 = vld [vmem:[#allocation2 + $0x88] sm:$0xf]
        %v664 = vld [vmem:[#allocation2 + $0x90] sm:$0x8]
        %v665 = vld [vmem:[#allocation2 + $0x94] sm:$0xf]
        %v666 = vld [vmem:[#allocation2 + $0x9c] sm:$0x8]
        %v667 = vld [vmem:[#allocation2 + $0xa0] sm:$0xf]
        %v668 = vld [vmem:[#allocation2 + $0xa8] sm:$0x8]
        %v669 = vld [vmem:[#allocation2 + $0xac] sm:$0xf]
        %v670 = vld [vmem:[#allocation2 + $0xb4] sm:$0x8]
        %v671 = vld [vmem:[#allocation2 + $0xb8] sm:$0xf]
        %v672 = vld [vmem:[#allocation2 + $0xc0] sm:$0x8]
        %v673 = vld [vmem:[#allocation2 + $0xc4] sm:$0xf]
        %v674 = vld [vmem:[#allocation2 + $0xcc] sm:$0x8]
        %v675 = vld [vmem:[#allocation2 + $0xd0] sm:$0xf]
        %v676 = vld [vmem:[#allocation2 + $0xf0] sm:$0x8]
        %v677 = vld [vmem:[#allocation2 + $0xf4] sm:$0xf]
        %v678 = vld [vmem:[#allocation2 + $0xfc] sm:$0x8]
        %v679 = vld [vmem:[#allocation2 + $0x100] sm:$0xf]
        %v680 = vld [vmem:[#allocation2 + $0x108] sm:$0x8]
        %v681 = vld [vmem:[#allocation2 + $0x10c] sm:$0xf]
        %v682 = vld [vmem:[#allocation2 + $0x114] sm:$0x8]
        %v683 = vld [vmem:[#allocation2 + $0x118] sm:$0xf]
        %v684 = vld [vmem:[#allocation2 + $0x120] sm:$0x8]
        %v685 = vld [vmem:[#allocation2 + $0x124] sm:$0xf]
        %v686 = vld [vmem:[#allocation2 + $0x12c] sm:$0x8]
        %v687 = vld [vmem:[#allocation2 + $0x130] sm:$0xf]
        %v688 = vld [vmem:[#allocation2 + $0x138] sm:$0x8]
        %v689 = vld [vmem:[#allocation2 + $0x13c] sm:$0xf]
        %v690 = vld [vmem:[#allocation2 + $0x144] sm:$0x8]
        %v691 = vld [vmem:[#allocation2 + $0x148] sm:$0xf]
        %v692 = vld [vmem:[#allocation2 + $0x168] sm:$0x8]
        %v693 = vld [vmem:[#allocation2 + $0x16c] sm:$0xf]
        %v694 = vld [vmem:[#allocation2 + $0x174] sm:$0x8]
        %v695 = vld [vmem:[#allocation2 + $0x178] sm:$0xf]
        %v696 = vld [vmem:[#allocation2 + $0x180] sm:$0x8]
        %v697 = vld [vmem:[#allocation2 + $0x184] sm:$0xf]
        %v698 = vld [vmem:[#allocation2 + $0x18c] sm:$0x8]
        %v699 = vld [vmem:[#allocation2 + $0x190] sm:$0xf]
        %v700 = vld [vmem:[#allocation2 + $0x198] sm:$0x8]
        %v701 = vld [vmem:[#allocation2 + $0x19c] sm:$0xf]
        %v702 = vld [vmem:[#allocation2 + $0x1a4] sm:$0x8]
        %v703 = vld [vmem:[#allocation2 + $0x1a8] sm:$0xf]
        %v704 = vld [vmem:[#allocation2 + $0x1b0] sm:$0x8]
        %v705 = vld [vmem:[#allocation2 + $0x1b4] sm:$0xf]
        %v706 = vld [vmem:[#allocation2 + $0x1bc] sm:$0x8]
        %v707 = vld [vmem:[#allocation2 + $0x1c0] sm:$0xf]
        %vm708 = vsmask.f32 4368
        %vm709 = vmor %vm425, %vm708
        %v711 = vshrl.u32 %v644, 16
        %v713 = vrot.slane %v711, 7
        %v714 = vrot.slane %v713, 4
        %v716 = vshrl.u32 %v645, 16
        %v718 = vrot.slane %v716, 7
        %v719 = vshll.u32 %v645, 16
        %v721 = vor.u32 %v718, %v719
        %v722 = vsel %vm709, %v714, %v721
        %v724 = vshrl.u32 %v646, 16
        %v726 = vrot.slane %v724, 7
        %v727 = vrot.slane %v726, 4
        %v729 = vshrl.u32 %v647, 16
        %v731 = vrot.slane %v729, 7
        %v732 = vshll.u32 %v647, 16
        %v734 = vor.u32 %v731, %v732
        %v735 = vsel %vm709, %v727, %v734
        %v737 = vshrl.u32 %v648, 16
        %v739 = vrot.slane %v737, 7
        %v740 = vrot.slane %v739, 4
        %v742 = vshrl.u32 %v649, 16
        %v744 = vrot.slane %v742, 7
        %v745 = vshll.u32 %v649, 16
        %v747 = vor.u32 %v744, %v745
        %v748 = vsel %vm709, %v740, %v747
        %v750 = vshrl.u32 %v650, 16
        %v752 = vrot.slane %v750, 7
        %v753 = vrot.slane %v752, 4
        %v755 = vshrl.u32 %v651, 16
        %v757 = vrot.slane %v755, 7
        %v758 = vshll.u32 %v651, 16
        %v760 = vor.u32 %v757, %v758
        %v761 = vsel %vm709, %v753, %v760
        %v763 = vshrl.u32 %v652, 16
        %v765 = vrot.slane %v763, 7
        %v766 = vrot.slane %v765, 4
        %v768 = vshrl.u32 %v653, 16
        %v770 = vrot.slane %v768, 7
        %v771 = vshll.u32 %v653, 16
        %v773 = vor.u32 %v770, %v771
        %v774 = vsel %vm709, %v766, %v773
        %v776 = vshrl.u32 %v654, 16
        %v778 = vrot.slane %v776, 7
        %v779 = vrot.slane %v778, 4
        %v781 = vshrl.u32 %v655, 16
        %v783 = vrot.slane %v781, 7
        %v784 = vshll.u32 %v655, 16
        %v786 = vor.u32 %v783, %v784
        %v787 = vsel %vm709, %v779, %v786
        %v789 = vshrl.u32 %v656, 16
        %v791 = vrot.slane %v789, 7
        %v792 = vrot.slane %v791, 4
        %v794 = vshrl.u32 %v657, 16
        %v796 = vrot.slane %v794, 7
        %v797 = vshll.u32 %v657, 16
        %v799 = vor.u32 %v796, %v797
        %v800 = vsel %vm709, %v792, %v799
        %v802 = vshrl.u32 %v658, 16
        %v804 = vrot.slane %v802, 7
        %v805 = vrot.slane %v804, 4
        %v807 = vshrl.u32 %v659, 16
        %v809 = vrot.slane %v807, 7
        %v810 = vshll.u32 %v659, 16
        %v812 = vor.u32 %v809, %v810
        %v813 = vsel %vm709, %v805, %v812
        %v815 = vshrl.u32 %v660, 16
        %v817 = vrot.slane %v815, 7
        %v818 = vrot.slane %v817, 4
        %v820 = vshrl.u32 %v661, 16
        %v822 = vrot.slane %v820, 7
        %v823 = vshll.u32 %v661, 16
        %v825 = vor.u32 %v822, %v823
        %v826 = vsel %vm709, %v818, %v825
        %v828 = vshrl.u32 %v662, 16
        %v830 = vrot.slane %v828, 7
        %v831 = vrot.slane %v830, 4
        %v833 = vshrl.u32 %v663, 16
        %v835 = vrot.slane %v833, 7
        %v836 = vshll.u32 %v663, 16
        %v838 = vor.u32 %v835, %v836
        %v839 = vsel %vm709, %v831, %v838
        %v841 = vshrl.u32 %v664, 16
        %v843 = vrot.slane %v841, 7
        %v844 = vrot.slane %v843, 4
        %v846 = vshrl.u32 %v665, 16
        %v848 = vrot.slane %v846, 7
        %v849 = vshll.u32 %v665, 16
        %v851 = vor.u32 %v848, %v849
        %v852 = vsel %vm709, %v844, %v851
        %v854 = vshrl.u32 %v666, 16
        %v856 = vrot.slane %v854, 7
        %v857 = vrot.slane %v856, 4
        %v859 = vshrl.u32 %v667, 16
        %v861 = vrot.slane %v859, 7
        %v862 = vshll.u32 %v667, 16
        %v864 = vor.u32 %v861, %v862
        %v865 = vsel %vm709, %v857, %v864
        %v867 = vshrl.u32 %v668, 16
        %v869 = vrot.slane %v867, 7
        %v870 = vrot.slane %v869, 4
        %v872 = vshrl.u32 %v669, 16
        %v874 = vrot.slane %v872, 7
        %v875 = vshll.u32 %v669, 16
        %v877 = vor.u32 %v874, %v875
        %v878 = vsel %vm709, %v870, %v877
        %v880 = vshrl.u32 %v670, 16
        %v882 = vrot.slane %v880, 7
        %v883 = vrot.slane %v882, 4
        %v885 = vshrl.u32 %v671, 16
        %v887 = vrot.slane %v885, 7
        %v888 = vshll.u32 %v671, 16
        %v890 = vor.u32 %v887, %v888
        %v891 = vsel %vm709, %v883, %v890
        %v893 = vshrl.u32 %v672, 16
        %v895 = vrot.slane %v893, 7
        %v896 = vrot.slane %v895, 4
        %v898 = vshrl.u32 %v673, 16
        %v900 = vrot.slane %v898, 7
        %v901 = vshll.u32 %v673, 16
        %v903 = vor.u32 %v900, %v901
        %v904 = vsel %vm709, %v896, %v903
        %v906 = vshrl.u32 %v674, 16
        %v908 = vrot.slane %v906, 7
        %v909 = vrot.slane %v908, 4
        %v911 = vshrl.u32 %v675, 16
        %v913 = vrot.slane %v911, 7
        %v914 = vshll.u32 %v675, 16
        %v916 = vor.u32 %v913, %v914
        %v917 = vsel %vm709, %v909, %v916
        %v919 = vshrl.u32 %v676, 16
        %v921 = vrot.slane %v919, 7
        %v922 = vrot.slane %v921, 4
        %v924 = vshrl.u32 %v677, 16
        %v926 = vrot.slane %v924, 7
        %v927 = vshll.u32 %v677, 16
        %v929 = vor.u32 %v926, %v927
        %v930 = vsel %vm709, %v922, %v929
        %v932 = vshrl.u32 %v678, 16
        %v934 = vrot.slane %v932, 7
        %v935 = vrot.slane %v934, 4
        %v937 = vshrl.u32 %v679, 16
        %v939 = vrot.slane %v937, 7
        %v940 = vshll.u32 %v679, 16
        %v942 = vor.u32 %v939, %v940
        %v943 = vsel %vm709, %v935, %v942
        %v945 = vshrl.u32 %v680, 16
        %v947 = vrot.slane %v945, 7
        %v948 = vrot.slane %v947, 4
        %v950 = vshrl.u32 %v681, 16
        %v952 = vrot.slane %v950, 7
        %v953 = vshll.u32 %v681, 16
        %v955 = vor.u32 %v952, %v953
        %v956 = vsel %vm709, %v948, %v955
        %v958 = vshrl.u32 %v682, 16
        %v960 = vrot.slane %v958, 7
        %v961 = vrot.slane %v960, 4
        %v963 = vshrl.u32 %v683, 16
        %v965 = vrot.slane %v963, 7
        %v966 = vshll.u32 %v683, 16
        %v968 = vor.u32 %v965, %v966
        %v969 = vsel %vm709, %v961, %v968
        %v971 = vshrl.u32 %v684, 16
        %v973 = vrot.slane %v971, 7
        %v974 = vrot.slane %v973, 4
        %v976 = vshrl.u32 %v685, 16
        %v978 = vrot.slane %v976, 7
        %v979 = vshll.u32 %v685, 16
        %v981 = vor.u32 %v978, %v979
        %v982 = vsel %vm709, %v974, %v981
        %v984 = vshrl.u32 %v686, 16
        %v986 = vrot.slane %v984, 7
        %v987 = vrot.slane %v986, 4
        %v989 = vshrl.u32 %v687, 16
        %v991 = vrot.slane %v989, 7
        %v992 = vshll.u32 %v687, 16
        %v994 = vor.u32 %v991, %v992
        %v995 = vsel %vm709, %v987, %v994
        %v997 = vshrl.u32 %v688, 16
        %v999 = vrot.slane %v997, 7
        %v1000 = vrot.slane %v999, 4
        %v1002 = vshrl.u32 %v689, 16
        %v1004 = vrot.slane %v1002, 7
        %v1005 = vshll.u32 %v689, 16
        %v1007 = vor.u32 %v1004, %v1005
        %v1008 = vsel %vm709, %v1000, %v1007
        %v1010 = vshrl.u32 %v690, 16
        %v1012 = vrot.slane %v1010, 7
        %v1013 = vrot.slane %v1012, 4
        %v1015 = vshrl.u32 %v691, 16
        %v1017 = vrot.slane %v1015, 7
        %v1018 = vshll.u32 %v691, 16
        %v1020 = vor.u32 %v1017, %v1018
        %v1021 = vsel %vm709, %v1013, %v1020
        %v1023 = vshrl.u32 %v692, 16
        %v1025 = vrot.slane %v1023, 7
        %v1026 = vrot.slane %v1025, 4
        %v1028 = vshrl.u32 %v693, 16
        %v1030 = vrot.slane %v1028, 7
        %v1031 = vshll.u32 %v693, 16
        %v1033 = vor.u32 %v1030, %v1031
        %v1034 = vsel %vm709, %v1026, %v1033
        %v1036 = vshrl.u32 %v694, 16
        %v1038 = vrot.slane %v1036, 7
        %v1039 = vrot.slane %v1038, 4
        %v1041 = vshrl.u32 %v695, 16
        %v1043 = vrot.slane %v1041, 7
        %v1044 = vshll.u32 %v695, 16
        %v1046 = vor.u32 %v1043, %v1044
        %v1047 = vsel %vm709, %v1039, %v1046
        %v1049 = vshrl.u32 %v696, 16
        %v1051 = vrot.slane %v1049, 7
        %v1052 = vrot.slane %v1051, 4
        %v1054 = vshrl.u32 %v697, 16
        %v1056 = vrot.slane %v1054, 7
        %v1057 = vshll.u32 %v697, 16
        %v1059 = vor.u32 %v1056, %v1057
        %v1060 = vsel %vm709, %v1052, %v1059
        %v1062 = vshrl.u32 %v698, 16
        %v1064 = vrot.slane %v1062, 7
        %v1065 = vrot.slane %v1064, 4
        %v1067 = vshrl.u32 %v699, 16
        %v1069 = vrot.slane %v1067, 7
        %v1070 = vshll.u32 %v699, 16
        %v1072 = vor.u32 %v1069, %v1070
        %v1073 = vsel %vm709, %v1065, %v1072
        %v1075 = vshrl.u32 %v700, 16
        %v1077 = vrot.slane %v1075, 7
        %v1078 = vrot.slane %v1077, 4
        %v1080 = vshrl.u32 %v701, 16
        %v1082 = vrot.slane %v1080, 7
        %v1083 = vshll.u32 %v701, 16
        %v1085 = vor.u32 %v1082, %v1083
        %v1086 = vsel %vm709, %v1078, %v1085
        %v1088 = vshrl.u32 %v702, 16
        %v1090 = vrot.slane %v1088, 7
        %v1091 = vrot.slane %v1090, 4
        %v1093 = vshrl.u32 %v703, 16
        %v1095 = vrot.slane %v1093, 7
        %v1096 = vshll.u32 %v703, 16
        %v1098 = vor.u32 %v1095, %v1096
        %v1099 = vsel %vm709, %v1091, %v1098
        %v1101 = vshrl.u32 %v704, 16
        %v1103 = vrot.slane %v1101, 7
        %v1104 = vrot.slane %v1103, 4
        %v1106 = vshrl.u32 %v705, 16
        %v1108 = vrot.slane %v1106, 7
        %v1109 = vshll.u32 %v705, 16
        %v1111 = vor.u32 %v1108, %v1109
        %v1112 = vsel %vm709, %v1104, %v1111
        %v1114 = vshrl.u32 %v706, 16
        %v1116 = vrot.slane %v1114, 7
        %v1117 = vrot.slane %v1116, 4
        %v1119 = vshrl.u32 %v707, 16
        %v1121 = vrot.slane %v1119, 7
        %v1122 = vshll.u32 %v707, 16
        %v1124 = vor.u32 %v1121, %v1122
        %v1125 = vsel %vm709, %v1117, %v1124
        %v1126 = vld [vmem:[#allocation6] sm:$0xf]
        %v1127 = vld [vmem:[#allocation6 + $0x4] sm:$0xf]
        %v1128 = vld [vmem:[#allocation6 + $0x8] sm:$0xf]
        %v1129 = vld [vmem:[#allocation6 + $0xc] sm:$0xf]
        %v1130 = vld [vmem:[#allocation6 + $0x10] sm:$0xf]
        %v1131 = vld [vmem:[#allocation6 + $0x14] sm:$0xf]
        %v1132 = vld [vmem:[#allocation6 + $0x18] sm:$0xf]
        %v1133 = vld [vmem:[#allocation6 + $0x1c] sm:$0xf]
        %v1134 = vld [vmem:[#allocation6 + $0x20] sm:$0xf]
        %v1135 = vld [vmem:[#allocation6 + $0x24] sm:$0xf]
        %v1136 = vld [vmem:[#allocation6 + $0x28] sm:$0xf]
        %v1137 = vld [vmem:[#allocation6 + $0x2c] sm:$0xf]
        %v1138 = vld [vmem:[#allocation6 + $0x30] sm:$0xf]
        %v1139 = vld [vmem:[#allocation6 + $0x34] sm:$0xf]
        %v1140 = vld [vmem:[#allocation6 + $0x38] sm:$0xf]
        %v1141 = vld [vmem:[#allocation6 + $0x3c] sm:$0xf]
        %v1142 = vld [vmem:[#allocation6 + $0x40] sm:$0xf]
        %v1143 = vld [vmem:[#allocation6 + $0x44] sm:$0xf]
        %v1144 = vld [vmem:[#allocation6 + $0x48] sm:$0xf]
        %v1145 = vld [vmem:[#allocation6 + $0x4c] sm:$0xf]
        %v1146 = vld [vmem:[#allocation6 + $0x50] sm:$0xf]
        %v1147 = vld [vmem:[#allocation6 + $0x54] sm:$0xf]
        %v1148 = vld [vmem:[#allocation6 + $0x58] sm:$0xf]
        %v1149 = vld [vmem:[#allocation6 + $0x5c] sm:$0xf]
        %v1150 = vld [vmem:[#allocation6 + $0x60] sm:$0xf]
        %v1151 = vld [vmem:[#allocation6 + $0x64] sm:$0xf]
        %v1152 = vld [vmem:[#allocation6 + $0x68] sm:$0xf]
        %v1153 = vld [vmem:[#allocation6 + $0x6c] sm:$0xf]
        %v1154 = vld [vmem:[#allocation6 + $0x70] sm:$0xf]
        %v1155 = vld [vmem:[#allocation6 + $0x74] sm:$0xf]
        %v1156 = vld [vmem:[#allocation6 + $0x78] sm:$0xf]
        %v1157 = vld [vmem:[#allocation6 + $0x7c] sm:$0xf]
        %v1190 = vunpack.c.l.b16 %v645
        %v1191 = vunpack.c.l.b16 %v647
        %v1192 = vunpack.c.l.b16 %v649
        %v1193 = vunpack.c.l.b16 %v651
        %v1194 = vunpack.c.l.b16 %v653
        %v1195 = vunpack.c.l.b16 %v655
        %v1196 = vunpack.c.l.b16 %v657
        %v1197 = vunpack.c.l.b16 %v659
        %v1198 = vunpack.c.l.b16 %v661
        %v1199 = vunpack.c.l.b16 %v663
        %v1200 = vunpack.c.l.b16 %v665
        %v1201 = vunpack.c.l.b16 %v667
        %v1202 = vunpack.c.l.b16 %v669
        %v1203 = vunpack.c.l.b16 %v671
        %v1204 = vunpack.c.l.b16 %v673
        %v1205 = vunpack.c.l.b16 %v675
        %v1206 = vunpack.c.l.b16 %v677
        %v1207 = vunpack.c.l.b16 %v679
        %v1208 = vunpack.c.l.b16 %v681
        %v1209 = vunpack.c.l.b16 %v683
        %v1210 = vunpack.c.l.b16 %v685
        %v1211 = vunpack.c.l.b16 %v687
        %v1212 = vunpack.c.l.b16 %v689
        %v1213 = vunpack.c.l.b16 %v691
        %v1214 = vunpack.c.l.b16 %v693
        %v1215 = vunpack.c.l.b16 %v695
        %v1216 = vunpack.c.l.b16 %v697
        %v1217 = vunpack.c.l.b16 %v699
        %v1218 = vunpack.c.l.b16 %v701
        %v1219 = vunpack.c.l.b16 %v703
        %v1220 = vunpack.c.l.b16 %v705
        %v1221 = vunpack.c.l.b16 %v707
        %v1222 = vpack.c.b16 %v1191, %v1190
        %v1223 = vpack.c.b16 %v1193, %v1192
        %v1224 = vpack.c.b16 %v1195, %v1194
        %v1225 = vpack.c.b16 %v1197, %v1196
        %v1226 = vpack.c.b16 %v1199, %v1198
        %v1227 = vpack.c.b16 %v1201, %v1200
        %v1228 = vpack.c.b16 %v1203, %v1202
        %v1229 = vpack.c.b16 %v1205, %v1204
        %v1230 = vpack.c.b16 %v1207, %v1206
        %v1231 = vpack.c.b16 %v1209, %v1208
        %v1232 = vpack.c.b16 %v1211, %v1210
        %v1233 = vpack.c.b16 %v1213, %v1212
        %v1234 = vpack.c.b16 %v1215, %v1214
        %v1235 = vpack.c.b16 %v1217, %v1216
        %v1236 = vpack.c.b16 %v1219, %v1218
        %v1237 = vpack.c.b16 %v1221, %v1220
        %v1270 = vunpack.c.l.b16 %v1142
        %v1271 = vunpack.c.l.b16 %v1143
        %v1272 = vunpack.c.l.b16 %v1144
        %v1273 = vunpack.c.l.b16 %v1145
        %v1274 = vunpack.c.l.b16 %v1146
        %v1275 = vunpack.c.l.b16 %v1147
        %v1276 = vunpack.c.l.b16 %v1148
        %v1277 = vunpack.c.l.b16 %v1149
        %v1278 = vunpack.c.l.b16 %v1150
        %v1279 = vunpack.c.l.b16 %v1151
        %v1280 = vunpack.c.l.b16 %v1152
        %v1281 = vunpack.c.l.b16 %v1153
        %v1282 = vunpack.c.l.b16 %v1154
        %v1283 = vunpack.c.l.b16 %v1155
        %v1284 = vunpack.c.l.b16 %v1156
        %v1285 = vunpack.c.l.b16 %v1157
        %v1286 = vpack.c.b16 %v1271, %v1270
        %v1287 = vpack.c.b16 %v1273, %v1272
        %v1288 = vpack.c.b16 %v1275, %v1274
        %v1289 = vpack.c.b16 %v1277, %v1276
        %v1290 = vpack.c.b16 %v1279, %v1278
        %v1291 = vpack.c.b16 %v1281, %v1280
        %v1292 = vpack.c.b16 %v1283, %v1282
        %v1293 = vpack.c.b16 %v1285, %v1284
        %1302 = vmatprep.subr.bf16.mxu0 0
        %1303 = vmatpush1.bf16.msra.mxu0 %v1293
        %1304 = vmatprep.subr.bf16.mxu0 0
        %1305 = vmatpush1.bf16.msra.mxu0 %v1292
        %1306 = vmatprep.subr.bf16.mxu0 0
        %1307 = vmatpush1.bf16.msra.mxu0 %v1291
        %1308 = vmatprep.subr.bf16.mxu0 0
        %1309 = vmatpush1.bf16.msra.mxu0 %v1290
        %1310 = vmatprep.subr.bf16.mxu0 0
        %1311 = vmatpush1.bf16.msra.mxu0 %v1289
        %1312 = vmatprep.subr.bf16.mxu0 0
        %1313 = vmatpush1.bf16.msra.mxu0 %v1288
        %1314 = vmatprep.subr.bf16.mxu0 0
        %1315 = vmatpush1.bf16.msra.mxu0 %v1287
        %1316 = vmatprep.subr.bf16.mxu0 0
        %1317 = vmatpush1.bf16.msra.mxu0 %v1286
        %1318 = vmatprep.subr.bf16.mxu0 0
        %1319 = vmatpush2.bf16.msra.mxu0 0
        %1320 = vmatprep.subr.bf16.mxu0 0
        %1321 = vmatpush2.bf16.msra.mxu0 0
        %1322 = vmatprep.subr.bf16.mxu0 0
        %1323 = vmatpush2.bf16.msra.mxu0 0
        %1324 = vmatprep.subr.bf16.mxu0 0
        %1325 = vmatpush2.bf16.msra.mxu0 0
        %1326 = vmatprep.subr.bf16.mxu0 0
        %1327 = vmatpush2.bf16.msra.mxu0 0
        %1328 = vmatprep.subr.bf16.mxu0 0
        %1329 = vmatpush2.bf16.msra.mxu0 0
        %1330 = vmatprep.subr.bf16.mxu0 0
        %1331 = vmatpush2.bf16.msra.mxu0 0
        %1332 = vmatprep.subr.bf16.mxu0 0
        %1333 = vmatpush2.bf16.msra.mxu0 0
        %1334 = vmatprep.mubr.bf16.mxu0 0
        %1335 = vmatmul.mubr.bf16.gmra.mxu0 %v1222
        %v1336 = vpop.f32.mrf.mxu0
        %v1337 = vadd.f32 0.0, %v1336
        %v1338 = vpop.f32.mrf.mxu0
        %v1339 = vpop.f32.mrf.mxu0
        %v1340 = vadd.f32 0.0, %v1339
        %v1341 = vpop.f32.mrf.mxu0
        %1342 = vmatprep.mubr.bf16.mxu0 0
        %1343 = vmatmul.mubr.bf16.gmra.mxu0 %v1223
        %v1344 = vpop.f32.mrf.mxu0
        %v1345 = vadd.f32 0.0, %v1344
        %v1346 = vpop.f32.mrf.mxu0
        %v1347 = vpop.f32.mrf.mxu0
        %v1348 = vadd.f32 0.0, %v1347
        %v1349 = vpop.f32.mrf.mxu0
        %1350 = vmatprep.mubr.bf16.mxu0 0
        %1351 = vmatmul.mubr.bf16.gmra.mxu0 %v1224
        %v1352 = vpop.f32.mrf.mxu0
        %v1353 = vadd.f32 0.0, %v1352
        %v1354 = vpop.f32.mrf.mxu0
        %v1355 = vpop.f32.mrf.mxu0
        %v1356 = vadd.f32 0.0, %v1355
        %v1357 = vpop.f32.mrf.mxu0
        %1358 = vmatprep.mubr.bf16.mxu0 0
        %1359 = vmatmul.mubr.bf16.gmra.mxu0 %v1225
        %v1360 = vpop.f32.mrf.mxu0
        %v1361 = vadd.f32 0.0, %v1360
        %v1362 = vpop.f32.mrf.mxu0
        %v1363 = vpop.f32.mrf.mxu0
        %v1364 = vadd.f32 0.0, %v1363
        %v1365 = vpop.f32.mrf.mxu0
        %1366 = vmatprep.mubr.bf16.mxu0 0
        %1367 = vmatmul.mubr.bf16.gmra.mxu0 %v1226
        %v1368 = vpop.f32.mrf.mxu0
        %v1369 = vadd.f32 0.0, %v1368
        %v1370 = vpop.f32.mrf.mxu0
        %v1371 = vpop.f32.mrf.mxu0
        %v1372 = vadd.f32 0.0, %v1371
        %v1373 = vpop.f32.mrf.mxu0
        %1374 = vmatprep.mubr.bf16.mxu0 0
        %1375 = vmatmul.mubr.bf16.gmra.mxu0 %v1227
        %v1376 = vpop.f32.mrf.mxu0
        %v1377 = vadd.f32 0.0, %v1376
        %v1378 = vpop.f32.mrf.mxu0
        %v1379 = vpop.f32.mrf.mxu0
        %v1380 = vadd.f32 0.0, %v1379
        %v1381 = vpop.f32.mrf.mxu0
        %1382 = vmatprep.mubr.bf16.mxu0 0
        %1383 = vmatmul.mubr.bf16.gmra.mxu0 %v1228
        %v1384 = vpop.f32.mrf.mxu0
        %v1385 = vadd.f32 0.0, %v1384
        %v1386 = vpop.f32.mrf.mxu0
        %v1387 = vpop.f32.mrf.mxu0
        %v1388 = vadd.f32 0.0, %v1387
        %v1389 = vpop.f32.mrf.mxu0
        %1390 = vmatprep.mubr.bf16.mxu0 0
        %1391 = vmatmul.mubr.bf16.gmra.mxu0 %v1229
        %v1392 = vpop.f32.mrf.mxu0
        %v1393 = vadd.f32 0.0, %v1392
        %v1394 = vpop.f32.mrf.mxu0
        %v1395 = vpop.f32.mrf.mxu0
        %v1396 = vadd.f32 0.0, %v1395
        %v1397 = vpop.f32.mrf.mxu0
        %1398 = vmatprep.mubr.bf16.mxu0 0
        %1399 = vmatmul.mubr.bf16.gmra.mxu0 %v1230
        %v1400 = vpop.f32.mrf.mxu0
        %v1401 = vadd.f32 0.0, %v1400
        %v1402 = vpop.f32.mrf.mxu0
        %v1403 = vpop.f32.mrf.mxu0
        %v1404 = vadd.f32 0.0, %v1403
        %v1405 = vpop.f32.mrf.mxu0
        %1406 = vmatprep.mubr.bf16.mxu0 0
        %1407 = vmatmul.mubr.bf16.gmra.mxu0 %v1231
        %v1408 = vpop.f32.mrf.mxu0
        %v1409 = vadd.f32 0.0, %v1408
        %v1410 = vpop.f32.mrf.mxu0
        %v1411 = vpop.f32.mrf.mxu0
        %v1412 = vadd.f32 0.0, %v1411
        %v1413 = vpop.f32.mrf.mxu0
        %1414 = vmatprep.mubr.bf16.mxu0 0
        %1415 = vmatmul.mubr.bf16.gmra.mxu0 %v1232
        %v1416 = vpop.f32.mrf.mxu0
        %v1417 = vadd.f32 0.0, %v1416
        %v1418 = vpop.f32.mrf.mxu0
        %v1419 = vpop.f32.mrf.mxu0
        %v1420 = vadd.f32 0.0, %v1419
        %v1421 = vpop.f32.mrf.mxu0
        %1422 = vmatprep.mubr.bf16.mxu0 0
        %1423 = vmatmul.mubr.bf16.gmra.mxu0 %v1233
        %v1424 = vpop.f32.mrf.mxu0
        %v1425 = vadd.f32 0.0, %v1424
        %v1426 = vpop.f32.mrf.mxu0
        %v1427 = vpop.f32.mrf.mxu0
        %v1428 = vadd.f32 0.0, %v1427
        %v1429 = vpop.f32.mrf.mxu0
        %1430 = vmatprep.mubr.bf16.mxu0 0
        %1431 = vmatmul.mubr.bf16.gmra.mxu0 %v1234
        %v1432 = vpop.f32.mrf.mxu0
        %v1433 = vadd.f32 0.0, %v1432
        %v1434 = vpop.f32.mrf.mxu0
        %v1435 = vpop.f32.mrf.mxu0
        %v1436 = vadd.f32 0.0, %v1435
        %v1437 = vpop.f32.mrf.mxu0
        %1438 = vmatprep.mubr.bf16.mxu0 0
        %1439 = vmatmul.mubr.bf16.gmra.mxu0 %v1235
        %v1440 = vpop.f32.mrf.mxu0
        %v1441 = vadd.f32 0.0, %v1440
        %v1442 = vpop.f32.mrf.mxu0
        %v1443 = vpop.f32.mrf.mxu0
        %v1444 = vadd.f32 0.0, %v1443
        %v1445 = vpop.f32.mrf.mxu0
        %1446 = vmatprep.mubr.bf16.mxu0 0
        %1447 = vmatmul.mubr.bf16.gmra.mxu0 %v1236
        %v1448 = vpop.f32.mrf.mxu0
        %v1449 = vadd.f32 0.0, %v1448
        %v1450 = vpop.f32.mrf.mxu0
        %v1451 = vpop.f32.mrf.mxu0
        %v1452 = vadd.f32 0.0, %v1451
        %v1453 = vpop.f32.mrf.mxu0
        %1454 = vmatprep.mubr.bf16.mxu0 0
        %1455 = vmatmul.mubr.bf16.gmra.mxu0 %v1237
        %v1456 = vpop.f32.mrf.mxu0
        %v1457 = vadd.f32 0.0, %v1456
        %v1458 = vpop.f32.mrf.mxu0
        %v1459 = vpop.f32.mrf.mxu0
        %v1460 = vadd.f32 0.0, %v1459
        %v1461 = vpop.f32.mrf.mxu0
        %1462 = vdwg.mxu0
        %v1463 = vunpack.c.l.b16 %v722
        %v1464 = vunpack.c.l.b16 %v735
        %v1465 = vunpack.c.l.b16 %v748
        %v1466 = vunpack.c.l.b16 %v761
        %v1467 = vunpack.c.l.b16 %v774
        %v1468 = vunpack.c.l.b16 %v787
        %v1469 = vunpack.c.l.b16 %v800
        %v1470 = vunpack.c.l.b16 %v813
        %v1471 = vunpack.c.l.b16 %v826
        %v1472 = vunpack.c.l.b16 %v839
        %v1473 = vunpack.c.l.b16 %v852
        %v1474 = vunpack.c.l.b16 %v865
        %v1475 = vunpack.c.l.b16 %v878
        %v1476 = vunpack.c.l.b16 %v891
        %v1477 = vunpack.c.l.b16 %v904
        %v1478 = vunpack.c.l.b16 %v917
        %v1479 = vunpack.c.l.b16 %v930
        %v1480 = vunpack.c.l.b16 %v943
        %v1481 = vunpack.c.l.b16 %v956
        %v1482 = vunpack.c.l.b16 %v969
        %v1483 = vunpack.c.l.b16 %v982
        %v1484 = vunpack.c.l.b16 %v995
        %v1485 = vunpack.c.l.b16 %v1008
        %v1486 = vunpack.c.l.b16 %v1021
        %v1487 = vunpack.c.l.b16 %v1034
        %v1488 = vunpack.c.l.b16 %v1047
        %v1489 = vunpack.c.l.b16 %v1060
        %v1490 = vunpack.c.l.b16 %v1073
        %v1491 = vunpack.c.l.b16 %v1086
        %v1492 = vunpack.c.l.b16 %v1099
        %v1493 = vunpack.c.l.b16 %v1112
        %v1494 = vunpack.c.l.b16 %v1125
        %v1495 = vpack.c.b16 %v1464, %v1463
        %v1496 = vpack.c.b16 %v1466, %v1465
        %v1497 = vpack.c.b16 %v1468, %v1467
        %v1498 = vpack.c.b16 %v1470, %v1469
        %v1499 = vpack.c.b16 %v1472, %v1471
        %v1500 = vpack.c.b16 %v1474, %v1473
        %v1501 = vpack.c.b16 %v1476, %v1475
        %v1502 = vpack.c.b16 %v1478, %v1477
        %v1503 = vpack.c.b16 %v1480, %v1479
        %v1504 = vpack.c.b16 %v1482, %v1481
        %v1505 = vpack.c.b16 %v1484, %v1483
        %v1506 = vpack.c.b16 %v1486, %v1485
        %v1507 = vpack.c.b16 %v1488, %v1487
        %v1508 = vpack.c.b16 %v1490, %v1489
        %v1509 = vpack.c.b16 %v1492, %v1491
        %v1510 = vpack.c.b16 %v1494, %v1493
        %v1543 = vunpack.c.l.b16 %v1126
        %v1544 = vunpack.c.l.b16 %v1127
        %v1545 = vunpack.c.l.b16 %v1128
        %v1546 = vunpack.c.l.b16 %v1129
        %v1547 = vunpack.c.l.b16 %v1130
        %v1548 = vunpack.c.l.b16 %v1131
        %v1549 = vunpack.c.l.b16 %v1132
        %v1550 = vunpack.c.l.b16 %v1133
        %v1551 = vunpack.c.l.b16 %v1134
        %v1552 = vunpack.c.l.b16 %v1135
        %v1553 = vunpack.c.l.b16 %v1136
        %v1554 = vunpack.c.l.b16 %v1137
        %v1555 = vunpack.c.l.b16 %v1138
        %v1556 = vunpack.c.l.b16 %v1139
        %v1557 = vunpack.c.l.b16 %v1140
        %v1558 = vunpack.c.l.b16 %v1141
        %v1559 = vpack.c.b16 %v1544, %v1543
        %v1560 = vpack.c.b16 %v1546, %v1545
        %v1561 = vpack.c.b16 %v1548, %v1547
        %v1562 = vpack.c.b16 %v1550, %v1549
        %v1563 = vpack.c.b16 %v1552, %v1551
        %v1564 = vpack.c.b16 %v1554, %v1553
        %v1565 = vpack.c.b16 %v1556, %v1555
        %v1566 = vpack.c.b16 %v1558, %v1557
        %1575 = vmatprep.subr.bf16.mxu0 0
        %1576 = vmatpush1.bf16.msra.mxu0 %v1566
        %1577 = vmatprep.subr.bf16.mxu0 0
        %1578 = vmatpush1.bf16.msra.mxu0 %v1565
        %1579 = vmatprep.subr.bf16.mxu0 0
        %1580 = vmatpush1.bf16.msra.mxu0 %v1564
        %1581 = vmatprep.subr.bf16.mxu0 0
        %1582 = vmatpush1.bf16.msra.mxu0 %v1563
        %1583 = vmatprep.subr.bf16.mxu0 0
        %1584 = vmatpush1.bf16.msra.mxu0 %v1562
        %1585 = vmatprep.subr.bf16.mxu0 0
        %1586 = vmatpush1.bf16.msra.mxu0 %v1561
        %1587 = vmatprep.subr.bf16.mxu0 0
        %1588 = vmatpush1.bf16.msra.mxu0 %v1560
        %1589 = vmatprep.subr.bf16.mxu0 0
        %1590 = vmatpush1.bf16.msra.mxu0 %v1559
        %1591 = vmatprep.subr.bf16.mxu0 0
        %1592 = vmatpush2.bf16.msra.mxu0 0
        %1593 = vmatprep.subr.bf16.mxu0 0
        %1594 = vmatpush2.bf16.msra.mxu0 0
        %1595 = vmatprep.subr.bf16.mxu0 0
        %1596 = vmatpush2.bf16.msra.mxu0 0
        %1597 = vmatprep.subr.bf16.mxu0 0
        %1598 = vmatpush2.bf16.msra.mxu0 0
        %1599 = vmatprep.subr.bf16.mxu0 0
        %1600 = vmatpush2.bf16.msra.mxu0 0
        %1601 = vmatprep.subr.bf16.mxu0 0
        %1602 = vmatpush2.bf16.msra.mxu0 0
        %1603 = vmatprep.subr.bf16.mxu0 0
        %1604 = vmatpush2.bf16.msra.mxu0 0
        %1605 = vmatprep.subr.bf16.mxu0 0
        %1606 = vmatpush2.bf16.msra.mxu0 0
        %1607 = vmatprep.mubr.bf16.mxu0 0
        %1608 = vmatmul.mubr.bf16.gmra.mxu0 %v1495
        %v1609 = vpop.f32.mrf.mxu0
        %v1610 = vadd.f32 %v1337, %v1609
        %v1611 = vpop.f32.mrf.mxu0
        %v1612 = vpop.f32.mrf.mxu0
        %v1613 = vadd.f32 %v1340, %v1612
        %v1614 = vpop.f32.mrf.mxu0
        %1615 = vmatprep.mubr.bf16.mxu0 0
        %1616 = vmatmul.mubr.bf16.gmra.mxu0 %v1496
        %v1617 = vpop.f32.mrf.mxu0
        %v1618 = vadd.f32 %v1345, %v1617
        %v1619 = vpop.f32.mrf.mxu0
        %v1620 = vpop.f32.mrf.mxu0
        %v1621 = vadd.f32 %v1348, %v1620
        %v1622 = vpop.f32.mrf.mxu0
        %1623 = vmatprep.mubr.bf16.mxu0 0
        %1624 = vmatmul.mubr.bf16.gmra.mxu0 %v1497
        %v1625 = vpop.f32.mrf.mxu0
        %v1626 = vadd.f32 %v1353, %v1625
        %v1627 = vpop.f32.mrf.mxu0
        %v1628 = vpop.f32.mrf.mxu0
        %v1629 = vadd.f32 %v1356, %v1628
        %v1630 = vpop.f32.mrf.mxu0
        %1631 = vmatprep.mubr.bf16.mxu0 0
        %1632 = vmatmul.mubr.bf16.gmra.mxu0 %v1498
        %v1633 = vpop.f32.mrf.mxu0
        %v1634 = vadd.f32 %v1361, %v1633
        %v1635 = vpop.f32.mrf.mxu0
        %v1636 = vpop.f32.mrf.mxu0
        %v1637 = vadd.f32 %v1364, %v1636
        %v1638 = vpop.f32.mrf.mxu0
        %1639 = vmatprep.mubr.bf16.mxu0 0
        %1640 = vmatmul.mubr.bf16.gmra.mxu0 %v1499
        %v1641 = vpop.f32.mrf.mxu0
        %v1642 = vadd.f32 %v1369, %v1641
        %v1643 = vpop.f32.mrf.mxu0
        %v1644 = vpop.f32.mrf.mxu0
        %v1645 = vadd.f32 %v1372, %v1644
        %v1646 = vpop.f32.mrf.mxu0
        %1647 = vmatprep.mubr.bf16.mxu0 0
        %1648 = vmatmul.mubr.bf16.gmra.mxu0 %v1500
        %v1649 = vpop.f32.mrf.mxu0
        %v1650 = vadd.f32 %v1377, %v1649
        %v1651 = vpop.f32.mrf.mxu0
        %v1652 = vpop.f32.mrf.mxu0
        %v1653 = vadd.f32 %v1380, %v1652
        %v1654 = vpop.f32.mrf.mxu0
        %1655 = vmatprep.mubr.bf16.mxu0 0
        %1656 = vmatmul.mubr.bf16.gmra.mxu0 %v1501
        %v1657 = vpop.f32.mrf.mxu0
        %v1658 = vadd.f32 %v1385, %v1657
        %v1659 = vpop.f32.mrf.mxu0
        %v1660 = vpop.f32.mrf.mxu0
        %v1661 = vadd.f32 %v1388, %v1660
        %v1662 = vpop.f32.mrf.mxu0
        %1663 = vmatprep.mubr.bf16.mxu0 0
        %1664 = vmatmul.mubr.bf16.gmra.mxu0 %v1502
        %v1665 = vpop.f32.mrf.mxu0
        %v1666 = vadd.f32 %v1393, %v1665
        %v1667 = vpop.f32.mrf.mxu0
        %v1668 = vpop.f32.mrf.mxu0
        %v1669 = vadd.f32 %v1396, %v1668
        %v1670 = vpop.f32.mrf.mxu0
        %1671 = vmatprep.mubr.bf16.mxu0 0
        %1672 = vmatmul.mubr.bf16.gmra.mxu0 %v1503
        %v1673 = vpop.f32.mrf.mxu0
        %v1674 = vadd.f32 %v1401, %v1673
        %v1675 = vpop.f32.mrf.mxu0
        %v1676 = vpop.f32.mrf.mxu0
        %v1677 = vadd.f32 %v1404, %v1676
        %v1678 = vpop.f32.mrf.mxu0
        %1679 = vmatprep.mubr.bf16.mxu0 0
        %1680 = vmatmul.mubr.bf16.gmra.mxu0 %v1504
        %v1681 = vpop.f32.mrf.mxu0
        %v1682 = vadd.f32 %v1409, %v1681
        %v1683 = vpop.f32.mrf.mxu0
        %v1684 = vpop.f32.mrf.mxu0
        %v1685 = vadd.f32 %v1412, %v1684
        %v1686 = vpop.f32.mrf.mxu0
        %1687 = vmatprep.mubr.bf16.mxu0 0
        %1688 = vmatmul.mubr.bf16.gmra.mxu0 %v1505
        %v1689 = vpop.f32.mrf.mxu0
        %v1690 = vadd.f32 %v1417, %v1689
        %v1691 = vpop.f32.mrf.mxu0
        %v1692 = vpop.f32.mrf.mxu0
        %v1693 = vadd.f32 %v1420, %v1692
        %v1694 = vpop.f32.mrf.mxu0
        %1695 = vmatprep.mubr.bf16.mxu0 0
        %1696 = vmatmul.mubr.bf16.gmra.mxu0 %v1506
        %v1697 = vpop.f32.mrf.mxu0
        %v1698 = vadd.f32 %v1425, %v1697
        %v1699 = vpop.f32.mrf.mxu0
        %v1700 = vpop.f32.mrf.mxu0
        %v1701 = vadd.f32 %v1428, %v1700
        %v1702 = vpop.f32.mrf.mxu0
        %1703 = vmatprep.mubr.bf16.mxu0 0
        %1704 = vmatmul.mubr.bf16.gmra.mxu0 %v1507
        %v1705 = vpop.f32.mrf.mxu0
        %v1706 = vadd.f32 %v1433, %v1705
        %v1707 = vpop.f32.mrf.mxu0
        %v1708 = vpop.f32.mrf.mxu0
        %v1709 = vadd.f32 %v1436, %v1708
        %v1710 = vpop.f32.mrf.mxu0
        %1711 = vmatprep.mubr.bf16.mxu0 0
        %1712 = vmatmul.mubr.bf16.gmra.mxu0 %v1508
        %v1713 = vpop.f32.mrf.mxu0
        %v1714 = vadd.f32 %v1441, %v1713
        %v1715 = vpop.f32.mrf.mxu0
        %v1716 = vpop.f32.mrf.mxu0
        %v1717 = vadd.f32 %v1444, %v1716
        %v1718 = vpop.f32.mrf.mxu0
        %1719 = vmatprep.mubr.bf16.mxu0 0
        %1720 = vmatmul.mubr.bf16.gmra.mxu0 %v1509
        %v1721 = vpop.f32.mrf.mxu0
        %v1722 = vadd.f32 %v1449, %v1721
        %v1723 = vpop.f32.mrf.mxu0
        %v1724 = vpop.f32.mrf.mxu0
        %v1725 = vadd.f32 %v1452, %v1724
        %v1726 = vpop.f32.mrf.mxu0
        %1727 = vmatprep.mubr.bf16.mxu0 0
        %1728 = vmatmul.mubr.bf16.gmra.mxu0 %v1510
        %v1729 = vpop.f32.mrf.mxu0
        %v1730 = vadd.f32 %v1457, %v1729
        %v1731 = vpop.f32.mrf.mxu0
        %v1732 = vpop.f32.mrf.mxu0
        %v1733 = vadd.f32 %v1460, %v1732
        %v1734 = vpop.f32.mrf.mxu0
        %1735 = vdwg.mxu0
        %v1736 = vld [vmem:[#allocation2 + $0x4] sm:$0xf]
        %v1737 = vld [vmem:[#allocation2 + $0x8] sm:$0x1]
        %v1738 = vld [vmem:[#allocation2 + $0x10] sm:$0xf]
        %v1739 = vld [vmem:[#allocation2 + $0x14] sm:$0x1]
        %v1740 = vld [vmem:[#allocation2 + $0x1c] sm:$0xf]
        %v1741 = vld [vmem:[#allocation2 + $0x20] sm:$0x1]
        %v1742 = vld [vmem:[#allocation2 + $0x28] sm:$0xf]
        %v1743 = vld [vmem:[#allocation2 + $0x2c] sm:$0x1]
        %v1744 = vld [vmem:[#allocation2 + $0x34] sm:$0xf]
        %v1745 = vld [vmem:[#allocation2 + $0x38] sm:$0x1]
        %v1746 = vld [vmem:[#allocation2 + $0x40] sm:$0xf]
        %v1747 = vld [vmem:[#allocation2 + $0x44] sm:$0x1]
        %v1748 = vld [vmem:[#allocation2 + $0x4c] sm:$0xf]
        %v1749 = vld [vmem:[#allocation2 + $0x50] sm:$0x1]
        %v1750 = vld [vmem:[#allocation2 + $0x58] sm:$0xf]
        %v1751 = vld [vmem:[#allocation2 + $0x5c] sm:$0x1]
        %v1752 = vld [vmem:[#allocation2 + $0x7c] sm:$0xf]
        %v1753 = vld [vmem:[#allocation2 + $0x80] sm:$0x1]
        %v1754 = vld [vmem:[#allocation2 + $0x88] sm:$0xf]
        %v1755 = vld [vmem:[#allocation2 + $0x8c] sm:$0x1]
        %v1756 = vld [vmem:[#allocation2 + $0x94] sm:$0xf]
        %v1757 = vld [vmem:[#allocation2 + $0x98] sm:$0x1]
        %v1758 = vld [vmem:[#allocation2 + $0xa0] sm:$0xf]
        %v1759 = vld [vmem:[#allocation2 + $0xa4] sm:$0x1]
        %v1760 = vld [vmem:[#allocation2 + $0xac] sm:$0xf]
        %v1761 = vld [vmem:[#allocation2 + $0xb0] sm:$0x1]
        %v1762 = vld [vmem:[#allocation2 + $0xb8] sm:$0xf]
        %v1763 = vld [vmem:[#allocation2 + $0xbc] sm:$0x1]
        %v1764 = vld [vmem:[#allocation2 + $0xc4] sm:$0xf]
        %v1765 = vld [vmem:[#allocation2 + $0xc8] sm:$0x1]
        %v1766 = vld [vmem:[#allocation2 + $0xd0] sm:$0xf]
        %v1767 = vld [vmem:[#allocation2 + $0xd4] sm:$0x1]
        %v1768 = vld [vmem:[#allocation2 + $0xf4] sm:$0xf]
        %v1769 = vld [vmem:[#allocation2 + $0xf8] sm:$0x1]
        %v1770 = vld [vmem:[#allocation2 + $0x100] sm:$0xf]
        %v1771 = vld [vmem:[#allocation2 + $0x104] sm:$0x1]
        %v1772 = vld [vmem:[#allocation2 + $0x10c] sm:$0xf]
        %v1773 = vld [vmem:[#allocation2 + $0x110] sm:$0x1]
        %v1774 = vld [vmem:[#allocation2 + $0x118] sm:$0xf]
        %v1775 = vld [vmem:[#allocation2 + $0x11c] sm:$0x1]
        %v1776 = vld [vmem:[#allocation2 + $0x124] sm:$0xf]
        %v1777 = vld [vmem:[#allocation2 + $0x128] sm:$0x1]
        %v1778 = vld [vmem:[#allocation2 + $0x130] sm:$0xf]
        %v1779 = vld [vmem:[#allocation2 + $0x134] sm:$0x1]
        %v1780 = vld [vmem:[#allocation2 + $0x13c] sm:$0xf]
        %v1781 = vld [vmem:[#allocation2 + $0x140] sm:$0x1]
        %v1782 = vld [vmem:[#allocation2 + $0x148] sm:$0xf]
        %v1783 = vld [vmem:[#allocation2 + $0x14c] sm:$0x1]
        %v1784 = vld [vmem:[#allocation2 + $0x16c] sm:$0xf]
        %v1785 = vld [vmem:[#allocation2 + $0x170] sm:$0x1]
        %v1786 = vld [vmem:[#allocation2 + $0x178] sm:$0xf]
        %v1787 = vld [vmem:[#allocation2 + $0x17c] sm:$0x1]
        %v1788 = vld [vmem:[#allocation2 + $0x184] sm:$0xf]
        %v1789 = vld [vmem:[#allocation2 + $0x188] sm:$0x1]
        %v1790 = vld [vmem:[#allocation2 + $0x190] sm:$0xf]
        %v1791 = vld [vmem:[#allocation2 + $0x194] sm:$0x1]
        %v1792 = vld [vmem:[#allocation2 + $0x19c] sm:$0xf]
        %v1793 = vld [vmem:[#allocation2 + $0x1a0] sm:$0x1]
        %v1794 = vld [vmem:[#allocation2 + $0x1a8] sm:$0xf]
        %v1795 = vld [vmem:[#allocation2 + $0x1ac] sm:$0x1]
        %v1796 = vld [vmem:[#allocation2 + $0x1b4] sm:$0xf]
        %v1797 = vld [vmem:[#allocation2 + $0x1b8] sm:$0x1]
        %v1798 = vld [vmem:[#allocation2 + $0x1c0] sm:$0xf]
        %v1799 = vld [vmem:[#allocation2 + $0x1c4] sm:$0x1]
        %vm1800 = vsmask.f32 3328
        %vm1801 = vsmask.f32 7440
        %vm1802 = vmor %vm1800, %vm1801
        %v1804 = vshrl.u32 %v1736, 16
        %v1806 = vrot.slane %v1804, 4
        %v1807 = vshll.u32 %v1736, 16
        %v1809 = vrot.slane %v1807, 5
        %v1810 = vor.u32 %v1806, %v1809
        %v1811 = vrot.slane %v1810, 4
        %v1813 = vshll.u32 %v1737, 16
        %v1815 = vrot.slane %v1813, 5
        %v1816 = vsel %vm1802, %v1811, %v1815
        %v1818 = vshrl.u32 %v1738, 16
        %v1820 = vrot.slane %v1818, 4
        %v1821 = vshll.u32 %v1738, 16
        %v1823 = vrot.slane %v1821, 5
        %v1824 = vor.u32 %v1820, %v1823
        %v1825 = vrot.slane %v1824, 4
        %v1827 = vshll.u32 %v1739, 16
        %v1829 = vrot.slane %v1827, 5
        %v1830 = vsel %vm1802, %v1825, %v1829
        %v1832 = vshrl.u32 %v1740, 16
        %v1834 = vrot.slane %v1832, 4
        %v1835 = vshll.u32 %v1740, 16
        %v1837 = vrot.slane %v1835, 5
        %v1838 = vor.u32 %v1834, %v1837
        %v1839 = vrot.slane %v1838, 4
        %v1841 = vshll.u32 %v1741, 16
        %v1843 = vrot.slane %v1841, 5
        %v1844 = vsel %vm1802, %v1839, %v1843
        %v1846 = vshrl.u32 %v1742, 16
        %v1848 = vrot.slane %v1846, 4
        %v1849 = vshll.u32 %v1742, 16
        %v1851 = vrot.slane %v1849, 5
        %v1852 = vor.u32 %v1848, %v1851
        %v1853 = vrot.slane %v1852, 4
        %v1855 = vshll.u32 %v1743, 16
        %v1857 = vrot.slane %v1855, 5
        %v1858 = vsel %vm1802, %v1853, %v1857
        %v1860 = vshrl.u32 %v1744, 16
        %v1862 = vrot.slane %v1860, 4
        %v1863 = vshll.u32 %v1744, 16
        %v1865 = vrot.slane %v1863, 5
        %v1866 = vor.u32 %v1862, %v1865
        %v1867 = vrot.slane %v1866, 4
        %v1869 = vshll.u32 %v1745, 16
        %v1871 = vrot.slane %v1869, 5
        %v1872 = vsel %vm1802, %v1867, %v1871
        %v1874 = vshrl.u32 %v1746, 16
        %v1876 = vrot.slane %v1874, 4
        %v1877 = vshll.u32 %v1746, 16
        %v1879 = vrot.slane %v1877, 5
        %v1880 = vor.u32 %v1876, %v1879
        %v1881 = vrot.slane %v1880, 4
        %v1883 = vshll.u32 %v1747, 16
        %v1885 = vrot.slane %v1883, 5
        %v1886 = vsel %vm1802, %v1881, %v1885
        %v1888 = vshrl.u32 %v1748, 16
        %v1890 = vrot.slane %v1888, 4
        %v1891 = vshll.u32 %v1748, 16
        %v1893 = vrot.slane %v1891, 5
        %v1894 = vor.u32 %v1890, %v1893
        %v1895 = vrot.slane %v1894, 4
        %v1897 = vshll.u32 %v1749, 16
        %v1899 = vrot.slane %v1897, 5
        %v1900 = vsel %vm1802, %v1895, %v1899
        %v1902 = vshrl.u32 %v1750, 16
        %v1904 = vrot.slane %v1902, 4
        %v1905 = vshll.u32 %v1750, 16
        %v1907 = vrot.slane %v1905, 5
        %v1908 = vor.u32 %v1904, %v1907
        %v1909 = vrot.slane %v1908, 4
        %v1911 = vshll.u32 %v1751, 16
        %v1913 = vrot.slane %v1911, 5
        %v1914 = vsel %vm1802, %v1909, %v1913
        %v1916 = vshrl.u32 %v1752, 16
        %v1918 = vrot.slane %v1916, 4
        %v1919 = vshll.u32 %v1752, 16
        %v1921 = vrot.slane %v1919, 5
        %v1922 = vor.u32 %v1918, %v1921
        %v1923 = vrot.slane %v1922, 4
        %v1925 = vshll.u32 %v1753, 16
        %v1927 = vrot.slane %v1925, 5
        %v1928 = vsel %vm1802, %v1923, %v1927
        %v1930 = vshrl.u32 %v1754, 16
        %v1932 = vrot.slane %v1930, 4
        %v1933 = vshll.u32 %v1754, 16
        %v1935 = vrot.slane %v1933, 5
        %v1936 = vor.u32 %v1932, %v1935
        %v1937 = vrot.slane %v1936, 4
        %v1939 = vshll.u32 %v1755, 16
        %v1941 = vrot.slane %v1939, 5
        %v1942 = vsel %vm1802, %v1937, %v1941
        %v1944 = vshrl.u32 %v1756, 16
        %v1946 = vrot.slane %v1944, 4
        %v1947 = vshll.u32 %v1756, 16
        %v1949 = vrot.slane %v1947, 5
        %v1950 = vor.u32 %v1946, %v1949
        %v1951 = vrot.slane %v1950, 4
        %v1953 = vshll.u32 %v1757, 16
        %v1955 = vrot.slane %v1953, 5
        %v1956 = vsel %vm1802, %v1951, %v1955
        %v1958 = vshrl.u32 %v1758, 16
        %v1960 = vrot.slane %v1958, 4
        %v1961 = vshll.u32 %v1758, 16
        %v1963 = vrot.slane %v1961, 5
        %v1964 = vor.u32 %v1960, %v1963
        %v1965 = vrot.slane %v1964, 4
        %v1967 = vshll.u32 %v1759, 16
        %v1969 = vrot.slane %v1967, 5
        %v1970 = vsel %vm1802, %v1965, %v1969
        %v1972 = vshrl.u32 %v1760, 16
        %v1974 = vrot.slane %v1972, 4
        %v1975 = vshll.u32 %v1760, 16
        %v1977 = vrot.slane %v1975, 5
        %v1978 = vor.u32 %v1974, %v1977
        %v1979 = vrot.slane %v1978, 4
        %v1981 = vshll.u32 %v1761, 16
        %v1983 = vrot.slane %v1981, 5
        %v1984 = vsel %vm1802, %v1979, %v1983
        %v1986 = vshrl.u32 %v1762, 16
        %v1988 = vrot.slane %v1986, 4
        %v1989 = vshll.u32 %v1762, 16
        %v1991 = vrot.slane %v1989, 5
        %v1992 = vor.u32 %v1988, %v1991
        %v1993 = vrot.slane %v1992, 4
        %v1995 = vshll.u32 %v1763, 16
        %v1997 = vrot.slane %v1995, 5
        %v1998 = vsel %vm1802, %v1993, %v1997
        %v2000 = vshrl.u32 %v1764, 16
        %v2002 = vrot.slane %v2000, 4
        %v2003 = vshll.u32 %v1764, 16
        %v2005 = vrot.slane %v2003, 5
        %v2006 = vor.u32 %v2002, %v2005
        %v2007 = vrot.slane %v2006, 4
        %v2009 = vshll.u32 %v1765, 16
        %v2011 = vrot.slane %v2009, 5
        %v2012 = vsel %vm1802, %v2007, %v2011
        %v2014 = vshrl.u32 %v1766, 16
        %v2016 = vrot.slane %v2014, 4
        %v2017 = vshll.u32 %v1766, 16
        %v2019 = vrot.slane %v2017, 5
        %v2020 = vor.u32 %v2016, %v2019
        %v2021 = vrot.slane %v2020, 4
        %v2023 = vshll.u32 %v1767, 16
        %v2025 = vrot.slane %v2023, 5
        %v2026 = vsel %vm1802, %v2021, %v2025
        %v2028 = vshrl.u32 %v1768, 16
        %v2030 = vrot.slane %v2028, 4
        %v2031 = vshll.u32 %v1768, 16
        %v2033 = vrot.slane %v2031, 5
        %v2034 = vor.u32 %v2030, %v2033
        %v2035 = vrot.slane %v2034, 4
        %v2037 = vshll.u32 %v1769, 16
        %v2039 = vrot.slane %v2037, 5
        %v2040 = vsel %vm1802, %v2035, %v2039
        %v2042 = vshrl.u32 %v1770, 16
        %v2044 = vrot.slane %v2042, 4
        %v2045 = vshll.u32 %v1770, 16
        %v2047 = vrot.slane %v2045, 5
        %v2048 = vor.u32 %v2044, %v2047
        %v2049 = vrot.slane %v2048, 4
        %v2051 = vshll.u32 %v1771, 16
        %v2053 = vrot.slane %v2051, 5
        %v2054 = vsel %vm1802, %v2049, %v2053
        %v2056 = vshrl.u32 %v1772, 16
        %v2058 = vrot.slane %v2056, 4
        %v2059 = vshll.u32 %v1772, 16
        %v2061 = vrot.slane %v2059, 5
        %v2062 = vor.u32 %v2058, %v2061
        %v2063 = vrot.slane %v2062, 4
        %v2065 = vshll.u32 %v1773, 16
        %v2067 = vrot.slane %v2065, 5
        %v2068 = vsel %vm1802, %v2063, %v2067
        %v2070 = vshrl.u32 %v1774, 16
        %v2072 = vrot.slane %v2070, 4
        %v2073 = vshll.u32 %v1774, 16
        %v2075 = vrot.slane %v2073, 5
        %v2076 = vor.u32 %v2072, %v2075
        %v2077 = vrot.slane %v2076, 4
        %v2079 = vshll.u32 %v1775, 16
        %v2081 = vrot.slane %v2079, 5
        %v2082 = vsel %vm1802, %v2077, %v2081
        %v2084 = vshrl.u32 %v1776, 16
        %v2086 = vrot.slane %v2084, 4
        %v2087 = vshll.u32 %v1776, 16
        %v2089 = vrot.slane %v2087, 5
        %v2090 = vor.u32 %v2086, %v2089
        %v2091 = vrot.slane %v2090, 4
        %v2093 = vshll.u32 %v1777, 16
        %v2095 = vrot.slane %v2093, 5
        %v2096 = vsel %vm1802, %v2091, %v2095
        %v2098 = vshrl.u32 %v1778, 16
        %v2100 = vrot.slane %v2098, 4
        %v2101 = vshll.u32 %v1778, 16
        %v2103 = vrot.slane %v2101, 5
        %v2104 = vor.u32 %v2100, %v2103
        %v2105 = vrot.slane %v2104, 4
        %v2107 = vshll.u32 %v1779, 16
        %v2109 = vrot.slane %v2107, 5
        %v2110 = vsel %vm1802, %v2105, %v2109
        %v2112 = vshrl.u32 %v1780, 16
        %v2114 = vrot.slane %v2112, 4
        %v2115 = vshll.u32 %v1780, 16
        %v2117 = vrot.slane %v2115, 5
        %v2118 = vor.u32 %v2114, %v2117
        %v2119 = vrot.slane %v2118, 4
        %v2121 = vshll.u32 %v1781, 16
        %v2123 = vrot.slane %v2121, 5
        %v2124 = vsel %vm1802, %v2119, %v2123
        %v2126 = vshrl.u32 %v1782, 16
        %v2128 = vrot.slane %v2126, 4
        %v2129 = vshll.u32 %v1782, 16
        %v2131 = vrot.slane %v2129, 5
        %v2132 = vor.u32 %v2128, %v2131
        %v2133 = vrot.slane %v2132, 4
        %v2135 = vshll.u32 %v1783, 16
        %v2137 = vrot.slane %v2135, 5
        %v2138 = vsel %vm1802, %v2133, %v2137
        %v2140 = vshrl.u32 %v1784, 16
        %v2142 = vrot.slane %v2140, 4
        %v2143 = vshll.u32 %v1784, 16
        %v2145 = vrot.slane %v2143, 5
        %v2146 = vor.u32 %v2142, %v2145
        %v2147 = vrot.slane %v2146, 4
        %v2149 = vshll.u32 %v1785, 16
        %v2151 = vrot.slane %v2149, 5
        %v2152 = vsel %vm1802, %v2147, %v2151
        %v2154 = vshrl.u32 %v1786, 16
        %v2156 = vrot.slane %v2154, 4
        %v2157 = vshll.u32 %v1786, 16
        %v2159 = vrot.slane %v2157, 5
        %v2160 = vor.u32 %v2156, %v2159
        %v2161 = vrot.slane %v2160, 4
        %v2163 = vshll.u32 %v1787, 16
        %v2165 = vrot.slane %v2163, 5
        %v2166 = vsel %vm1802, %v2161, %v2165
        %v2168 = vshrl.u32 %v1788, 16
        %v2170 = vrot.slane %v2168, 4
        %v2171 = vshll.u32 %v1788, 16
        %v2173 = vrot.slane %v2171, 5
        %v2174 = vor.u32 %v2170, %v2173
        %v2175 = vrot.slane %v2174, 4
        %v2177 = vshll.u32 %v1789, 16
        %v2179 = vrot.slane %v2177, 5
        %v2180 = vsel %vm1802, %v2175, %v2179
        %v2182 = vshrl.u32 %v1790, 16
        %v2184 = vrot.slane %v2182, 4
        %v2185 = vshll.u32 %v1790, 16
        %v2187 = vrot.slane %v2185, 5
        %v2188 = vor.u32 %v2184, %v2187
        %v2189 = vrot.slane %v2188, 4
        %v2191 = vshll.u32 %v1791, 16
        %v2193 = vrot.slane %v2191, 5
        %v2194 = vsel %vm1802, %v2189, %v2193
        %v2196 = vshrl.u32 %v1792, 16
        %v2198 = vrot.slane %v2196, 4
        %v2199 = vshll.u32 %v1792, 16
        %v2201 = vrot.slane %v2199, 5
        %v2202 = vor.u32 %v2198, %v2201
        %v2203 = vrot.slane %v2202, 4
        %v2205 = vshll.u32 %v1793, 16
        %v2207 = vrot.slane %v2205, 5
        %v2208 = vsel %vm1802, %v2203, %v2207
        %v2210 = vshrl.u32 %v1794, 16
        %v2212 = vrot.slane %v2210, 4
        %v2213 = vshll.u32 %v1794, 16
        %v2215 = vrot.slane %v2213, 5
        %v2216 = vor.u32 %v2212, %v2215
        %v2217 = vrot.slane %v2216, 4
        %v2219 = vshll.u32 %v1795, 16
        %v2221 = vrot.slane %v2219, 5
        %v2222 = vsel %vm1802, %v2217, %v2221
        %v2224 = vshrl.u32 %v1796, 16
        %v2226 = vrot.slane %v2224, 4
        %v2227 = vshll.u32 %v1796, 16
        %v2229 = vrot.slane %v2227, 5
        %v2230 = vor.u32 %v2226, %v2229
        %v2231 = vrot.slane %v2230, 4
        %v2233 = vshll.u32 %v1797, 16
        %v2235 = vrot.slane %v2233, 5
        %v2236 = vsel %vm1802, %v2231, %v2235
        %v2238 = vshrl.u32 %v1798, 16
        %v2240 = vrot.slane %v2238, 4
        %v2241 = vshll.u32 %v1798, 16
        %v2243 = vrot.slane %v2241, 5
        %v2244 = vor.u32 %v2240, %v2243
        %v2245 = vrot.slane %v2244, 4
        %v2247 = vshll.u32 %v1799, 16
        %v2249 = vrot.slane %v2247, 5
        %v2250 = vsel %vm1802, %v2245, %v2249
        %v2251 = vld [vmem:[#allocation6 + $0x80] sm:$0xf]
        %v2252 = vld [vmem:[#allocation6 + $0x84] sm:$0xf]
        %v2253 = vld [vmem:[#allocation6 + $0x88] sm:$0xf]
        %v2254 = vld [vmem:[#allocation6 + $0x8c] sm:$0xf]
        %v2255 = vld [vmem:[#allocation6 + $0x90] sm:$0xf]
        %v2256 = vld [vmem:[#allocation6 + $0x94] sm:$0xf]
        %v2257 = vld [vmem:[#allocation6 + $0x98] sm:$0xf]
        %v2258 = vld [vmem:[#allocation6 + $0x9c] sm:$0xf]
        %v2259 = vld [vmem:[#allocation6 + $0xa0] sm:$0xf]
        %v2260 = vld [vmem:[#allocation6 + $0xa4] sm:$0xf]
        %v2261 = vld [vmem:[#allocation6 + $0xa8] sm:$0xf]
        %v2262 = vld [vmem:[#allocation6 + $0xac] sm:$0xf]
        %v2263 = vld [vmem:[#allocation6 + $0xb0] sm:$0xf]
        %v2264 = vld [vmem:[#allocation6 + $0xb4] sm:$0xf]
        %v2265 = vld [vmem:[#allocation6 + $0xb8] sm:$0xf]
        %v2266 = vld [vmem:[#allocation6 + $0xbc] sm:$0xf]
        %v2267 = vunpack.c.l.b16 %v1816
        %v2268 = vunpack.c.l.b16 %v1830
        %v2269 = vunpack.c.l.b16 %v1844
        %v2270 = vunpack.c.l.b16 %v1858
        %v2271 = vunpack.c.l.b16 %v1872
        %v2272 = vunpack.c.l.b16 %v1886
        %v2273 = vunpack.c.l.b16 %v1900
        %v2274 = vunpack.c.l.b16 %v1914
        %v2275 = vunpack.c.l.b16 %v1928
        %v2276 = vunpack.c.l.b16 %v1942
        %v2277 = vunpack.c.l.b16 %v1956
        %v2278 = vunpack.c.l.b16 %v1970
        %v2279 = vunpack.c.l.b16 %v1984
        %v2280 = vunpack.c.l.b16 %v1998
        %v2281 = vunpack.c.l.b16 %v2012
        %v2282 = vunpack.c.l.b16 %v2026
        %v2283 = vunpack.c.l.b16 %v2040
        %v2284 = vunpack.c.l.b16 %v2054
        %v2285 = vunpack.c.l.b16 %v2068
        %v2286 = vunpack.c.l.b16 %v2082
        %v2287 = vunpack.c.l.b16 %v2096
        %v2288 = vunpack.c.l.b16 %v2110
        %v2289 = vunpack.c.l.b16 %v2124
        %v2290 = vunpack.c.l.b16 %v2138
        %v2291 = vunpack.c.l.b16 %v2152
        %v2292 = vunpack.c.l.b16 %v2166
        %v2293 = vunpack.c.l.b16 %v2180
        %v2294 = vunpack.c.l.b16 %v2194
        %v2295 = vunpack.c.l.b16 %v2208
        %v2296 = vunpack.c.l.b16 %v2222
        %v2297 = vunpack.c.l.b16 %v2236
        %v2298 = vunpack.c.l.b16 %v2250
        %v2299 = vpack.c.b16 %v2268, %v2267
        %v2300 = vpack.c.b16 %v2270, %v2269
        %v2301 = vpack.c.b16 %v2272, %v2271
        %v2302 = vpack.c.b16 %v2274, %v2273
        %v2303 = vpack.c.b16 %v2276, %v2275
        %v2304 = vpack.c.b16 %v2278, %v2277
        %v2305 = vpack.c.b16 %v2280, %v2279
        %v2306 = vpack.c.b16 %v2282, %v2281
        %v2307 = vpack.c.b16 %v2284, %v2283
        %v2308 = vpack.c.b16 %v2286, %v2285
        %v2309 = vpack.c.b16 %v2288, %v2287
        %v2310 = vpack.c.b16 %v2290, %v2289
        %v2311 = vpack.c.b16 %v2292, %v2291
        %v2312 = vpack.c.b16 %v2294, %v2293
        %v2313 = vpack.c.b16 %v2296, %v2295
        %v2314 = vpack.c.b16 %v2298, %v2297
        %v2347 = vunpack.c.l.b16 %v2251
        %v2348 = vunpack.c.l.b16 %v2252
        %v2349 = vunpack.c.l.b16 %v2253
        %v2350 = vunpack.c.l.b16 %v2254
        %v2351 = vunpack.c.l.b16 %v2255
        %v2352 = vunpack.c.l.b16 %v2256
        %v2353 = vunpack.c.l.b16 %v2257
        %v2354 = vunpack.c.l.b16 %v2258
        %v2355 = vunpack.c.l.b16 %v2259
        %v2356 = vunpack.c.l.b16 %v2260
        %v2357 = vunpack.c.l.b16 %v2261
        %v2358 = vunpack.c.l.b16 %v2262
        %v2359 = vunpack.c.l.b16 %v2263
        %v2360 = vunpack.c.l.b16 %v2264
        %v2361 = vunpack.c.l.b16 %v2265
        %v2362 = vunpack.c.l.b16 %v2266
        %v2363 = vpack.c.b16 %v2348, %v2347
        %v2364 = vpack.c.b16 %v2350, %v2349
        %v2365 = vpack.c.b16 %v2352, %v2351
        %v2366 = vpack.c.b16 %v2354, %v2353
        %v2367 = vpack.c.b16 %v2356, %v2355
        %v2368 = vpack.c.b16 %v2358, %v2357
        %v2369 = vpack.c.b16 %v2360, %v2359
        %v2370 = vpack.c.b16 %v2362, %v2361
        %2379 = vmatprep.subr.bf16.mxu0 0
        %2380 = vmatpush1.bf16.msra.mxu0 %v2370
        %2381 = vmatprep.subr.bf16.mxu0 0
        %2382 = vmatpush1.bf16.msra.mxu0 %v2369
        %2383 = vmatprep.subr.bf16.mxu0 0
        %2384 = vmatpush1.bf16.msra.mxu0 %v2368
        %2385 = vmatprep.subr.bf16.mxu0 0
        %2386 = vmatpush1.bf16.msra.mxu0 %v2367
        %2387 = vmatprep.subr.bf16.mxu0 0
        %2388 = vmatpush1.bf16.msra.mxu0 %v2366
        %2389 = vmatprep.subr.bf16.mxu0 0
        %2390 = vmatpush1.bf16.msra.mxu0 %v2365
        %2391 = vmatprep.subr.bf16.mxu0 0
        %2392 = vmatpush1.bf16.msra.mxu0 %v2364
        %2393 = vmatprep.subr.bf16.mxu0 0
        %2394 = vmatpush1.bf16.msra.mxu0 %v2363
        %2395 = vmatprep.subr.bf16.mxu0 0
        %2396 = vmatpush2.bf16.msra.mxu0 0
        %2397 = vmatprep.subr.bf16.mxu0 0
        %2398 = vmatpush2.bf16.msra.mxu0 0
        %2399 = vmatprep.subr.bf16.mxu0 0
        %2400 = vmatpush2.bf16.msra.mxu0 0
        %2401 = vmatprep.subr.bf16.mxu0 0
        %2402 = vmatpush2.bf16.msra.mxu0 0
        %2403 = vmatprep.subr.bf16.mxu0 0
        %2404 = vmatpush2.bf16.msra.mxu0 0
        %2405 = vmatprep.subr.bf16.mxu0 0
        %2406 = vmatpush2.bf16.msra.mxu0 0
        %2407 = vmatprep.subr.bf16.mxu0 0
        %2408 = vmatpush2.bf16.msra.mxu0 0
        %2409 = vmatprep.subr.bf16.mxu0 0
        %2410 = vmatpush2.bf16.msra.mxu0 0
        %2411 = vmatprep.mubr.bf16.mxu0 0
        %2412 = vmatmul.mubr.bf16.gmra.mxu0 %v2299
        %v2413 = vpop.f32.mrf.mxu0
        %v2414 = vadd.f32 0.0, %v2413
        %v2415 = vpop.f32.mrf.mxu0
        %v2416 = vpop.f32.mrf.mxu0
        %v2417 = vadd.f32 0.0, %v2416
        %v2418 = vpop.f32.mrf.mxu0
        %2419 = vmatprep.mubr.bf16.mxu0 0
        %2420 = vmatmul.mubr.bf16.gmra.mxu0 %v2300
        %v2421 = vpop.f32.mrf.mxu0
        %v2422 = vadd.f32 0.0, %v2421
        %v2423 = vpop.f32.mrf.mxu0
        %v2424 = vpop.f32.mrf.mxu0
        %v2425 = vadd.f32 0.0, %v2424
        %v2426 = vpop.f32.mrf.mxu0
        %2427 = vmatprep.mubr.bf16.mxu0 0
        %2428 = vmatmul.mubr.bf16.gmra.mxu0 %v2301
        %v2429 = vpop.f32.mrf.mxu0
        %v2430 = vadd.f32 0.0, %v2429
        %v2431 = vpop.f32.mrf.mxu0
        %v2432 = vpop.f32.mrf.mxu0
        %v2433 = vadd.f32 0.0, %v2432
        %v2434 = vpop.f32.mrf.mxu0
        %2435 = vmatprep.mubr.bf16.mxu0 0
        %2436 = vmatmul.mubr.bf16.gmra.mxu0 %v2302
        %v2437 = vpop.f32.mrf.mxu0
        %v2438 = vadd.f32 0.0, %v2437
        %v2439 = vpop.f32.mrf.mxu0
        %v2440 = vpop.f32.mrf.mxu0
        %v2441 = vadd.f32 0.0, %v2440
        %v2442 = vpop.f32.mrf.mxu0
        %2443 = vmatprep.mubr.bf16.mxu0 0
        %2444 = vmatmul.mubr.bf16.gmra.mxu0 %v2303
        %v2445 = vpop.f32.mrf.mxu0
        %v2446 = vadd.f32 0.0, %v2445
        %v2447 = vpop.f32.mrf.mxu0
        %v2448 = vpop.f32.mrf.mxu0
        %v2449 = vadd.f32 0.0, %v2448
        %v2450 = vpop.f32.mrf.mxu0
        %2451 = vmatprep.mubr.bf16.mxu0 0
        %2452 = vmatmul.mubr.bf16.gmra.mxu0 %v2304
        %v2453 = vpop.f32.mrf.mxu0
        %v2454 = vadd.f32 0.0, %v2453
        %v2455 = vpop.f32.mrf.mxu0
        %v2456 = vpop.f32.mrf.mxu0
        %v2457 = vadd.f32 0.0, %v2456
        %v2458 = vpop.f32.mrf.mxu0
        %2459 = vmatprep.mubr.bf16.mxu0 0
        %2460 = vmatmul.mubr.bf16.gmra.mxu0 %v2305
        %v2461 = vpop.f32.mrf.mxu0
        %v2462 = vadd.f32 0.0, %v2461
        %v2463 = vpop.f32.mrf.mxu0
        %v2464 = vpop.f32.mrf.mxu0
        %v2465 = vadd.f32 0.0, %v2464
        %v2466 = vpop.f32.mrf.mxu0
        %2467 = vmatprep.mubr.bf16.mxu0 0
        %2468 = vmatmul.mubr.bf16.gmra.mxu0 %v2306
        %v2469 = vpop.f32.mrf.mxu0
        %v2470 = vadd.f32 0.0, %v2469
        %v2471 = vpop.f32.mrf.mxu0
        %v2472 = vpop.f32.mrf.mxu0
        %v2473 = vadd.f32 0.0, %v2472
        %v2474 = vpop.f32.mrf.mxu0
        %2475 = vmatprep.mubr.bf16.mxu0 0
        %2476 = vmatmul.mubr.bf16.gmra.mxu0 %v2307
        %v2477 = vpop.f32.mrf.mxu0
        %v2478 = vadd.f32 0.0, %v2477
        %v2479 = vpop.f32.mrf.mxu0
        %v2480 = vpop.f32.mrf.mxu0
        %v2481 = vadd.f32 0.0, %v2480
        %v2482 = vpop.f32.mrf.mxu0
        %2483 = vmatprep.mubr.bf16.mxu0 0
        %2484 = vmatmul.mubr.bf16.gmra.mxu0 %v2308
        %v2485 = vpop.f32.mrf.mxu0
        %v2486 = vadd.f32 0.0, %v2485
        %v2487 = vpop.f32.mrf.mxu0
        %v2488 = vpop.f32.mrf.mxu0
        %v2489 = vadd.f32 0.0, %v2488
        %v2490 = vpop.f32.mrf.mxu0
        %2491 = vmatprep.mubr.bf16.mxu0 0
        %2492 = vmatmul.mubr.bf16.gmra.mxu0 %v2309
        %v2493 = vpop.f32.mrf.mxu0
        %v2494 = vadd.f32 0.0, %v2493
        %v2495 = vpop.f32.mrf.mxu0
        %v2496 = vpop.f32.mrf.mxu0
        %v2497 = vadd.f32 0.0, %v2496
        %v2498 = vpop.f32.mrf.mxu0
        %2499 = vmatprep.mubr.bf16.mxu0 0
        %2500 = vmatmul.mubr.bf16.gmra.mxu0 %v2310
        %v2501 = vpop.f32.mrf.mxu0
        %v2502 = vadd.f32 0.0, %v2501
        %v2503 = vpop.f32.mrf.mxu0
        %v2504 = vpop.f32.mrf.mxu0
        %v2505 = vadd.f32 0.0, %v2504
        %v2506 = vpop.f32.mrf.mxu0
        %2507 = vmatprep.mubr.bf16.mxu0 0
        %2508 = vmatmul.mubr.bf16.gmra.mxu0 %v2311
        %v2509 = vpop.f32.mrf.mxu0
        %v2510 = vadd.f32 0.0, %v2509
        %v2511 = vpop.f32.mrf.mxu0
        %v2512 = vpop.f32.mrf.mxu0
        %v2513 = vadd.f32 0.0, %v2512
        %v2514 = vpop.f32.mrf.mxu0
        %2515 = vmatprep.mubr.bf16.mxu0 0
        %2516 = vmatmul.mubr.bf16.gmra.mxu0 %v2312
        %v2517 = vpop.f32.mrf.mxu0
        %v2518 = vadd.f32 0.0, %v2517
        %v2519 = vpop.f32.mrf.mxu0
        %v2520 = vpop.f32.mrf.mxu0
        %v2521 = vadd.f32 0.0, %v2520
        %v2522 = vpop.f32.mrf.mxu0
        %2523 = vmatprep.mubr.bf16.mxu0 0
        %2524 = vmatmul.mubr.bf16.gmra.mxu0 %v2313
        %v2525 = vpop.f32.mrf.mxu0
        %v2526 = vadd.f32 0.0, %v2525
        %v2527 = vpop.f32.mrf.mxu0
        %v2528 = vpop.f32.mrf.mxu0
        %v2529 = vadd.f32 0.0, %v2528
        %v2530 = vpop.f32.mrf.mxu0
        %2531 = vmatprep.mubr.bf16.mxu0 0
        %2532 = vmatmul.mubr.bf16.gmra.mxu0 %v2314
        %v2533 = vpop.f32.mrf.mxu0
        %v2534 = vadd.f32 0.0, %v2533
        %v2535 = vpop.f32.mrf.mxu0
        %v2536 = vpop.f32.mrf.mxu0
        %v2537 = vadd.f32 0.0, %v2536
        %v2538 = vpop.f32.mrf.mxu0
        %2539 = vdwg.mxu0
        %v2540 = vadd.f32 %v1610, %v2414
        %v2541 = vadd.f32 %v1613, %v2417
        %v2542 = vadd.f32 %v1618, %v2422
        %v2543 = vadd.f32 %v1621, %v2425
        %v2544 = vadd.f32 %v1626, %v2430
        %v2545 = vadd.f32 %v1629, %v2433
        %v2546 = vadd.f32 %v1634, %v2438
        %v2547 = vadd.f32 %v1637, %v2441
        %v2548 = vadd.f32 %v1642, %v2446
        %v2549 = vadd.f32 %v1645, %v2449
        %v2550 = vadd.f32 %v1650, %v2454
        %v2551 = vadd.f32 %v1653, %v2457
        %v2552 = vadd.f32 %v1658, %v2462
        %v2553 = vadd.f32 %v1661, %v2465
        %v2554 = vadd.f32 %v1666, %v2470
        %v2555 = vadd.f32 %v1669, %v2473
        %v2556 = vadd.f32 %v1674, %v2478
        %v2557 = vadd.f32 %v1677, %v2481
        %v2558 = vadd.f32 %v1682, %v2486
        %v2559 = vadd.f32 %v1685, %v2489
        %v2560 = vadd.f32 %v1690, %v2494
        %v2561 = vadd.f32 %v1693, %v2497
        %v2562 = vadd.f32 %v1698, %v2502
        %v2563 = vadd.f32 %v1701, %v2505
        %v2564 = vadd.f32 %v1706, %v2510
        %v2565 = vadd.f32 %v1709, %v2513
        %v2566 = vadd.f32 %v1714, %v2518
        %v2567 = vadd.f32 %v1717, %v2521
        %v2568 = vadd.f32 %v1722, %v2526
        %v2569 = vadd.f32 %v1725, %v2529
        %v2570 = vadd.f32 %v1730, %v2534
        %v2571 = vadd.f32 %v1733, %v2537
        %v2572 = vld [vmem:[%s611] sm:$0x8]
        %v2573 = vld [vmem:[%s611 + $0x4] sm:$0xf]
        %v2574 = vld [vmem:[%s611 + $0xc] sm:$0x8]
        %v2575 = vld [vmem:[%s611 + $0x10] sm:$0xf]
        %v2576 = vld [vmem:[%s611 + $0x18] sm:$0x8]
        %v2577 = vld [vmem:[%s611 + $0x1c] sm:$0xf]
        %v2578 = vld [vmem:[%s611 + $0x24] sm:$0x8]
        %v2579 = vld [vmem:[%s611 + $0x28] sm:$0xf]
        %v2580 = vld [vmem:[%s611 + $0x30] sm:$0x8]
        %v2581 = vld [vmem:[%s611 + $0x34] sm:$0xf]
        %v2582 = vld [vmem:[%s611 + $0x3c] sm:$0x8]
        %v2583 = vld [vmem:[%s611 + $0x40] sm:$0xf]
        %v2584 = vld [vmem:[%s611 + $0x48] sm:$0x8]
        %v2585 = vld [vmem:[%s611 + $0x4c] sm:$0xf]
        %v2586 = vld [vmem:[%s611 + $0x54] sm:$0x8]
        %v2587 = vld [vmem:[%s611 + $0x58] sm:$0xf]
        %v2588 = vld [vmem:[%s611 + $0x78] sm:$0x8]
        %v2589 = vld [vmem:[%s611 + $0x7c] sm:$0xf]
        %v2590 = vld [vmem:[%s611 + $0x84] sm:$0x8]
        %v2591 = vld [vmem:[%s611 + $0x88] sm:$0xf]
        %v2592 = vld [vmem:[%s611 + $0x90] sm:$0x8]
        %v2593 = vld [vmem:[%s611 + $0x94] sm:$0xf]
        %v2594 = vld [vmem:[%s611 + $0x9c] sm:$0x8]
        %v2595 = vld [vmem:[%s611 + $0xa0] sm:$0xf]
        %v2596 = vld [vmem:[%s611 + $0xa8] sm:$0x8]
        %v2597 = vld [vmem:[%s611 + $0xac] sm:$0xf]
        %v2598 = vld [vmem:[%s611 + $0xb4] sm:$0x8]
        %v2599 = vld [vmem:[%s611 + $0xb8] sm:$0xf]
        %v2600 = vld [vmem:[%s611 + $0xc0] sm:$0x8]
        %v2601 = vld [vmem:[%s611 + $0xc4] sm:$0xf]
        %v2602 = vld [vmem:[%s611 + $0xcc] sm:$0x8]
        %v2603 = vld [vmem:[%s611 + $0xd0] sm:$0xf]
        %v2604 = vld [vmem:[%s611 + $0xf0] sm:$0x8]
        %v2605 = vld [vmem:[%s611 + $0xf4] sm:$0xf]
        %v2606 = vld [vmem:[%s611 + $0xfc] sm:$0x8]
        %v2607 = vld [vmem:[%s611 + $0x100] sm:$0xf]
        %v2608 = vld [vmem:[%s611 + $0x108] sm:$0x8]
        %v2609 = vld [vmem:[%s611 + $0x10c] sm:$0xf]
        %v2610 = vld [vmem:[%s611 + $0x114] sm:$0x8]
        %v2611 = vld [vmem:[%s611 + $0x118] sm:$0xf]
        %v2612 = vld [vmem:[%s611 + $0x120] sm:$0x8]
        %v2613 = vld [vmem:[%s611 + $0x124] sm:$0xf]
        %v2614 = vld [vmem:[%s611 + $0x12c] sm:$0x8]
        %v2615 = vld [vmem:[%s611 + $0x130] sm:$0xf]
        %v2616 = vld [vmem:[%s611 + $0x138] sm:$0x8]
        %v2617 = vld [vmem:[%s611 + $0x13c] sm:$0xf]
        %v2618 = vld [vmem:[%s611 + $0x144] sm:$0x8]
        %v2619 = vld [vmem:[%s611 + $0x148] sm:$0xf]
        %v2620 = vld [vmem:[%s611 + $0x168] sm:$0x8]
        %v2621 = vld [vmem:[%s611 + $0x16c] sm:$0xf]
        %v2622 = vld [vmem:[%s611 + $0x174] sm:$0x8]
        %v2623 = vld [vmem:[%s611 + $0x178] sm:$0xf]
        %v2624 = vld [vmem:[%s611 + $0x180] sm:$0x8]
        %v2625 = vld [vmem:[%s611 + $0x184] sm:$0xf]
        %v2626 = vld [vmem:[%s611 + $0x18c] sm:$0x8]
        %v2627 = vld [vmem:[%s611 + $0x190] sm:$0xf]
        %v2628 = vld [vmem:[%s611 + $0x198] sm:$0x8]
        %v2629 = vld [vmem:[%s611 + $0x19c] sm:$0xf]
        %v2630 = vld [vmem:[%s611 + $0x1a4] sm:$0x8]
        %v2631 = vld [vmem:[%s611 + $0x1a8] sm:$0xf]
        %v2632 = vld [vmem:[%s611 + $0x1b0] sm:$0x8]
        %v2633 = vld [vmem:[%s611 + $0x1b4] sm:$0xf]
        %v2634 = vld [vmem:[%s611 + $0x1bc] sm:$0x8]
        %v2635 = vld [vmem:[%s611 + $0x1c0] sm:$0xf]
        %v2637 = vshrl.u32 %v2572, 16
        %v2639 = vrot.slane %v2637, 7
        %v2640 = vrot.slane %v2639, 4
        %v2642 = vshrl.u32 %v2573, 16
        %v2644 = vrot.slane %v2642, 7
        %v2645 = vshll.u32 %v2573, 16
        %v2647 = vor.u32 %v2644, %v2645
        %v2648 = vsel %vm709, %v2640, %v2647
        %v2650 = vshrl.u32 %v2574, 16
        %v2652 = vrot.slane %v2650, 7
        %v2653 = vrot.slane %v2652, 4
        %v2655 = vshrl.u32 %v2575, 16
        %v2657 = vrot.slane %v2655, 7
        %v2658 = vshll.u32 %v2575, 16
        %v2660 = vor.u32 %v2657, %v2658
        %v2661 = vsel %vm709, %v2653, %v2660
        %v2663 = vshrl.u32 %v2576, 16
        %v2665 = vrot.slane %v2663, 7
        %v2666 = vrot.slane %v2665, 4
        %v2668 = vshrl.u32 %v2577, 16
        %v2670 = vrot.slane %v2668, 7
        %v2671 = vshll.u32 %v2577, 16
        %v2673 = vor.u32 %v2670, %v2671
        %v2674 = vsel %vm709, %v2666, %v2673
        %v2676 = vshrl.u32 %v2578, 16
        %v2678 = vrot.slane %v2676, 7
        %v2679 = vrot.slane %v2678, 4
        %v2681 = vshrl.u32 %v2579, 16
        %v2683 = vrot.slane %v2681, 7
        %v2684 = vshll.u32 %v2579, 16
        %v2686 = vor.u32 %v2683, %v2684
        %v2687 = vsel %vm709, %v2679, %v2686
        %v2689 = vshrl.u32 %v2580, 16
        %v2691 = vrot.slane %v2689, 7
        %v2692 = vrot.slane %v2691, 4
        %v2694 = vshrl.u32 %v2581, 16
        %v2696 = vrot.slane %v2694, 7
        %v2697 = vshll.u32 %v2581, 16
        %v2699 = vor.u32 %v2696, %v2697
        %v2700 = vsel %vm709, %v2692, %v2699
        %v2702 = vshrl.u32 %v2582, 16
        %v2704 = vrot.slane %v2702, 7
        %v2705 = vrot.slane %v2704, 4
        %v2707 = vshrl.u32 %v2583, 16
        %v2709 = vrot.slane %v2707, 7
        %v2710 = vshll.u32 %v2583, 16
        %v2712 = vor.u32 %v2709, %v2710
        %v2713 = vsel %vm709, %v2705, %v2712
        %v2715 = vshrl.u32 %v2584, 16
        %v2717 = vrot.slane %v2715, 7
        %v2718 = vrot.slane %v2717, 4
        %v2720 = vshrl.u32 %v2585, 16
        %v2722 = vrot.slane %v2720, 7
        %v2723 = vshll.u32 %v2585, 16
        %v2725 = vor.u32 %v2722, %v2723
        %v2726 = vsel %vm709, %v2718, %v2725
        %v2728 = vshrl.u32 %v2586, 16
        %v2730 = vrot.slane %v2728, 7
        %v2731 = vrot.slane %v2730, 4
        %v2733 = vshrl.u32 %v2587, 16
        %v2735 = vrot.slane %v2733, 7
        %v2736 = vshll.u32 %v2587, 16
        %v2738 = vor.u32 %v2735, %v2736
        %v2739 = vsel %vm709, %v2731, %v2738
        %v2741 = vshrl.u32 %v2588, 16
        %v2743 = vrot.slane %v2741, 7
        %v2744 = vrot.slane %v2743, 4
        %v2746 = vshrl.u32 %v2589, 16
        %v2748 = vrot.slane %v2746, 7
        %v2749 = vshll.u32 %v2589, 16
        %v2751 = vor.u32 %v2748, %v2749
        %v2752 = vsel %vm709, %v2744, %v2751
        %v2754 = vshrl.u32 %v2590, 16
        %v2756 = vrot.slane %v2754, 7
        %v2757 = vrot.slane %v2756, 4
        %v2759 = vshrl.u32 %v2591, 16
        %v2761 = vrot.slane %v2759, 7
        %v2762 = vshll.u32 %v2591, 16
        %v2764 = vor.u32 %v2761, %v2762
        %v2765 = vsel %vm709, %v2757, %v2764
        %v2767 = vshrl.u32 %v2592, 16
        %v2769 = vrot.slane %v2767, 7
        %v2770 = vrot.slane %v2769, 4
        %v2772 = vshrl.u32 %v2593, 16
        %v2774 = vrot.slane %v2772, 7
        %v2775 = vshll.u32 %v2593, 16
        %v2777 = vor.u32 %v2774, %v2775
        %v2778 = vsel %vm709, %v2770, %v2777
        %v2780 = vshrl.u32 %v2594, 16
        %v2782 = vrot.slane %v2780, 7
        %v2783 = vrot.slane %v2782, 4
        %v2785 = vshrl.u32 %v2595, 16
        %v2787 = vrot.slane %v2785, 7
        %v2788 = vshll.u32 %v2595, 16
        %v2790 = vor.u32 %v2787, %v2788
        %v2791 = vsel %vm709, %v2783, %v2790
        %v2793 = vshrl.u32 %v2596, 16
        %v2795 = vrot.slane %v2793, 7
        %v2796 = vrot.slane %v2795, 4
        %v2798 = vshrl.u32 %v2597, 16
        %v2800 = vrot.slane %v2798, 7
        %v2801 = vshll.u32 %v2597, 16
        %v2803 = vor.u32 %v2800, %v2801
        %v2804 = vsel %vm709, %v2796, %v2803
        %v2806 = vshrl.u32 %v2598, 16
        %v2808 = vrot.slane %v2806, 7
        %v2809 = vrot.slane %v2808, 4
        %v2811 = vshrl.u32 %v2599, 16
        %v2813 = vrot.slane %v2811, 7
        %v2814 = vshll.u32 %v2599, 16
        %v2816 = vor.u32 %v2813, %v2814
        %v2817 = vsel %vm709, %v2809, %v2816
        %v2819 = vshrl.u32 %v2600, 16
        %v2821 = vrot.slane %v2819, 7
        %v2822 = vrot.slane %v2821, 4
        %v2824 = vshrl.u32 %v2601, 16
        %v2826 = vrot.slane %v2824, 7
        %v2827 = vshll.u32 %v2601, 16
        %v2829 = vor.u32 %v2826, %v2827
        %v2830 = vsel %vm709, %v2822, %v2829
        %v2832 = vshrl.u32 %v2602, 16
        %v2834 = vrot.slane %v2832, 7
        %v2835 = vrot.slane %v2834, 4
        %v2837 = vshrl.u32 %v2603, 16
        %v2839 = vrot.slane %v2837, 7
        %v2840 = vshll.u32 %v2603, 16
        %v2842 = vor.u32 %v2839, %v2840
        %v2843 = vsel %vm709, %v2835, %v2842
        %v2845 = vshrl.u32 %v2604, 16
        %v2847 = vrot.slane %v2845, 7
        %v2848 = vrot.slane %v2847, 4
        %v2850 = vshrl.u32 %v2605, 16
        %v2852 = vrot.slane %v2850, 7
        %v2853 = vshll.u32 %v2605, 16
        %v2855 = vor.u32 %v2852, %v2853
        %v2856 = vsel %vm709, %v2848, %v2855
        %v2858 = vshrl.u32 %v2606, 16
        %v2860 = vrot.slane %v2858, 7
        %v2861 = vrot.slane %v2860, 4
        %v2863 = vshrl.u32 %v2607, 16
        %v2865 = vrot.slane %v2863, 7
        %v2866 = vshll.u32 %v2607, 16
        %v2868 = vor.u32 %v2865, %v2866
        %v2869 = vsel %vm709, %v2861, %v2868
        %v2871 = vshrl.u32 %v2608, 16
        %v2873 = vrot.slane %v2871, 7
        %v2874 = vrot.slane %v2873, 4
        %v2876 = vshrl.u32 %v2609, 16
        %v2878 = vrot.slane %v2876, 7
        %v2879 = vshll.u32 %v2609, 16
        %v2881 = vor.u32 %v2878, %v2879
        %v2882 = vsel %vm709, %v2874, %v2881
        %v2884 = vshrl.u32 %v2610, 16
        %v2886 = vrot.slane %v2884, 7
        %v2887 = vrot.slane %v2886, 4
        %v2889 = vshrl.u32 %v2611, 16
        %v2891 = vrot.slane %v2889, 7
        %v2892 = vshll.u32 %v2611, 16
        %v2894 = vor.u32 %v2891, %v2892
        %v2895 = vsel %vm709, %v2887, %v2894
        %v2897 = vshrl.u32 %v2612, 16
        %v2899 = vrot.slane %v2897, 7
        %v2900 = vrot.slane %v2899, 4
        %v2902 = vshrl.u32 %v2613, 16
        %v2904 = vrot.slane %v2902, 7
        %v2905 = vshll.u32 %v2613, 16
        %v2907 = vor.u32 %v2904, %v2905
        %v2908 = vsel %vm709, %v2900, %v2907
        %v2910 = vshrl.u32 %v2614, 16
        %v2912 = vrot.slane %v2910, 7
        %v2913 = vrot.slane %v2912, 4
        %v2915 = vshrl.u32 %v2615, 16
        %v2917 = vrot.slane %v2915, 7
        %v2918 = vshll.u32 %v2615, 16
        %v2920 = vor.u32 %v2917, %v2918
        %v2921 = vsel %vm709, %v2913, %v2920
        %v2923 = vshrl.u32 %v2616, 16
        %v2925 = vrot.slane %v2923, 7
        %v2926 = vrot.slane %v2925, 4
        %v2928 = vshrl.u32 %v2617, 16
        %v2930 = vrot.slane %v2928, 7
        %v2931 = vshll.u32 %v2617, 16
        %v2933 = vor.u32 %v2930, %v2931
        %v2934 = vsel %vm709, %v2926, %v2933
        %v2936 = vshrl.u32 %v2618, 16
        %v2938 = vrot.slane %v2936, 7
        %v2939 = vrot.slane %v2938, 4
        %v2941 = vshrl.u32 %v2619, 16
        %v2943 = vrot.slane %v2941, 7
        %v2944 = vshll.u32 %v2619, 16
        %v2946 = vor.u32 %v2943, %v2944
        %v2947 = vsel %vm709, %v2939, %v2946
        %v2949 = vshrl.u32 %v2620, 16
        %v2951 = vrot.slane %v2949, 7
        %v2952 = vrot.slane %v2951, 4
        %v2954 = vshrl.u32 %v2621, 16
        %v2956 = vrot.slane %v2954, 7
        %v2957 = vshll.u32 %v2621, 16
        %v2959 = vor.u32 %v2956, %v2957
        %v2960 = vsel %vm709, %v2952, %v2959
        %v2962 = vshrl.u32 %v2622, 16
        %v2964 = vrot.slane %v2962, 7
        %v2965 = vrot.slane %v2964, 4
        %v2967 = vshrl.u32 %v2623, 16
        %v2969 = vrot.slane %v2967, 7
        %v2970 = vshll.u32 %v2623, 16
        %v2972 = vor.u32 %v2969, %v2970
        %v2973 = vsel %vm709, %v2965, %v2972
        %v2975 = vshrl.u32 %v2624, 16
        %v2977 = vrot.slane %v2975, 7
        %v2978 = vrot.slane %v2977, 4
        %v2980 = vshrl.u32 %v2625, 16
        %v2982 = vrot.slane %v2980, 7
        %v2983 = vshll.u32 %v2625, 16
        %v2985 = vor.u32 %v2982, %v2983
        %v2986 = vsel %vm709, %v2978, %v2985
        %v2988 = vshrl.u32 %v2626, 16
        %v2990 = vrot.slane %v2988, 7
        %v2991 = vrot.slane %v2990, 4
        %v2993 = vshrl.u32 %v2627, 16
        %v2995 = vrot.slane %v2993, 7
        %v2996 = vshll.u32 %v2627, 16
        %v2998 = vor.u32 %v2995, %v2996
        %v2999 = vsel %vm709, %v2991, %v2998
        %v3001 = vshrl.u32 %v2628, 16
        %v3003 = vrot.slane %v3001, 7
        %v3004 = vrot.slane %v3003, 4
        %v3006 = vshrl.u32 %v2629, 16
        %v3008 = vrot.slane %v3006, 7
        %v3009 = vshll.u32 %v2629, 16
        %v3011 = vor.u32 %v3008, %v3009
        %v3012 = vsel %vm709, %v3004, %v3011
        %v3014 = vshrl.u32 %v2630, 16
        %v3016 = vrot.slane %v3014, 7
        %v3017 = vrot.slane %v3016, 4
        %v3019 = vshrl.u32 %v2631, 16
        %v3021 = vrot.slane %v3019, 7
        %v3022 = vshll.u32 %v2631, 16
        %v3024 = vor.u32 %v3021, %v3022
        %v3025 = vsel %vm709, %v3017, %v3024
        %v3027 = vshrl.u32 %v2632, 16
        %v3029 = vrot.slane %v3027, 7
        %v3030 = vrot.slane %v3029, 4
        %v3032 = vshrl.u32 %v2633, 16
        %v3034 = vrot.slane %v3032, 7
        %v3035 = vshll.u32 %v2633, 16
        %v3037 = vor.u32 %v3034, %v3035
        %v3038 = vsel %vm709, %v3030, %v3037
        %v3040 = vshrl.u32 %v2634, 16
        %v3042 = vrot.slane %v3040, 7
        %v3043 = vrot.slane %v3042, 4
        %v3045 = vshrl.u32 %v2635, 16
        %v3047 = vrot.slane %v3045, 7
        %v3048 = vshll.u32 %v2635, 16
        %v3050 = vor.u32 %v3047, %v3048
        %v3051 = vsel %vm709, %v3043, %v3050
        %v3052 = vld [vmem:[#allocation6 + $0xc0] sm:$0xf]
        %v3053 = vld [vmem:[#allocation6 + $0xc4] sm:$0xf]
        %v3054 = vld [vmem:[#allocation6 + $0xc8] sm:$0xf]
        %v3055 = vld [vmem:[#allocation6 + $0xcc] sm:$0xf]
        %v3056 = vld [vmem:[#allocation6 + $0xd0] sm:$0xf]
        %v3057 = vld [vmem:[#allocation6 + $0xd4] sm:$0xf]
        %v3058 = vld [vmem:[#allocation6 + $0xd8] sm:$0xf]
        %v3059 = vld [vmem:[#allocation6 + $0xdc] sm:$0xf]
        %v3060 = vld [vmem:[#allocation6 + $0xe0] sm:$0xf]
        %v3061 = vld [vmem:[#allocation6 + $0xe4] sm:$0xf]
        %v3062 = vld [vmem:[#allocation6 + $0xe8] sm:$0xf]
        %v3063 = vld [vmem:[#allocation6 + $0xec] sm:$0xf]
        %v3064 = vld [vmem:[#allocation6 + $0xf0] sm:$0xf]
        %v3065 = vld [vmem:[#allocation6 + $0xf4] sm:$0xf]
        %v3066 = vld [vmem:[#allocation6 + $0xf8] sm:$0xf]
        %v3067 = vld [vmem:[#allocation6 + $0xfc] sm:$0xf]
        %v3068 = vunpack.c.l.b16 %v2648
        %v3069 = vunpack.c.l.b16 %v2661
        %v3070 = vunpack.c.l.b16 %v2674
        %v3071 = vunpack.c.l.b16 %v2687
        %v3072 = vunpack.c.l.b16 %v2700
        %v3073 = vunpack.c.l.b16 %v2713
        %v3074 = vunpack.c.l.b16 %v2726
        %v3075 = vunpack.c.l.b16 %v2739
        %v3076 = vunpack.c.l.b16 %v2752
        %v3077 = vunpack.c.l.b16 %v2765
        %v3078 = vunpack.c.l.b16 %v2778
        %v3079 = vunpack.c.l.b16 %v2791
        %v3080 = vunpack.c.l.b16 %v2804
        %v3081 = vunpack.c.l.b16 %v2817
        %v3082 = vunpack.c.l.b16 %v2830
        %v3083 = vunpack.c.l.b16 %v2843
        %v3084 = vunpack.c.l.b16 %v2856
        %v3085 = vunpack.c.l.b16 %v2869
        %v3086 = vunpack.c.l.b16 %v2882
        %v3087 = vunpack.c.l.b16 %v2895
        %v3088 = vunpack.c.l.b16 %v2908
        %v3089 = vunpack.c.l.b16 %v2921
        %v3090 = vunpack.c.l.b16 %v2934
        %v3091 = vunpack.c.l.b16 %v2947
        %v3092 = vunpack.c.l.b16 %v2960
        %v3093 = vunpack.c.l.b16 %v2973
        %v3094 = vunpack.c.l.b16 %v2986
        %v3095 = vunpack.c.l.b16 %v2999
        %v3096 = vunpack.c.l.b16 %v3012
        %v3097 = vunpack.c.l.b16 %v3025
        %v3098 = vunpack.c.l.b16 %v3038
        %v3099 = vunpack.c.l.b16 %v3051
        %v3100 = vpack.c.b16 %v3069, %v3068
        %v3101 = vpack.c.b16 %v3071, %v3070
        %v3102 = vpack.c.b16 %v3073, %v3072
        %v3103 = vpack.c.b16 %v3075, %v3074
        %v3104 = vpack.c.b16 %v3077, %v3076
        %v3105 = vpack.c.b16 %v3079, %v3078
        %v3106 = vpack.c.b16 %v3081, %v3080
        %v3107 = vpack.c.b16 %v3083, %v3082
        %v3108 = vpack.c.b16 %v3085, %v3084
        %v3109 = vpack.c.b16 %v3087, %v3086
        %v3110 = vpack.c.b16 %v3089, %v3088
        %v3111 = vpack.c.b16 %v3091, %v3090
        %v3112 = vpack.c.b16 %v3093, %v3092
        %v3113 = vpack.c.b16 %v3095, %v3094
        %v3114 = vpack.c.b16 %v3097, %v3096
        %v3115 = vpack.c.b16 %v3099, %v3098
        %v3148 = vunpack.c.l.b16 %v3052
        %v3149 = vunpack.c.l.b16 %v3053
        %v3150 = vunpack.c.l.b16 %v3054
        %v3151 = vunpack.c.l.b16 %v3055
        %v3152 = vunpack.c.l.b16 %v3056
        %v3153 = vunpack.c.l.b16 %v3057
        %v3154 = vunpack.c.l.b16 %v3058
        %v3155 = vunpack.c.l.b16 %v3059
        %v3156 = vunpack.c.l.b16 %v3060
        %v3157 = vunpack.c.l.b16 %v3061
        %v3158 = vunpack.c.l.b16 %v3062
        %v3159 = vunpack.c.l.b16 %v3063
        %v3160 = vunpack.c.l.b16 %v3064
        %v3161 = vunpack.c.l.b16 %v3065
        %v3162 = vunpack.c.l.b16 %v3066
        %v3163 = vunpack.c.l.b16 %v3067
        %v3164 = vpack.c.b16 %v3149, %v3148
        %v3165 = vpack.c.b16 %v3151, %v3150
        %v3166 = vpack.c.b16 %v3153, %v3152
        %v3167 = vpack.c.b16 %v3155, %v3154
        %v3168 = vpack.c.b16 %v3157, %v3156
        %v3169 = vpack.c.b16 %v3159, %v3158
        %v3170 = vpack.c.b16 %v3161, %v3160
        %v3171 = vpack.c.b16 %v3163, %v3162
        %3180 = vmatprep.subr.bf16.mxu0 0
        %3181 = vmatpush1.bf16.msra.mxu0 %v3171
        %3182 = vmatprep.subr.bf16.mxu0 0
        %3183 = vmatpush1.bf16.msra.mxu0 %v3170
        %3184 = vmatprep.subr.bf16.mxu0 0
        %3185 = vmatpush1.bf16.msra.mxu0 %v3169
        %3186 = vmatprep.subr.bf16.mxu0 0
        %3187 = vmatpush1.bf16.msra.mxu0 %v3168
        %3188 = vmatprep.subr.bf16.mxu0 0
        %3189 = vmatpush1.bf16.msra.mxu0 %v3167
        %3190 = vmatprep.subr.bf16.mxu0 0
        %3191 = vmatpush1.bf16.msra.mxu0 %v3166
        %3192 = vmatprep.subr.bf16.mxu0 0
        %3193 = vmatpush1.bf16.msra.mxu0 %v3165
        %3194 = vmatprep.subr.bf16.mxu0 0
        %3195 = vmatpush1.bf16.msra.mxu0 %v3164
        %3196 = vmatprep.subr.bf16.mxu0 0
        %3197 = vmatpush2.bf16.msra.mxu0 0
        %3198 = vmatprep.subr.bf16.mxu0 0
        %3199 = vmatpush2.bf16.msra.mxu0 0
        %3200 = vmatprep.subr.bf16.mxu0 0
        %3201 = vmatpush2.bf16.msra.mxu0 0
        %3202 = vmatprep.subr.bf16.mxu0 0
        %3203 = vmatpush2.bf16.msra.mxu0 0
        %3204 = vmatprep.subr.bf16.mxu0 0
        %3205 = vmatpush2.bf16.msra.mxu0 0
        %3206 = vmatprep.subr.bf16.mxu0 0
        %3207 = vmatpush2.bf16.msra.mxu0 0
        %3208 = vmatprep.subr.bf16.mxu0 0
        %3209 = vmatpush2.bf16.msra.mxu0 0
        %3210 = vmatprep.subr.bf16.mxu0 0
        %3211 = vmatpush2.bf16.msra.mxu0 0
        %3212 = vmatprep.mubr.bf16.mxu0 0
        %3213 = vmatmul.mubr.bf16.gmra.mxu0 %v3100
        %v3214 = vpop.f32.mrf.mxu0
        %v3215 = vadd.f32 0.0, %v3214
        %v3216 = vpop.f32.mrf.mxu0
        %v3217 = vpop.f32.mrf.mxu0
        %v3218 = vadd.f32 0.0, %v3217
        %v3219 = vpop.f32.mrf.mxu0
        %3220 = vmatprep.mubr.bf16.mxu0 0
        %3221 = vmatmul.mubr.bf16.gmra.mxu0 %v3101
        %v3222 = vpop.f32.mrf.mxu0
        %v3223 = vadd.f32 0.0, %v3222
        %v3224 = vpop.f32.mrf.mxu0
        %v3225 = vpop.f32.mrf.mxu0
        %v3226 = vadd.f32 0.0, %v3225
        %v3227 = vpop.f32.mrf.mxu0
        %3228 = vmatprep.mubr.bf16.mxu0 0
        %3229 = vmatmul.mubr.bf16.gmra.mxu0 %v3102
        %v3230 = vpop.f32.mrf.mxu0
        %v3231 = vadd.f32 0.0, %v3230
        %v3232 = vpop.f32.mrf.mxu0
        %v3233 = vpop.f32.mrf.mxu0
        %v3234 = vadd.f32 0.0, %v3233
        %v3235 = vpop.f32.mrf.mxu0
        %3236 = vmatprep.mubr.bf16.mxu0 0
        %3237 = vmatmul.mubr.bf16.gmra.mxu0 %v3103
        %v3238 = vpop.f32.mrf.mxu0
        %v3239 = vadd.f32 0.0, %v3238
        %v3240 = vpop.f32.mrf.mxu0
        %v3241 = vpop.f32.mrf.mxu0
        %v3242 = vadd.f32 0.0, %v3241
        %v3243 = vpop.f32.mrf.mxu0
        %3244 = vmatprep.mubr.bf16.mxu0 0
        %3245 = vmatmul.mubr.bf16.gmra.mxu0 %v3104
        %v3246 = vpop.f32.mrf.mxu0
        %v3247 = vadd.f32 0.0, %v3246
        %v3248 = vpop.f32.mrf.mxu0
        %v3249 = vpop.f32.mrf.mxu0
        %v3250 = vadd.f32 0.0, %v3249
        %v3251 = vpop.f32.mrf.mxu0
        %3252 = vmatprep.mubr.bf16.mxu0 0
        %3253 = vmatmul.mubr.bf16.gmra.mxu0 %v3105
        %v3254 = vpop.f32.mrf.mxu0
        %v3255 = vadd.f32 0.0, %v3254
        %v3256 = vpop.f32.mrf.mxu0
        %v3257 = vpop.f32.mrf.mxu0
        %v3258 = vadd.f32 0.0, %v3257
        %v3259 = vpop.f32.mrf.mxu0
        %3260 = vmatprep.mubr.bf16.mxu0 0
        %3261 = vmatmul.mubr.bf16.gmra.mxu0 %v3106
        %v3262 = vpop.f32.mrf.mxu0
        %v3263 = vadd.f32 0.0, %v3262
        %v3264 = vpop.f32.mrf.mxu0
        %v3265 = vpop.f32.mrf.mxu0
        %v3266 = vadd.f32 0.0, %v3265
        %v3267 = vpop.f32.mrf.mxu0
        %3268 = vmatprep.mubr.bf16.mxu0 0
        %3269 = vmatmul.mubr.bf16.gmra.mxu0 %v3107
        %v3270 = vpop.f32.mrf.mxu0
        %v3271 = vadd.f32 0.0, %v3270
        %v3272 = vpop.f32.mrf.mxu0
        %v3273 = vpop.f32.mrf.mxu0
        %v3274 = vadd.f32 0.0, %v3273
        %v3275 = vpop.f32.mrf.mxu0
        %3276 = vmatprep.mubr.bf16.mxu0 0
        %3277 = vmatmul.mubr.bf16.gmra.mxu0 %v3108
        %v3278 = vpop.f32.mrf.mxu0
        %v3279 = vadd.f32 0.0, %v3278
        %v3280 = vpop.f32.mrf.mxu0
        %v3281 = vpop.f32.mrf.mxu0
        %v3282 = vadd.f32 0.0, %v3281
        %v3283 = vpop.f32.mrf.mxu0
        %3284 = vmatprep.mubr.bf16.mxu0 0
        %3285 = vmatmul.mubr.bf16.gmra.mxu0 %v3109
        %v3286 = vpop.f32.mrf.mxu0
        %v3287 = vadd.f32 0.0, %v3286
        %v3288 = vpop.f32.mrf.mxu0
        %v3289 = vpop.f32.mrf.mxu0
        %v3290 = vadd.f32 0.0, %v3289
        %v3291 = vpop.f32.mrf.mxu0
        %3292 = vmatprep.mubr.bf16.mxu0 0
        %3293 = vmatmul.mubr.bf16.gmra.mxu0 %v3110
        %v3294 = vpop.f32.mrf.mxu0
        %v3295 = vadd.f32 0.0, %v3294
        %v3296 = vpop.f32.mrf.mxu0
        %v3297 = vpop.f32.mrf.mxu0
        %v3298 = vadd.f32 0.0, %v3297
        %v3299 = vpop.f32.mrf.mxu0
        %3300 = vmatprep.mubr.bf16.mxu0 0
        %3301 = vmatmul.mubr.bf16.gmra.mxu0 %v3111
        %v3302 = vpop.f32.mrf.mxu0
        %v3303 = vadd.f32 0.0, %v3302
        %v3304 = vpop.f32.mrf.mxu0
        %v3305 = vpop.f32.mrf.mxu0
        %v3306 = vadd.f32 0.0, %v3305
        %v3307 = vpop.f32.mrf.mxu0
        %3308 = vmatprep.mubr.bf16.mxu0 0
        %3309 = vmatmul.mubr.bf16.gmra.mxu0 %v3112
        %v3310 = vpop.f32.mrf.mxu0
        %v3311 = vadd.f32 0.0, %v3310
        %v3312 = vpop.f32.mrf.mxu0
        %v3313 = vpop.f32.mrf.mxu0
        %v3314 = vadd.f32 0.0, %v3313
        %v3315 = vpop.f32.mrf.mxu0
        %3316 = vmatprep.mubr.bf16.mxu0 0
        %3317 = vmatmul.mubr.bf16.gmra.mxu0 %v3113
        %v3318 = vpop.f32.mrf.mxu0
        %v3319 = vadd.f32 0.0, %v3318
        %v3320 = vpop.f32.mrf.mxu0
        %v3321 = vpop.f32.mrf.mxu0
        %v3322 = vadd.f32 0.0, %v3321
        %v3323 = vpop.f32.mrf.mxu0
        %3324 = vmatprep.mubr.bf16.mxu0 0
        %3325 = vmatmul.mubr.bf16.gmra.mxu0 %v3114
        %v3326 = vpop.f32.mrf.mxu0
        %v3327 = vadd.f32 0.0, %v3326
        %v3328 = vpop.f32.mrf.mxu0
        %v3329 = vpop.f32.mrf.mxu0
        %v3330 = vadd.f32 0.0, %v3329
        %v3331 = vpop.f32.mrf.mxu0
        %3332 = vmatprep.mubr.bf16.mxu0 0
        %3333 = vmatmul.mubr.bf16.gmra.mxu0 %v3115
        %v3334 = vpop.f32.mrf.mxu0
        %v3335 = vadd.f32 0.0, %v3334
        %v3336 = vpop.f32.mrf.mxu0
        %v3337 = vpop.f32.mrf.mxu0
        %v3338 = vadd.f32 0.0, %v3337
        %v3339 = vpop.f32.mrf.mxu0
        %3340 = vdwg.mxu0
        %v3341 = vadd.f32 %v2540, %v3215
        %v3342 = vadd.f32 %v2541, %v3218
        %v3343 = vadd.f32 %v2542, %v3223
        %v3344 = vadd.f32 %v2543, %v3226
        %v3345 = vadd.f32 %v2544, %v3231
        %v3346 = vadd.f32 %v2545, %v3234
        %v3347 = vadd.f32 %v2546, %v3239
        %v3348 = vadd.f32 %v2547, %v3242
        %v3349 = vadd.f32 %v2548, %v3247
        %v3350 = vadd.f32 %v2549, %v3250
        %v3351 = vadd.f32 %v2550, %v3255
        %v3352 = vadd.f32 %v2551, %v3258
        %v3353 = vadd.f32 %v2552, %v3263
        %v3354 = vadd.f32 %v2553, %v3266
        %v3355 = vadd.f32 %v2554, %v3271
        %v3356 = vadd.f32 %v2555, %v3274
        %v3357 = vadd.f32 %v2556, %v3279
        %v3358 = vadd.f32 %v2557, %v3282
        %v3359 = vadd.f32 %v2558, %v3287
        %v3360 = vadd.f32 %v2559, %v3290
        %v3361 = vadd.f32 %v2560, %v3295
        %v3362 = vadd.f32 %v2561, %v3298
        %v3363 = vadd.f32 %v2562, %v3303
        %v3364 = vadd.f32 %v2563, %v3306
        %v3365 = vadd.f32 %v2564, %v3311
        %v3366 = vadd.f32 %v2565, %v3314
        %v3367 = vadd.f32 %v2566, %v3319
        %v3368 = vadd.f32 %v2567, %v3322
        %v3369 = vadd.f32 %v2568, %v3327
        %v3370 = vadd.f32 %v2569, %v3330
        %v3371 = vadd.f32 %v2570, %v3335
        %v3372 = vadd.f32 %v2571, %v3338
        %v3373 = vld [vmem:[#allocation6 + $0x100] sm:$0xf]
        %v3374 = vld [vmem:[#allocation6 + $0x104] sm:$0xf]
        %v3375 = vld [vmem:[#allocation6 + $0x108] sm:$0xf]
        %v3376 = vld [vmem:[#allocation6 + $0x10c] sm:$0xf]
        %v3377 = vld [vmem:[#allocation6 + $0x110] sm:$0xf]
        %v3378 = vld [vmem:[#allocation6 + $0x114] sm:$0xf]
        %v3379 = vld [vmem:[#allocation6 + $0x118] sm:$0xf]
        %v3380 = vld [vmem:[#allocation6 + $0x11c] sm:$0xf]
        %v3381 = vld [vmem:[#allocation6 + $0x120] sm:$0xf]
        %v3382 = vld [vmem:[#allocation6 + $0x124] sm:$0xf]
        %v3383 = vld [vmem:[#allocation6 + $0x128] sm:$0xf]
        %v3384 = vld [vmem:[#allocation6 + $0x12c] sm:$0xf]
        %v3385 = vld [vmem:[#allocation6 + $0x130] sm:$0xf]
        %v3386 = vld [vmem:[#allocation6 + $0x134] sm:$0xf]
        %v3387 = vld [vmem:[#allocation6 + $0x138] sm:$0xf]
        %v3388 = vld [vmem:[#allocation6 + $0x13c] sm:$0xf]
        %v3421 = vunpack.c.l.b16 %v2573
        %v3422 = vunpack.c.l.b16 %v2575
        %v3423 = vunpack.c.l.b16 %v2577
        %v3424 = vunpack.c.l.b16 %v2579
        %v3425 = vunpack.c.l.b16 %v2581
        %v3426 = vunpack.c.l.b16 %v2583
        %v3427 = vunpack.c.l.b16 %v2585
        %v3428 = vunpack.c.l.b16 %v2587
        %v3429 = vunpack.c.l.b16 %v2589
        %v3430 = vunpack.c.l.b16 %v2591
        %v3431 = vunpack.c.l.b16 %v2593
        %v3432 = vunpack.c.l.b16 %v2595
        %v3433 = vunpack.c.l.b16 %v2597
        %v3434 = vunpack.c.l.b16 %v2599
        %v3435 = vunpack.c.l.b16 %v2601
        %v3436 = vunpack.c.l.b16 %v2603
        %v3437 = vunpack.c.l.b16 %v2605
        %v3438 = vunpack.c.l.b16 %v2607
        %v3439 = vunpack.c.l.b16 %v2609
        %v3440 = vunpack.c.l.b16 %v2611
        %v3441 = vunpack.c.l.b16 %v2613
        %v3442 = vunpack.c.l.b16 %v2615
        %v3443 = vunpack.c.l.b16 %v2617
        %v3444 = vunpack.c.l.b16 %v2619
        %v3445 = vunpack.c.l.b16 %v2621
        %v3446 = vunpack.c.l.b16 %v2623
        %v3447 = vunpack.c.l.b16 %v2625
        %v3448 = vunpack.c.l.b16 %v2627
        %v3449 = vunpack.c.l.b16 %v2629
        %v3450 = vunpack.c.l.b16 %v2631
        %v3451 = vunpack.c.l.b16 %v2633
        %v3452 = vunpack.c.l.b16 %v2635
        %v3453 = vpack.c.b16 %v3422, %v3421
        %v3454 = vpack.c.b16 %v3424, %v3423
        %v3455 = vpack.c.b16 %v3426, %v3425
        %v3456 = vpack.c.b16 %v3428, %v3427
        %v3457 = vpack.c.b16 %v3430, %v3429
        %v3458 = vpack.c.b16 %v3432, %v3431
        %v3459 = vpack.c.b16 %v3434, %v3433
        %v3460 = vpack.c.b16 %v3436, %v3435
        %v3461 = vpack.c.b16 %v3438, %v3437
        %v3462 = vpack.c.b16 %v3440, %v3439
        %v3463 = vpack.c.b16 %v3442, %v3441
        %v3464 = vpack.c.b16 %v3444, %v3443
        %v3465 = vpack.c.b16 %v3446, %v3445
        %v3466 = vpack.c.b16 %v3448, %v3447
        %v3467 = vpack.c.b16 %v3450, %v3449
        %v3468 = vpack.c.b16 %v3452, %v3451
        %v3501 = vunpack.c.l.b16 %v3373
        %v3502 = vunpack.c.l.b16 %v3374
        %v3503 = vunpack.c.l.b16 %v3375
        %v3504 = vunpack.c.l.b16 %v3376
        %v3505 = vunpack.c.l.b16 %v3377
        %v3506 = vunpack.c.l.b16 %v3378
        %v3507 = vunpack.c.l.b16 %v3379
        %v3508 = vunpack.c.l.b16 %v3380
        %v3509 = vunpack.c.l.b16 %v3381
        %v3510 = vunpack.c.l.b16 %v3382
        %v3511 = vunpack.c.l.b16 %v3383
        %v3512 = vunpack.c.l.b16 %v3384
        %v3513 = vunpack.c.l.b16 %v3385
        %v3514 = vunpack.c.l.b16 %v3386
        %v3515 = vunpack.c.l.b16 %v3387
        %v3516 = vunpack.c.l.b16 %v3388
        %v3517 = vpack.c.b16 %v3502, %v3501
        %v3518 = vpack.c.b16 %v3504, %v3503
        %v3519 = vpack.c.b16 %v3506, %v3505
        %v3520 = vpack.c.b16 %v3508, %v3507
        %v3521 = vpack.c.b16 %v3510, %v3509
        %v3522 = vpack.c.b16 %v3512, %v3511
        %v3523 = vpack.c.b16 %v3514, %v3513
        %v3524 = vpack.c.b16 %v3516, %v3515
        %3533 = vmatprep.subr.bf16.mxu0 0
        %3534 = vmatpush1.bf16.msra.mxu0 %v3524
        %3535 = vmatprep.subr.bf16.mxu0 0
        %3536 = vmatpush1.bf16.msra.mxu0 %v3523
        %3537 = vmatprep.subr.bf16.mxu0 0
        %3538 = vmatpush1.bf16.msra.mxu0 %v3522
        %3539 = vmatprep.subr.bf16.mxu0 0
        %3540 = vmatpush1.bf16.msra.mxu0 %v3521
        %3541 = vmatprep.subr.bf16.mxu0 0
        %3542 = vmatpush1.bf16.msra.mxu0 %v3520
        %3543 = vmatprep.subr.bf16.mxu0 0
        %3544 = vmatpush1.bf16.msra.mxu0 %v3519
        %3545 = vmatprep.subr.bf16.mxu0 0
        %3546 = vmatpush1.bf16.msra.mxu0 %v3518
        %3547 = vmatprep.subr.bf16.mxu0 0
        %3548 = vmatpush1.bf16.msra.mxu0 %v3517
        %3549 = vmatprep.subr.bf16.mxu0 0
        %3550 = vmatpush2.bf16.msra.mxu0 0
        %3551 = vmatprep.subr.bf16.mxu0 0
        %3552 = vmatpush2.bf16.msra.mxu0 0
        %3553 = vmatprep.subr.bf16.mxu0 0
        %3554 = vmatpush2.bf16.msra.mxu0 0
        %3555 = vmatprep.subr.bf16.mxu0 0
        %3556 = vmatpush2.bf16.msra.mxu0 0
        %3557 = vmatprep.subr.bf16.mxu0 0
        %3558 = vmatpush2.bf16.msra.mxu0 0
        %3559 = vmatprep.subr.bf16.mxu0 0
        %3560 = vmatpush2.bf16.msra.mxu0 0
        %3561 = vmatprep.subr.bf16.mxu0 0
        %3562 = vmatpush2.bf16.msra.mxu0 0
        %3563 = vmatprep.subr.bf16.mxu0 0
        %3564 = vmatpush2.bf16.msra.mxu0 0
        %3565 = vmatprep.mubr.bf16.mxu0 0
        %3566 = vmatmul.mubr.bf16.gmra.mxu0 %v3453
        %v3567 = vpop.f32.mrf.mxu0
        %v3568 = vadd.f32 0.0, %v3567
        %v3569 = vpop.f32.mrf.mxu0
        %v3570 = vpop.f32.mrf.mxu0
        %v3571 = vadd.f32 0.0, %v3570
        %v3572 = vpop.f32.mrf.mxu0
        %3573 = vmatprep.mubr.bf16.mxu0 0
        %3574 = vmatmul.mubr.bf16.gmra.mxu0 %v3454
        %v3575 = vpop.f32.mrf.mxu0
        %v3576 = vadd.f32 0.0, %v3575
        %v3577 = vpop.f32.mrf.mxu0
        %v3578 = vpop.f32.mrf.mxu0
        %v3579 = vadd.f32 0.0, %v3578
        %v3580 = vpop.f32.mrf.mxu0
        %3581 = vmatprep.mubr.bf16.mxu0 0
        %3582 = vmatmul.mubr.bf16.gmra.mxu0 %v3455
        %v3583 = vpop.f32.mrf.mxu0
        %v3584 = vadd.f32 0.0, %v3583
        %v3585 = vpop.f32.mrf.mxu0
        %v3586 = vpop.f32.mrf.mxu0
        %v3587 = vadd.f32 0.0, %v3586
        %v3588 = vpop.f32.mrf.mxu0
        %3589 = vmatprep.mubr.bf16.mxu0 0
        %3590 = vmatmul.mubr.bf16.gmra.mxu0 %v3456
        %v3591 = vpop.f32.mrf.mxu0
        %v3592 = vadd.f32 0.0, %v3591
        %v3593 = vpop.f32.mrf.mxu0
        %v3594 = vpop.f32.mrf.mxu0
        %v3595 = vadd.f32 0.0, %v3594
        %v3596 = vpop.f32.mrf.mxu0
        %3597 = vmatprep.mubr.bf16.mxu0 0
        %3598 = vmatmul.mubr.bf16.gmra.mxu0 %v3457
        %v3599 = vpop.f32.mrf.mxu0
        %v3600 = vadd.f32 0.0, %v3599
        %v3601 = vpop.f32.mrf.mxu0
        %v3602 = vpop.f32.mrf.mxu0
        %v3603 = vadd.f32 0.0, %v3602
        %v3604 = vpop.f32.mrf.mxu0
        %3605 = vmatprep.mubr.bf16.mxu0 0
        %3606 = vmatmul.mubr.bf16.gmra.mxu0 %v3458
        %v3607 = vpop.f32.mrf.mxu0
        %v3608 = vadd.f32 0.0, %v3607
        %v3609 = vpop.f32.mrf.mxu0
        %v3610 = vpop.f32.mrf.mxu0
        %v3611 = vadd.f32 0.0, %v3610
        %v3612 = vpop.f32.mrf.mxu0
        %3613 = vmatprep.mubr.bf16.mxu0 0
        %3614 = vmatmul.mubr.bf16.gmra.mxu0 %v3459
        %v3615 = vpop.f32.mrf.mxu0
        %v3616 = vadd.f32 0.0, %v3615
        %v3617 = vpop.f32.mrf.mxu0
        %v3618 = vpop.f32.mrf.mxu0
        %v3619 = vadd.f32 0.0, %v3618
        %v3620 = vpop.f32.mrf.mxu0
        %3621 = vmatprep.mubr.bf16.mxu0 0
        %3622 = vmatmul.mubr.bf16.gmra.mxu0 %v3460
        %v3623 = vpop.f32.mrf.mxu0
        %v3624 = vadd.f32 0.0, %v3623
        %v3625 = vpop.f32.mrf.mxu0
        %v3626 = vpop.f32.mrf.mxu0
        %v3627 = vadd.f32 0.0, %v3626
        %v3628 = vpop.f32.mrf.mxu0
        %3629 = vmatprep.mubr.bf16.mxu0 0
        %3630 = vmatmul.mubr.bf16.gmra.mxu0 %v3461
        %v3631 = vpop.f32.mrf.mxu0
        %v3632 = vadd.f32 0.0, %v3631
        %v3633 = vpop.f32.mrf.mxu0
        %v3634 = vpop.f32.mrf.mxu0
        %v3635 = vadd.f32 0.0, %v3634
        %v3636 = vpop.f32.mrf.mxu0
        %3637 = vmatprep.mubr.bf16.mxu0 0
        %3638 = vmatmul.mubr.bf16.gmra.mxu0 %v3462
        %v3639 = vpop.f32.mrf.mxu0
        %v3640 = vadd.f32 0.0, %v3639
        %v3641 = vpop.f32.mrf.mxu0
        %v3642 = vpop.f32.mrf.mxu0
        %v3643 = vadd.f32 0.0, %v3642
        %v3644 = vpop.f32.mrf.mxu0
        %3645 = vmatprep.mubr.bf16.mxu0 0
        %3646 = vmatmul.mubr.bf16.gmra.mxu0 %v3463
        %v3647 = vpop.f32.mrf.mxu0
        %v3648 = vadd.f32 0.0, %v3647
        %v3649 = vpop.f32.mrf.mxu0
        %v3650 = vpop.f32.mrf.mxu0
        %v3651 = vadd.f32 0.0, %v3650
        %v3652 = vpop.f32.mrf.mxu0
        %3653 = vmatprep.mubr.bf16.mxu0 0
        %3654 = vmatmul.mubr.bf16.gmra.mxu0 %v3464
        %v3655 = vpop.f32.mrf.mxu0
        %v3656 = vadd.f32 0.0, %v3655
        %v3657 = vpop.f32.mrf.mxu0
        %v3658 = vpop.f32.mrf.mxu0
        %v3659 = vadd.f32 0.0, %v3658
        %v3660 = vpop.f32.mrf.mxu0
        %3661 = vmatprep.mubr.bf16.mxu0 0
        %3662 = vmatmul.mubr.bf16.gmra.mxu0 %v3465
        %v3663 = vpop.f32.mrf.mxu0
        %v3664 = vadd.f32 0.0, %v3663
        %v3665 = vpop.f32.mrf.mxu0
        %v3666 = vpop.f32.mrf.mxu0
        %v3667 = vadd.f32 0.0, %v3666
        %v3668 = vpop.f32.mrf.mxu0
        %3669 = vmatprep.mubr.bf16.mxu0 0
        %3670 = vmatmul.mubr.bf16.gmra.mxu0 %v3466
        %v3671 = vpop.f32.mrf.mxu0
        %v3672 = vadd.f32 0.0, %v3671
        %v3673 = vpop.f32.mrf.mxu0
        %v3674 = vpop.f32.mrf.mxu0
        %v3675 = vadd.f32 0.0, %v3674
        %v3676 = vpop.f32.mrf.mxu0
        %3677 = vmatprep.mubr.bf16.mxu0 0
        %3678 = vmatmul.mubr.bf16.gmra.mxu0 %v3467
        %v3679 = vpop.f32.mrf.mxu0
        %v3680 = vadd.f32 0.0, %v3679
        %v3681 = vpop.f32.mrf.mxu0
        %v3682 = vpop.f32.mrf.mxu0
        %v3683 = vadd.f32 0.0, %v3682
        %v3684 = vpop.f32.mrf.mxu0
        %3685 = vmatprep.mubr.bf16.mxu0 0
        %3686 = vmatmul.mubr.bf16.gmra.mxu0 %v3468
        %v3687 = vpop.f32.mrf.mxu0
        %v3688 = vadd.f32 0.0, %v3687
        %v3689 = vpop.f32.mrf.mxu0
        %v3690 = vpop.f32.mrf.mxu0
        %v3691 = vadd.f32 0.0, %v3690
        %v3692 = vpop.f32.mrf.mxu0
        %3693 = vdwg.mxu0
        %v3694 = vadd.f32 %v3341, %v3568
        %v3695 = vadd.f32 %v3342, %v3571
        %v3696 = vadd.f32 %v3343, %v3576
        %v3697 = vadd.f32 %v3344, %v3579
        %v3698 = vadd.f32 %v3345, %v3584
        %v3699 = vadd.f32 %v3346, %v3587
        %v3700 = vadd.f32 %v3347, %v3592
        %v3701 = vadd.f32 %v3348, %v3595
        %v3702 = vadd.f32 %v3349, %v3600
        %v3703 = vadd.f32 %v3350, %v3603
        %v3704 = vadd.f32 %v3351, %v3608
        %v3705 = vadd.f32 %v3352, %v3611
        %v3706 = vadd.f32 %v3353, %v3616
        %v3707 = vadd.f32 %v3354, %v3619
        %v3708 = vadd.f32 %v3355, %v3624
        %v3709 = vadd.f32 %v3356, %v3627
        %v3710 = vadd.f32 %v3357, %v3632
        %v3711 = vadd.f32 %v3358, %v3635
        %v3712 = vadd.f32 %v3359, %v3640
        %v3713 = vadd.f32 %v3360, %v3643
        %v3714 = vadd.f32 %v3361, %v3648
        %v3715 = vadd.f32 %v3362, %v3651
        %v3716 = vadd.f32 %v3363, %v3656
        %v3717 = vadd.f32 %v3364, %v3659
        %v3718 = vadd.f32 %v3365, %v3664
        %v3719 = vadd.f32 %v3366, %v3667
        %v3720 = vadd.f32 %v3367, %v3672
        %v3721 = vadd.f32 %v3368, %v3675
        %v3722 = vadd.f32 %v3369, %v3680
        %v3723 = vadd.f32 %v3370, %v3683
        %v3724 = vadd.f32 %v3371, %v3688
        %v3725 = vadd.f32 %v3372, %v3691
        %v3726 = vld [vmem:[%s611 + $0x4] sm:$0xf]
        %v3727 = vld [vmem:[%s611 + $0x8] sm:$0x1]
        %v3728 = vld [vmem:[%s611 + $0x10] sm:$0xf]
        %v3729 = vld [vmem:[%s611 + $0x14] sm:$0x1]
        %v3730 = vld [vmem:[%s611 + $0x1c] sm:$0xf]
        %v3731 = vld [vmem:[%s611 + $0x20] sm:$0x1]
        %v3732 = vld [vmem:[%s611 + $0x28] sm:$0xf]
        %v3733 = vld [vmem:[%s611 + $0x2c] sm:$0x1]
        %v3734 = vld [vmem:[%s611 + $0x34] sm:$0xf]
        %v3735 = vld [vmem:[%s611 + $0x38] sm:$0x1]
        %v3736 = vld [vmem:[%s611 + $0x40] sm:$0xf]
        %v3737 = vld [vmem:[%s611 + $0x44] sm:$0x1]
        %v3738 = vld [vmem:[%s611 + $0x4c] sm:$0xf]
        %v3739 = vld [vmem:[%s611 + $0x50] sm:$0x1]
        %v3740 = vld [vmem:[%s611 + $0x58] sm:$0xf]
        %v3741 = vld [vmem:[%s611 + $0x5c] sm:$0x1]
        %v3742 = vld [vmem:[%s611 + $0x7c] sm:$0xf]
        %v3743 = vld [vmem:[%s611 + $0x80] sm:$0x1]
        %v3744 = vld [vmem:[%s611 + $0x88] sm:$0xf]
        %v3745 = vld [vmem:[%s611 + $0x8c] sm:$0x1]
        %v3746 = vld [vmem:[%s611 + $0x94] sm:$0xf]
        %v3747 = vld [vmem:[%s611 + $0x98] sm:$0x1]
        %v3748 = vld [vmem:[%s611 + $0xa0] sm:$0xf]
        %v3749 = vld [vmem:[%s611 + $0xa4] sm:$0x1]
        %v3750 = vld [vmem:[%s611 + $0xac] sm:$0xf]
        %v3751 = vld [vmem:[%s611 + $0xb0] sm:$0x1]
        %v3752 = vld [vmem:[%s611 + $0xb8] sm:$0xf]
        %v3753 = vld [vmem:[%s611 + $0xbc] sm:$0x1]
        %v3754 = vld [vmem:[%s611 + $0xc4] sm:$0xf]
        %v3755 = vld [vmem:[%s611 + $0xc8] sm:$0x1]
        %v3756 = vld [vmem:[%s611 + $0xd0] sm:$0xf]
        %v3757 = vld [vmem:[%s611 + $0xd4] sm:$0x1]
        %v3758 = vld [vmem:[%s611 + $0xf4] sm:$0xf]
        %v3759 = vld [vmem:[%s611 + $0xf8] sm:$0x1]
        %v3760 = vld [vmem:[%s611 + $0x100] sm:$0xf]
        %v3761 = vld [vmem:[%s611 + $0x104] sm:$0x1]
        %v3762 = vld [vmem:[%s611 + $0x10c] sm:$0xf]
        %v3763 = vld [vmem:[%s611 + $0x110] sm:$0x1]
        %v3764 = vld [vmem:[%s611 + $0x118] sm:$0xf]
        %v3765 = vld [vmem:[%s611 + $0x11c] sm:$0x1]
        %v3766 = vld [vmem:[%s611 + $0x124] sm:$0xf]
        %v3767 = vld [vmem:[%s611 + $0x128] sm:$0x1]
        %v3768 = vld [vmem:[%s611 + $0x130] sm:$0xf]
        %v3769 = vld [vmem:[%s611 + $0x134] sm:$0x1]
        %v3770 = vld [vmem:[%s611 + $0x13c] sm:$0xf]
        %v3771 = vld [vmem:[%s611 + $0x140] sm:$0x1]
        %v3772 = vld [vmem:[%s611 + $0x148] sm:$0xf]
        %v3773 = vld [vmem:[%s611 + $0x14c] sm:$0x1]
        %v3774 = vld [vmem:[%s611 + $0x16c] sm:$0xf]
        %v3775 = vld [vmem:[%s611 + $0x170] sm:$0x1]
        %v3776 = vld [vmem:[%s611 + $0x178] sm:$0xf]
        %v3777 = vld [vmem:[%s611 + $0x17c] sm:$0x1]
        %v3778 = vld [vmem:[%s611 + $0x184] sm:$0xf]
        %v3779 = vld [vmem:[%s611 + $0x188] sm:$0x1]
        %v3780 = vld [vmem:[%s611 + $0x190] sm:$0xf]
        %v3781 = vld [vmem:[%s611 + $0x194] sm:$0x1]
        %v3782 = vld [vmem:[%s611 + $0x19c] sm:$0xf]
        %v3783 = vld [vmem:[%s611 + $0x1a0] sm:$0x1]
        %v3784 = vld [vmem:[%s611 + $0x1a8] sm:$0xf]
        %v3785 = vld [vmem:[%s611 + $0x1ac] sm:$0x1]
        %v3786 = vld [vmem:[%s611 + $0x1b4] sm:$0xf]
        %v3787 = vld [vmem:[%s611 + $0x1b8] sm:$0x1]
        %v3788 = vld [vmem:[%s611 + $0x1c0] sm:$0xf]
        %v3789 = vld [vmem:[%s611 + $0x1c4] sm:$0x1]
        %v3791 = vshrl.u32 %v3726, 16
        %v3793 = vrot.slane %v3791, 4
        %v3794 = vshll.u32 %v3726, 16
        %v3796 = vrot.slane %v3794, 5
        %v3797 = vor.u32 %v3793, %v3796
        %v3798 = vrot.slane %v3797, 4
        %v3800 = vshll.u32 %v3727, 16
        %v3802 = vrot.slane %v3800, 5
        %v3803 = vsel %vm1802, %v3798, %v3802
        %v3805 = vshrl.u32 %v3728, 16
        %v3807 = vrot.slane %v3805, 4
        %v3808 = vshll.u32 %v3728, 16
        %v3810 = vrot.slane %v3808, 5
        %v3811 = vor.u32 %v3807, %v3810
        %v3812 = vrot.slane %v3811, 4
        %v3814 = vshll.u32 %v3729, 16
        %v3816 = vrot.slane %v3814, 5
        %v3817 = vsel %vm1802, %v3812, %v3816
        %v3819 = vshrl.u32 %v3730, 16
        %v3821 = vrot.slane %v3819, 4
        %v3822 = vshll.u32 %v3730, 16
        %v3824 = vrot.slane %v3822, 5
        %v3825 = vor.u32 %v3821, %v3824
        %v3826 = vrot.slane %v3825, 4
        %v3828 = vshll.u32 %v3731, 16
        %v3830 = vrot.slane %v3828, 5
        %v3831 = vsel %vm1802, %v3826, %v3830
        %v3833 = vshrl.u32 %v3732, 16
        %v3835 = vrot.slane %v3833, 4
        %v3836 = vshll.u32 %v3732, 16
        %v3838 = vrot.slane %v3836, 5
        %v3839 = vor.u32 %v3835, %v3838
        %v3840 = vrot.slane %v3839, 4
        %v3842 = vshll.u32 %v3733, 16
        %v3844 = vrot.slane %v3842, 5
        %v3845 = vsel %vm1802, %v3840, %v3844
        %v3847 = vshrl.u32 %v3734, 16
        %v3849 = vrot.slane %v3847, 4
        %v3850 = vshll.u32 %v3734, 16
        %v3852 = vrot.slane %v3850, 5
        %v3853 = vor.u32 %v3849, %v3852
        %v3854 = vrot.slane %v3853, 4
        %v3856 = vshll.u32 %v3735, 16
        %v3858 = vrot.slane %v3856, 5
        %v3859 = vsel %vm1802, %v3854, %v3858
        %v3861 = vshrl.u32 %v3736, 16
        %v3863 = vrot.slane %v3861, 4
        %v3864 = vshll.u32 %v3736, 16
        %v3866 = vrot.slane %v3864, 5
        %v3867 = vor.u32 %v3863, %v3866
        %v3868 = vrot.slane %v3867, 4
        %v3870 = vshll.u32 %v3737, 16
        %v3872 = vrot.slane %v3870, 5
        %v3873 = vsel %vm1802, %v3868, %v3872
        %v3875 = vshrl.u32 %v3738, 16
        %v3877 = vrot.slane %v3875, 4
        %v3878 = vshll.u32 %v3738, 16
        %v3880 = vrot.slane %v3878, 5
        %v3881 = vor.u32 %v3877, %v3880
        %v3882 = vrot.slane %v3881, 4
        %v3884 = vshll.u32 %v3739, 16
        %v3886 = vrot.slane %v3884, 5
        %v3887 = vsel %vm1802, %v3882, %v3886
        %v3889 = vshrl.u32 %v3740, 16
        %v3891 = vrot.slane %v3889, 4
        %v3892 = vshll.u32 %v3740, 16
        %v3894 = vrot.slane %v3892, 5
        %v3895 = vor.u32 %v3891, %v3894
        %v3896 = vrot.slane %v3895, 4
        %v3898 = vshll.u32 %v3741, 16
        %v3900 = vrot.slane %v3898, 5
        %v3901 = vsel %vm1802, %v3896, %v3900
        %v3903 = vshrl.u32 %v3742, 16
        %v3905 = vrot.slane %v3903, 4
        %v3906 = vshll.u32 %v3742, 16
        %v3908 = vrot.slane %v3906, 5
        %v3909 = vor.u32 %v3905, %v3908
        %v3910 = vrot.slane %v3909, 4
        %v3912 = vshll.u32 %v3743, 16
        %v3914 = vrot.slane %v3912, 5
        %v3915 = vsel %vm1802, %v3910, %v3914
        %v3917 = vshrl.u32 %v3744, 16
        %v3919 = vrot.slane %v3917, 4
        %v3920 = vshll.u32 %v3744, 16
        %v3922 = vrot.slane %v3920, 5
        %v3923 = vor.u32 %v3919, %v3922
        %v3924 = vrot.slane %v3923, 4
        %v3926 = vshll.u32 %v3745, 16
        %v3928 = vrot.slane %v3926, 5
        %v3929 = vsel %vm1802, %v3924, %v3928
        %v3931 = vshrl.u32 %v3746, 16
        %v3933 = vrot.slane %v3931, 4
        %v3934 = vshll.u32 %v3746, 16
        %v3936 = vrot.slane %v3934, 5
        %v3937 = vor.u32 %v3933, %v3936
        %v3938 = vrot.slane %v3937, 4
        %v3940 = vshll.u32 %v3747, 16
        %v3942 = vrot.slane %v3940, 5
        %v3943 = vsel %vm1802, %v3938, %v3942
        %v3945 = vshrl.u32 %v3748, 16
        %v3947 = vrot.slane %v3945, 4
        %v3948 = vshll.u32 %v3748, 16
        %v3950 = vrot.slane %v3948, 5
        %v3951 = vor.u32 %v3947, %v3950
        %v3952 = vrot.slane %v3951, 4
        %v3954 = vshll.u32 %v3749, 16
        %v3956 = vrot.slane %v3954, 5
        %v3957 = vsel %vm1802, %v3952, %v3956
        %v3959 = vshrl.u32 %v3750, 16
        %v3961 = vrot.slane %v3959, 4
        %v3962 = vshll.u32 %v3750, 16
        %v3964 = vrot.slane %v3962, 5
        %v3965 = vor.u32 %v3961, %v3964
        %v3966 = vrot.slane %v3965, 4
        %v3968 = vshll.u32 %v3751, 16
        %v3970 = vrot.slane %v3968, 5
        %v3971 = vsel %vm1802, %v3966, %v3970
        %v3973 = vshrl.u32 %v3752, 16
        %v3975 = vrot.slane %v3973, 4
        %v3976 = vshll.u32 %v3752, 16
        %v3978 = vrot.slane %v3976, 5
        %v3979 = vor.u32 %v3975, %v3978
        %v3980 = vrot.slane %v3979, 4
        %v3982 = vshll.u32 %v3753, 16
        %v3984 = vrot.slane %v3982, 5
        %v3985 = vsel %vm1802, %v3980, %v3984
        %v3987 = vshrl.u32 %v3754, 16
        %v3989 = vrot.slane %v3987, 4
        %v3990 = vshll.u32 %v3754, 16
        %v3992 = vrot.slane %v3990, 5
        %v3993 = vor.u32 %v3989, %v3992
        %v3994 = vrot.slane %v3993, 4
        %v3996 = vshll.u32 %v3755, 16
        %v3998 = vrot.slane %v3996, 5
        %v3999 = vsel %vm1802, %v3994, %v3998
        %v4001 = vshrl.u32 %v3756, 16
        %v4003 = vrot.slane %v4001, 4
        %v4004 = vshll.u32 %v3756, 16
        %v4006 = vrot.slane %v4004, 5
        %v4007 = vor.u32 %v4003, %v4006
        %v4008 = vrot.slane %v4007, 4
        %v4010 = vshll.u32 %v3757, 16
        %v4012 = vrot.slane %v4010, 5
        %v4013 = vsel %vm1802, %v4008, %v4012
        %v4015 = vshrl.u32 %v3758, 16
        %v4017 = vrot.slane %v4015, 4
        %v4018 = vshll.u32 %v3758, 16
        %v4020 = vrot.slane %v4018, 5
        %v4021 = vor.u32 %v4017, %v4020
        %v4022 = vrot.slane %v4021, 4
        %v4024 = vshll.u32 %v3759, 16
        %v4026 = vrot.slane %v4024, 5
        %v4027 = vsel %vm1802, %v4022, %v4026
        %v4029 = vshrl.u32 %v3760, 16
        %v4031 = vrot.slane %v4029, 4
        %v4032 = vshll.u32 %v3760, 16
        %v4034 = vrot.slane %v4032, 5
        %v4035 = vor.u32 %v4031, %v4034
        %v4036 = vrot.slane %v4035, 4
        %v4038 = vshll.u32 %v3761, 16
        %v4040 = vrot.slane %v4038, 5
        %v4041 = vsel %vm1802, %v4036, %v4040
        %v4043 = vshrl.u32 %v3762, 16
        %v4045 = vrot.slane %v4043, 4
        %v4046 = vshll.u32 %v3762, 16
        %v4048 = vrot.slane %v4046, 5
        %v4049 = vor.u32 %v4045, %v4048
        %v4050 = vrot.slane %v4049, 4
        %v4052 = vshll.u32 %v3763, 16
        %v4054 = vrot.slane %v4052, 5
        %v4055 = vsel %vm1802, %v4050, %v4054
        %v4057 = vshrl.u32 %v3764, 16
        %v4059 = vrot.slane %v4057, 4
        %v4060 = vshll.u32 %v3764, 16
        %v4062 = vrot.slane %v4060, 5
        %v4063 = vor.u32 %v4059, %v4062
        %v4064 = vrot.slane %v4063, 4
        %v4066 = vshll.u32 %v3765, 16
        %v4068 = vrot.slane %v4066, 5
        %v4069 = vsel %vm1802, %v4064, %v4068
        %v4071 = vshrl.u32 %v3766, 16
        %v4073 = vrot.slane %v4071, 4
        %v4074 = vshll.u32 %v3766, 16
        %v4076 = vrot.slane %v4074, 5
        %v4077 = vor.u32 %v4073, %v4076
        %v4078 = vrot.slane %v4077, 4
        %v4080 = vshll.u32 %v3767, 16
        %v4082 = vrot.slane %v4080, 5
        %v4083 = vsel %vm1802, %v4078, %v4082
        %v4085 = vshrl.u32 %v3768, 16
        %v4087 = vrot.slane %v4085, 4
        %v4088 = vshll.u32 %v3768, 16
        %v4090 = vrot.slane %v4088, 5
        %v4091 = vor.u32 %v4087, %v4090
        %v4092 = vrot.slane %v4091, 4
        %v4094 = vshll.u32 %v3769, 16
        %v4096 = vrot.slane %v4094, 5
        %v4097 = vsel %vm1802, %v4092, %v4096
        %v4099 = vshrl.u32 %v3770, 16
        %v4101 = vrot.slane %v4099, 4
        %v4102 = vshll.u32 %v3770, 16
        %v4104 = vrot.slane %v4102, 5
        %v4105 = vor.u32 %v4101, %v4104
        %v4106 = vrot.slane %v4105, 4
        %v4108 = vshll.u32 %v3771, 16
        %v4110 = vrot.slane %v4108, 5
        %v4111 = vsel %vm1802, %v4106, %v4110
        %v4113 = vshrl.u32 %v3772, 16
        %v4115 = vrot.slane %v4113, 4
        %v4116 = vshll.u32 %v3772, 16
        %v4118 = vrot.slane %v4116, 5
        %v4119 = vor.u32 %v4115, %v4118
        %v4120 = vrot.slane %v4119, 4
        %v4122 = vshll.u32 %v3773, 16
        %v4124 = vrot.slane %v4122, 5
        %v4125 = vsel %vm1802, %v4120, %v4124
        %v4127 = vshrl.u32 %v3774, 16
        %v4129 = vrot.slane %v4127, 4
        %v4130 = vshll.u32 %v3774, 16
        %v4132 = vrot.slane %v4130, 5
        %v4133 = vor.u32 %v4129, %v4132
        %v4134 = vrot.slane %v4133, 4
        %v4136 = vshll.u32 %v3775, 16
        %v4138 = vrot.slane %v4136, 5
        %v4139 = vsel %vm1802, %v4134, %v4138
        %v4141 = vshrl.u32 %v3776, 16
        %v4143 = vrot.slane %v4141, 4
        %v4144 = vshll.u32 %v3776, 16
        %v4146 = vrot.slane %v4144, 5
        %v4147 = vor.u32 %v4143, %v4146
        %v4148 = vrot.slane %v4147, 4
        %v4150 = vshll.u32 %v3777, 16
        %v4152 = vrot.slane %v4150, 5
        %v4153 = vsel %vm1802, %v4148, %v4152
        %v4155 = vshrl.u32 %v3778, 16
        %v4157 = vrot.slane %v4155, 4
        %v4158 = vshll.u32 %v3778, 16
        %v4160 = vrot.slane %v4158, 5
        %v4161 = vor.u32 %v4157, %v4160
        %v4162 = vrot.slane %v4161, 4
        %v4164 = vshll.u32 %v3779, 16
        %v4166 = vrot.slane %v4164, 5
        %v4167 = vsel %vm1802, %v4162, %v4166
        %v4169 = vshrl.u32 %v3780, 16
        %v4171 = vrot.slane %v4169, 4
        %v4172 = vshll.u32 %v3780, 16
        %v4174 = vrot.slane %v4172, 5
        %v4175 = vor.u32 %v4171, %v4174
        %v4176 = vrot.slane %v4175, 4
        %v4178 = vshll.u32 %v3781, 16
        %v4180 = vrot.slane %v4178, 5
        %v4181 = vsel %vm1802, %v4176, %v4180
        %v4183 = vshrl.u32 %v3782, 16
        %v4185 = vrot.slane %v4183, 4
        %v4186 = vshll.u32 %v3782, 16
        %v4188 = vrot.slane %v4186, 5
        %v4189 = vor.u32 %v4185, %v4188
        %v4190 = vrot.slane %v4189, 4
        %v4192 = vshll.u32 %v3783, 16
        %v4194 = vrot.slane %v4192, 5
        %v4195 = vsel %vm1802, %v4190, %v4194
        %v4197 = vshrl.u32 %v3784, 16
        %v4199 = vrot.slane %v4197, 4
        %v4200 = vshll.u32 %v3784, 16
        %v4202 = vrot.slane %v4200, 5
        %v4203 = vor.u32 %v4199, %v4202
        %v4204 = vrot.slane %v4203, 4
        %v4206 = vshll.u32 %v3785, 16
        %v4208 = vrot.slane %v4206, 5
        %v4209 = vsel %vm1802, %v4204, %v4208
        %v4211 = vshrl.u32 %v3786, 16
        %v4213 = vrot.slane %v4211, 4
        %v4214 = vshll.u32 %v3786, 16
        %v4216 = vrot.slane %v4214, 5
        %v4217 = vor.u32 %v4213, %v4216
        %v4218 = vrot.slane %v4217, 4
        %v4220 = vshll.u32 %v3787, 16
        %v4222 = vrot.slane %v4220, 5
        %v4223 = vsel %vm1802, %v4218, %v4222
        %v4225 = vshrl.u32 %v3788, 16
        %v4227 = vrot.slane %v4225, 4
        %v4228 = vshll.u32 %v3788, 16
        %v4230 = vrot.slane %v4228, 5
        %v4231 = vor.u32 %v4227, %v4230
        %v4232 = vrot.slane %v4231, 4
        %v4234 = vshll.u32 %v3789, 16
        %v4236 = vrot.slane %v4234, 5
        %v4237 = vsel %vm1802, %v4232, %v4236
        %v4238 = vld [vmem:[#allocation6 + $0x140] sm:$0xf]
        %v4239 = vld [vmem:[#allocation6 + $0x144] sm:$0xf]
        %v4240 = vld [vmem:[#allocation6 + $0x148] sm:$0xf]
        %v4241 = vld [vmem:[#allocation6 + $0x14c] sm:$0xf]
        %v4242 = vld [vmem:[#allocation6 + $0x150] sm:$0xf]
        %v4243 = vld [vmem:[#allocation6 + $0x154] sm:$0xf]
        %v4244 = vld [vmem:[#allocation6 + $0x158] sm:$0xf]
        %v4245 = vld [vmem:[#allocation6 + $0x15c] sm:$0xf]
        %v4246 = vld [vmem:[#allocation6 + $0x160] sm:$0xf]
        %v4247 = vld [vmem:[#allocation6 + $0x164] sm:$0xf]
        %v4248 = vld [vmem:[#allocation6 + $0x168] sm:$0xf]
        %v4249 = vld [vmem:[#allocation6 + $0x16c] sm:$0xf]
        %v4250 = vld [vmem:[#allocation6 + $0x170] sm:$0xf]
        %v4251 = vld [vmem:[#allocation6 + $0x174] sm:$0xf]
        %v4252 = vld [vmem:[#allocation6 + $0x178] sm:$0xf]
        %v4253 = vld [vmem:[#allocation6 + $0x17c] sm:$0xf]
        %v4254 = vunpack.c.l.b16 %v3803
        %v4255 = vunpack.c.l.b16 %v3817
        %v4256 = vunpack.c.l.b16 %v3831
        %v4257 = vunpack.c.l.b16 %v3845
        %v4258 = vunpack.c.l.b16 %v3859
        %v4259 = vunpack.c.l.b16 %v3873
        %v4260 = vunpack.c.l.b16 %v3887
        %v4261 = vunpack.c.l.b16 %v3901
        %v4262 = vunpack.c.l.b16 %v3915
        %v4263 = vunpack.c.l.b16 %v3929
        %v4264 = vunpack.c.l.b16 %v3943
        %v4265 = vunpack.c.l.b16 %v3957
        %v4266 = vunpack.c.l.b16 %v3971
        %v4267 = vunpack.c.l.b16 %v3985
        %v4268 = vunpack.c.l.b16 %v3999
        %v4269 = vunpack.c.l.b16 %v4013
        %v4270 = vunpack.c.l.b16 %v4027
        %v4271 = vunpack.c.l.b16 %v4041
        %v4272 = vunpack.c.l.b16 %v4055
        %v4273 = vunpack.c.l.b16 %v4069
        %v4274 = vunpack.c.l.b16 %v4083
        %v4275 = vunpack.c.l.b16 %v4097
        %v4276 = vunpack.c.l.b16 %v4111
        %v4277 = vunpack.c.l.b16 %v4125
        %v4278 = vunpack.c.l.b16 %v4139
        %v4279 = vunpack.c.l.b16 %v4153
        %v4280 = vunpack.c.l.b16 %v4167
        %v4281 = vunpack.c.l.b16 %v4181
        %v4282 = vunpack.c.l.b16 %v4195
        %v4283 = vunpack.c.l.b16 %v4209
        %v4284 = vunpack.c.l.b16 %v4223
        %v4285 = vunpack.c.l.b16 %v4237
        %v4286 = vpack.c.b16 %v4255, %v4254
        %v4287 = vpack.c.b16 %v4257, %v4256
        %v4288 = vpack.c.b16 %v4259, %v4258
        %v4289 = vpack.c.b16 %v4261, %v4260
        %v4290 = vpack.c.b16 %v4263, %v4262
        %v4291 = vpack.c.b16 %v4265, %v4264
        %v4292 = vpack.c.b16 %v4267, %v4266
        %v4293 = vpack.c.b16 %v4269, %v4268
        %v4294 = vpack.c.b16 %v4271, %v4270
        %v4295 = vpack.c.b16 %v4273, %v4272
        %v4296 = vpack.c.b16 %v4275, %v4274
        %v4297 = vpack.c.b16 %v4277, %v4276
        %v4298 = vpack.c.b16 %v4279, %v4278
        %v4299 = vpack.c.b16 %v4281, %v4280
        %v4300 = vpack.c.b16 %v4283, %v4282
        %v4301 = vpack.c.b16 %v4285, %v4284
        %v4334 = vunpack.c.l.b16 %v4238
        %v4335 = vunpack.c.l.b16 %v4239
        %v4336 = vunpack.c.l.b16 %v4240
        %v4337 = vunpack.c.l.b16 %v4241
        %v4338 = vunpack.c.l.b16 %v4242
        %v4339 = vunpack.c.l.b16 %v4243
        %v4340 = vunpack.c.l.b16 %v4244
        %v4341 = vunpack.c.l.b16 %v4245
        %v4342 = vunpack.c.l.b16 %v4246
        %v4343 = vunpack.c.l.b16 %v4247
        %v4344 = vunpack.c.l.b16 %v4248
        %v4345 = vunpack.c.l.b16 %v4249
        %v4346 = vunpack.c.l.b16 %v4250
        %v4347 = vunpack.c.l.b16 %v4251
        %v4348 = vunpack.c.l.b16 %v4252
        %v4349 = vunpack.c.l.b16 %v4253
        %v4350 = vpack.c.b16 %v4335, %v4334
        %v4351 = vpack.c.b16 %v4337, %v4336
        %v4352 = vpack.c.b16 %v4339, %v4338
        %v4353 = vpack.c.b16 %v4341, %v4340
        %v4354 = vpack.c.b16 %v4343, %v4342
        %v4355 = vpack.c.b16 %v4345, %v4344
        %v4356 = vpack.c.b16 %v4347, %v4346
        %v4357 = vpack.c.b16 %v4349, %v4348
        %4366 = vmatprep.subr.bf16.mxu0 0
        %4367 = vmatpush1.bf16.msra.mxu0 %v4357
        %4368 = vmatprep.subr.bf16.mxu0 0
        %4369 = vmatpush1.bf16.msra.mxu0 %v4356
        %4370 = vmatprep.subr.bf16.mxu0 0
        %4371 = vmatpush1.bf16.msra.mxu0 %v4355
        %4372 = vmatprep.subr.bf16.mxu0 0
        %4373 = vmatpush1.bf16.msra.mxu0 %v4354
        %4374 = vmatprep.subr.bf16.mxu0 0
        %4375 = vmatpush1.bf16.msra.mxu0 %v4353
        %4376 = vmatprep.subr.bf16.mxu0 0
        %4377 = vmatpush1.bf16.msra.mxu0 %v4352
        %4378 = vmatprep.subr.bf16.mxu0 0
        %4379 = vmatpush1.bf16.msra.mxu0 %v4351
        %4380 = vmatprep.subr.bf16.mxu0 0
        %4381 = vmatpush1.bf16.msra.mxu0 %v4350
        %4382 = vmatprep.subr.bf16.mxu0 0
        %4383 = vmatpush2.bf16.msra.mxu0 0
        %4384 = vmatprep.subr.bf16.mxu0 0
        %4385 = vmatpush2.bf16.msra.mxu0 0
        %4386 = vmatprep.subr.bf16.mxu0 0
        %4387 = vmatpush2.bf16.msra.mxu0 0
        %4388 = vmatprep.subr.bf16.mxu0 0
        %4389 = vmatpush2.bf16.msra.mxu0 0
        %4390 = vmatprep.subr.bf16.mxu0 0
        %4391 = vmatpush2.bf16.msra.mxu0 0
        %4392 = vmatprep.subr.bf16.mxu0 0
        %4393 = vmatpush2.bf16.msra.mxu0 0
        %4394 = vmatprep.subr.bf16.mxu0 0
        %4395 = vmatpush2.bf16.msra.mxu0 0
        %4396 = vmatprep.subr.bf16.mxu0 0
        %4397 = vmatpush2.bf16.msra.mxu0 0
        %4398 = vmatprep.mubr.bf16.mxu0 0
        %4399 = vmatmul.mubr.bf16.gmra.mxu0 %v4286
        %v4400 = vpop.f32.mrf.mxu0
        %v4401 = vadd.f32 0.0, %v4400
        %v4402 = vpop.f32.mrf.mxu0
        %v4403 = vpop.f32.mrf.mxu0
        %v4404 = vadd.f32 0.0, %v4403
        %v4405 = vpop.f32.mrf.mxu0
        %4406 = vmatprep.mubr.bf16.mxu0 0
        %4407 = vmatmul.mubr.bf16.gmra.mxu0 %v4287
        %v4408 = vpop.f32.mrf.mxu0
        %v4409 = vadd.f32 0.0, %v4408
        %v4410 = vpop.f32.mrf.mxu0
        %v4411 = vpop.f32.mrf.mxu0
        %v4412 = vadd.f32 0.0, %v4411
        %v4413 = vpop.f32.mrf.mxu0
        %4414 = vmatprep.mubr.bf16.mxu0 0
        %4415 = vmatmul.mubr.bf16.gmra.mxu0 %v4288
        %v4416 = vpop.f32.mrf.mxu0
        %v4417 = vadd.f32 0.0, %v4416
        %v4418 = vpop.f32.mrf.mxu0
        %v4419 = vpop.f32.mrf.mxu0
        %v4420 = vadd.f32 0.0, %v4419
        %v4421 = vpop.f32.mrf.mxu0
        %4422 = vmatprep.mubr.bf16.mxu0 0
        %4423 = vmatmul.mubr.bf16.gmra.mxu0 %v4289
        %v4424 = vpop.f32.mrf.mxu0
        %v4425 = vadd.f32 0.0, %v4424
        %v4426 = vpop.f32.mrf.mxu0
        %v4427 = vpop.f32.mrf.mxu0
        %v4428 = vadd.f32 0.0, %v4427
        %v4429 = vpop.f32.mrf.mxu0
        %4430 = vmatprep.mubr.bf16.mxu0 0
        %4431 = vmatmul.mubr.bf16.gmra.mxu0 %v4290
        %v4432 = vpop.f32.mrf.mxu0
        %v4433 = vadd.f32 0.0, %v4432
        %v4434 = vpop.f32.mrf.mxu0
        %v4435 = vpop.f32.mrf.mxu0
        %v4436 = vadd.f32 0.0, %v4435
        %v4437 = vpop.f32.mrf.mxu0
        %4438 = vmatprep.mubr.bf16.mxu0 0
        %4439 = vmatmul.mubr.bf16.gmra.mxu0 %v4291
        %v4440 = vpop.f32.mrf.mxu0
        %v4441 = vadd.f32 0.0, %v4440
        %v4442 = vpop.f32.mrf.mxu0
        %v4443 = vpop.f32.mrf.mxu0
        %v4444 = vadd.f32 0.0, %v4443
        %v4445 = vpop.f32.mrf.mxu0
        %4446 = vmatprep.mubr.bf16.mxu0 0
        %4447 = vmatmul.mubr.bf16.gmra.mxu0 %v4292
        %v4448 = vpop.f32.mrf.mxu0
        %v4449 = vadd.f32 0.0, %v4448
        %v4450 = vpop.f32.mrf.mxu0
        %v4451 = vpop.f32.mrf.mxu0
        %v4452 = vadd.f32 0.0, %v4451
        %v4453 = vpop.f32.mrf.mxu0
        %4454 = vmatprep.mubr.bf16.mxu0 0
        %4455 = vmatmul.mubr.bf16.gmra.mxu0 %v4293
        %v4456 = vpop.f32.mrf.mxu0
        %v4457 = vadd.f32 0.0, %v4456
        %v4458 = vpop.f32.mrf.mxu0
        %v4459 = vpop.f32.mrf.mxu0
        %v4460 = vadd.f32 0.0, %v4459
        %v4461 = vpop.f32.mrf.mxu0
        %4462 = vmatprep.mubr.bf16.mxu0 0
        %4463 = vmatmul.mubr.bf16.gmra.mxu0 %v4294
        %v4464 = vpop.f32.mrf.mxu0
        %v4465 = vadd.f32 0.0, %v4464
        %v4466 = vpop.f32.mrf.mxu0
        %v4467 = vpop.f32.mrf.mxu0
        %v4468 = vadd.f32 0.0, %v4467
        %v4469 = vpop.f32.mrf.mxu0
        %4470 = vmatprep.mubr.bf16.mxu0 0
        %4471 = vmatmul.mubr.bf16.gmra.mxu0 %v4295
        %v4472 = vpop.f32.mrf.mxu0
        %v4473 = vadd.f32 0.0, %v4472
        %v4474 = vpop.f32.mrf.mxu0
        %v4475 = vpop.f32.mrf.mxu0
        %v4476 = vadd.f32 0.0, %v4475
        %v4477 = vpop.f32.mrf.mxu0
        %4478 = vmatprep.mubr.bf16.mxu0 0
        %4479 = vmatmul.mubr.bf16.gmra.mxu0 %v4296
        %v4480 = vpop.f32.mrf.mxu0
        %v4481 = vadd.f32 0.0, %v4480
        %v4482 = vpop.f32.mrf.mxu0
        %v4483 = vpop.f32.mrf.mxu0
        %v4484 = vadd.f32 0.0, %v4483
        %v4485 = vpop.f32.mrf.mxu0
        %4486 = vmatprep.mubr.bf16.mxu0 0
        %4487 = vmatmul.mubr.bf16.gmra.mxu0 %v4297
        %v4488 = vpop.f32.mrf.mxu0
        %v4489 = vadd.f32 0.0, %v4488
        %v4490 = vpop.f32.mrf.mxu0
        %v4491 = vpop.f32.mrf.mxu0
        %v4492 = vadd.f32 0.0, %v4491
        %v4493 = vpop.f32.mrf.mxu0
        %4494 = vmatprep.mubr.bf16.mxu0 0
        %4495 = vmatmul.mubr.bf16.gmra.mxu0 %v4298
        %v4496 = vpop.f32.mrf.mxu0
        %v4497 = vadd.f32 0.0, %v4496
        %v4498 = vpop.f32.mrf.mxu0
        %v4499 = vpop.f32.mrf.mxu0
        %v4500 = vadd.f32 0.0, %v4499
        %v4501 = vpop.f32.mrf.mxu0
        %4502 = vmatprep.mubr.bf16.mxu0 0
        %4503 = vmatmul.mubr.bf16.gmra.mxu0 %v4299
        %v4504 = vpop.f32.mrf.mxu0
        %v4505 = vadd.f32 0.0, %v4504
        %v4506 = vpop.f32.mrf.mxu0
        %v4507 = vpop.f32.mrf.mxu0
        %v4508 = vadd.f32 0.0, %v4507
        %v4509 = vpop.f32.mrf.mxu0
        %4510 = vmatprep.mubr.bf16.mxu0 0
        %4511 = vmatmul.mubr.bf16.gmra.mxu0 %v4300
        %v4512 = vpop.f32.mrf.mxu0
        %v4513 = vadd.f32 0.0, %v4512
        %v4514 = vpop.f32.mrf.mxu0
        %v4515 = vpop.f32.mrf.mxu0
        %v4516 = vadd.f32 0.0, %v4515
        %v4517 = vpop.f32.mrf.mxu0
        %4518 = vmatprep.mubr.bf16.mxu0 0
        %4519 = vmatmul.mubr.bf16.gmra.mxu0 %v4301
        %v4520 = vpop.f32.mrf.mxu0
        %v4521 = vadd.f32 0.0, %v4520
        %v4522 = vpop.f32.mrf.mxu0
        %v4523 = vpop.f32.mrf.mxu0
        %v4524 = vadd.f32 0.0, %v4523
        %v4525 = vpop.f32.mrf.mxu0
        %4526 = vdwg.mxu0
        %v4527 = vadd.f32 %v3694, %v4401
        %v4528 = vadd.f32 %v3695, %v4404
        %v4529 = vadd.f32 %v3696, %v4409
        %v4530 = vadd.f32 %v3697, %v4412
        %v4531 = vadd.f32 %v3698, %v4417
        %v4532 = vadd.f32 %v3699, %v4420
        %v4533 = vadd.f32 %v3700, %v4425
        %v4534 = vadd.f32 %v3701, %v4428
        %v4535 = vadd.f32 %v3702, %v4433
        %v4536 = vadd.f32 %v3703, %v4436
        %v4537 = vadd.f32 %v3704, %v4441
        %v4538 = vadd.f32 %v3705, %v4444
        %v4539 = vadd.f32 %v3706, %v4449
        %v4540 = vadd.f32 %v3707, %v4452
        %v4541 = vadd.f32 %v3708, %v4457
        %v4542 = vadd.f32 %v3709, %v4460
        %v4543 = vadd.f32 %v3710, %v4465
        %v4544 = vadd.f32 %v3711, %v4468
        %v4545 = vadd.f32 %v3712, %v4473
        %v4546 = vadd.f32 %v3713, %v4476
        %v4547 = vadd.f32 %v3714, %v4481
        %v4548 = vadd.f32 %v3715, %v4484
        %v4549 = vadd.f32 %v3716, %v4489
        %v4550 = vadd.f32 %v3717, %v4492
        %v4551 = vadd.f32 %v3718, %v4497
        %v4552 = vadd.f32 %v3719, %v4500
        %v4553 = vadd.f32 %v3720, %v4505
        %v4554 = vadd.f32 %v3721, %v4508
        %v4555 = vadd.f32 %v3722, %v4513
        %v4556 = vadd.f32 %v3723, %v4516
        %v4557 = vadd.f32 %v3724, %v4521
        %v4558 = vadd.f32 %v3725, %v4524
        %s4559 = scalar_lea.vmem [#allocation2], 24
        %v4560 = vld [vmem:[%s4559] sm:$0x8]
        %v4561 = vld [vmem:[%s4559 + $0x4] sm:$0xf]
        %v4562 = vld [vmem:[%s4559 + $0xc] sm:$0x8]
        %v4563 = vld [vmem:[%s4559 + $0x10] sm:$0xf]
        %v4564 = vld [vmem:[%s4559 + $0x18] sm:$0x8]
        %v4565 = vld [vmem:[%s4559 + $0x1c] sm:$0xf]
        %v4566 = vld [vmem:[%s4559 + $0x24] sm:$0x8]
        %v4567 = vld [vmem:[%s4559 + $0x28] sm:$0xf]
        %v4568 = vld [vmem:[%s4559 + $0x30] sm:$0x8]
        %v4569 = vld [vmem:[%s4559 + $0x34] sm:$0xf]
        %v4570 = vld [vmem:[%s4559 + $0x3c] sm:$0x8]
        %v4571 = vld [vmem:[%s4559 + $0x40] sm:$0xf]
        %v4572 = vld [vmem:[%s4559 + $0x48] sm:$0x8]
        %v4573 = vld [vmem:[%s4559 + $0x4c] sm:$0xf]
        %v4574 = vld [vmem:[%s4559 + $0x54] sm:$0x8]
        %v4575 = vld [vmem:[%s4559 + $0x58] sm:$0xf]
        %v4576 = vld [vmem:[%s4559 + $0x78] sm:$0x8]
        %v4577 = vld [vmem:[%s4559 + $0x7c] sm:$0xf]
        %v4578 = vld [vmem:[%s4559 + $0x84] sm:$0x8]
        %v4579 = vld [vmem:[%s4559 + $0x88] sm:$0xf]
        %v4580 = vld [vmem:[%s4559 + $0x90] sm:$0x8]
        %v4581 = vld [vmem:[%s4559 + $0x94] sm:$0xf]
        %v4582 = vld [vmem:[%s4559 + $0x9c] sm:$0x8]
        %v4583 = vld [vmem:[%s4559 + $0xa0] sm:$0xf]
        %v4584 = vld [vmem:[%s4559 + $0xa8] sm:$0x8]
        %v4585 = vld [vmem:[%s4559 + $0xac] sm:$0xf]
        %v4586 = vld [vmem:[%s4559 + $0xb4] sm:$0x8]
        %v4587 = vld [vmem:[%s4559 + $0xb8] sm:$0xf]
        %v4588 = vld [vmem:[%s4559 + $0xc0] sm:$0x8]
        %v4589 = vld [vmem:[%s4559 + $0xc4] sm:$0xf]
        %v4590 = vld [vmem:[%s4559 + $0xcc] sm:$0x8]
        %v4591 = vld [vmem:[%s4559 + $0xd0] sm:$0xf]
        %v4592 = vld [vmem:[%s4559 + $0xf0] sm:$0x8]
        %v4593 = vld [vmem:[%s4559 + $0xf4] sm:$0xf]
        %v4594 = vld [vmem:[%s4559 + $0xfc] sm:$0x8]
        %v4595 = vld [vmem:[%s4559 + $0x100] sm:$0xf]
        %v4596 = vld [vmem:[%s4559 + $0x108] sm:$0x8]
        %v4597 = vld [vmem:[%s4559 + $0x10c] sm:$0xf]
        %v4598 = vld [vmem:[%s4559 + $0x114] sm:$0x8]
        %v4599 = vld [vmem:[%s4559 + $0x118] sm:$0xf]
        %v4600 = vld [vmem:[%s4559 + $0x120] sm:$0x8]
        %v4601 = vld [vmem:[%s4559 + $0x124] sm:$0xf]
        %v4602 = vld [vmem:[%s4559 + $0x12c] sm:$0x8]
        %v4603 = vld [vmem:[%s4559 + $0x130] sm:$0xf]
        %v4604 = vld [vmem:[%s4559 + $0x138] sm:$0x8]
        %v4605 = vld [vmem:[%s4559 + $0x13c] sm:$0xf]
        %v4606 = vld [vmem:[%s4559 + $0x144] sm:$0x8]
        %v4607 = vld [vmem:[%s4559 + $0x148] sm:$0xf]
        %v4608 = vld [vmem:[%s4559 + $0x168] sm:$0x8]
        %v4609 = vld [vmem:[%s4559 + $0x16c] sm:$0xf]
        %v4610 = vld [vmem:[%s4559 + $0x174] sm:$0x8]
        %v4611 = vld [vmem:[%s4559 + $0x178] sm:$0xf]
        %v4612 = vld [vmem:[%s4559 + $0x180] sm:$0x8]
        %v4613 = vld [vmem:[%s4559 + $0x184] sm:$0xf]
        %v4614 = vld [vmem:[%s4559 + $0x18c] sm:$0x8]
        %v4615 = vld [vmem:[%s4559 + $0x190] sm:$0xf]
        %v4616 = vld [vmem:[%s4559 + $0x198] sm:$0x8]
        %v4617 = vld [vmem:[%s4559 + $0x19c] sm:$0xf]
        %v4618 = vld [vmem:[%s4559 + $0x1a4] sm:$0x8]
        %v4619 = vld [vmem:[%s4559 + $0x1a8] sm:$0xf]
        %v4620 = vld [vmem:[%s4559 + $0x1b0] sm:$0x8]
        %v4621 = vld [vmem:[%s4559 + $0x1b4] sm:$0xf]
        %v4622 = vld [vmem:[%s4559 + $0x1bc] sm:$0x8]
        %v4623 = vld [vmem:[%s4559 + $0x1c0] sm:$0xf]
        %v4625 = vshrl.u32 %v4560, 16
        %v4627 = vrot.slane %v4625, 7
        %v4628 = vrot.slane %v4627, 4
        %v4630 = vshrl.u32 %v4561, 16
        %v4632 = vrot.slane %v4630, 7
        %v4633 = vshll.u32 %v4561, 16
        %v4635 = vor.u32 %v4632, %v4633
        %v4636 = vsel %vm709, %v4628, %v4635
        %v4638 = vshrl.u32 %v4562, 16
        %v4640 = vrot.slane %v4638, 7
        %v4641 = vrot.slane %v4640, 4
        %v4643 = vshrl.u32 %v4563, 16
        %v4645 = vrot.slane %v4643, 7
        %v4646 = vshll.u32 %v4563, 16
        %v4648 = vor.u32 %v4645, %v4646
        %v4649 = vsel %vm709, %v4641, %v4648
        %v4651 = vshrl.u32 %v4564, 16
        %v4653 = vrot.slane %v4651, 7
        %v4654 = vrot.slane %v4653, 4
        %v4656 = vshrl.u32 %v4565, 16
        %v4658 = vrot.slane %v4656, 7
        %v4659 = vshll.u32 %v4565, 16
        %v4661 = vor.u32 %v4658, %v4659
        %v4662 = vsel %vm709, %v4654, %v4661
        %v4664 = vshrl.u32 %v4566, 16
        %v4666 = vrot.slane %v4664, 7
        %v4667 = vrot.slane %v4666, 4
        %v4669 = vshrl.u32 %v4567, 16
        %v4671 = vrot.slane %v4669, 7
        %v4672 = vshll.u32 %v4567, 16
        %v4674 = vor.u32 %v4671, %v4672
        %v4675 = vsel %vm709, %v4667, %v4674
        %v4677 = vshrl.u32 %v4568, 16
        %v4679 = vrot.slane %v4677, 7
        %v4680 = vrot.slane %v4679, 4
        %v4682 = vshrl.u32 %v4569, 16
        %v4684 = vrot.slane %v4682, 7
        %v4685 = vshll.u32 %v4569, 16
        %v4687 = vor.u32 %v4684, %v4685
        %v4688 = vsel %vm709, %v4680, %v4687
        %v4690 = vshrl.u32 %v4570, 16
        %v4692 = vrot.slane %v4690, 7
        %v4693 = vrot.slane %v4692, 4
        %v4695 = vshrl.u32 %v4571, 16
        %v4697 = vrot.slane %v4695, 7
        %v4698 = vshll.u32 %v4571, 16
        %v4700 = vor.u32 %v4697, %v4698
        %v4701 = vsel %vm709, %v4693, %v4700
        %v4703 = vshrl.u32 %v4572, 16
        %v4705 = vrot.slane %v4703, 7
        %v4706 = vrot.slane %v4705, 4
        %v4708 = vshrl.u32 %v4573, 16
        %v4710 = vrot.slane %v4708, 7
        %v4711 = vshll.u32 %v4573, 16
        %v4713 = vor.u32 %v4710, %v4711
        %v4714 = vsel %vm709, %v4706, %v4713
        %v4716 = vshrl.u32 %v4574, 16
        %v4718 = vrot.slane %v4716, 7
        %v4719 = vrot.slane %v4718, 4
        %v4721 = vshrl.u32 %v4575, 16
        %v4723 = vrot.slane %v4721, 7
        %v4724 = vshll.u32 %v4575, 16
        %v4726 = vor.u32 %v4723, %v4724
        %v4727 = vsel %vm709, %v4719, %v4726
        %v4729 = vshrl.u32 %v4576, 16
        %v4731 = vrot.slane %v4729, 7
        %v4732 = vrot.slane %v4731, 4
        %v4734 = vshrl.u32 %v4577, 16
        %v4736 = vrot.slane %v4734, 7
        %v4737 = vshll.u32 %v4577, 16
        %v4739 = vor.u32 %v4736, %v4737
        %v4740 = vsel %vm709, %v4732, %v4739
        %v4742 = vshrl.u32 %v4578, 16
        %v4744 = vrot.slane %v4742, 7
        %v4745 = vrot.slane %v4744, 4
        %v4747 = vshrl.u32 %v4579, 16
        %v4749 = vrot.slane %v4747, 7
        %v4750 = vshll.u32 %v4579, 16
        %v4752 = vor.u32 %v4749, %v4750
        %v4753 = vsel %vm709, %v4745, %v4752
        %v4755 = vshrl.u32 %v4580, 16
        %v4757 = vrot.slane %v4755, 7
        %v4758 = vrot.slane %v4757, 4
        %v4760 = vshrl.u32 %v4581, 16
        %v4762 = vrot.slane %v4760, 7
        %v4763 = vshll.u32 %v4581, 16
        %v4765 = vor.u32 %v4762, %v4763
        %v4766 = vsel %vm709, %v4758, %v4765
        %v4768 = vshrl.u32 %v4582, 16
        %v4770 = vrot.slane %v4768, 7
        %v4771 = vrot.slane %v4770, 4
        %v4773 = vshrl.u32 %v4583, 16
        %v4775 = vrot.slane %v4773, 7
        %v4776 = vshll.u32 %v4583, 16
        %v4778 = vor.u32 %v4775, %v4776
        %v4779 = vsel %vm709, %v4771, %v4778
        %v4781 = vshrl.u32 %v4584, 16
        %v4783 = vrot.slane %v4781, 7
        %v4784 = vrot.slane %v4783, 4
        %v4786 = vshrl.u32 %v4585, 16
        %v4788 = vrot.slane %v4786, 7
        %v4789 = vshll.u32 %v4585, 16
        %v4791 = vor.u32 %v4788, %v4789
        %v4792 = vsel %vm709, %v4784, %v4791
        %v4794 = vshrl.u32 %v4586, 16
        %v4796 = vrot.slane %v4794, 7
        %v4797 = vrot.slane %v4796, 4
        %v4799 = vshrl.u32 %v4587, 16
        %v4801 = vrot.slane %v4799, 7
        %v4802 = vshll.u32 %v4587, 16
        %v4804 = vor.u32 %v4801, %v4802
        %v4805 = vsel %vm709, %v4797, %v4804
        %v4807 = vshrl.u32 %v4588, 16
        %v4809 = vrot.slane %v4807, 7
        %v4810 = vrot.slane %v4809, 4
        %v4812 = vshrl.u32 %v4589, 16
        %v4814 = vrot.slane %v4812, 7
        %v4815 = vshll.u32 %v4589, 16
        %v4817 = vor.u32 %v4814, %v4815
        %v4818 = vsel %vm709, %v4810, %v4817
        %v4820 = vshrl.u32 %v4590, 16
        %v4822 = vrot.slane %v4820, 7
        %v4823 = vrot.slane %v4822, 4
        %v4825 = vshrl.u32 %v4591, 16
        %v4827 = vrot.slane %v4825, 7
        %v4828 = vshll.u32 %v4591, 16
        %v4830 = vor.u32 %v4827, %v4828
        %v4831 = vsel %vm709, %v4823, %v4830
        %v4833 = vshrl.u32 %v4592, 16
        %v4835 = vrot.slane %v4833, 7
        %v4836 = vrot.slane %v4835, 4
        %v4838 = vshrl.u32 %v4593, 16
        %v4840 = vrot.slane %v4838, 7
        %v4841 = vshll.u32 %v4593, 16
        %v4843 = vor.u32 %v4840, %v4841
        %v4844 = vsel %vm709, %v4836, %v4843
        %v4846 = vshrl.u32 %v4594, 16
        %v4848 = vrot.slane %v4846, 7
        %v4849 = vrot.slane %v4848, 4
        %v4851 = vshrl.u32 %v4595, 16
        %v4853 = vrot.slane %v4851, 7
        %v4854 = vshll.u32 %v4595, 16
        %v4856 = vor.u32 %v4853, %v4854
        %v4857 = vsel %vm709, %v4849, %v4856
        %v4859 = vshrl.u32 %v4596, 16
        %v4861 = vrot.slane %v4859, 7
        %v4862 = vrot.slane %v4861, 4
        %v4864 = vshrl.u32 %v4597, 16
        %v4866 = vrot.slane %v4864, 7
        %v4867 = vshll.u32 %v4597, 16
        %v4869 = vor.u32 %v4866, %v4867
        %v4870 = vsel %vm709, %v4862, %v4869
        %v4872 = vshrl.u32 %v4598, 16
        %v4874 = vrot.slane %v4872, 7
        %v4875 = vrot.slane %v4874, 4
        %v4877 = vshrl.u32 %v4599, 16
        %v4879 = vrot.slane %v4877, 7
        %v4880 = vshll.u32 %v4599, 16
        %v4882 = vor.u32 %v4879, %v4880
        %v4883 = vsel %vm709, %v4875, %v4882
        %v4885 = vshrl.u32 %v4600, 16
        %v4887 = vrot.slane %v4885, 7
        %v4888 = vrot.slane %v4887, 4
        %v4890 = vshrl.u32 %v4601, 16
        %v4892 = vrot.slane %v4890, 7
        %v4893 = vshll.u32 %v4601, 16
        %v4895 = vor.u32 %v4892, %v4893
        %v4896 = vsel %vm709, %v4888, %v4895
        %v4898 = vshrl.u32 %v4602, 16
        %v4900 = vrot.slane %v4898, 7
        %v4901 = vrot.slane %v4900, 4
        %v4903 = vshrl.u32 %v4603, 16
        %v4905 = vrot.slane %v4903, 7
        %v4906 = vshll.u32 %v4603, 16
        %v4908 = vor.u32 %v4905, %v4906
        %v4909 = vsel %vm709, %v4901, %v4908
        %v4911 = vshrl.u32 %v4604, 16
        %v4913 = vrot.slane %v4911, 7
        %v4914 = vrot.slane %v4913, 4
        %v4916 = vshrl.u32 %v4605, 16
        %v4918 = vrot.slane %v4916, 7
        %v4919 = vshll.u32 %v4605, 16
        %v4921 = vor.u32 %v4918, %v4919
        %v4922 = vsel %vm709, %v4914, %v4921
        %v4924 = vshrl.u32 %v4606, 16
        %v4926 = vrot.slane %v4924, 7
        %v4927 = vrot.slane %v4926, 4
        %v4929 = vshrl.u32 %v4607, 16
        %v4931 = vrot.slane %v4929, 7
        %v4932 = vshll.u32 %v4607, 16
        %v4934 = vor.u32 %v4931, %v4932
        %v4935 = vsel %vm709, %v4927, %v4934
        %v4937 = vshrl.u32 %v4608, 16
        %v4939 = vrot.slane %v4937, 7
        %v4940 = vrot.slane %v4939, 4
        %v4942 = vshrl.u32 %v4609, 16
        %v4944 = vrot.slane %v4942, 7
        %v4945 = vshll.u32 %v4609, 16
        %v4947 = vor.u32 %v4944, %v4945
        %v4948 = vsel %vm709, %v4940, %v4947
        %v4950 = vshrl.u32 %v4610, 16
        %v4952 = vrot.slane %v4950, 7
        %v4953 = vrot.slane %v4952, 4
        %v4955 = vshrl.u32 %v4611, 16
        %v4957 = vrot.slane %v4955, 7
        %v4958 = vshll.u32 %v4611, 16
        %v4960 = vor.u32 %v4957, %v4958
        %v4961 = vsel %vm709, %v4953, %v4960
        %v4963 = vshrl.u32 %v4612, 16
        %v4965 = vrot.slane %v4963, 7
        %v4966 = vrot.slane %v4965, 4
        %v4968 = vshrl.u32 %v4613, 16
        %v4970 = vrot.slane %v4968, 7
        %v4971 = vshll.u32 %v4613, 16
        %v4973 = vor.u32 %v4970, %v4971
        %v4974 = vsel %vm709, %v4966, %v4973
        %v4976 = vshrl.u32 %v4614, 16
        %v4978 = vrot.slane %v4976, 7
        %v4979 = vrot.slane %v4978, 4
        %v4981 = vshrl.u32 %v4615, 16
        %v4983 = vrot.slane %v4981, 7
        %v4984 = vshll.u32 %v4615, 16
        %v4986 = vor.u32 %v4983, %v4984
        %v4987 = vsel %vm709, %v4979, %v4986
        %v4989 = vshrl.u32 %v4616, 16
        %v4991 = vrot.slane %v4989, 7
        %v4992 = vrot.slane %v4991, 4
        %v4994 = vshrl.u32 %v4617, 16
        %v4996 = vrot.slane %v4994, 7
        %v4997 = vshll.u32 %v4617, 16
        %v4999 = vor.u32 %v4996, %v4997
        %v5000 = vsel %vm709, %v4992, %v4999
        %v5002 = vshrl.u32 %v4618, 16
        %v5004 = vrot.slane %v5002, 7
        %v5005 = vrot.slane %v5004, 4
        %v5007 = vshrl.u32 %v4619, 16
        %v5009 = vrot.slane %v5007, 7
        %v5010 = vshll.u32 %v4619, 16
        %v5012 = vor.u32 %v5009, %v5010
        %v5013 = vsel %vm709, %v5005, %v5012
        %v5015 = vshrl.u32 %v4620, 16
        %v5017 = vrot.slane %v5015, 7
        %v5018 = vrot.slane %v5017, 4
        %v5020 = vshrl.u32 %v4621, 16
        %v5022 = vrot.slane %v5020, 7
        %v5023 = vshll.u32 %v4621, 16
        %v5025 = vor.u32 %v5022, %v5023
        %v5026 = vsel %vm709, %v5018, %v5025
        %v5028 = vshrl.u32 %v4622, 16
        %v5030 = vrot.slane %v5028, 7
        %v5031 = vrot.slane %v5030, 4
        %v5033 = vshrl.u32 %v4623, 16
        %v5035 = vrot.slane %v5033, 7
        %v5036 = vshll.u32 %v4623, 16
        %v5038 = vor.u32 %v5035, %v5036
        %v5039 = vsel %vm709, %v5031, %v5038
        %v5040 = vld [vmem:[#allocation6 + $0x180] sm:$0xf]
        %v5041 = vld [vmem:[#allocation6 + $0x184] sm:$0xf]
        %v5042 = vld [vmem:[#allocation6 + $0x188] sm:$0xf]
        %v5043 = vld [vmem:[#allocation6 + $0x18c] sm:$0xf]
        %v5044 = vld [vmem:[#allocation6 + $0x190] sm:$0xf]
        %v5045 = vld [vmem:[#allocation6 + $0x194] sm:$0xf]
        %v5046 = vld [vmem:[#allocation6 + $0x198] sm:$0xf]
        %v5047 = vld [vmem:[#allocation6 + $0x19c] sm:$0xf]
        %v5048 = vld [vmem:[#allocation6 + $0x1a0] sm:$0xf]
        %v5049 = vld [vmem:[#allocation6 + $0x1a4] sm:$0xf]
        %v5050 = vld [vmem:[#allocation6 + $0x1a8] sm:$0xf]
        %v5051 = vld [vmem:[#allocation6 + $0x1ac] sm:$0xf]
        %v5052 = vld [vmem:[#allocation6 + $0x1b0] sm:$0xf]
        %v5053 = vld [vmem:[#allocation6 + $0x1b4] sm:$0xf]
        %v5054 = vld [vmem:[#allocation6 + $0x1b8] sm:$0xf]
        %v5055 = vld [vmem:[#allocation6 + $0x1bc] sm:$0xf]
        %v5056 = vunpack.c.l.b16 %v4636
        %v5057 = vunpack.c.l.b16 %v4649
        %v5058 = vunpack.c.l.b16 %v4662
        %v5059 = vunpack.c.l.b16 %v4675
        %v5060 = vunpack.c.l.b16 %v4688
        %v5061 = vunpack.c.l.b16 %v4701
        %v5062 = vunpack.c.l.b16 %v4714
        %v5063 = vunpack.c.l.b16 %v4727
        %v5064 = vunpack.c.l.b16 %v4740
        %v5065 = vunpack.c.l.b16 %v4753
        %v5066 = vunpack.c.l.b16 %v4766
        %v5067 = vunpack.c.l.b16 %v4779
        %v5068 = vunpack.c.l.b16 %v4792
        %v5069 = vunpack.c.l.b16 %v4805
        %v5070 = vunpack.c.l.b16 %v4818
        %v5071 = vunpack.c.l.b16 %v4831
        %v5072 = vunpack.c.l.b16 %v4844
        %v5073 = vunpack.c.l.b16 %v4857
        %v5074 = vunpack.c.l.b16 %v4870
        %v5075 = vunpack.c.l.b16 %v4883
        %v5076 = vunpack.c.l.b16 %v4896
        %v5077 = vunpack.c.l.b16 %v4909
        %v5078 = vunpack.c.l.b16 %v4922
        %v5079 = vunpack.c.l.b16 %v4935
        %v5080 = vunpack.c.l.b16 %v4948
        %v5081 = vunpack.c.l.b16 %v4961
        %v5082 = vunpack.c.l.b16 %v4974
        %v5083 = vunpack.c.l.b16 %v4987
        %v5084 = vunpack.c.l.b16 %v5000
        %v5085 = vunpack.c.l.b16 %v5013
        %v5086 = vunpack.c.l.b16 %v5026
        %v5087 = vunpack.c.l.b16 %v5039
        %v5088 = vpack.c.b16 %v5057, %v5056
        %v5089 = vpack.c.b16 %v5059, %v5058
        %v5090 = vpack.c.b16 %v5061, %v5060
        %v5091 = vpack.c.b16 %v5063, %v5062
        %v5092 = vpack.c.b16 %v5065, %v5064
        %v5093 = vpack.c.b16 %v5067, %v5066
        %v5094 = vpack.c.b16 %v5069, %v5068
        %v5095 = vpack.c.b16 %v5071, %v5070
        %v5096 = vpack.c.b16 %v5073, %v5072
        %v5097 = vpack.c.b16 %v5075, %v5074
        %v5098 = vpack.c.b16 %v5077, %v5076
        %v5099 = vpack.c.b16 %v5079, %v5078
        %v5100 = vpack.c.b16 %v5081, %v5080
        %v5101 = vpack.c.b16 %v5083, %v5082
        %v5102 = vpack.c.b16 %v5085, %v5084
        %v5103 = vpack.c.b16 %v5087, %v5086
        %v5136 = vunpack.c.l.b16 %v5040
        %v5137 = vunpack.c.l.b16 %v5041
        %v5138 = vunpack.c.l.b16 %v5042
        %v5139 = vunpack.c.l.b16 %v5043
        %v5140 = vunpack.c.l.b16 %v5044
        %v5141 = vunpack.c.l.b16 %v5045
        %v5142 = vunpack.c.l.b16 %v5046
        %v5143 = vunpack.c.l.b16 %v5047
        %v5144 = vunpack.c.l.b16 %v5048
        %v5145 = vunpack.c.l.b16 %v5049
        %v5146 = vunpack.c.l.b16 %v5050
        %v5147 = vunpack.c.l.b16 %v5051
        %v5148 = vunpack.c.l.b16 %v5052
        %v5149 = vunpack.c.l.b16 %v5053
        %v5150 = vunpack.c.l.b16 %v5054
        %v5151 = vunpack.c.l.b16 %v5055
        %v5152 = vpack.c.b16 %v5137, %v5136
        %v5153 = vpack.c.b16 %v5139, %v5138
        %v5154 = vpack.c.b16 %v5141, %v5140
        %v5155 = vpack.c.b16 %v5143, %v5142
        %v5156 = vpack.c.b16 %v5145, %v5144
        %v5157 = vpack.c.b16 %v5147, %v5146
        %v5158 = vpack.c.b16 %v5149, %v5148
        %v5159 = vpack.c.b16 %v5151, %v5150
        %5168 = vmatprep.subr.bf16.mxu0 0
        %5169 = vmatpush1.bf16.msra.mxu0 %v5159
        %5170 = vmatprep.subr.bf16.mxu0 0
        %5171 = vmatpush1.bf16.msra.mxu0 %v5158
        %5172 = vmatprep.subr.bf16.mxu0 0
        %5173 = vmatpush1.bf16.msra.mxu0 %v5157
        %5174 = vmatprep.subr.bf16.mxu0 0
        %5175 = vmatpush1.bf16.msra.mxu0 %v5156
        %5176 = vmatprep.subr.bf16.mxu0 0
        %5177 = vmatpush1.bf16.msra.mxu0 %v5155
        %5178 = vmatprep.subr.bf16.mxu0 0
        %5179 = vmatpush1.bf16.msra.mxu0 %v5154
        %5180 = vmatprep.subr.bf16.mxu0 0
        %5181 = vmatpush1.bf16.msra.mxu0 %v5153
        %5182 = vmatprep.subr.bf16.mxu0 0
        %5183 = vmatpush1.bf16.msra.mxu0 %v5152
        %5184 = vmatprep.subr.bf16.mxu0 0
        %5185 = vmatpush2.bf16.msra.mxu0 0
        %5186 = vmatprep.subr.bf16.mxu0 0
        %5187 = vmatpush2.bf16.msra.mxu0 0
        %5188 = vmatprep.subr.bf16.mxu0 0
        %5189 = vmatpush2.bf16.msra.mxu0 0
        %5190 = vmatprep.subr.bf16.mxu0 0
        %5191 = vmatpush2.bf16.msra.mxu0 0
        %5192 = vmatprep.subr.bf16.mxu0 0
        %5193 = vmatpush2.bf16.msra.mxu0 0
        %5194 = vmatprep.subr.bf16.mxu0 0
        %5195 = vmatpush2.bf16.msra.mxu0 0
        %5196 = vmatprep.subr.bf16.mxu0 0
        %5197 = vmatpush2.bf16.msra.mxu0 0
        %5198 = vmatprep.subr.bf16.mxu0 0
        %5199 = vmatpush2.bf16.msra.mxu0 0
        %5200 = vmatprep.mubr.bf16.mxu0 0
        %5201 = vmatmul.mubr.bf16.gmra.mxu0 %v5088
        %v5202 = vpop.f32.mrf.mxu0
        %v5203 = vadd.f32 0.0, %v5202
        %v5204 = vpop.f32.mrf.mxu0
        %v5205 = vpop.f32.mrf.mxu0
        %v5206 = vadd.f32 0.0, %v5205
        %v5207 = vpop.f32.mrf.mxu0
        %5208 = vmatprep.mubr.bf16.mxu0 0
        %5209 = vmatmul.mubr.bf16.gmra.mxu0 %v5089
        %v5210 = vpop.f32.mrf.mxu0
        %v5211 = vadd.f32 0.0, %v5210
        %v5212 = vpop.f32.mrf.mxu0
        %v5213 = vpop.f32.mrf.mxu0
        %v5214 = vadd.f32 0.0, %v5213
        %v5215 = vpop.f32.mrf.mxu0
        %5216 = vmatprep.mubr.bf16.mxu0 0
        %5217 = vmatmul.mubr.bf16.gmra.mxu0 %v5090
        %v5218 = vpop.f32.mrf.mxu0
        %v5219 = vadd.f32 0.0, %v5218
        %v5220 = vpop.f32.mrf.mxu0
        %v5221 = vpop.f32.mrf.mxu0
        %v5222 = vadd.f32 0.0, %v5221
        %v5223 = vpop.f32.mrf.mxu0
        %5224 = vmatprep.mubr.bf16.mxu0 0
        %5225 = vmatmul.mubr.bf16.gmra.mxu0 %v5091
        %v5226 = vpop.f32.mrf.mxu0
        %v5227 = vadd.f32 0.0, %v5226
        %v5228 = vpop.f32.mrf.mxu0
        %v5229 = vpop.f32.mrf.mxu0
        %v5230 = vadd.f32 0.0, %v5229
        %v5231 = vpop.f32.mrf.mxu0
        %5232 = vmatprep.mubr.bf16.mxu0 0
        %5233 = vmatmul.mubr.bf16.gmra.mxu0 %v5092
        %v5234 = vpop.f32.mrf.mxu0
        %v5235 = vadd.f32 0.0, %v5234
        %v5236 = vpop.f32.mrf.mxu0
        %v5237 = vpop.f32.mrf.mxu0
        %v5238 = vadd.f32 0.0, %v5237
        %v5239 = vpop.f32.mrf.mxu0
        %5240 = vmatprep.mubr.bf16.mxu0 0
        %5241 = vmatmul.mubr.bf16.gmra.mxu0 %v5093
        %v5242 = vpop.f32.mrf.mxu0
        %v5243 = vadd.f32 0.0, %v5242
        %v5244 = vpop.f32.mrf.mxu0
        %v5245 = vpop.f32.mrf.mxu0
        %v5246 = vadd.f32 0.0, %v5245
        %v5247 = vpop.f32.mrf.mxu0
        %5248 = vmatprep.mubr.bf16.mxu0 0
        %5249 = vmatmul.mubr.bf16.gmra.mxu0 %v5094
        %v5250 = vpop.f32.mrf.mxu0
        %v5251 = vadd.f32 0.0, %v5250
        %v5252 = vpop.f32.mrf.mxu0
        %v5253 = vpop.f32.mrf.mxu0
        %v5254 = vadd.f32 0.0, %v5253
        %v5255 = vpop.f32.mrf.mxu0
        %5256 = vmatprep.mubr.bf16.mxu0 0
        %5257 = vmatmul.mubr.bf16.gmra.mxu0 %v5095
        %v5258 = vpop.f32.mrf.mxu0
        %v5259 = vadd.f32 0.0, %v5258
        %v5260 = vpop.f32.mrf.mxu0
        %v5261 = vpop.f32.mrf.mxu0
        %v5262 = vadd.f32 0.0, %v5261
        %v5263 = vpop.f32.mrf.mxu0
        %5264 = vmatprep.mubr.bf16.mxu0 0
        %5265 = vmatmul.mubr.bf16.gmra.mxu0 %v5096
        %v5266 = vpop.f32.mrf.mxu0
        %v5267 = vadd.f32 0.0, %v5266
        %v5268 = vpop.f32.mrf.mxu0
        %v5269 = vpop.f32.mrf.mxu0
        %v5270 = vadd.f32 0.0, %v5269
        %v5271 = vpop.f32.mrf.mxu0
        %5272 = vmatprep.mubr.bf16.mxu0 0
        %5273 = vmatmul.mubr.bf16.gmra.mxu0 %v5097
        %v5274 = vpop.f32.mrf.mxu0
        %v5275 = vadd.f32 0.0, %v5274
        %v5276 = vpop.f32.mrf.mxu0
        %v5277 = vpop.f32.mrf.mxu0
        %v5278 = vadd.f32 0.0, %v5277
        %v5279 = vpop.f32.mrf.mxu0
        %5280 = vmatprep.mubr.bf16.mxu0 0
        %5281 = vmatmul.mubr.bf16.gmra.mxu0 %v5098
        %v5282 = vpop.f32.mrf.mxu0
        %v5283 = vadd.f32 0.0, %v5282
        %v5284 = vpop.f32.mrf.mxu0
        %v5285 = vpop.f32.mrf.mxu0
        %v5286 = vadd.f32 0.0, %v5285
        %v5287 = vpop.f32.mrf.mxu0
        %5288 = vmatprep.mubr.bf16.mxu0 0
        %5289 = vmatmul.mubr.bf16.gmra.mxu0 %v5099
        %v5290 = vpop.f32.mrf.mxu0
        %v5291 = vadd.f32 0.0, %v5290
        %v5292 = vpop.f32.mrf.mxu0
        %v5293 = vpop.f32.mrf.mxu0
        %v5294 = vadd.f32 0.0, %v5293
        %v5295 = vpop.f32.mrf.mxu0
        %5296 = vmatprep.mubr.bf16.mxu0 0
        %5297 = vmatmul.mubr.bf16.gmra.mxu0 %v5100
        %v5298 = vpop.f32.mrf.mxu0
        %v5299 = vadd.f32 0.0, %v5298
        %v5300 = vpop.f32.mrf.mxu0
        %v5301 = vpop.f32.mrf.mxu0
        %v5302 = vadd.f32 0.0, %v5301
        %v5303 = vpop.f32.mrf.mxu0
        %5304 = vmatprep.mubr.bf16.mxu0 0
        %5305 = vmatmul.mubr.bf16.gmra.mxu0 %v5101
        %v5306 = vpop.f32.mrf.mxu0
        %v5307 = vadd.f32 0.0, %v5306
        %v5308 = vpop.f32.mrf.mxu0
        %v5309 = vpop.f32.mrf.mxu0
        %v5310 = vadd.f32 0.0, %v5309
        %v5311 = vpop.f32.mrf.mxu0
        %5312 = vmatprep.mubr.bf16.mxu0 0
        %5313 = vmatmul.mubr.bf16.gmra.mxu0 %v5102
        %v5314 = vpop.f32.mrf.mxu0
        %v5315 = vadd.f32 0.0, %v5314
        %v5316 = vpop.f32.mrf.mxu0
        %v5317 = vpop.f32.mrf.mxu0
        %v5318 = vadd.f32 0.0, %v5317
        %v5319 = vpop.f32.mrf.mxu0
        %5320 = vmatprep.mubr.bf16.mxu0 0
        %5321 = vmatmul.mubr.bf16.gmra.mxu0 %v5103
        %v5322 = vpop.f32.mrf.mxu0
        %v5323 = vadd.f32 0.0, %v5322
        %v5324 = vpop.f32.mrf.mxu0
        %v5325 = vpop.f32.mrf.mxu0
        %v5326 = vadd.f32 0.0, %v5325
        %v5327 = vpop.f32.mrf.mxu0
        %5328 = vdwg.mxu0
        %v5329 = vadd.f32 %v4527, %v5203
        %v5330 = vadd.f32 %v4528, %v5206
        %v5331 = vadd.f32 %v4529, %v5211
        %v5332 = vadd.f32 %v4530, %v5214
        %v5333 = vadd.f32 %v4531, %v5219
        %v5334 = vadd.f32 %v4532, %v5222
        %v5335 = vadd.f32 %v4533, %v5227
        %v5336 = vadd.f32 %v4534, %v5230
        %v5337 = vadd.f32 %v4535, %v5235
        %v5338 = vadd.f32 %v4536, %v5238
        %v5339 = vadd.f32 %v4537, %v5243
        %v5340 = vadd.f32 %v4538, %v5246
        %v5341 = vadd.f32 %v4539, %v5251
        %v5342 = vadd.f32 %v4540, %v5254
        %v5343 = vadd.f32 %v4541, %v5259
        %v5344 = vadd.f32 %v4542, %v5262
        %v5345 = vadd.f32 %v4543, %v5267
        %v5346 = vadd.f32 %v4544, %v5270
        %v5347 = vadd.f32 %v4545, %v5275
        %v5348 = vadd.f32 %v4546, %v5278
        %v5349 = vadd.f32 %v4547, %v5283
        %v5350 = vadd.f32 %v4548, %v5286
        %v5351 = vadd.f32 %v4549, %v5291
        %v5352 = vadd.f32 %v4550, %v5294
        %v5353 = vadd.f32 %v4551, %v5299
        %v5354 = vadd.f32 %v4552, %v5302
        %v5355 = vadd.f32 %v4553, %v5307
        %v5356 = vadd.f32 %v4554, %v5310
        %v5357 = vadd.f32 %v4555, %v5315
        %v5358 = vadd.f32 %v4556, %v5318
        %v5359 = vadd.f32 %v4557, %v5323
        %v5360 = vadd.f32 %v4558, %v5326
        %v5361 = vld [vmem:[#allocation6 + $0x1c0] sm:$0xf]
        %v5362 = vld [vmem:[#allocation6 + $0x1c4] sm:$0xf]
        %v5363 = vld [vmem:[#allocation6 + $0x1c8] sm:$0xf]
        %v5364 = vld [vmem:[#allocation6 + $0x1cc] sm:$0xf]
        %v5365 = vld [vmem:[#allocation6 + $0x1d0] sm:$0xf]
        %v5366 = vld [vmem:[#allocation6 + $0x1d4] sm:$0xf]
        %v5367 = vld [vmem:[#allocation6 + $0x1d8] sm:$0xf]
        %v5368 = vld [vmem:[#allocation6 + $0x1dc] sm:$0xf]
        %v5369 = vld [vmem:[#allocation6 + $0x1e0] sm:$0xf]
        %v5370 = vld [vmem:[#allocation6 + $0x1e4] sm:$0xf]
        %v5371 = vld [vmem:[#allocation6 + $0x1e8] sm:$0xf]
        %v5372 = vld [vmem:[#allocation6 + $0x1ec] sm:$0xf]
        %v5373 = vld [vmem:[#allocation6 + $0x1f0] sm:$0xf]
        %v5374 = vld [vmem:[#allocation6 + $0x1f4] sm:$0xf]
        %v5375 = vld [vmem:[#allocation6 + $0x1f8] sm:$0xf]
        %v5376 = vld [vmem:[#allocation6 + $0x1fc] sm:$0xf]
        %v5409 = vunpack.c.l.b16 %v4561
        %v5410 = vunpack.c.l.b16 %v4563
        %v5411 = vunpack.c.l.b16 %v4565
        %v5412 = vunpack.c.l.b16 %v4567
        %v5413 = vunpack.c.l.b16 %v4569
        %v5414 = vunpack.c.l.b16 %v4571
        %v5415 = vunpack.c.l.b16 %v4573
        %v5416 = vunpack.c.l.b16 %v4575
        %v5417 = vunpack.c.l.b16 %v4577
        %v5418 = vunpack.c.l.b16 %v4579
        %v5419 = vunpack.c.l.b16 %v4581
        %v5420 = vunpack.c.l.b16 %v4583
        %v5421 = vunpack.c.l.b16 %v4585
        %v5422 = vunpack.c.l.b16 %v4587
        %v5423 = vunpack.c.l.b16 %v4589
        %v5424 = vunpack.c.l.b16 %v4591
        %v5425 = vunpack.c.l.b16 %v4593
        %v5426 = vunpack.c.l.b16 %v4595
        %v5427 = vunpack.c.l.b16 %v4597
        %v5428 = vunpack.c.l.b16 %v4599
        %v5429 = vunpack.c.l.b16 %v4601
        %v5430 = vunpack.c.l.b16 %v4603
        %v5431 = vunpack.c.l.b16 %v4605
        %v5432 = vunpack.c.l.b16 %v4607
        %v5433 = vunpack.c.l.b16 %v4609
        %v5434 = vunpack.c.l.b16 %v4611
        %v5435 = vunpack.c.l.b16 %v4613
        %v5436 = vunpack.c.l.b16 %v4615
        %v5437 = vunpack.c.l.b16 %v4617
        %v5438 = vunpack.c.l.b16 %v4619
        %v5439 = vunpack.c.l.b16 %v4621
        %v5440 = vunpack.c.l.b16 %v4623
        %v5441 = vpack.c.b16 %v5410, %v5409
        %v5442 = vpack.c.b16 %v5412, %v5411
        %v5443 = vpack.c.b16 %v5414, %v5413
        %v5444 = vpack.c.b16 %v5416, %v5415
        %v5445 = vpack.c.b16 %v5418, %v5417
        %v5446 = vpack.c.b16 %v5420, %v5419
        %v5447 = vpack.c.b16 %v5422, %v5421
        %v5448 = vpack.c.b16 %v5424, %v5423
        %v5449 = vpack.c.b16 %v5426, %v5425
        %v5450 = vpack.c.b16 %v5428, %v5427
        %v5451 = vpack.c.b16 %v5430, %v5429
        %v5452 = vpack.c.b16 %v5432, %v5431
        %v5453 = vpack.c.b16 %v5434, %v5433
        %v5454 = vpack.c.b16 %v5436, %v5435
        %v5455 = vpack.c.b16 %v5438, %v5437
        %v5456 = vpack.c.b16 %v5440, %v5439
        %v5489 = vunpack.c.l.b16 %v5361
        %v5490 = vunpack.c.l.b16 %v5362
        %v5491 = vunpack.c.l.b16 %v5363
        %v5492 = vunpack.c.l.b16 %v5364
        %v5493 = vunpack.c.l.b16 %v5365
        %v5494 = vunpack.c.l.b16 %v5366
        %v5495 = vunpack.c.l.b16 %v5367
        %v5496 = vunpack.c.l.b16 %v5368
        %v5497 = vunpack.c.l.b16 %v5369
        %v5498 = vunpack.c.l.b16 %v5370
        %v5499 = vunpack.c.l.b16 %v5371
        %v5500 = vunpack.c.l.b16 %v5372
        %v5501 = vunpack.c.l.b16 %v5373
        %v5502 = vunpack.c.l.b16 %v5374
        %v5503 = vunpack.c.l.b16 %v5375
        %v5504 = vunpack.c.l.b16 %v5376
        %v5505 = vpack.c.b16 %v5490, %v5489
        %v5506 = vpack.c.b16 %v5492, %v5491
        %v5507 = vpack.c.b16 %v5494, %v5493
        %v5508 = vpack.c.b16 %v5496, %v5495
        %v5509 = vpack.c.b16 %v5498, %v5497
        %v5510 = vpack.c.b16 %v5500, %v5499
        %v5511 = vpack.c.b16 %v5502, %v5501
        %v5512 = vpack.c.b16 %v5504, %v5503
        %5521 = vmatprep.subr.bf16.mxu0 0
        %5522 = vmatpush1.bf16.msra.mxu0 %v5512
        %5523 = vmatprep.subr.bf16.mxu0 0
        %5524 = vmatpush1.bf16.msra.mxu0 %v5511
        %5525 = vmatprep.subr.bf16.mxu0 0
        %5526 = vmatpush1.bf16.msra.mxu0 %v5510
        %5527 = vmatprep.subr.bf16.mxu0 0
        %5528 = vmatpush1.bf16.msra.mxu0 %v5509
        %5529 = vmatprep.subr.bf16.mxu0 0
        %5530 = vmatpush1.bf16.msra.mxu0 %v5508
        %5531 = vmatprep.subr.bf16.mxu0 0
        %5532 = vmatpush1.bf16.msra.mxu0 %v5507
        %5533 = vmatprep.subr.bf16.mxu0 0
        %5534 = vmatpush1.bf16.msra.mxu0 %v5506
        %5535 = vmatprep.subr.bf16.mxu0 0
        %5536 = vmatpush1.bf16.msra.mxu0 %v5505
        %5537 = vmatprep.subr.bf16.mxu0 0
        %5538 = vmatpush2.bf16.msra.mxu0 0
        %5539 = vmatprep.subr.bf16.mxu0 0
        %5540 = vmatpush2.bf16.msra.mxu0 0
        %5541 = vmatprep.subr.bf16.mxu0 0
        %5542 = vmatpush2.bf16.msra.mxu0 0
        %5543 = vmatprep.subr.bf16.mxu0 0
        %5544 = vmatpush2.bf16.msra.mxu0 0
        %5545 = vmatprep.subr.bf16.mxu0 0
        %5546 = vmatpush2.bf16.msra.mxu0 0
        %5547 = vmatprep.subr.bf16.mxu0 0
        %5548 = vmatpush2.bf16.msra.mxu0 0
        %5549 = vmatprep.subr.bf16.mxu0 0
        %5550 = vmatpush2.bf16.msra.mxu0 0
        %5551 = vmatprep.subr.bf16.mxu0 0
        %5552 = vmatpush2.bf16.msra.mxu0 0
        %5553 = vmatprep.mubr.bf16.mxu0 0
        %5554 = vmatmul.mubr.bf16.gmra.mxu0 %v5441
        %v5555 = vpop.f32.mrf.mxu0
        %v5556 = vadd.f32 0.0, %v5555
        %v5557 = vpop.f32.mrf.mxu0
        %v5558 = vpop.f32.mrf.mxu0
        %v5559 = vadd.f32 0.0, %v5558
        %v5560 = vpop.f32.mrf.mxu0
        %5561 = vmatprep.mubr.bf16.mxu0 0
        %5562 = vmatmul.mubr.bf16.gmra.mxu0 %v5442
        %v5563 = vpop.f32.mrf.mxu0
        %v5564 = vadd.f32 0.0, %v5563
        %v5565 = vpop.f32.mrf.mxu0
        %v5566 = vpop.f32.mrf.mxu0
        %v5567 = vadd.f32 0.0, %v5566
        %v5568 = vpop.f32.mrf.mxu0
        %5569 = vmatprep.mubr.bf16.mxu0 0
        %5570 = vmatmul.mubr.bf16.gmra.mxu0 %v5443
        %v5571 = vpop.f32.mrf.mxu0
        %v5572 = vadd.f32 0.0, %v5571
        %v5573 = vpop.f32.mrf.mxu0
        %v5574 = vpop.f32.mrf.mxu0
        %v5575 = vadd.f32 0.0, %v5574
        %v5576 = vpop.f32.mrf.mxu0
        %5577 = vmatprep.mubr.bf16.mxu0 0
        %5578 = vmatmul.mubr.bf16.gmra.mxu0 %v5444
        %v5579 = vpop.f32.mrf.mxu0
        %v5580 = vadd.f32 0.0, %v5579
        %v5581 = vpop.f32.mrf.mxu0
        %v5582 = vpop.f32.mrf.mxu0
        %v5583 = vadd.f32 0.0, %v5582
        %v5584 = vpop.f32.mrf.mxu0
        %5585 = vmatprep.mubr.bf16.mxu0 0
        %5586 = vmatmul.mubr.bf16.gmra.mxu0 %v5445
        %v5587 = vpop.f32.mrf.mxu0
        %v5588 = vadd.f32 0.0, %v5587
        %v5589 = vpop.f32.mrf.mxu0
        %v5590 = vpop.f32.mrf.mxu0
        %v5591 = vadd.f32 0.0, %v5590
        %v5592 = vpop.f32.mrf.mxu0
        %5593 = vmatprep.mubr.bf16.mxu0 0
        %5594 = vmatmul.mubr.bf16.gmra.mxu0 %v5446
        %v5595 = vpop.f32.mrf.mxu0
        %v5596 = vadd.f32 0.0, %v5595
        %v5597 = vpop.f32.mrf.mxu0
        %v5598 = vpop.f32.mrf.mxu0
        %v5599 = vadd.f32 0.0, %v5598
        %v5600 = vpop.f32.mrf.mxu0
        %5601 = vmatprep.mubr.bf16.mxu0 0
        %5602 = vmatmul.mubr.bf16.gmra.mxu0 %v5447
        %v5603 = vpop.f32.mrf.mxu0
        %v5604 = vadd.f32 0.0, %v5603
        %v5605 = vpop.f32.mrf.mxu0
        %v5606 = vpop.f32.mrf.mxu0
        %v5607 = vadd.f32 0.0, %v5606
        %v5608 = vpop.f32.mrf.mxu0
        %5609 = vmatprep.mubr.bf16.mxu0 0
        %5610 = vmatmul.mubr.bf16.gmra.mxu0 %v5448
        %v5611 = vpop.f32.mrf.mxu0
        %v5612 = vadd.f32 0.0, %v5611
        %v5613 = vpop.f32.mrf.mxu0
        %v5614 = vpop.f32.mrf.mxu0
        %v5615 = vadd.f32 0.0, %v5614
        %v5616 = vpop.f32.mrf.mxu0
        %5617 = vmatprep.mubr.bf16.mxu0 0
        %5618 = vmatmul.mubr.bf16.gmra.mxu0 %v5449
        %v5619 = vpop.f32.mrf.mxu0
        %v5620 = vadd.f32 0.0, %v5619
        %v5621 = vpop.f32.mrf.mxu0
        %v5622 = vpop.f32.mrf.mxu0
        %v5623 = vadd.f32 0.0, %v5622
        %v5624 = vpop.f32.mrf.mxu0
        %5625 = vmatprep.mubr.bf16.mxu0 0
        %5626 = vmatmul.mubr.bf16.gmra.mxu0 %v5450
        %v5627 = vpop.f32.mrf.mxu0
        %v5628 = vadd.f32 0.0, %v5627
        %v5629 = vpop.f32.mrf.mxu0
        %v5630 = vpop.f32.mrf.mxu0
        %v5631 = vadd.f32 0.0, %v5630
        %v5632 = vpop.f32.mrf.mxu0
        %5633 = vmatprep.mubr.bf16.mxu0 0
        %5634 = vmatmul.mubr.bf16.gmra.mxu0 %v5451
        %v5635 = vpop.f32.mrf.mxu0
        %v5636 = vadd.f32 0.0, %v5635
        %v5637 = vpop.f32.mrf.mxu0
        %v5638 = vpop.f32.mrf.mxu0
        %v5639 = vadd.f32 0.0, %v5638
        %v5640 = vpop.f32.mrf.mxu0
        %5641 = vmatprep.mubr.bf16.mxu0 0
        %5642 = vmatmul.mubr.bf16.gmra.mxu0 %v5452
        %v5643 = vpop.f32.mrf.mxu0
        %v5644 = vadd.f32 0.0, %v5643
        %v5645 = vpop.f32.mrf.mxu0
        %v5646 = vpop.f32.mrf.mxu0
        %v5647 = vadd.f32 0.0, %v5646
        %v5648 = vpop.f32.mrf.mxu0
        %5649 = vmatprep.mubr.bf16.mxu0 0
        %5650 = vmatmul.mubr.bf16.gmra.mxu0 %v5453
        %v5651 = vpop.f32.mrf.mxu0
        %v5652 = vadd.f32 0.0, %v5651
        %v5653 = vpop.f32.mrf.mxu0
        %v5654 = vpop.f32.mrf.mxu0
        %v5655 = vadd.f32 0.0, %v5654
        %v5656 = vpop.f32.mrf.mxu0
        %5657 = vmatprep.mubr.bf16.mxu0 0
        %5658 = vmatmul.mubr.bf16.gmra.mxu0 %v5454
        %v5659 = vpop.f32.mrf.mxu0
        %v5660 = vadd.f32 0.0, %v5659
        %v5661 = vpop.f32.mrf.mxu0
        %v5662 = vpop.f32.mrf.mxu0
        %v5663 = vadd.f32 0.0, %v5662
        %v5664 = vpop.f32.mrf.mxu0
        %5665 = vmatprep.mubr.bf16.mxu0 0
        %5666 = vmatmul.mubr.bf16.gmra.mxu0 %v5455
        %v5667 = vpop.f32.mrf.mxu0
        %v5668 = vadd.f32 0.0, %v5667
        %v5669 = vpop.f32.mrf.mxu0
        %v5670 = vpop.f32.mrf.mxu0
        %v5671 = vadd.f32 0.0, %v5670
        %v5672 = vpop.f32.mrf.mxu0
        %5673 = vmatprep.mubr.bf16.mxu0 0
        %5674 = vmatmul.mubr.bf16.gmra.mxu0 %v5456
        %v5675 = vpop.f32.mrf.mxu0
        %v5676 = vadd.f32 0.0, %v5675
        %v5677 = vpop.f32.mrf.mxu0
        %v5678 = vpop.f32.mrf.mxu0
        %v5679 = vadd.f32 0.0, %v5678
        %v5680 = vpop.f32.mrf.mxu0
        %5681 = vdwg.mxu0
        %v5682 = vadd.f32 %v5329, %v5556
        %v5683 = vadd.f32 %v5330, %v5559
        %v5684 = vadd.f32 %v5331, %v5564
        %v5685 = vadd.f32 %v5332, %v5567
        %v5686 = vadd.f32 %v5333, %v5572
        %v5687 = vadd.f32 %v5334, %v5575
        %v5688 = vadd.f32 %v5335, %v5580
        %v5689 = vadd.f32 %v5336, %v5583
        %v5690 = vadd.f32 %v5337, %v5588
        %v5691 = vadd.f32 %v5338, %v5591
        %v5692 = vadd.f32 %v5339, %v5596
        %v5693 = vadd.f32 %v5340, %v5599
        %v5694 = vadd.f32 %v5341, %v5604
        %v5695 = vadd.f32 %v5342, %v5607
        %v5696 = vadd.f32 %v5343, %v5612
        %v5697 = vadd.f32 %v5344, %v5615
        %v5698 = vadd.f32 %v5345, %v5620
        %v5699 = vadd.f32 %v5346, %v5623
        %v5700 = vadd.f32 %v5347, %v5628
        %v5701 = vadd.f32 %v5348, %v5631
        %v5702 = vadd.f32 %v5349, %v5636
        %v5703 = vadd.f32 %v5350, %v5639
        %v5704 = vadd.f32 %v5351, %v5644
        %v5705 = vadd.f32 %v5352, %v5647
        %v5706 = vadd.f32 %v5353, %v5652
        %v5707 = vadd.f32 %v5354, %v5655
        %v5708 = vadd.f32 %v5355, %v5660
        %v5709 = vadd.f32 %v5356, %v5663
        %v5710 = vadd.f32 %v5357, %v5668
        %v5711 = vadd.f32 %v5358, %v5671
        %v5712 = vadd.f32 %v5359, %v5676
        %v5713 = vadd.f32 %v5360, %v5679
        %v5714 = vld [vmem:[%s4559 + $0x4] sm:$0xf]
        %v5715 = vld [vmem:[%s4559 + $0x8] sm:$0x1]
        %v5716 = vld [vmem:[%s4559 + $0x10] sm:$0xf]
        %v5717 = vld [vmem:[%s4559 + $0x14] sm:$0x1]
        %v5718 = vld [vmem:[%s4559 + $0x1c] sm:$0xf]
        %v5719 = vld [vmem:[%s4559 + $0x20] sm:$0x1]
        %v5720 = vld [vmem:[%s4559 + $0x28] sm:$0xf]
        %v5721 = vld [vmem:[%s4559 + $0x2c] sm:$0x1]
        %v5722 = vld [vmem:[%s4559 + $0x34] sm:$0xf]
        %v5723 = vld [vmem:[%s4559 + $0x38] sm:$0x1]
        %v5724 = vld [vmem:[%s4559 + $0x40] sm:$0xf]
        %v5725 = vld [vmem:[%s4559 + $0x44] sm:$0x1]
        %v5726 = vld [vmem:[%s4559 + $0x4c] sm:$0xf]
        %v5727 = vld [vmem:[%s4559 + $0x50] sm:$0x1]
        %v5728 = vld [vmem:[%s4559 + $0x58] sm:$0xf]
        %v5729 = vld [vmem:[%s4559 + $0x5c] sm:$0x1]
        %v5730 = vld [vmem:[%s4559 + $0x7c] sm:$0xf]
        %v5731 = vld [vmem:[%s4559 + $0x80] sm:$0x1]
        %v5732 = vld [vmem:[%s4559 + $0x88] sm:$0xf]
        %v5733 = vld [vmem:[%s4559 + $0x8c] sm:$0x1]
        %v5734 = vld [vmem:[%s4559 + $0x94] sm:$0xf]
        %v5735 = vld [vmem:[%s4559 + $0x98] sm:$0x1]
        %v5736 = vld [vmem:[%s4559 + $0xa0] sm:$0xf]
        %v5737 = vld [vmem:[%s4559 + $0xa4] sm:$0x1]
        %v5738 = vld [vmem:[%s4559 + $0xac] sm:$0xf]
        %v5739 = vld [vmem:[%s4559 + $0xb0] sm:$0x1]
        %v5740 = vld [vmem:[%s4559 + $0xb8] sm:$0xf]
        %v5741 = vld [vmem:[%s4559 + $0xbc] sm:$0x1]
        %v5742 = vld [vmem:[%s4559 + $0xc4] sm:$0xf]
        %v5743 = vld [vmem:[%s4559 + $0xc8] sm:$0x1]
        %v5744 = vld [vmem:[%s4559 + $0xd0] sm:$0xf]
        %v5745 = vld [vmem:[%s4559 + $0xd4] sm:$0x1]
        %v5746 = vld [vmem:[%s4559 + $0xf4] sm:$0xf]
        %v5747 = vld [vmem:[%s4559 + $0xf8] sm:$0x1]
        %v5748 = vld [vmem:[%s4559 + $0x100] sm:$0xf]
        %v5749 = vld [vmem:[%s4559 + $0x104] sm:$0x1]
        %v5750 = vld [vmem:[%s4559 + $0x10c] sm:$0xf]
        %v5751 = vld [vmem:[%s4559 + $0x110] sm:$0x1]
        %v5752 = vld [vmem:[%s4559 + $0x118] sm:$0xf]
        %v5753 = vld [vmem:[%s4559 + $0x11c] sm:$0x1]
        %v5754 = vld [vmem:[%s4559 + $0x124] sm:$0xf]
        %v5755 = vld [vmem:[%s4559 + $0x128] sm:$0x1]
        %v5756 = vld [vmem:[%s4559 + $0x130] sm:$0xf]
        %v5757 = vld [vmem:[%s4559 + $0x134] sm:$0x1]
        %v5758 = vld [vmem:[%s4559 + $0x13c] sm:$0xf]
        %v5759 = vld [vmem:[%s4559 + $0x140] sm:$0x1]
        %v5760 = vld [vmem:[%s4559 + $0x148] sm:$0xf]
        %v5761 = vld [vmem:[%s4559 + $0x14c] sm:$0x1]
        %v5762 = vld [vmem:[%s4559 + $0x16c] sm:$0xf]
        %v5763 = vld [vmem:[%s4559 + $0x170] sm:$0x1]
        %v5764 = vld [vmem:[%s4559 + $0x178] sm:$0xf]
        %v5765 = vld [vmem:[%s4559 + $0x17c] sm:$0x1]
        %v5766 = vld [vmem:[%s4559 + $0x184] sm:$0xf]
        %v5767 = vld [vmem:[%s4559 + $0x188] sm:$0x1]
        %v5768 = vld [vmem:[%s4559 + $0x190] sm:$0xf]
        %v5769 = vld [vmem:[%s4559 + $0x194] sm:$0x1]
        %v5770 = vld [vmem:[%s4559 + $0x19c] sm:$0xf]
        %v5771 = vld [vmem:[%s4559 + $0x1a0] sm:$0x1]
        %v5772 = vld [vmem:[%s4559 + $0x1a8] sm:$0xf]
        %v5773 = vld [vmem:[%s4559 + $0x1ac] sm:$0x1]
        %v5774 = vld [vmem:[%s4559 + $0x1b4] sm:$0xf]
        %v5775 = vld [vmem:[%s4559 + $0x1b8] sm:$0x1]
        %v5776 = vld [vmem:[%s4559 + $0x1c0] sm:$0xf]
        %v5777 = vld [vmem:[%s4559 + $0x1c4] sm:$0x1]
        %v5779 = vshrl.u32 %v5714, 16
        %v5781 = vrot.slane %v5779, 4
        %v5782 = vshll.u32 %v5714, 16
        %v5784 = vrot.slane %v5782, 5
        %v5785 = vor.u32 %v5781, %v5784
        %v5786 = vrot.slane %v5785, 4
        %v5788 = vshll.u32 %v5715, 16
        %v5790 = vrot.slane %v5788, 5
        %v5791 = vsel %vm1802, %v5786, %v5790
        %v5793 = vshrl.u32 %v5716, 16
        %v5795 = vrot.slane %v5793, 4
        %v5796 = vshll.u32 %v5716, 16
        %v5798 = vrot.slane %v5796, 5
        %v5799 = vor.u32 %v5795, %v5798
        %v5800 = vrot.slane %v5799, 4
        %v5802 = vshll.u32 %v5717, 16
        %v5804 = vrot.slane %v5802, 5
        %v5805 = vsel %vm1802, %v5800, %v5804
        %v5807 = vshrl.u32 %v5718, 16
        %v5809 = vrot.slane %v5807, 4
        %v5810 = vshll.u32 %v5718, 16
        %v5812 = vrot.slane %v5810, 5
        %v5813 = vor.u32 %v5809, %v5812
        %v5814 = vrot.slane %v5813, 4
        %v5816 = vshll.u32 %v5719, 16
        %v5818 = vrot.slane %v5816, 5
        %v5819 = vsel %vm1802, %v5814, %v5818
        %v5821 = vshrl.u32 %v5720, 16
        %v5823 = vrot.slane %v5821, 4
        %v5824 = vshll.u32 %v5720, 16
        %v5826 = vrot.slane %v5824, 5
        %v5827 = vor.u32 %v5823, %v5826
        %v5828 = vrot.slane %v5827, 4
        %v5830 = vshll.u32 %v5721, 16
        %v5832 = vrot.slane %v5830, 5
        %v5833 = vsel %vm1802, %v5828, %v5832
        %v5835 = vshrl.u32 %v5722, 16
        %v5837 = vrot.slane %v5835, 4
        %v5838 = vshll.u32 %v5722, 16
        %v5840 = vrot.slane %v5838, 5
        %v5841 = vor.u32 %v5837, %v5840
        %v5842 = vrot.slane %v5841, 4
        %v5844 = vshll.u32 %v5723, 16
        %v5846 = vrot.slane %v5844, 5
        %v5847 = vsel %vm1802, %v5842, %v5846
        %v5849 = vshrl.u32 %v5724, 16
        %v5851 = vrot.slane %v5849, 4
        %v5852 = vshll.u32 %v5724, 16
        %v5854 = vrot.slane %v5852, 5
        %v5855 = vor.u32 %v5851, %v5854
        %v5856 = vrot.slane %v5855, 4
        %v5858 = vshll.u32 %v5725, 16
        %v5860 = vrot.slane %v5858, 5
        %v5861 = vsel %vm1802, %v5856, %v5860
        %v5863 = vshrl.u32 %v5726, 16
        %v5865 = vrot.slane %v5863, 4
        %v5866 = vshll.u32 %v5726, 16
        %v5868 = vrot.slane %v5866, 5
        %v5869 = vor.u32 %v5865, %v5868
        %v5870 = vrot.slane %v5869, 4
        %v5872 = vshll.u32 %v5727, 16
        %v5874 = vrot.slane %v5872, 5
        %v5875 = vsel %vm1802, %v5870, %v5874
        %v5877 = vshrl.u32 %v5728, 16
        %v5879 = vrot.slane %v5877, 4
        %v5880 = vshll.u32 %v5728, 16
        %v5882 = vrot.slane %v5880, 5
        %v5883 = vor.u32 %v5879, %v5882
        %v5884 = vrot.slane %v5883, 4
        %v5886 = vshll.u32 %v5729, 16
        %v5888 = vrot.slane %v5886, 5
        %v5889 = vsel %vm1802, %v5884, %v5888
        %v5891 = vshrl.u32 %v5730, 16
        %v5893 = vrot.slane %v5891, 4
        %v5894 = vshll.u32 %v5730, 16
        %v5896 = vrot.slane %v5894, 5
        %v5897 = vor.u32 %v5893, %v5896
        %v5898 = vrot.slane %v5897, 4
        %v5900 = vshll.u32 %v5731, 16
        %v5902 = vrot.slane %v5900, 5
        %v5903 = vsel %vm1802, %v5898, %v5902
        %v5905 = vshrl.u32 %v5732, 16
        %v5907 = vrot.slane %v5905, 4
        %v5908 = vshll.u32 %v5732, 16
        %v5910 = vrot.slane %v5908, 5
        %v5911 = vor.u32 %v5907, %v5910
        %v5912 = vrot.slane %v5911, 4
        %v5914 = vshll.u32 %v5733, 16
        %v5916 = vrot.slane %v5914, 5
        %v5917 = vsel %vm1802, %v5912, %v5916
        %v5919 = vshrl.u32 %v5734, 16
        %v5921 = vrot.slane %v5919, 4
        %v5922 = vshll.u32 %v5734, 16
        %v5924 = vrot.slane %v5922, 5
        %v5925 = vor.u32 %v5921, %v5924
        %v5926 = vrot.slane %v5925, 4
        %v5928 = vshll.u32 %v5735, 16
        %v5930 = vrot.slane %v5928, 5
        %v5931 = vsel %vm1802, %v5926, %v5930
        %v5933 = vshrl.u32 %v5736, 16
        %v5935 = vrot.slane %v5933, 4
        %v5936 = vshll.u32 %v5736, 16
        %v5938 = vrot.slane %v5936, 5
        %v5939 = vor.u32 %v5935, %v5938
        %v5940 = vrot.slane %v5939, 4
        %v5942 = vshll.u32 %v5737, 16
        %v5944 = vrot.slane %v5942, 5
        %v5945 = vsel %vm1802, %v5940, %v5944
        %v5947 = vshrl.u32 %v5738, 16
        %v5949 = vrot.slane %v5947, 4
        %v5950 = vshll.u32 %v5738, 16
        %v5952 = vrot.slane %v5950, 5
        %v5953 = vor.u32 %v5949, %v5952
        %v5954 = vrot.slane %v5953, 4
        %v5956 = vshll.u32 %v5739, 16
        %v5958 = vrot.slane %v5956, 5
        %v5959 = vsel %vm1802, %v5954, %v5958
        %v5961 = vshrl.u32 %v5740, 16
        %v5963 = vrot.slane %v5961, 4
        %v5964 = vshll.u32 %v5740, 16
        %v5966 = vrot.slane %v5964, 5
        %v5967 = vor.u32 %v5963, %v5966
        %v5968 = vrot.slane %v5967, 4
        %v5970 = vshll.u32 %v5741, 16
        %v5972 = vrot.slane %v5970, 5
        %v5973 = vsel %vm1802, %v5968, %v5972
        %v5975 = vshrl.u32 %v5742, 16
        %v5977 = vrot.slane %v5975, 4
        %v5978 = vshll.u32 %v5742, 16
        %v5980 = vrot.slane %v5978, 5
        %v5981 = vor.u32 %v5977, %v5980
        %v5982 = vrot.slane %v5981, 4
        %v5984 = vshll.u32 %v5743, 16
        %v5986 = vrot.slane %v5984, 5
        %v5987 = vsel %vm1802, %v5982, %v5986
        %v5989 = vshrl.u32 %v5744, 16
        %v5991 = vrot.slane %v5989, 4
        %v5992 = vshll.u32 %v5744, 16
        %v5994 = vrot.slane %v5992, 5
        %v5995 = vor.u32 %v5991, %v5994
        %v5996 = vrot.slane %v5995, 4
        %v5998 = vshll.u32 %v5745, 16
        %v6000 = vrot.slane %v5998, 5
        %v6001 = vsel %vm1802, %v5996, %v6000
        %v6003 = vshrl.u32 %v5746, 16
        %v6005 = vrot.slane %v6003, 4
        %v6006 = vshll.u32 %v5746, 16
        %v6008 = vrot.slane %v6006, 5
        %v6009 = vor.u32 %v6005, %v6008
        %v6010 = vrot.slane %v6009, 4
        %v6012 = vshll.u32 %v5747, 16
        %v6014 = vrot.slane %v6012, 5
        %v6015 = vsel %vm1802, %v6010, %v6014
        %v6017 = vshrl.u32 %v5748, 16
        %v6019 = vrot.slane %v6017, 4
        %v6020 = vshll.u32 %v5748, 16
        %v6022 = vrot.slane %v6020, 5
        %v6023 = vor.u32 %v6019, %v6022
        %v6024 = vrot.slane %v6023, 4
        %v6026 = vshll.u32 %v5749, 16
        %v6028 = vrot.slane %v6026, 5
        %v6029 = vsel %vm1802, %v6024, %v6028
        %v6031 = vshrl.u32 %v5750, 16
        %v6033 = vrot.slane %v6031, 4
        %v6034 = vshll.u32 %v5750, 16
        %v6036 = vrot.slane %v6034, 5
        %v6037 = vor.u32 %v6033, %v6036
        %v6038 = vrot.slane %v6037, 4
        %v6040 = vshll.u32 %v5751, 16
        %v6042 = vrot.slane %v6040, 5
        %v6043 = vsel %vm1802, %v6038, %v6042
        %v6045 = vshrl.u32 %v5752, 16
        %v6047 = vrot.slane %v6045, 4
        %v6048 = vshll.u32 %v5752, 16
        %v6050 = vrot.slane %v6048, 5
        %v6051 = vor.u32 %v6047, %v6050
        %v6052 = vrot.slane %v6051, 4
        %v6054 = vshll.u32 %v5753, 16
        %v6056 = vrot.slane %v6054, 5
        %v6057 = vsel %vm1802, %v6052, %v6056
        %v6059 = vshrl.u32 %v5754, 16
        %v6061 = vrot.slane %v6059, 4
        %v6062 = vshll.u32 %v5754, 16
        %v6064 = vrot.slane %v6062, 5
        %v6065 = vor.u32 %v6061, %v6064
        %v6066 = vrot.slane %v6065, 4
        %v6068 = vshll.u32 %v5755, 16
        %v6070 = vrot.slane %v6068, 5
        %v6071 = vsel %vm1802, %v6066, %v6070
        %v6073 = vshrl.u32 %v5756, 16
        %v6075 = vrot.slane %v6073, 4
        %v6076 = vshll.u32 %v5756, 16
        %v6078 = vrot.slane %v6076, 5
        %v6079 = vor.u32 %v6075, %v6078
        %v6080 = vrot.slane %v6079, 4
        %v6082 = vshll.u32 %v5757, 16
        %v6084 = vrot.slane %v6082, 5
        %v6085 = vsel %vm1802, %v6080, %v6084
        %v6087 = vshrl.u32 %v5758, 16
        %v6089 = vrot.slane %v6087, 4
        %v6090 = vshll.u32 %v5758, 16
        %v6092 = vrot.slane %v6090, 5
        %v6093 = vor.u32 %v6089, %v6092
        %v6094 = vrot.slane %v6093, 4
        %v6096 = vshll.u32 %v5759, 16
        %v6098 = vrot.slane %v6096, 5
        %v6099 = vsel %vm1802, %v6094, %v6098
        %v6101 = vshrl.u32 %v5760, 16
        %v6103 = vrot.slane %v6101, 4
        %v6104 = vshll.u32 %v5760, 16
        %v6106 = vrot.slane %v6104, 5
        %v6107 = vor.u32 %v6103, %v6106
        %v6108 = vrot.slane %v6107, 4
        %v6110 = vshll.u32 %v5761, 16
        %v6112 = vrot.slane %v6110, 5
        %v6113 = vsel %vm1802, %v6108, %v6112
        %v6115 = vshrl.u32 %v5762, 16
        %v6117 = vrot.slane %v6115, 4
        %v6118 = vshll.u32 %v5762, 16
        %v6120 = vrot.slane %v6118, 5
        %v6121 = vor.u32 %v6117, %v6120
        %v6122 = vrot.slane %v6121, 4
        %v6124 = vshll.u32 %v5763, 16
        %v6126 = vrot.slane %v6124, 5
        %v6127 = vsel %vm1802, %v6122, %v6126
        %v6129 = vshrl.u32 %v5764, 16
        %v6131 = vrot.slane %v6129, 4
        %v6132 = vshll.u32 %v5764, 16
        %v6134 = vrot.slane %v6132, 5
        %v6135 = vor.u32 %v6131, %v6134
        %v6136 = vrot.slane %v6135, 4
        %v6138 = vshll.u32 %v5765, 16
        %v6140 = vrot.slane %v6138, 5
        %v6141 = vsel %vm1802, %v6136, %v6140
        %v6143 = vshrl.u32 %v5766, 16
        %v6145 = vrot.slane %v6143, 4
        %v6146 = vshll.u32 %v5766, 16
        %v6148 = vrot.slane %v6146, 5
        %v6149 = vor.u32 %v6145, %v6148
        %v6150 = vrot.slane %v6149, 4
        %v6152 = vshll.u32 %v5767, 16
        %v6154 = vrot.slane %v6152, 5
        %v6155 = vsel %vm1802, %v6150, %v6154
        %v6157 = vshrl.u32 %v5768, 16
        %v6159 = vrot.slane %v6157, 4
        %v6160 = vshll.u32 %v5768, 16
        %v6162 = vrot.slane %v6160, 5
        %v6163 = vor.u32 %v6159, %v6162
        %v6164 = vrot.slane %v6163, 4
        %v6166 = vshll.u32 %v5769, 16
        %v6168 = vrot.slane %v6166, 5
        %v6169 = vsel %vm1802, %v6164, %v6168
        %v6171 = vshrl.u32 %v5770, 16
        %v6173 = vrot.slane %v6171, 4
        %v6174 = vshll.u32 %v5770, 16
        %v6176 = vrot.slane %v6174, 5
        %v6177 = vor.u32 %v6173, %v6176
        %v6178 = vrot.slane %v6177, 4
        %v6180 = vshll.u32 %v5771, 16
        %v6182 = vrot.slane %v6180, 5
        %v6183 = vsel %vm1802, %v6178, %v6182
        %v6185 = vshrl.u32 %v5772, 16
        %v6187 = vrot.slane %v6185, 4
        %v6188 = vshll.u32 %v5772, 16
        %v6190 = vrot.slane %v6188, 5
        %v6191 = vor.u32 %v6187, %v6190
        %v6192 = vrot.slane %v6191, 4
        %v6194 = vshll.u32 %v5773, 16
        %v6196 = vrot.slane %v6194, 5
        %v6197 = vsel %vm1802, %v6192, %v6196
        %v6199 = vshrl.u32 %v5774, 16
        %v6201 = vrot.slane %v6199, 4
        %v6202 = vshll.u32 %v5774, 16
        %v6204 = vrot.slane %v6202, 5
        %v6205 = vor.u32 %v6201, %v6204
        %v6206 = vrot.slane %v6205, 4
        %v6208 = vshll.u32 %v5775, 16
        %v6210 = vrot.slane %v6208, 5
        %v6211 = vsel %vm1802, %v6206, %v6210
        %v6213 = vshrl.u32 %v5776, 16
        %v6215 = vrot.slane %v6213, 4
        %v6216 = vshll.u32 %v5776, 16
        %v6218 = vrot.slane %v6216, 5
        %v6219 = vor.u32 %v6215, %v6218
        %v6220 = vrot.slane %v6219, 4
        %v6222 = vshll.u32 %v5777, 16
        %v6224 = vrot.slane %v6222, 5
        %v6225 = vsel %vm1802, %v6220, %v6224
        %v6226 = vld [vmem:[#allocation6 + $0x200] sm:$0xf]
        %v6227 = vld [vmem:[#allocation6 + $0x204] sm:$0xf]
        %v6228 = vld [vmem:[#allocation6 + $0x208] sm:$0xf]
        %v6229 = vld [vmem:[#allocation6 + $0x20c] sm:$0xf]
        %v6230 = vld [vmem:[#allocation6 + $0x210] sm:$0xf]
        %v6231 = vld [vmem:[#allocation6 + $0x214] sm:$0xf]
        %v6232 = vld [vmem:[#allocation6 + $0x218] sm:$0xf]
        %v6233 = vld [vmem:[#allocation6 + $0x21c] sm:$0xf]
        %v6234 = vld [vmem:[#allocation6 + $0x220] sm:$0xf]
        %v6235 = vld [vmem:[#allocation6 + $0x224] sm:$0xf]
        %v6236 = vld [vmem:[#allocation6 + $0x228] sm:$0xf]
        %v6237 = vld [vmem:[#allocation6 + $0x22c] sm:$0xf]
        %v6238 = vld [vmem:[#allocation6 + $0x230] sm:$0xf]
        %v6239 = vld [vmem:[#allocation6 + $0x234] sm:$0xf]
        %v6240 = vld [vmem:[#allocation6 + $0x238] sm:$0xf]
        %v6241 = vld [vmem:[#allocation6 + $0x23c] sm:$0xf]
        %v6242 = vunpack.c.l.b16 %v5791
        %v6243 = vunpack.c.l.b16 %v5805
        %v6244 = vunpack.c.l.b16 %v5819
        %v6245 = vunpack.c.l.b16 %v5833
        %v6246 = vunpack.c.l.b16 %v5847
        %v6247 = vunpack.c.l.b16 %v5861
        %v6248 = vunpack.c.l.b16 %v5875
        %v6249 = vunpack.c.l.b16 %v5889
        %v6250 = vunpack.c.l.b16 %v5903
        %v6251 = vunpack.c.l.b16 %v5917
        %v6252 = vunpack.c.l.b16 %v5931
        %v6253 = vunpack.c.l.b16 %v5945
        %v6254 = vunpack.c.l.b16 %v5959
        %v6255 = vunpack.c.l.b16 %v5973
        %v6256 = vunpack.c.l.b16 %v5987
        %v6257 = vunpack.c.l.b16 %v6001
        %v6258 = vunpack.c.l.b16 %v6015
        %v6259 = vunpack.c.l.b16 %v6029
        %v6260 = vunpack.c.l.b16 %v6043
        %v6261 = vunpack.c.l.b16 %v6057
        %v6262 = vunpack.c.l.b16 %v6071
        %v6263 = vunpack.c.l.b16 %v6085
        %v6264 = vunpack.c.l.b16 %v6099
        %v6265 = vunpack.c.l.b16 %v6113
        %v6266 = vunpack.c.l.b16 %v6127
        %v6267 = vunpack.c.l.b16 %v6141
        %v6268 = vunpack.c.l.b16 %v6155
        %v6269 = vunpack.c.l.b16 %v6169
        %v6270 = vunpack.c.l.b16 %v6183
        %v6271 = vunpack.c.l.b16 %v6197
        %v6272 = vunpack.c.l.b16 %v6211
        %v6273 = vunpack.c.l.b16 %v6225
        %v6274 = vpack.c.b16 %v6243, %v6242
        %v6275 = vpack.c.b16 %v6245, %v6244
        %v6276 = vpack.c.b16 %v6247, %v6246
        %v6277 = vpack.c.b16 %v6249, %v6248
        %v6278 = vpack.c.b16 %v6251, %v6250
        %v6279 = vpack.c.b16 %v6253, %v6252
        %v6280 = vpack.c.b16 %v6255, %v6254
        %v6281 = vpack.c.b16 %v6257, %v6256
        %v6282 = vpack.c.b16 %v6259, %v6258
        %v6283 = vpack.c.b16 %v6261, %v6260
        %v6284 = vpack.c.b16 %v6263, %v6262
        %v6285 = vpack.c.b16 %v6265, %v6264
        %v6286 = vpack.c.b16 %v6267, %v6266
        %v6287 = vpack.c.b16 %v6269, %v6268
        %v6288 = vpack.c.b16 %v6271, %v6270
        %v6289 = vpack.c.b16 %v6273, %v6272
        %v6322 = vunpack.c.l.b16 %v6226
        %v6323 = vunpack.c.l.b16 %v6227
        %v6324 = vunpack.c.l.b16 %v6228
        %v6325 = vunpack.c.l.b16 %v6229
        %v6326 = vunpack.c.l.b16 %v6230
        %v6327 = vunpack.c.l.b16 %v6231
        %v6328 = vunpack.c.l.b16 %v6232
        %v6329 = vunpack.c.l.b16 %v6233
        %v6330 = vunpack.c.l.b16 %v6234
        %v6331 = vunpack.c.l.b16 %v6235
        %v6332 = vunpack.c.l.b16 %v6236
        %v6333 = vunpack.c.l.b16 %v6237
        %v6334 = vunpack.c.l.b16 %v6238
        %v6335 = vunpack.c.l.b16 %v6239
        %v6336 = vunpack.c.l.b16 %v6240
        %v6337 = vunpack.c.l.b16 %v6241
        %v6338 = vpack.c.b16 %v6323, %v6322
        %v6339 = vpack.c.b16 %v6325, %v6324
        %v6340 = vpack.c.b16 %v6327, %v6326
        %v6341 = vpack.c.b16 %v6329, %v6328
        %v6342 = vpack.c.b16 %v6331, %v6330
        %v6343 = vpack.c.b16 %v6333, %v6332
        %v6344 = vpack.c.b16 %v6335, %v6334
        %v6345 = vpack.c.b16 %v6337, %v6336
        %6354 = vmatprep.subr.bf16.mxu0 0
        %6355 = vmatpush1.bf16.msra.mxu0 %v6345
        %6356 = vmatprep.subr.bf16.mxu0 0
        %6357 = vmatpush1.bf16.msra.mxu0 %v6344
        %6358 = vmatprep.subr.bf16.mxu0 0
        %6359 = vmatpush1.bf16.msra.mxu0 %v6343
        %6360 = vmatprep.subr.bf16.mxu0 0
        %6361 = vmatpush1.bf16.msra.mxu0 %v6342
        %6362 = vmatprep.subr.bf16.mxu0 0
        %6363 = vmatpush1.bf16.msra.mxu0 %v6341
        %6364 = vmatprep.subr.bf16.mxu0 0
        %6365 = vmatpush1.bf16.msra.mxu0 %v6340
        %6366 = vmatprep.subr.bf16.mxu0 0
        %6367 = vmatpush1.bf16.msra.mxu0 %v6339
        %6368 = vmatprep.subr.bf16.mxu0 0
        %6369 = vmatpush1.bf16.msra.mxu0 %v6338
        %6370 = vmatprep.subr.bf16.mxu0 0
        %6371 = vmatpush2.bf16.msra.mxu0 0
        %6372 = vmatprep.subr.bf16.mxu0 0
        %6373 = vmatpush2.bf16.msra.mxu0 0
        %6374 = vmatprep.subr.bf16.mxu0 0
        %6375 = vmatpush2.bf16.msra.mxu0 0
        %6376 = vmatprep.subr.bf16.mxu0 0
        %6377 = vmatpush2.bf16.msra.mxu0 0
        %6378 = vmatprep.subr.bf16.mxu0 0
        %6379 = vmatpush2.bf16.msra.mxu0 0
        %6380 = vmatprep.subr.bf16.mxu0 0
        %6381 = vmatpush2.bf16.msra.mxu0 0
        %6382 = vmatprep.subr.bf16.mxu0 0
        %6383 = vmatpush2.bf16.msra.mxu0 0
        %6384 = vmatprep.subr.bf16.mxu0 0
        %6385 = vmatpush2.bf16.msra.mxu0 0
        %6386 = vmatprep.mubr.bf16.mxu0 0
        %6387 = vmatmul.mubr.bf16.gmra.mxu0 %v6274
        %v6388 = vpop.f32.mrf.mxu0
        %v6389 = vadd.f32 0.0, %v6388
        %v6390 = vpop.f32.mrf.mxu0
        %v6391 = vpop.f32.mrf.mxu0
        %v6392 = vadd.f32 0.0, %v6391
        %v6393 = vpop.f32.mrf.mxu0
        %6394 = vmatprep.mubr.bf16.mxu0 0
        %6395 = vmatmul.mubr.bf16.gmra.mxu0 %v6275
        %v6396 = vpop.f32.mrf.mxu0
        %v6397 = vadd.f32 0.0, %v6396
        %v6398 = vpop.f32.mrf.mxu0
        %v6399 = vpop.f32.mrf.mxu0
        %v6400 = vadd.f32 0.0, %v6399
        %v6401 = vpop.f32.mrf.mxu0
        %6402 = vmatprep.mubr.bf16.mxu0 0
        %6403 = vmatmul.mubr.bf16.gmra.mxu0 %v6276
        %v6404 = vpop.f32.mrf.mxu0
        %v6405 = vadd.f32 0.0, %v6404
        %v6406 = vpop.f32.mrf.mxu0
        %v6407 = vpop.f32.mrf.mxu0
        %v6408 = vadd.f32 0.0, %v6407
        %v6409 = vpop.f32.mrf.mxu0
        %6410 = vmatprep.mubr.bf16.mxu0 0
        %6411 = vmatmul.mubr.bf16.gmra.mxu0 %v6277
        %v6412 = vpop.f32.mrf.mxu0
        %v6413 = vadd.f32 0.0, %v6412
        %v6414 = vpop.f32.mrf.mxu0
        %v6415 = vpop.f32.mrf.mxu0
        %v6416 = vadd.f32 0.0, %v6415
        %v6417 = vpop.f32.mrf.mxu0
        %6418 = vmatprep.mubr.bf16.mxu0 0
        %6419 = vmatmul.mubr.bf16.gmra.mxu0 %v6278
        %v6420 = vpop.f32.mrf.mxu0
        %v6421 = vadd.f32 0.0, %v6420
        %v6422 = vpop.f32.mrf.mxu0
        %v6423 = vpop.f32.mrf.mxu0
        %v6424 = vadd.f32 0.0, %v6423
        %v6425 = vpop.f32.mrf.mxu0
        %6426 = vmatprep.mubr.bf16.mxu0 0
        %6427 = vmatmul.mubr.bf16.gmra.mxu0 %v6279
        %v6428 = vpop.f32.mrf.mxu0
        %v6429 = vadd.f32 0.0, %v6428
        %v6430 = vpop.f32.mrf.mxu0
        %v6431 = vpop.f32.mrf.mxu0
        %v6432 = vadd.f32 0.0, %v6431
        %v6433 = vpop.f32.mrf.mxu0
        %6434 = vmatprep.mubr.bf16.mxu0 0
        %6435 = vmatmul.mubr.bf16.gmra.mxu0 %v6280
        %v6436 = vpop.f32.mrf.mxu0
        %v6437 = vadd.f32 0.0, %v6436
        %v6438 = vpop.f32.mrf.mxu0
        %v6439 = vpop.f32.mrf.mxu0
        %v6440 = vadd.f32 0.0, %v6439
        %v6441 = vpop.f32.mrf.mxu0
        %6442 = vmatprep.mubr.bf16.mxu0 0
        %6443 = vmatmul.mubr.bf16.gmra.mxu0 %v6281
        %v6444 = vpop.f32.mrf.mxu0
        %v6445 = vadd.f32 0.0, %v6444
        %v6446 = vpop.f32.mrf.mxu0
        %v6447 = vpop.f32.mrf.mxu0
        %v6448 = vadd.f32 0.0, %v6447
        %v6449 = vpop.f32.mrf.mxu0
        %6450 = vmatprep.mubr.bf16.mxu0 0
        %6451 = vmatmul.mubr.bf16.gmra.mxu0 %v6282
        %v6452 = vpop.f32.mrf.mxu0
        %v6453 = vadd.f32 0.0, %v6452
        %v6454 = vpop.f32.mrf.mxu0
        %v6455 = vpop.f32.mrf.mxu0
        %v6456 = vadd.f32 0.0, %v6455
        %v6457 = vpop.f32.mrf.mxu0
        %6458 = vmatprep.mubr.bf16.mxu0 0
        %6459 = vmatmul.mubr.bf16.gmra.mxu0 %v6283
        %v6460 = vpop.f32.mrf.mxu0
        %v6461 = vadd.f32 0.0, %v6460
        %v6462 = vpop.f32.mrf.mxu0
        %v6463 = vpop.f32.mrf.mxu0
        %v6464 = vadd.f32 0.0, %v6463
        %v6465 = vpop.f32.mrf.mxu0
        %6466 = vmatprep.mubr.bf16.mxu0 0
        %6467 = vmatmul.mubr.bf16.gmra.mxu0 %v6284
        %v6468 = vpop.f32.mrf.mxu0
        %v6469 = vadd.f32 0.0, %v6468
        %v6470 = vpop.f32.mrf.mxu0
        %v6471 = vpop.f32.mrf.mxu0
        %v6472 = vadd.f32 0.0, %v6471
        %v6473 = vpop.f32.mrf.mxu0
        %6474 = vmatprep.mubr.bf16.mxu0 0
        %6475 = vmatmul.mubr.bf16.gmra.mxu0 %v6285
        %v6476 = vpop.f32.mrf.mxu0
        %v6477 = vadd.f32 0.0, %v6476
        %v6478 = vpop.f32.mrf.mxu0
        %v6479 = vpop.f32.mrf.mxu0
        %v6480 = vadd.f32 0.0, %v6479
        %v6481 = vpop.f32.mrf.mxu0
        %6482 = vmatprep.mubr.bf16.mxu0 0
        %6483 = vmatmul.mubr.bf16.gmra.mxu0 %v6286
        %v6484 = vpop.f32.mrf.mxu0
        %v6485 = vadd.f32 0.0, %v6484
        %v6486 = vpop.f32.mrf.mxu0
        %v6487 = vpop.f32.mrf.mxu0
        %v6488 = vadd.f32 0.0, %v6487
        %v6489 = vpop.f32.mrf.mxu0
        %6490 = vmatprep.mubr.bf16.mxu0 0
        %6491 = vmatmul.mubr.bf16.gmra.mxu0 %v6287
        %v6492 = vpop.f32.mrf.mxu0
        %v6493 = vadd.f32 0.0, %v6492
        %v6494 = vpop.f32.mrf.mxu0
        %v6495 = vpop.f32.mrf.mxu0
        %v6496 = vadd.f32 0.0, %v6495
        %v6497 = vpop.f32.mrf.mxu0
        %6498 = vmatprep.mubr.bf16.mxu0 0
        %6499 = vmatmul.mubr.bf16.gmra.mxu0 %v6288
        %v6500 = vpop.f32.mrf.mxu0
        %v6501 = vadd.f32 0.0, %v6500
        %v6502 = vpop.f32.mrf.mxu0
        %v6503 = vpop.f32.mrf.mxu0
        %v6504 = vadd.f32 0.0, %v6503
        %v6505 = vpop.f32.mrf.mxu0
        %6506 = vmatprep.mubr.bf16.mxu0 0
        %6507 = vmatmul.mubr.bf16.gmra.mxu0 %v6289
        %v6508 = vpop.f32.mrf.mxu0
        %v6509 = vadd.f32 0.0, %v6508
        %v6510 = vpop.f32.mrf.mxu0
        %v6511 = vpop.f32.mrf.mxu0
        %v6512 = vadd.f32 0.0, %v6511
        %v6513 = vpop.f32.mrf.mxu0
        %6514 = vdwg.mxu0
        %v6515 = vadd.f32 %v5682, %v6389
        %v6516 = vadd.f32 %v5683, %v6392
        %v6517 = vadd.f32 %v5684, %v6397
        %v6518 = vadd.f32 %v5685, %v6400
        %v6519 = vadd.f32 %v5686, %v6405
        %v6520 = vadd.f32 %v5687, %v6408
        %v6521 = vadd.f32 %v5688, %v6413
        %v6522 = vadd.f32 %v5689, %v6416
        %v6523 = vadd.f32 %v5690, %v6421
        %v6524 = vadd.f32 %v5691, %v6424
        %v6525 = vadd.f32 %v5692, %v6429
        %v6526 = vadd.f32 %v5693, %v6432
        %v6527 = vadd.f32 %v5694, %v6437
        %v6528 = vadd.f32 %v5695, %v6440
        %v6529 = vadd.f32 %v5696, %v6445
        %v6530 = vadd.f32 %v5697, %v6448
        %v6531 = vadd.f32 %v5698, %v6453
        %v6532 = vadd.f32 %v5699, %v6456
        %v6533 = vadd.f32 %v5700, %v6461
        %v6534 = vadd.f32 %v5701, %v6464
        %v6535 = vadd.f32 %v5702, %v6469
        %v6536 = vadd.f32 %v5703, %v6472
        %v6537 = vadd.f32 %v5704, %v6477
        %v6538 = vadd.f32 %v5705, %v6480
        %v6539 = vadd.f32 %v5706, %v6485
        %v6540 = vadd.f32 %v5707, %v6488
        %v6541 = vadd.f32 %v5708, %v6493
        %v6542 = vadd.f32 %v5709, %v6496
        %v6543 = vadd.f32 %v5710, %v6501
        %v6544 = vadd.f32 %v5711, %v6504
        %v6545 = vadd.f32 %v5712, %v6509
        %v6546 = vadd.f32 %v5713, %v6512
        %v6547 = vld [vmem:[%s2] sm:$0x1]
        %v6549 = vlaneseq
        %v6550 = vshrl.u32 %v6549, 7
        %v6551 = vsub.s32 0, %v6550
        %v6552 = vrot.slane %v6547, %v6551
        %v6554 = vadd.f32 %v6515, %v6552
        %v6555 = vadd.f32 %v6516, %v6552
        %v6556 = vadd.f32 %v6517, %v6552
        %v6557 = vadd.f32 %v6518, %v6552
        %v6558 = vadd.f32 %v6519, %v6552
        %v6559 = vadd.f32 %v6520, %v6552
        %v6560 = vadd.f32 %v6521, %v6552
        %v6561 = vadd.f32 %v6522, %v6552
        %v6562 = vadd.f32 %v6523, %v6552
        %v6563 = vadd.f32 %v6524, %v6552
        %v6564 = vadd.f32 %v6525, %v6552
        %v6565 = vadd.f32 %v6526, %v6552
        %v6566 = vadd.f32 %v6527, %v6552
        %v6567 = vadd.f32 %v6528, %v6552
        %v6568 = vadd.f32 %v6529, %v6552
        %v6569 = vadd.f32 %v6530, %v6552
        %v6570 = vadd.f32 %v6531, %v6552
        %v6571 = vadd.f32 %v6532, %v6552
        %v6572 = vadd.f32 %v6533, %v6552
        %v6573 = vadd.f32 %v6534, %v6552
        %v6574 = vadd.f32 %v6535, %v6552
        %v6575 = vadd.f32 %v6536, %v6552
        %v6576 = vadd.f32 %v6537, %v6552
        %v6577 = vadd.f32 %v6538, %v6552
        %v6578 = vadd.f32 %v6539, %v6552
        %v6579 = vadd.f32 %v6540, %v6552
        %v6580 = vadd.f32 %v6541, %v6552
        %v6581 = vadd.f32 %v6542, %v6552
        %v6582 = vadd.f32 %v6543, %v6552
        %v6583 = vadd.f32 %v6544, %v6552
        %v6584 = vadd.f32 %v6545, %v6552
        %v6585 = vadd.f32 %v6546, %v6552
        %v6586 = vmax.f32 %v6554, 0.0
        %v6587 = vmax.f32 %v6555, 0.0
        %v6588 = vmax.f32 %v6556, 0.0
        %v6589 = vmax.f32 %v6557, 0.0
        %v6590 = vmax.f32 %v6558, 0.0
        %v6591 = vmax.f32 %v6559, 0.0
        %v6592 = vmax.f32 %v6560, 0.0
        %v6593 = vmax.f32 %v6561, 0.0
        %v6594 = vmax.f32 %v6562, 0.0
        %v6595 = vmax.f32 %v6563, 0.0
        %v6596 = vmax.f32 %v6564, 0.0
        %v6597 = vmax.f32 %v6565, 0.0
        %v6598 = vmax.f32 %v6566, 0.0
        %v6599 = vmax.f32 %v6567, 0.0
        %v6600 = vmax.f32 %v6568, 0.0
        %v6601 = vmax.f32 %v6569, 0.0
        %v6602 = vmax.f32 %v6570, 0.0
        %v6603 = vmax.f32 %v6571, 0.0
        %v6604 = vmax.f32 %v6572, 0.0
        %v6605 = vmax.f32 %v6573, 0.0
        %v6606 = vmax.f32 %v6574, 0.0
        %v6607 = vmax.f32 %v6575, 0.0
        %v6608 = vmax.f32 %v6576, 0.0
        %v6609 = vmax.f32 %v6577, 0.0
        %v6610 = vmax.f32 %v6578, 0.0
        %v6611 = vmax.f32 %v6579, 0.0
        %v6612 = vmax.f32 %v6580, 0.0
        %v6613 = vmax.f32 %v6581, 0.0
        %v6614 = vmax.f32 %v6582, 0.0
        %v6615 = vmax.f32 %v6583, 0.0
        %v6616 = vmax.f32 %v6584, 0.0
        %v6617 = vmax.f32 %v6585, 0.0
        %v6618 = vpack.c.bf16 %v6586, %v6586
        %v6619 = vpack.c.bf16 %v6587, %v6587
        %v6620 = vpack.c.bf16 %v6588, %v6588
        %v6621 = vpack.c.bf16 %v6589, %v6589
        %v6622 = vpack.c.bf16 %v6590, %v6590
        %v6623 = vpack.c.bf16 %v6591, %v6591
        %v6624 = vpack.c.bf16 %v6592, %v6592
        %v6625 = vpack.c.bf16 %v6593, %v6593
        %v6626 = vpack.c.bf16 %v6594, %v6594
        %v6627 = vpack.c.bf16 %v6595, %v6595
        %v6628 = vpack.c.bf16 %v6596, %v6596
        %v6629 = vpack.c.bf16 %v6597, %v6597
        %v6630 = vpack.c.bf16 %v6598, %v6598
        %v6631 = vpack.c.bf16 %v6599, %v6599
        %v6632 = vpack.c.bf16 %v6600, %v6600
        %v6633 = vpack.c.bf16 %v6601, %v6601
        %v6634 = vpack.c.bf16 %v6602, %v6602
        %v6635 = vpack.c.bf16 %v6603, %v6603
        %v6636 = vpack.c.bf16 %v6604, %v6604
        %v6637 = vpack.c.bf16 %v6605, %v6605
        %v6638 = vpack.c.bf16 %v6606, %v6606
        %v6639 = vpack.c.bf16 %v6607, %v6607
        %v6640 = vpack.c.bf16 %v6608, %v6608
        %v6641 = vpack.c.bf16 %v6609, %v6609
        %v6642 = vpack.c.bf16 %v6610, %v6610
        %v6643 = vpack.c.bf16 %v6611, %v6611
        %v6644 = vpack.c.bf16 %v6612, %v6612
        %v6645 = vpack.c.bf16 %v6613, %v6613
        %v6646 = vpack.c.bf16 %v6614, %v6614
        %v6647 = vpack.c.bf16 %v6615, %v6615
        %v6648 = vpack.c.bf16 %v6616, %v6616
        %v6649 = vpack.c.bf16 %v6617, %v6617
        %6650 = vst [vmem:[%s611 + $0x4] sm:$0xf] %v6618
        %6651 = vst [vmem:[%s611 + $0x10] sm:$0xf] %v6619
        %6652 = vst [vmem:[%s611 + $0x1c] sm:$0xf] %v6620
        %6653 = vst [vmem:[%s611 + $0x28] sm:$0xf] %v6621
        %6654 = vst [vmem:[%s611 + $0x34] sm:$0xf] %v6622
        %6655 = vst [vmem:[%s611 + $0x40] sm:$0xf] %v6623
        %6656 = vst [vmem:[%s611 + $0x4c] sm:$0xf] %v6624
        %6657 = vst [vmem:[%s611 + $0x58] sm:$0xf] %v6625
        %6658 = vst [vmem:[%s611 + $0x7c] sm:$0xf] %v6626
        %6659 = vst [vmem:[%s611 + $0x88] sm:$0xf] %v6627
        %6660 = vst [vmem:[%s611 + $0x94] sm:$0xf] %v6628
        %6661 = vst [vmem:[%s611 + $0xa0] sm:$0xf] %v6629
        %6662 = vst [vmem:[%s611 + $0xac] sm:$0xf] %v6630
        %6663 = vst [vmem:[%s611 + $0xb8] sm:$0xf] %v6631
        %6664 = vst [vmem:[%s611 + $0xc4] sm:$0xf] %v6632
        %6665 = vst [vmem:[%s611 + $0xd0] sm:$0xf] %v6633
        %6666 = vst [vmem:[%s611 + $0xf4] sm:$0xf] %v6634
        %6667 = vst [vmem:[%s611 + $0x100] sm:$0xf] %v6635
        %6668 = vst [vmem:[%s611 + $0x10c] sm:$0xf] %v6636
        %6669 = vst [vmem:[%s611 + $0x118] sm:$0xf] %v6637
        %6670 = vst [vmem:[%s611 + $0x124] sm:$0xf] %v6638
        %6671 = vst [vmem:[%s611 + $0x130] sm:$0xf] %v6639
        %6672 = vst [vmem:[%s611 + $0x13c] sm:$0xf] %v6640
        %6673 = vst [vmem:[%s611 + $0x148] sm:$0xf] %v6641
        %6674 = vst [vmem:[%s611 + $0x16c] sm:$0xf] %v6642
        %6675 = vst [vmem:[%s611 + $0x178] sm:$0xf] %v6643
        %6676 = vst [vmem:[%s611 + $0x184] sm:$0xf] %v6644
        %6677 = vst [vmem:[%s611 + $0x190] sm:$0xf] %v6645
        %6678 = vst [vmem:[%s611 + $0x19c] sm:$0xf] %v6646
        %6679 = vst [vmem:[%s611 + $0x1a8] sm:$0xf] %v6647
        %6680 = vst [vmem:[%s611 + $0x1b4] sm:$0xf] %v6648
        %6681 = vst [vmem:[%s611 + $0x1c0] sm:$0xf] %v6649
        %v6682 = vld [vmem:[#allocation2] sm:$0x8]
        %v6683 = vld [vmem:[#allocation2 + $0x4] sm:$0xf]
        %v6684 = vld [vmem:[#allocation2 + $0xc] sm:$0x8]
        %v6685 = vld [vmem:[#allocation2 + $0x10] sm:$0xf]
        %v6686 = vld [vmem:[#allocation2 + $0x18] sm:$0x8]
        %v6687 = vld [vmem:[#allocation2 + $0x1c] sm:$0xf]
        %v6688 = vld [vmem:[#allocation2 + $0x24] sm:$0x8]
        %v6689 = vld [vmem:[#allocation2 + $0x28] sm:$0xf]
        %v6690 = vld [vmem:[#allocation2 + $0x30] sm:$0x8]
        %v6691 = vld [vmem:[#allocation2 + $0x34] sm:$0xf]
        %v6692 = vld [vmem:[#allocation2 + $0x3c] sm:$0x8]
        %v6693 = vld [vmem:[#allocation2 + $0x40] sm:$0xf]
        %v6694 = vld [vmem:[#allocation2 + $0x48] sm:$0x8]
        %v6695 = vld [vmem:[#allocation2 + $0x4c] sm:$0xf]
        %v6696 = vld [vmem:[#allocation2 + $0x54] sm:$0x8]
        %v6697 = vld [vmem:[#allocation2 + $0x58] sm:$0xf]
        %v6698 = vld [vmem:[#allocation2 + $0x78] sm:$0x8]
        %v6699 = vld [vmem:[#allocation2 + $0x7c] sm:$0xf]
        %v6700 = vld [vmem:[#allocation2 + $0x84] sm:$0x8]
        %v6701 = vld [vmem:[#allocation2 + $0x88] sm:$0xf]
        %v6702 = vld [vmem:[#allocation2 + $0x90] sm:$0x8]
        %v6703 = vld [vmem:[#allocation2 + $0x94] sm:$0xf]
        %v6704 = vld [vmem:[#allocation2 + $0x9c] sm:$0x8]
        %v6705 = vld [vmem:[#allocation2 + $0xa0] sm:$0xf]
        %v6706 = vld [vmem:[#allocation2 + $0xa8] sm:$0x8]
        %v6707 = vld [vmem:[#allocation2 + $0xac] sm:$0xf]
        %v6708 = vld [vmem:[#allocation2 + $0xb4] sm:$0x8]
        %v6709 = vld [vmem:[#allocation2 + $0xb8] sm:$0xf]
        %v6710 = vld [vmem:[#allocation2 + $0xc0] sm:$0x8]
        %v6711 = vld [vmem:[#allocation2 + $0xc4] sm:$0xf]
        %v6712 = vld [vmem:[#allocation2 + $0xcc] sm:$0x8]
        %v6713 = vld [vmem:[#allocation2 + $0xd0] sm:$0xf]
        %v6714 = vld [vmem:[#allocation2 + $0xf0] sm:$0x8]
        %v6715 = vld [vmem:[#allocation2 + $0xf4] sm:$0xf]
        %v6716 = vld [vmem:[#allocation2 + $0xfc] sm:$0x8]
        %v6717 = vld [vmem:[#allocation2 + $0x100] sm:$0xf]
        %v6718 = vld [vmem:[#allocation2 + $0x108] sm:$0x8]
        %v6719 = vld [vmem:[#allocation2 + $0x10c] sm:$0xf]
        %v6720 = vld [vmem:[#allocation2 + $0x114] sm:$0x8]
        %v6721 = vld [vmem:[#allocation2 + $0x118] sm:$0xf]
        %v6722 = vld [vmem:[#allocation2 + $0x120] sm:$0x8]
        %v6723 = vld [vmem:[#allocation2 + $0x124] sm:$0xf]
        %v6724 = vld [vmem:[#allocation2 + $0x12c] sm:$0x8]
        %v6725 = vld [vmem:[#allocation2 + $0x130] sm:$0xf]
        %v6726 = vld [vmem:[#allocation2 + $0x138] sm:$0x8]
        %v6727 = vld [vmem:[#allocation2 + $0x13c] sm:$0xf]
        %v6728 = vld [vmem:[#allocation2 + $0x144] sm:$0x8]
        %v6729 = vld [vmem:[#allocation2 + $0x148] sm:$0xf]
        %v6730 = vld [vmem:[#allocation2 + $0x168] sm:$0x8]
        %v6731 = vld [vmem:[#allocation2 + $0x16c] sm:$0xf]
        %v6732 = vld [vmem:[#allocation2 + $0x174] sm:$0x8]
        %v6733 = vld [vmem:[#allocation2 + $0x178] sm:$0xf]
        %v6734 = vld [vmem:[#allocation2 + $0x180] sm:$0x8]
        %v6735 = vld [vmem:[#allocation2 + $0x184] sm:$0xf]
        %v6736 = vld [vmem:[#allocation2 + $0x18c] sm:$0x8]
        %v6737 = vld [vmem:[#allocation2 + $0x190] sm:$0xf]
        %v6738 = vld [vmem:[#allocation2 + $0x198] sm:$0x8]
        %v6739 = vld [vmem:[#allocation2 + $0x19c] sm:$0xf]
        %v6740 = vld [vmem:[#allocation2 + $0x1a4] sm:$0x8]
        %v6741 = vld [vmem:[#allocation2 + $0x1a8] sm:$0xf]
        %v6742 = vld [vmem:[#allocation2 + $0x1b0] sm:$0x8]
        %v6743 = vld [vmem:[#allocation2 + $0x1b4] sm:$0xf]
        %v6744 = vld [vmem:[#allocation2 + $0x1bc] sm:$0x8]
        %v6745 = vld [vmem:[#allocation2 + $0x1c0] sm:$0xf]
        %v6747 = vshrl.u32 %v6682, 16
        %v6749 = vrot.slane %v6747, 7
        %v6750 = vrot.slane %v6749, 4
        %v6752 = vshrl.u32 %v6683, 16
        %v6754 = vrot.slane %v6752, 7
        %v6755 = vshll.u32 %v6683, 16
        %v6757 = vor.u32 %v6754, %v6755
        %v6758 = vsel %vm709, %v6750, %v6757
        %v6760 = vshrl.u32 %v6684, 16
        %v6762 = vrot.slane %v6760, 7
        %v6763 = vrot.slane %v6762, 4
        %v6765 = vshrl.u32 %v6685, 16
        %v6767 = vrot.slane %v6765, 7
        %v6768 = vshll.u32 %v6685, 16
        %v6770 = vor.u32 %v6767, %v6768
        %v6771 = vsel %vm709, %v6763, %v6770
        %v6773 = vshrl.u32 %v6686, 16
        %v6775 = vrot.slane %v6773, 7
        %v6776 = vrot.slane %v6775, 4
        %v6778 = vshrl.u32 %v6687, 16
        %v6780 = vrot.slane %v6778, 7
        %v6781 = vshll.u32 %v6687, 16
        %v6783 = vor.u32 %v6780, %v6781
        %v6784 = vsel %vm709, %v6776, %v6783
        %v6786 = vshrl.u32 %v6688, 16
        %v6788 = vrot.slane %v6786, 7
        %v6789 = vrot.slane %v6788, 4
        %v6791 = vshrl.u32 %v6689, 16
        %v6793 = vrot.slane %v6791, 7
        %v6794 = vshll.u32 %v6689, 16
        %v6796 = vor.u32 %v6793, %v6794
        %v6797 = vsel %vm709, %v6789, %v6796
        %v6799 = vshrl.u32 %v6690, 16
        %v6801 = vrot.slane %v6799, 7
        %v6802 = vrot.slane %v6801, 4
        %v6804 = vshrl.u32 %v6691, 16
        %v6806 = vrot.slane %v6804, 7
        %v6807 = vshll.u32 %v6691, 16
        %v6809 = vor.u32 %v6806, %v6807
        %v6810 = vsel %vm709, %v6802, %v6809
        %v6812 = vshrl.u32 %v6692, 16
        %v6814 = vrot.slane %v6812, 7
        %v6815 = vrot.slane %v6814, 4
        %v6817 = vshrl.u32 %v6693, 16
        %v6819 = vrot.slane %v6817, 7
        %v6820 = vshll.u32 %v6693, 16
        %v6822 = vor.u32 %v6819, %v6820
        %v6823 = vsel %vm709, %v6815, %v6822
        %v6825 = vshrl.u32 %v6694, 16
        %v6827 = vrot.slane %v6825, 7
        %v6828 = vrot.slane %v6827, 4
        %v6830 = vshrl.u32 %v6695, 16
        %v6832 = vrot.slane %v6830, 7
        %v6833 = vshll.u32 %v6695, 16
        %v6835 = vor.u32 %v6832, %v6833
        %v6836 = vsel %vm709, %v6828, %v6835
        %v6838 = vshrl.u32 %v6696, 16
        %v6840 = vrot.slane %v6838, 7
        %v6841 = vrot.slane %v6840, 4
        %v6843 = vshrl.u32 %v6697, 16
        %v6845 = vrot.slane %v6843, 7
        %v6846 = vshll.u32 %v6697, 16
        %v6848 = vor.u32 %v6845, %v6846
        %v6849 = vsel %vm709, %v6841, %v6848
        %v6851 = vshrl.u32 %v6698, 16
        %v6853 = vrot.slane %v6851, 7
        %v6854 = vrot.slane %v6853, 4
        %v6856 = vshrl.u32 %v6699, 16
        %v6858 = vrot.slane %v6856, 7
        %v6859 = vshll.u32 %v6699, 16
        %v6861 = vor.u32 %v6858, %v6859
        %v6862 = vsel %vm709, %v6854, %v6861
        %v6864 = vshrl.u32 %v6700, 16
        %v6866 = vrot.slane %v6864, 7
        %v6867 = vrot.slane %v6866, 4
        %v6869 = vshrl.u32 %v6701, 16
        %v6871 = vrot.slane %v6869, 7
        %v6872 = vshll.u32 %v6701, 16
        %v6874 = vor.u32 %v6871, %v6872
        %v6875 = vsel %vm709, %v6867, %v6874
        %v6877 = vshrl.u32 %v6702, 16
        %v6879 = vrot.slane %v6877, 7
        %v6880 = vrot.slane %v6879, 4
        %v6882 = vshrl.u32 %v6703, 16
        %v6884 = vrot.slane %v6882, 7
        %v6885 = vshll.u32 %v6703, 16
        %v6887 = vor.u32 %v6884, %v6885
        %v6888 = vsel %vm709, %v6880, %v6887
        %v6890 = vshrl.u32 %v6704, 16
        %v6892 = vrot.slane %v6890, 7
        %v6893 = vrot.slane %v6892, 4
        %v6895 = vshrl.u32 %v6705, 16
        %v6897 = vrot.slane %v6895, 7
        %v6898 = vshll.u32 %v6705, 16
        %v6900 = vor.u32 %v6897, %v6898
        %v6901 = vsel %vm709, %v6893, %v6900
        %v6903 = vshrl.u32 %v6706, 16
        %v6905 = vrot.slane %v6903, 7
        %v6906 = vrot.slane %v6905, 4
        %v6908 = vshrl.u32 %v6707, 16
        %v6910 = vrot.slane %v6908, 7
        %v6911 = vshll.u32 %v6707, 16
        %v6913 = vor.u32 %v6910, %v6911
        %v6914 = vsel %vm709, %v6906, %v6913
        %v6916 = vshrl.u32 %v6708, 16
        %v6918 = vrot.slane %v6916, 7
        %v6919 = vrot.slane %v6918, 4
        %v6921 = vshrl.u32 %v6709, 16
        %v6923 = vrot.slane %v6921, 7
        %v6924 = vshll.u32 %v6709, 16
        %v6926 = vor.u32 %v6923, %v6924
        %v6927 = vsel %vm709, %v6919, %v6926
        %v6929 = vshrl.u32 %v6710, 16
        %v6931 = vrot.slane %v6929, 7
        %v6932 = vrot.slane %v6931, 4
        %v6934 = vshrl.u32 %v6711, 16
        %v6936 = vrot.slane %v6934, 7
        %v6937 = vshll.u32 %v6711, 16
        %v6939 = vor.u32 %v6936, %v6937
        %v6940 = vsel %vm709, %v6932, %v6939
        %v6942 = vshrl.u32 %v6712, 16
        %v6944 = vrot.slane %v6942, 7
        %v6945 = vrot.slane %v6944, 4
        %v6947 = vshrl.u32 %v6713, 16
        %v6949 = vrot.slane %v6947, 7
        %v6950 = vshll.u32 %v6713, 16
        %v6952 = vor.u32 %v6949, %v6950
        %v6953 = vsel %vm709, %v6945, %v6952
        %v6955 = vshrl.u32 %v6714, 16
        %v6957 = vrot.slane %v6955, 7
        %v6958 = vrot.slane %v6957, 4
        %v6960 = vshrl.u32 %v6715, 16
        %v6962 = vrot.slane %v6960, 7
        %v6963 = vshll.u32 %v6715, 16
        %v6965 = vor.u32 %v6962, %v6963
        %v6966 = vsel %vm709, %v6958, %v6965
        %v6968 = vshrl.u32 %v6716, 16
        %v6970 = vrot.slane %v6968, 7
        %v6971 = vrot.slane %v6970, 4
        %v6973 = vshrl.u32 %v6717, 16
        %v6975 = vrot.slane %v6973, 7
        %v6976 = vshll.u32 %v6717, 16
        %v6978 = vor.u32 %v6975, %v6976
        %v6979 = vsel %vm709, %v6971, %v6978
        %v6981 = vshrl.u32 %v6718, 16
        %v6983 = vrot.slane %v6981, 7
        %v6984 = vrot.slane %v6983, 4
        %v6986 = vshrl.u32 %v6719, 16
        %v6988 = vrot.slane %v6986, 7
        %v6989 = vshll.u32 %v6719, 16
        %v6991 = vor.u32 %v6988, %v6989
        %v6992 = vsel %vm709, %v6984, %v6991
        %v6994 = vshrl.u32 %v6720, 16
        %v6996 = vrot.slane %v6994, 7
        %v6997 = vrot.slane %v6996, 4
        %v6999 = vshrl.u32 %v6721, 16
        %v7001 = vrot.slane %v6999, 7
        %v7002 = vshll.u32 %v6721, 16
        %v7004 = vor.u32 %v7001, %v7002
        %v7005 = vsel %vm709, %v6997, %v7004
        %v7007 = vshrl.u32 %v6722, 16
        %v7009 = vrot.slane %v7007, 7
        %v7010 = vrot.slane %v7009, 4
        %v7012 = vshrl.u32 %v6723, 16
        %v7014 = vrot.slane %v7012, 7
        %v7015 = vshll.u32 %v6723, 16
        %v7017 = vor.u32 %v7014, %v7015
        %v7018 = vsel %vm709, %v7010, %v7017
        %v7020 = vshrl.u32 %v6724, 16
        %v7022 = vrot.slane %v7020, 7
        %v7023 = vrot.slane %v7022, 4
        %v7025 = vshrl.u32 %v6725, 16
        %v7027 = vrot.slane %v7025, 7
        %v7028 = vshll.u32 %v6725, 16
        %v7030 = vor.u32 %v7027, %v7028
        %v7031 = vsel %vm709, %v7023, %v7030
        %v7033 = vshrl.u32 %v6726, 16
        %v7035 = vrot.slane %v7033, 7
        %v7036 = vrot.slane %v7035, 4
        %v7038 = vshrl.u32 %v6727, 16
        %v7040 = vrot.slane %v7038, 7
        %v7041 = vshll.u32 %v6727, 16
        %v7043 = vor.u32 %v7040, %v7041
        %v7044 = vsel %vm709, %v7036, %v7043
        %v7046 = vshrl.u32 %v6728, 16
        %v7048 = vrot.slane %v7046, 7
        %v7049 = vrot.slane %v7048, 4
        %v7051 = vshrl.u32 %v6729, 16
        %v7053 = vrot.slane %v7051, 7
        %v7054 = vshll.u32 %v6729, 16
        %v7056 = vor.u32 %v7053, %v7054
        %v7057 = vsel %vm709, %v7049, %v7056
        %v7059 = vshrl.u32 %v6730, 16
        %v7061 = vrot.slane %v7059, 7
        %v7062 = vrot.slane %v7061, 4
        %v7064 = vshrl.u32 %v6731, 16
        %v7066 = vrot.slane %v7064, 7
        %v7067 = vshll.u32 %v6731, 16
        %v7069 = vor.u32 %v7066, %v7067
        %v7070 = vsel %vm709, %v7062, %v7069
        %v7072 = vshrl.u32 %v6732, 16
        %v7074 = vrot.slane %v7072, 7
        %v7075 = vrot.slane %v7074, 4
        %v7077 = vshrl.u32 %v6733, 16
        %v7079 = vrot.slane %v7077, 7
        %v7080 = vshll.u32 %v6733, 16
        %v7082 = vor.u32 %v7079, %v7080
        %v7083 = vsel %vm709, %v7075, %v7082
        %v7085 = vshrl.u32 %v6734, 16
        %v7087 = vrot.slane %v7085, 7
        %v7088 = vrot.slane %v7087, 4
        %v7090 = vshrl.u32 %v6735, 16
        %v7092 = vrot.slane %v7090, 7
        %v7093 = vshll.u32 %v6735, 16
        %v7095 = vor.u32 %v7092, %v7093
        %v7096 = vsel %vm709, %v7088, %v7095
        %v7098 = vshrl.u32 %v6736, 16
        %v7100 = vrot.slane %v7098, 7
        %v7101 = vrot.slane %v7100, 4
        %v7103 = vshrl.u32 %v6737, 16
        %v7105 = vrot.slane %v7103, 7
        %v7106 = vshll.u32 %v6737, 16
        %v7108 = vor.u32 %v7105, %v7106
        %v7109 = vsel %vm709, %v7101, %v7108
        %v7111 = vshrl.u32 %v6738, 16
        %v7113 = vrot.slane %v7111, 7
        %v7114 = vrot.slane %v7113, 4
        %v7116 = vshrl.u32 %v6739, 16
        %v7118 = vrot.slane %v7116, 7
        %v7119 = vshll.u32 %v6739, 16
        %v7121 = vor.u32 %v7118, %v7119
        %v7122 = vsel %vm709, %v7114, %v7121
        %v7124 = vshrl.u32 %v6740, 16
        %v7126 = vrot.slane %v7124, 7
        %v7127 = vrot.slane %v7126, 4
        %v7129 = vshrl.u32 %v6741, 16
        %v7131 = vrot.slane %v7129, 7
        %v7132 = vshll.u32 %v6741, 16
        %v7134 = vor.u32 %v7131, %v7132
        %v7135 = vsel %vm709, %v7127, %v7134
        %v7137 = vshrl.u32 %v6742, 16
        %v7139 = vrot.slane %v7137, 7
        %v7140 = vrot.slane %v7139, 4
        %v7142 = vshrl.u32 %v6743, 16
        %v7144 = vrot.slane %v7142, 7
        %v7145 = vshll.u32 %v6743, 16
        %v7147 = vor.u32 %v7144, %v7145
        %v7148 = vsel %vm709, %v7140, %v7147
        %v7150 = vshrl.u32 %v6744, 16
        %v7152 = vrot.slane %v7150, 7
        %v7153 = vrot.slane %v7152, 4
        %v7155 = vshrl.u32 %v6745, 16
        %v7157 = vrot.slane %v7155, 7
        %v7158 = vshll.u32 %v6745, 16
        %v7160 = vor.u32 %v7157, %v7158
        %v7161 = vsel %vm709, %v7153, %v7160
        %v7162 = vld [vmem:[#allocation8] sm:$0xf]
        %v7163 = vld [vmem:[#allocation8 + $0x4] sm:$0xf]
        %v7164 = vld [vmem:[#allocation8 + $0x8] sm:$0xf]
        %v7165 = vld [vmem:[#allocation8 + $0xc] sm:$0xf]
        %v7166 = vld [vmem:[#allocation8 + $0x10] sm:$0xf]
        %v7167 = vld [vmem:[#allocation8 + $0x14] sm:$0xf]
        %v7168 = vld [vmem:[#allocation8 + $0x18] sm:$0xf]
        %v7169 = vld [vmem:[#allocation8 + $0x1c] sm:$0xf]
        %v7170 = vld [vmem:[#allocation8 + $0x20] sm:$0xf]
        %v7171 = vld [vmem:[#allocation8 + $0x24] sm:$0xf]
        %v7172 = vld [vmem:[#allocation8 + $0x28] sm:$0xf]
        %v7173 = vld [vmem:[#allocation8 + $0x2c] sm:$0xf]
        %v7174 = vld [vmem:[#allocation8 + $0x30] sm:$0xf]
        %v7175 = vld [vmem:[#allocation8 + $0x34] sm:$0xf]
        %v7176 = vld [vmem:[#allocation8 + $0x38] sm:$0xf]
        %v7177 = vld [vmem:[#allocation8 + $0x3c] sm:$0xf]
        %v7178 = vld [vmem:[#allocation8 + $0x40] sm:$0xf]
        %v7179 = vld [vmem:[#allocation8 + $0x44] sm:$0xf]
        %v7180 = vld [vmem:[#allocation8 + $0x48] sm:$0xf]
        %v7181 = vld [vmem:[#allocation8 + $0x4c] sm:$0xf]
        %v7182 = vld [vmem:[#allocation8 + $0x50] sm:$0xf]
        %v7183 = vld [vmem:[#allocation8 + $0x54] sm:$0xf]
        %v7184 = vld [vmem:[#allocation8 + $0x58] sm:$0xf]
        %v7185 = vld [vmem:[#allocation8 + $0x5c] sm:$0xf]
        %v7186 = vld [vmem:[#allocation8 + $0x60] sm:$0xf]
        %v7187 = vld [vmem:[#allocation8 + $0x64] sm:$0xf]
        %v7188 = vld [vmem:[#allocation8 + $0x68] sm:$0xf]
        %v7189 = vld [vmem:[#allocation8 + $0x6c] sm:$0xf]
        %v7190 = vld [vmem:[#allocation8 + $0x70] sm:$0xf]
        %v7191 = vld [vmem:[#allocation8 + $0x74] sm:$0xf]
        %v7192 = vld [vmem:[#allocation8 + $0x78] sm:$0xf]
        %v7193 = vld [vmem:[#allocation8 + $0x7c] sm:$0xf]
        %v7226 = vunpack.c.l.b16 %v6683
        %v7227 = vunpack.c.l.b16 %v6685
        %v7228 = vunpack.c.l.b16 %v6687
        %v7229 = vunpack.c.l.b16 %v6689
        %v7230 = vunpack.c.l.b16 %v6691
        %v7231 = vunpack.c.l.b16 %v6693
        %v7232 = vunpack.c.l.b16 %v6695
        %v7233 = vunpack.c.l.b16 %v6697
        %v7234 = vunpack.c.l.b16 %v6699
        %v7235 = vunpack.c.l.b16 %v6701
        %v7236 = vunpack.c.l.b16 %v6703
        %v7237 = vunpack.c.l.b16 %v6705
        %v7238 = vunpack.c.l.b16 %v6707
        %v7239 = vunpack.c.l.b16 %v6709
        %v7240 = vunpack.c.l.b16 %v6711
        %v7241 = vunpack.c.l.b16 %v6713
        %v7242 = vunpack.c.l.b16 %v6715
        %v7243 = vunpack.c.l.b16 %v6717
        %v7244 = vunpack.c.l.b16 %v6719
        %v7245 = vunpack.c.l.b16 %v6721
        %v7246 = vunpack.c.l.b16 %v6723
        %v7247 = vunpack.c.l.b16 %v6725
        %v7248 = vunpack.c.l.b16 %v6727
        %v7249 = vunpack.c.l.b16 %v6729
        %v7250 = vunpack.c.l.b16 %v6731
        %v7251 = vunpack.c.l.b16 %v6733
        %v7252 = vunpack.c.l.b16 %v6735
        %v7253 = vunpack.c.l.b16 %v6737
        %v7254 = vunpack.c.l.b16 %v6739
        %v7255 = vunpack.c.l.b16 %v6741
        %v7256 = vunpack.c.l.b16 %v6743
        %v7257 = vunpack.c.l.b16 %v6745
        %v7258 = vpack.c.b16 %v7227, %v7226
        %v7259 = vpack.c.b16 %v7229, %v7228
        %v7260 = vpack.c.b16 %v7231, %v7230
        %v7261 = vpack.c.b16 %v7233, %v7232
        %v7262 = vpack.c.b16 %v7235, %v7234
        %v7263 = vpack.c.b16 %v7237, %v7236
        %v7264 = vpack.c.b16 %v7239, %v7238
        %v7265 = vpack.c.b16 %v7241, %v7240
        %v7266 = vpack.c.b16 %v7243, %v7242
        %v7267 = vpack.c.b16 %v7245, %v7244
        %v7268 = vpack.c.b16 %v7247, %v7246
        %v7269 = vpack.c.b16 %v7249, %v7248
        %v7270 = vpack.c.b16 %v7251, %v7250
        %v7271 = vpack.c.b16 %v7253, %v7252
        %v7272 = vpack.c.b16 %v7255, %v7254
        %v7273 = vpack.c.b16 %v7257, %v7256
        %v7306 = vunpack.c.l.b16 %v7178
        %v7307 = vunpack.c.l.b16 %v7179
        %v7308 = vunpack.c.l.b16 %v7180
        %v7309 = vunpack.c.l.b16 %v7181
        %v7310 = vunpack.c.l.b16 %v7182
        %v7311 = vunpack.c.l.b16 %v7183
        %v7312 = vunpack.c.l.b16 %v7184
        %v7313 = vunpack.c.l.b16 %v7185
        %v7314 = vunpack.c.l.b16 %v7186
        %v7315 = vunpack.c.l.b16 %v7187
        %v7316 = vunpack.c.l.b16 %v7188
        %v7317 = vunpack.c.l.b16 %v7189
        %v7318 = vunpack.c.l.b16 %v7190
        %v7319 = vunpack.c.l.b16 %v7191
        %v7320 = vunpack.c.l.b16 %v7192
        %v7321 = vunpack.c.l.b16 %v7193
        %v7322 = vpack.c.b16 %v7307, %v7306
        %v7323 = vpack.c.b16 %v7309, %v7308
        %v7324 = vpack.c.b16 %v7311, %v7310
        %v7325 = vpack.c.b16 %v7313, %v7312
        %v7326 = vpack.c.b16 %v7315, %v7314
        %v7327 = vpack.c.b16 %v7317, %v7316
        %v7328 = vpack.c.b16 %v7319, %v7318
        %v7329 = vpack.c.b16 %v7321, %v7320
        %7338 = vmatprep.subr.bf16.mxu0 0
        %7339 = vmatpush1.bf16.msra.mxu0 %v7329
        %7340 = vmatprep.subr.bf16.mxu0 0
        %7341 = vmatpush1.bf16.msra.mxu0 %v7328
        %7342 = vmatprep.subr.bf16.mxu0 0
        %7343 = vmatpush1.bf16.msra.mxu0 %v7327
        %7344 = vmatprep.subr.bf16.mxu0 0
        %7345 = vmatpush1.bf16.msra.mxu0 %v7326
        %7346 = vmatprep.subr.bf16.mxu0 0
        %7347 = vmatpush1.bf16.msra.mxu0 %v7325
        %7348 = vmatprep.subr.bf16.mxu0 0
        %7349 = vmatpush1.bf16.msra.mxu0 %v7324
        %7350 = vmatprep.subr.bf16.mxu0 0
        %7351 = vmatpush1.bf16.msra.mxu0 %v7323
        %7352 = vmatprep.subr.bf16.mxu0 0
        %7353 = vmatpush1.bf16.msra.mxu0 %v7322
        %7354 = vmatprep.subr.bf16.mxu0 0
        %7355 = vmatpush2.bf16.msra.mxu0 0
        %7356 = vmatprep.subr.bf16.mxu0 0
        %7357 = vmatpush2.bf16.msra.mxu0 0
        %7358 = vmatprep.subr.bf16.mxu0 0
        %7359 = vmatpush2.bf16.msra.mxu0 0
        %7360 = vmatprep.subr.bf16.mxu0 0
        %7361 = vmatpush2.bf16.msra.mxu0 0
        %7362 = vmatprep.subr.bf16.mxu0 0
        %7363 = vmatpush2.bf16.msra.mxu0 0
        %7364 = vmatprep.subr.bf16.mxu0 0
        %7365 = vmatpush2.bf16.msra.mxu0 0
        %7366 = vmatprep.subr.bf16.mxu0 0
        %7367 = vmatpush2.bf16.msra.mxu0 0
        %7368 = vmatprep.subr.bf16.mxu0 0
        %7369 = vmatpush2.bf16.msra.mxu0 0
        %7370 = vmatprep.mubr.bf16.mxu0 0
        %7371 = vmatmul.mubr.bf16.gmra.mxu0 %v7258
        %v7372 = vpop.f32.mrf.mxu0
        %v7373 = vadd.f32 0.0, %v7372
        %v7374 = vpop.f32.mrf.mxu0
        %v7375 = vpop.f32.mrf.mxu0
        %v7376 = vadd.f32 0.0, %v7375
        %v7377 = vpop.f32.mrf.mxu0
        %7378 = vmatprep.mubr.bf16.mxu0 0
        %7379 = vmatmul.mubr.bf16.gmra.mxu0 %v7259
        %v7380 = vpop.f32.mrf.mxu0
        %v7381 = vadd.f32 0.0, %v7380
        %v7382 = vpop.f32.mrf.mxu0
        %v7383 = vpop.f32.mrf.mxu0
        %v7384 = vadd.f32 0.0, %v7383
        %v7385 = vpop.f32.mrf.mxu0
        %7386 = vmatprep.mubr.bf16.mxu0 0
        %7387 = vmatmul.mubr.bf16.gmra.mxu0 %v7260
        %v7388 = vpop.f32.mrf.mxu0
        %v7389 = vadd.f32 0.0, %v7388
        %v7390 = vpop.f32.mrf.mxu0
        %v7391 = vpop.f32.mrf.mxu0
        %v7392 = vadd.f32 0.0, %v7391
        %v7393 = vpop.f32.mrf.mxu0
        %7394 = vmatprep.mubr.bf16.mxu0 0
        %7395 = vmatmul.mubr.bf16.gmra.mxu0 %v7261
        %v7396 = vpop.f32.mrf.mxu0
        %v7397 = vadd.f32 0.0, %v7396
        %v7398 = vpop.f32.mrf.mxu0
        %v7399 = vpop.f32.mrf.mxu0
        %v7400 = vadd.f32 0.0, %v7399
        %v7401 = vpop.f32.mrf.mxu0
        %7402 = vmatprep.mubr.bf16.mxu0 0
        %7403 = vmatmul.mubr.bf16.gmra.mxu0 %v7262
        %v7404 = vpop.f32.mrf.mxu0
        %v7405 = vadd.f32 0.0, %v7404
        %v7406 = vpop.f32.mrf.mxu0
        %v7407 = vpop.f32.mrf.mxu0
        %v7408 = vadd.f32 0.0, %v7407
        %v7409 = vpop.f32.mrf.mxu0
        %7410 = vmatprep.mubr.bf16.mxu0 0
        %7411 = vmatmul.mubr.bf16.gmra.mxu0 %v7263
        %v7412 = vpop.f32.mrf.mxu0
        %v7413 = vadd.f32 0.0, %v7412
        %v7414 = vpop.f32.mrf.mxu0
        %v7415 = vpop.f32.mrf.mxu0
        %v7416 = vadd.f32 0.0, %v7415
        %v7417 = vpop.f32.mrf.mxu0
        %7418 = vmatprep.mubr.bf16.mxu0 0
        %7419 = vmatmul.mubr.bf16.gmra.mxu0 %v7264
        %v7420 = vpop.f32.mrf.mxu0
        %v7421 = vadd.f32 0.0, %v7420
        %v7422 = vpop.f32.mrf.mxu0
        %v7423 = vpop.f32.mrf.mxu0
        %v7424 = vadd.f32 0.0, %v7423
        %v7425 = vpop.f32.mrf.mxu0
        %7426 = vmatprep.mubr.bf16.mxu0 0
        %7427 = vmatmul.mubr.bf16.gmra.mxu0 %v7265
        %v7428 = vpop.f32.mrf.mxu0
        %v7429 = vadd.f32 0.0, %v7428
        %v7430 = vpop.f32.mrf.mxu0
        %v7431 = vpop.f32.mrf.mxu0
        %v7432 = vadd.f32 0.0, %v7431
        %v7433 = vpop.f32.mrf.mxu0
        %7434 = vmatprep.mubr.bf16.mxu0 0
        %7435 = vmatmul.mubr.bf16.gmra.mxu0 %v7266
        %v7436 = vpop.f32.mrf.mxu0
        %v7437 = vadd.f32 0.0, %v7436
        %v7438 = vpop.f32.mrf.mxu0
        %v7439 = vpop.f32.mrf.mxu0
        %v7440 = vadd.f32 0.0, %v7439
        %v7441 = vpop.f32.mrf.mxu0
        %7442 = vmatprep.mubr.bf16.mxu0 0
        %7443 = vmatmul.mubr.bf16.gmra.mxu0 %v7267
        %v7444 = vpop.f32.mrf.mxu0
        %v7445 = vadd.f32 0.0, %v7444
        %v7446 = vpop.f32.mrf.mxu0
        %v7447 = vpop.f32.mrf.mxu0
        %v7448 = vadd.f32 0.0, %v7447
        %v7449 = vpop.f32.mrf.mxu0
        %7450 = vmatprep.mubr.bf16.mxu0 0
        %7451 = vmatmul.mubr.bf16.gmra.mxu0 %v7268
        %v7452 = vpop.f32.mrf.mxu0
        %v7453 = vadd.f32 0.0, %v7452
        %v7454 = vpop.f32.mrf.mxu0
        %v7455 = vpop.f32.mrf.mxu0
        %v7456 = vadd.f32 0.0, %v7455
        %v7457 = vpop.f32.mrf.mxu0
        %7458 = vmatprep.mubr.bf16.mxu0 0
        %7459 = vmatmul.mubr.bf16.gmra.mxu0 %v7269
        %v7460 = vpop.f32.mrf.mxu0
        %v7461 = vadd.f32 0.0, %v7460
        %v7462 = vpop.f32.mrf.mxu0
        %v7463 = vpop.f32.mrf.mxu0
        %v7464 = vadd.f32 0.0, %v7463
        %v7465 = vpop.f32.mrf.mxu0
        %7466 = vmatprep.mubr.bf16.mxu0 0
        %7467 = vmatmul.mubr.bf16.gmra.mxu0 %v7270
        %v7468 = vpop.f32.mrf.mxu0
        %v7469 = vadd.f32 0.0, %v7468
        %v7470 = vpop.f32.mrf.mxu0
        %v7471 = vpop.f32.mrf.mxu0
        %v7472 = vadd.f32 0.0, %v7471
        %v7473 = vpop.f32.mrf.mxu0
        %7474 = vmatprep.mubr.bf16.mxu0 0
        %7475 = vmatmul.mubr.bf16.gmra.mxu0 %v7271
        %v7476 = vpop.f32.mrf.mxu0
        %v7477 = vadd.f32 0.0, %v7476
        %v7478 = vpop.f32.mrf.mxu0
        %v7479 = vpop.f32.mrf.mxu0
        %v7480 = vadd.f32 0.0, %v7479
        %v7481 = vpop.f32.mrf.mxu0
        %7482 = vmatprep.mubr.bf16.mxu0 0
        %7483 = vmatmul.mubr.bf16.gmra.mxu0 %v7272
        %v7484 = vpop.f32.mrf.mxu0
        %v7485 = vadd.f32 0.0, %v7484
        %v7486 = vpop.f32.mrf.mxu0
        %v7487 = vpop.f32.mrf.mxu0
        %v7488 = vadd.f32 0.0, %v7487
        %v7489 = vpop.f32.mrf.mxu0
        %7490 = vmatprep.mubr.bf16.mxu0 0
        %7491 = vmatmul.mubr.bf16.gmra.mxu0 %v7273
        %v7492 = vpop.f32.mrf.mxu0
        %v7493 = vadd.f32 0.0, %v7492
        %v7494 = vpop.f32.mrf.mxu0
        %v7495 = vpop.f32.mrf.mxu0
        %v7496 = vadd.f32 0.0, %v7495
        %v7497 = vpop.f32.mrf.mxu0
        %7498 = vdwg.mxu0
        %v7499 = vunpack.c.l.b16 %v6758
        %v7500 = vunpack.c.l.b16 %v6771
        %v7501 = vunpack.c.l.b16 %v6784
        %v7502 = vunpack.c.l.b16 %v6797
        %v7503 = vunpack.c.l.b16 %v6810
        %v7504 = vunpack.c.l.b16 %v6823
        %v7505 = vunpack.c.l.b16 %v6836
        %v7506 = vunpack.c.l.b16 %v6849
        %v7507 = vunpack.c.l.b16 %v6862
        %v7508 = vunpack.c.l.b16 %v6875
        %v7509 = vunpack.c.l.b16 %v6888
        %v7510 = vunpack.c.l.b16 %v6901
        %v7511 = vunpack.c.l.b16 %v6914
        %v7512 = vunpack.c.l.b16 %v6927
        %v7513 = vunpack.c.l.b16 %v6940
        %v7514 = vunpack.c.l.b16 %v6953
        %v7515 = vunpack.c.l.b16 %v6966
        %v7516 = vunpack.c.l.b16 %v6979
        %v7517 = vunpack.c.l.b16 %v6992
        %v7518 = vunpack.c.l.b16 %v7005
        %v7519 = vunpack.c.l.b16 %v7018
        %v7520 = vunpack.c.l.b16 %v7031
        %v7521 = vunpack.c.l.b16 %v7044
        %v7522 = vunpack.c.l.b16 %v7057
        %v7523 = vunpack.c.l.b16 %v7070
        %v7524 = vunpack.c.l.b16 %v7083
        %v7525 = vunpack.c.l.b16 %v7096
        %v7526 = vunpack.c.l.b16 %v7109
        %v7527 = vunpack.c.l.b16 %v7122
        %v7528 = vunpack.c.l.b16 %v7135
        %v7529 = vunpack.c.l.b16 %v7148
        %v7530 = vunpack.c.l.b16 %v7161
        %v7531 = vpack.c.b16 %v7500, %v7499
        %v7532 = vpack.c.b16 %v7502, %v7501
        %v7533 = vpack.c.b16 %v7504, %v7503
        %v7534 = vpack.c.b16 %v7506, %v7505
        %v7535 = vpack.c.b16 %v7508, %v7507
        %v7536 = vpack.c.b16 %v7510, %v7509
        %v7537 = vpack.c.b16 %v7512, %v7511
        %v7538 = vpack.c.b16 %v7514, %v7513
        %v7539 = vpack.c.b16 %v7516, %v7515
        %v7540 = vpack.c.b16 %v7518, %v7517
        %v7541 = vpack.c.b16 %v7520, %v7519
        %v7542 = vpack.c.b16 %v7522, %v7521
        %v7543 = vpack.c.b16 %v7524, %v7523
        %v7544 = vpack.c.b16 %v7526, %v7525
        %v7545 = vpack.c.b16 %v7528, %v7527
        %v7546 = vpack.c.b16 %v7530, %v7529
        %v7579 = vunpack.c.l.b16 %v7162
        %v7580 = vunpack.c.l.b16 %v7163
        %v7581 = vunpack.c.l.b16 %v7164
        %v7582 = vunpack.c.l.b16 %v7165
        %v7583 = vunpack.c.l.b16 %v7166
        %v7584 = vunpack.c.l.b16 %v7167
        %v7585 = vunpack.c.l.b16 %v7168
        %v7586 = vunpack.c.l.b16 %v7169
        %v7587 = vunpack.c.l.b16 %v7170
        %v7588 = vunpack.c.l.b16 %v7171
        %v7589 = vunpack.c.l.b16 %v7172
        %v7590 = vunpack.c.l.b16 %v7173
        %v7591 = vunpack.c.l.b16 %v7174
        %v7592 = vunpack.c.l.b16 %v7175
        %v7593 = vunpack.c.l.b16 %v7176
        %v7594 = vunpack.c.l.b16 %v7177
        %v7595 = vpack.c.b16 %v7580, %v7579
        %v7596 = vpack.c.b16 %v7582, %v7581
        %v7597 = vpack.c.b16 %v7584, %v7583
        %v7598 = vpack.c.b16 %v7586, %v7585
        %v7599 = vpack.c.b16 %v7588, %v7587
        %v7600 = vpack.c.b16 %v7590, %v7589
        %v7601 = vpack.c.b16 %v7592, %v7591
        %v7602 = vpack.c.b16 %v7594, %v7593
        %7611 = vmatprep.subr.bf16.mxu0 0
        %7612 = vmatpush1.bf16.msra.mxu0 %v7602
        %7613 = vmatprep.subr.bf16.mxu0 0
        %7614 = vmatpush1.bf16.msra.mxu0 %v7601
        %7615 = vmatprep.subr.bf16.mxu0 0
        %7616 = vmatpush1.bf16.msra.mxu0 %v7600
        %7617 = vmatprep.subr.bf16.mxu0 0
        %7618 = vmatpush1.bf16.msra.mxu0 %v7599
        %7619 = vmatprep.subr.bf16.mxu0 0
        %7620 = vmatpush1.bf16.msra.mxu0 %v7598
        %7621 = vmatprep.subr.bf16.mxu0 0
        %7622 = vmatpush1.bf16.msra.mxu0 %v7597
        %7623 = vmatprep.subr.bf16.mxu0 0
        %7624 = vmatpush1.bf16.msra.mxu0 %v7596
        %7625 = vmatprep.subr.bf16.mxu0 0
        %7626 = vmatpush1.bf16.msra.mxu0 %v7595
        %7627 = vmatprep.subr.bf16.mxu0 0
        %7628 = vmatpush2.bf16.msra.mxu0 0
        %7629 = vmatprep.subr.bf16.mxu0 0
        %7630 = vmatpush2.bf16.msra.mxu0 0
        %7631 = vmatprep.subr.bf16.mxu0 0
        %7632 = vmatpush2.bf16.msra.mxu0 0
        %7633 = vmatprep.subr.bf16.mxu0 0
        %7634 = vmatpush2.bf16.msra.mxu0 0
        %7635 = vmatprep.subr.bf16.mxu0 0
        %7636 = vmatpush2.bf16.msra.mxu0 0
        %7637 = vmatprep.subr.bf16.mxu0 0
        %7638 = vmatpush2.bf16.msra.mxu0 0
        %7639 = vmatprep.subr.bf16.mxu0 0
        %7640 = vmatpush2.bf16.msra.mxu0 0
        %7641 = vmatprep.subr.bf16.mxu0 0
        %7642 = vmatpush2.bf16.msra.mxu0 0
        %7643 = vmatprep.mubr.bf16.mxu0 0
        %7644 = vmatmul.mubr.bf16.gmra.mxu0 %v7531
        %v7645 = vpop.f32.mrf.mxu0
        %v7646 = vadd.f32 %v7373, %v7645
        %v7647 = vpop.f32.mrf.mxu0
        %v7648 = vpop.f32.mrf.mxu0
        %v7649 = vadd.f32 %v7376, %v7648
        %v7650 = vpop.f32.mrf.mxu0
        %7651 = vmatprep.mubr.bf16.mxu0 0
        %7652 = vmatmul.mubr.bf16.gmra.mxu0 %v7532
        %v7653 = vpop.f32.mrf.mxu0
        %v7654 = vadd.f32 %v7381, %v7653
        %v7655 = vpop.f32.mrf.mxu0
        %v7656 = vpop.f32.mrf.mxu0
        %v7657 = vadd.f32 %v7384, %v7656
        %v7658 = vpop.f32.mrf.mxu0
        %7659 = vmatprep.mubr.bf16.mxu0 0
        %7660 = vmatmul.mubr.bf16.gmra.mxu0 %v7533
        %v7661 = vpop.f32.mrf.mxu0
        %v7662 = vadd.f32 %v7389, %v7661
        %v7663 = vpop.f32.mrf.mxu0
        %v7664 = vpop.f32.mrf.mxu0
        %v7665 = vadd.f32 %v7392, %v7664
        %v7666 = vpop.f32.mrf.mxu0
        %7667 = vmatprep.mubr.bf16.mxu0 0
        %7668 = vmatmul.mubr.bf16.gmra.mxu0 %v7534
        %v7669 = vpop.f32.mrf.mxu0
        %v7670 = vadd.f32 %v7397, %v7669
        %v7671 = vpop.f32.mrf.mxu0
        %v7672 = vpop.f32.mrf.mxu0
        %v7673 = vadd.f32 %v7400, %v7672
        %v7674 = vpop.f32.mrf.mxu0
        %7675 = vmatprep.mubr.bf16.mxu0 0
        %7676 = vmatmul.mubr.bf16.gmra.mxu0 %v7535
        %v7677 = vpop.f32.mrf.mxu0
        %v7678 = vadd.f32 %v7405, %v7677
        %v7679 = vpop.f32.mrf.mxu0
        %v7680 = vpop.f32.mrf.mxu0
        %v7681 = vadd.f32 %v7408, %v7680
        %v7682 = vpop.f32.mrf.mxu0
        %7683 = vmatprep.mubr.bf16.mxu0 0
        %7684 = vmatmul.mubr.bf16.gmra.mxu0 %v7536
        %v7685 = vpop.f32.mrf.mxu0
        %v7686 = vadd.f32 %v7413, %v7685
        %v7687 = vpop.f32.mrf.mxu0
        %v7688 = vpop.f32.mrf.mxu0
        %v7689 = vadd.f32 %v7416, %v7688
        %v7690 = vpop.f32.mrf.mxu0
        %7691 = vmatprep.mubr.bf16.mxu0 0
        %7692 = vmatmul.mubr.bf16.gmra.mxu0 %v7537
        %v7693 = vpop.f32.mrf.mxu0
        %v7694 = vadd.f32 %v7421, %v7693
        %v7695 = vpop.f32.mrf.mxu0
        %v7696 = vpop.f32.mrf.mxu0
        %v7697 = vadd.f32 %v7424, %v7696
        %v7698 = vpop.f32.mrf.mxu0
        %7699 = vmatprep.mubr.bf16.mxu0 0
        %7700 = vmatmul.mubr.bf16.gmra.mxu0 %v7538
        %v7701 = vpop.f32.mrf.mxu0
        %v7702 = vadd.f32 %v7429, %v7701
        %v7703 = vpop.f32.mrf.mxu0
        %v7704 = vpop.f32.mrf.mxu0
        %v7705 = vadd.f32 %v7432, %v7704
        %v7706 = vpop.f32.mrf.mxu0
        %7707 = vmatprep.mubr.bf16.mxu0 0
        %7708 = vmatmul.mubr.bf16.gmra.mxu0 %v7539
        %v7709 = vpop.f32.mrf.mxu0
        %v7710 = vadd.f32 %v7437, %v7709
        %v7711 = vpop.f32.mrf.mxu0
        %v7712 = vpop.f32.mrf.mxu0
        %v7713 = vadd.f32 %v7440, %v7712
        %v7714 = vpop.f32.mrf.mxu0
        %7715 = vmatprep.mubr.bf16.mxu0 0
        %7716 = vmatmul.mubr.bf16.gmra.mxu0 %v7540
        %v7717 = vpop.f32.mrf.mxu0
        %v7718 = vadd.f32 %v7445, %v7717
        %v7719 = vpop.f32.mrf.mxu0
        %v7720 = vpop.f32.mrf.mxu0
        %v7721 = vadd.f32 %v7448, %v7720
        %v7722 = vpop.f32.mrf.mxu0
        %7723 = vmatprep.mubr.bf16.mxu0 0
        %7724 = vmatmul.mubr.bf16.gmra.mxu0 %v7541
        %v7725 = vpop.f32.mrf.mxu0
        %v7726 = vadd.f32 %v7453, %v7725
        %v7727 = vpop.f32.mrf.mxu0
        %v7728 = vpop.f32.mrf.mxu0
        %v7729 = vadd.f32 %v7456, %v7728
        %v7730 = vpop.f32.mrf.mxu0
        %7731 = vmatprep.mubr.bf16.mxu0 0
        %7732 = vmatmul.mubr.bf16.gmra.mxu0 %v7542
        %v7733 = vpop.f32.mrf.mxu0
        %v7734 = vadd.f32 %v7461, %v7733
        %v7735 = vpop.f32.mrf.mxu0
        %v7736 = vpop.f32.mrf.mxu0
        %v7737 = vadd.f32 %v7464, %v7736
        %v7738 = vpop.f32.mrf.mxu0
        %7739 = vmatprep.mubr.bf16.mxu0 0
        %7740 = vmatmul.mubr.bf16.gmra.mxu0 %v7543
        %v7741 = vpop.f32.mrf.mxu0
        %v7742 = vadd.f32 %v7469, %v7741
        %v7743 = vpop.f32.mrf.mxu0
        %v7744 = vpop.f32.mrf.mxu0
        %v7745 = vadd.f32 %v7472, %v7744
        %v7746 = vpop.f32.mrf.mxu0
        %7747 = vmatprep.mubr.bf16.mxu0 0
        %7748 = vmatmul.mubr.bf16.gmra.mxu0 %v7544
        %v7749 = vpop.f32.mrf.mxu0
        %v7750 = vadd.f32 %v7477, %v7749
        %v7751 = vpop.f32.mrf.mxu0
        %v7752 = vpop.f32.mrf.mxu0
        %v7753 = vadd.f32 %v7480, %v7752
        %v7754 = vpop.f32.mrf.mxu0
        %7755 = vmatprep.mubr.bf16.mxu0 0
        %7756 = vmatmul.mubr.bf16.gmra.mxu0 %v7545
        %v7757 = vpop.f32.mrf.mxu0
        %v7758 = vadd.f32 %v7485, %v7757
        %v7759 = vpop.f32.mrf.mxu0
        %v7760 = vpop.f32.mrf.mxu0
        %v7761 = vadd.f32 %v7488, %v7760
        %v7762 = vpop.f32.mrf.mxu0
        %7763 = vmatprep.mubr.bf16.mxu0 0
        %7764 = vmatmul.mubr.bf16.gmra.mxu0 %v7546
        %v7765 = vpop.f32.mrf.mxu0
        %v7766 = vadd.f32 %v7493, %v7765
        %v7767 = vpop.f32.mrf.mxu0
        %v7768 = vpop.f32.mrf.mxu0
        %v7769 = vadd.f32 %v7496, %v7768
        %v7770 = vpop.f32.mrf.mxu0
        %7771 = vdwg.mxu0
        %v7772 = vld [vmem:[#allocation2 + $0x4] sm:$0xf]
        %v7773 = vld [vmem:[#allocation2 + $0x8] sm:$0x1]
        %v7774 = vld [vmem:[#allocation2 + $0x10] sm:$0xf]
        %v7775 = vld [vmem:[#allocation2 + $0x14] sm:$0x1]
        %v7776 = vld [vmem:[#allocation2 + $0x1c] sm:$0xf]
        %v7777 = vld [vmem:[#allocation2 + $0x20] sm:$0x1]
        %v7778 = vld [vmem:[#allocation2 + $0x28] sm:$0xf]
        %v7779 = vld [vmem:[#allocation2 + $0x2c] sm:$0x1]
        %v7780 = vld [vmem:[#allocation2 + $0x34] sm:$0xf]
        %v7781 = vld [vmem:[#allocation2 + $0x38] sm:$0x1]
        %v7782 = vld [vmem:[#allocation2 + $0x40] sm:$0xf]
        %v7783 = vld [vmem:[#allocation2 + $0x44] sm:$0x1]
        %v7784 = vld [vmem:[#allocation2 + $0x4c] sm:$0xf]
        %v7785 = vld [vmem:[#allocation2 + $0x50] sm:$0x1]
        %v7786 = vld [vmem:[#allocation2 + $0x58] sm:$0xf]
        %v7787 = vld [vmem:[#allocation2 + $0x5c] sm:$0x1]
        %v7788 = vld [vmem:[#allocation2 + $0x7c] sm:$0xf]
        %v7789 = vld [vmem:[#allocation2 + $0x80] sm:$0x1]
        %v7790 = vld [vmem:[#allocation2 + $0x88] sm:$0xf]
        %v7791 = vld [vmem:[#allocation2 + $0x8c] sm:$0x1]
        %v7792 = vld [vmem:[#allocation2 + $0x94] sm:$0xf]
        %v7793 = vld [vmem:[#allocation2 + $0x98] sm:$0x1]
        %v7794 = vld [vmem:[#allocation2 + $0xa0] sm:$0xf]
        %v7795 = vld [vmem:[#allocation2 + $0xa4] sm:$0x1]
        %v7796 = vld [vmem:[#allocation2 + $0xac] sm:$0xf]
        %v7797 = vld [vmem:[#allocation2 + $0xb0] sm:$0x1]
        %v7798 = vld [vmem:[#allocation2 + $0xb8] sm:$0xf]
        %v7799 = vld [vmem:[#allocation2 + $0xbc] sm:$0x1]
        %v7800 = vld [vmem:[#allocation2 + $0xc4] sm:$0xf]
        %v7801 = vld [vmem:[#allocation2 + $0xc8] sm:$0x1]
        %v7802 = vld [vmem:[#allocation2 + $0xd0] sm:$0xf]
        %v7803 = vld [vmem:[#allocation2 + $0xd4] sm:$0x1]
        %v7804 = vld [vmem:[#allocation2 + $0xf4] sm:$0xf]
        %v7805 = vld [vmem:[#allocation2 + $0xf8] sm:$0x1]
        %v7806 = vld [vmem:[#allocation2 + $0x100] sm:$0xf]
        %v7807 = vld [vmem:[#allocation2 + $0x104] sm:$0x1]
        %v7808 = vld [vmem:[#allocation2 + $0x10c] sm:$0xf]
        %v7809 = vld [vmem:[#allocation2 + $0x110] sm:$0x1]
        %v7810 = vld [vmem:[#allocation2 + $0x118] sm:$0xf]
        %v7811 = vld [vmem:[#allocation2 + $0x11c] sm:$0x1]
        %v7812 = vld [vmem:[#allocation2 + $0x124] sm:$0xf]
        %v7813 = vld [vmem:[#allocation2 + $0x128] sm:$0x1]
        %v7814 = vld [vmem:[#allocation2 + $0x130] sm:$0xf]
        %v7815 = vld [vmem:[#allocation2 + $0x134] sm:$0x1]
        %v7816 = vld [vmem:[#allocation2 + $0x13c] sm:$0xf]
        %v7817 = vld [vmem:[#allocation2 + $0x140] sm:$0x1]
        %v7818 = vld [vmem:[#allocation2 + $0x148] sm:$0xf]
        %v7819 = vld [vmem:[#allocation2 + $0x14c] sm:$0x1]
        %v7820 = vld [vmem:[#allocation2 + $0x16c] sm:$0xf]
        %v7821 = vld [vmem:[#allocation2 + $0x170] sm:$0x1]
        %v7822 = vld [vmem:[#allocation2 + $0x178] sm:$0xf]
        %v7823 = vld [vmem:[#allocation2 + $0x17c] sm:$0x1]
        %v7824 = vld [vmem:[#allocation2 + $0x184] sm:$0xf]
        %v7825 = vld [vmem:[#allocation2 + $0x188] sm:$0x1]
        %v7826 = vld [vmem:[#allocation2 + $0x190] sm:$0xf]
        %v7827 = vld [vmem:[#allocation2 + $0x194] sm:$0x1]
        %v7828 = vld [vmem:[#allocation2 + $0x19c] sm:$0xf]
        %v7829 = vld [vmem:[#allocation2 + $0x1a0] sm:$0x1]
        %v7830 = vld [vmem:[#allocation2 + $0x1a8] sm:$0xf]
        %v7831 = vld [vmem:[#allocation2 + $0x1ac] sm:$0x1]
        %v7832 = vld [vmem:[#allocation2 + $0x1b4] sm:$0xf]
        %v7833 = vld [vmem:[#allocation2 + $0x1b8] sm:$0x1]
        %v7834 = vld [vmem:[#allocation2 + $0x1c0] sm:$0xf]
        %v7835 = vld [vmem:[#allocation2 + $0x1c4] sm:$0x1]
        %v7837 = vshrl.u32 %v7772, 16
        %v7839 = vrot.slane %v7837, 4
        %v7840 = vshll.u32 %v7772, 16
        %v7842 = vrot.slane %v7840, 5
        %v7843 = vor.u32 %v7839, %v7842
        %v7844 = vrot.slane %v7843, 4
        %v7846 = vshll.u32 %v7773, 16
        %v7848 = vrot.slane %v7846, 5
        %v7849 = vsel %vm1802, %v7844, %v7848
        %v7851 = vshrl.u32 %v7774, 16
        %v7853 = vrot.slane %v7851, 4
        %v7854 = vshll.u32 %v7774, 16
        %v7856 = vrot.slane %v7854, 5
        %v7857 = vor.u32 %v7853, %v7856
        %v7858 = vrot.slane %v7857, 4
        %v7860 = vshll.u32 %v7775, 16
        %v7862 = vrot.slane %v7860, 5
        %v7863 = vsel %vm1802, %v7858, %v7862
        %v7865 = vshrl.u32 %v7776, 16
        %v7867 = vrot.slane %v7865, 4
        %v7868 = vshll.u32 %v7776, 16
        %v7870 = vrot.slane %v7868, 5
        %v7871 = vor.u32 %v7867, %v7870
        %v7872 = vrot.slane %v7871, 4
        %v7874 = vshll.u32 %v7777, 16
        %v7876 = vrot.slane %v7874, 5
        %v7877 = vsel %vm1802, %v7872, %v7876
        %v7879 = vshrl.u32 %v7778, 16
        %v7881 = vrot.slane %v7879, 4
        %v7882 = vshll.u32 %v7778, 16
        %v7884 = vrot.slane %v7882, 5
        %v7885 = vor.u32 %v7881, %v7884
        %v7886 = vrot.slane %v7885, 4
        %v7888 = vshll.u32 %v7779, 16
        %v7890 = vrot.slane %v7888, 5
        %v7891 = vsel %vm1802, %v7886, %v7890
        %v7893 = vshrl.u32 %v7780, 16
        %v7895 = vrot.slane %v7893, 4
        %v7896 = vshll.u32 %v7780, 16
        %v7898 = vrot.slane %v7896, 5
        %v7899 = vor.u32 %v7895, %v7898
        %v7900 = vrot.slane %v7899, 4
        %v7902 = vshll.u32 %v7781, 16
        %v7904 = vrot.slane %v7902, 5
        %v7905 = vsel %vm1802, %v7900, %v7904
        %v7907 = vshrl.u32 %v7782, 16
        %v7909 = vrot.slane %v7907, 4
        %v7910 = vshll.u32 %v7782, 16
        %v7912 = vrot.slane %v7910, 5
        %v7913 = vor.u32 %v7909, %v7912
        %v7914 = vrot.slane %v7913, 4
        %v7916 = vshll.u32 %v7783, 16
        %v7918 = vrot.slane %v7916, 5
        %v7919 = vsel %vm1802, %v7914, %v7918
        %v7921 = vshrl.u32 %v7784, 16
        %v7923 = vrot.slane %v7921, 4
        %v7924 = vshll.u32 %v7784, 16
        %v7926 = vrot.slane %v7924, 5
        %v7927 = vor.u32 %v7923, %v7926
        %v7928 = vrot.slane %v7927, 4
        %v7930 = vshll.u32 %v7785, 16
        %v7932 = vrot.slane %v7930, 5
        %v7933 = vsel %vm1802, %v7928, %v7932
        %v7935 = vshrl.u32 %v7786, 16
        %v7937 = vrot.slane %v7935, 4
        %v7938 = vshll.u32 %v7786, 16
        %v7940 = vrot.slane %v7938, 5
        %v7941 = vor.u32 %v7937, %v7940
        %v7942 = vrot.slane %v7941, 4
        %v7944 = vshll.u32 %v7787, 16
        %v7946 = vrot.slane %v7944, 5
        %v7947 = vsel %vm1802, %v7942, %v7946
        %v7949 = vshrl.u32 %v7788, 16
        %v7951 = vrot.slane %v7949, 4
        %v7952 = vshll.u32 %v7788, 16
        %v7954 = vrot.slane %v7952, 5
        %v7955 = vor.u32 %v7951, %v7954
        %v7956 = vrot.slane %v7955, 4
        %v7958 = vshll.u32 %v7789, 16
        %v7960 = vrot.slane %v7958, 5
        %v7961 = vsel %vm1802, %v7956, %v7960
        %v7963 = vshrl.u32 %v7790, 16
        %v7965 = vrot.slane %v7963, 4
        %v7966 = vshll.u32 %v7790, 16
        %v7968 = vrot.slane %v7966, 5
        %v7969 = vor.u32 %v7965, %v7968
        %v7970 = vrot.slane %v7969, 4
        %v7972 = vshll.u32 %v7791, 16
        %v7974 = vrot.slane %v7972, 5
        %v7975 = vsel %vm1802, %v7970, %v7974
        %v7977 = vshrl.u32 %v7792, 16
        %v7979 = vrot.slane %v7977, 4
        %v7980 = vshll.u32 %v7792, 16
        %v7982 = vrot.slane %v7980, 5
        %v7983 = vor.u32 %v7979, %v7982
        %v7984 = vrot.slane %v7983, 4
        %v7986 = vshll.u32 %v7793, 16
        %v7988 = vrot.slane %v7986, 5
        %v7989 = vsel %vm1802, %v7984, %v7988
        %v7991 = vshrl.u32 %v7794, 16
        %v7993 = vrot.slane %v7991, 4
        %v7994 = vshll.u32 %v7794, 16
        %v7996 = vrot.slane %v7994, 5
        %v7997 = vor.u32 %v7993, %v7996
        %v7998 = vrot.slane %v7997, 4
        %v8000 = vshll.u32 %v7795, 16
        %v8002 = vrot.slane %v8000, 5
        %v8003 = vsel %vm1802, %v7998, %v8002
        %v8005 = vshrl.u32 %v7796, 16
        %v8007 = vrot.slane %v8005, 4
        %v8008 = vshll.u32 %v7796, 16
        %v8010 = vrot.slane %v8008, 5
        %v8011 = vor.u32 %v8007, %v8010
        %v8012 = vrot.slane %v8011, 4
        %v8014 = vshll.u32 %v7797, 16
        %v8016 = vrot.slane %v8014, 5
        %v8017 = vsel %vm1802, %v8012, %v8016
        %v8019 = vshrl.u32 %v7798, 16
        %v8021 = vrot.slane %v8019, 4
        %v8022 = vshll.u32 %v7798, 16
        %v8024 = vrot.slane %v8022, 5
        %v8025 = vor.u32 %v8021, %v8024
        %v8026 = vrot.slane %v8025, 4
        %v8028 = vshll.u32 %v7799, 16
        %v8030 = vrot.slane %v8028, 5
        %v8031 = vsel %vm1802, %v8026, %v8030
        %v8033 = vshrl.u32 %v7800, 16
        %v8035 = vrot.slane %v8033, 4
        %v8036 = vshll.u32 %v7800, 16
        %v8038 = vrot.slane %v8036, 5
        %v8039 = vor.u32 %v8035, %v8038
        %v8040 = vrot.slane %v8039, 4
        %v8042 = vshll.u32 %v7801, 16
        %v8044 = vrot.slane %v8042, 5
        %v8045 = vsel %vm1802, %v8040, %v8044
        %v8047 = vshrl.u32 %v7802, 16
        %v8049 = vrot.slane %v8047, 4
        %v8050 = vshll.u32 %v7802, 16
        %v8052 = vrot.slane %v8050, 5
        %v8053 = vor.u32 %v8049, %v8052
        %v8054 = vrot.slane %v8053, 4
        %v8056 = vshll.u32 %v7803, 16
        %v8058 = vrot.slane %v8056, 5
        %v8059 = vsel %vm1802, %v8054, %v8058
        %v8061 = vshrl.u32 %v7804, 16
        %v8063 = vrot.slane %v8061, 4
        %v8064 = vshll.u32 %v7804, 16
        %v8066 = vrot.slane %v8064, 5
        %v8067 = vor.u32 %v8063, %v8066
        %v8068 = vrot.slane %v8067, 4
        %v8070 = vshll.u32 %v7805, 16
        %v8072 = vrot.slane %v8070, 5
        %v8073 = vsel %vm1802, %v8068, %v8072
        %v8075 = vshrl.u32 %v7806, 16
        %v8077 = vrot.slane %v8075, 4
        %v8078 = vshll.u32 %v7806, 16
        %v8080 = vrot.slane %v8078, 5
        %v8081 = vor.u32 %v8077, %v8080
        %v8082 = vrot.slane %v8081, 4
        %v8084 = vshll.u32 %v7807, 16
        %v8086 = vrot.slane %v8084, 5
        %v8087 = vsel %vm1802, %v8082, %v8086
        %v8089 = vshrl.u32 %v7808, 16
        %v8091 = vrot.slane %v8089, 4
        %v8092 = vshll.u32 %v7808, 16
        %v8094 = vrot.slane %v8092, 5
        %v8095 = vor.u32 %v8091, %v8094
        %v8096 = vrot.slane %v8095, 4
        %v8098 = vshll.u32 %v7809, 16
        %v8100 = vrot.slane %v8098, 5
        %v8101 = vsel %vm1802, %v8096, %v8100
        %v8103 = vshrl.u32 %v7810, 16
        %v8105 = vrot.slane %v8103, 4
        %v8106 = vshll.u32 %v7810, 16
        %v8108 = vrot.slane %v8106, 5
        %v8109 = vor.u32 %v8105, %v8108
        %v8110 = vrot.slane %v8109, 4
        %v8112 = vshll.u32 %v7811, 16
        %v8114 = vrot.slane %v8112, 5
        %v8115 = vsel %vm1802, %v8110, %v8114
        %v8117 = vshrl.u32 %v7812, 16
        %v8119 = vrot.slane %v8117, 4
        %v8120 = vshll.u32 %v7812, 16
        %v8122 = vrot.slane %v8120, 5
        %v8123 = vor.u32 %v8119, %v8122
        %v8124 = vrot.slane %v8123, 4
        %v8126 = vshll.u32 %v7813, 16
        %v8128 = vrot.slane %v8126, 5
        %v8129 = vsel %vm1802, %v8124, %v8128
        %v8131 = vshrl.u32 %v7814, 16
        %v8133 = vrot.slane %v8131, 4
        %v8134 = vshll.u32 %v7814, 16
        %v8136 = vrot.slane %v8134, 5
        %v8137 = vor.u32 %v8133, %v8136
        %v8138 = vrot.slane %v8137, 4
        %v8140 = vshll.u32 %v7815, 16
        %v8142 = vrot.slane %v8140, 5
        %v8143 = vsel %vm1802, %v8138, %v8142
        %v8145 = vshrl.u32 %v7816, 16
        %v8147 = vrot.slane %v8145, 4
        %v8148 = vshll.u32 %v7816, 16
        %v8150 = vrot.slane %v8148, 5
        %v8151 = vor.u32 %v8147, %v8150
        %v8152 = vrot.slane %v8151, 4
        %v8154 = vshll.u32 %v7817, 16
        %v8156 = vrot.slane %v8154, 5
        %v8157 = vsel %vm1802, %v8152, %v8156
        %v8159 = vshrl.u32 %v7818, 16
        %v8161 = vrot.slane %v8159, 4
        %v8162 = vshll.u32 %v7818, 16
        %v8164 = vrot.slane %v8162, 5
        %v8165 = vor.u32 %v8161, %v8164
        %v8166 = vrot.slane %v8165, 4
        %v8168 = vshll.u32 %v7819, 16
        %v8170 = vrot.slane %v8168, 5
        %v8171 = vsel %vm1802, %v8166, %v8170
        %v8173 = vshrl.u32 %v7820, 16
        %v8175 = vrot.slane %v8173, 4
        %v8176 = vshll.u32 %v7820, 16
        %v8178 = vrot.slane %v8176, 5
        %v8179 = vor.u32 %v8175, %v8178
        %v8180 = vrot.slane %v8179, 4
        %v8182 = vshll.u32 %v7821, 16
        %v8184 = vrot.slane %v8182, 5
        %v8185 = vsel %vm1802, %v8180, %v8184
        %v8187 = vshrl.u32 %v7822, 16
        %v8189 = vrot.slane %v8187, 4
        %v8190 = vshll.u32 %v7822, 16
        %v8192 = vrot.slane %v8190, 5
        %v8193 = vor.u32 %v8189, %v8192
        %v8194 = vrot.slane %v8193, 4
        %v8196 = vshll.u32 %v7823, 16
        %v8198 = vrot.slane %v8196, 5
        %v8199 = vsel %vm1802, %v8194, %v8198
        %v8201 = vshrl.u32 %v7824, 16
        %v8203 = vrot.slane %v8201, 4
        %v8204 = vshll.u32 %v7824, 16
        %v8206 = vrot.slane %v8204, 5
        %v8207 = vor.u32 %v8203, %v8206
        %v8208 = vrot.slane %v8207, 4
        %v8210 = vshll.u32 %v7825, 16
        %v8212 = vrot.slane %v8210, 5
        %v8213 = vsel %vm1802, %v8208, %v8212
        %v8215 = vshrl.u32 %v7826, 16
        %v8217 = vrot.slane %v8215, 4
        %v8218 = vshll.u32 %v7826, 16
        %v8220 = vrot.slane %v8218, 5
        %v8221 = vor.u32 %v8217, %v8220
        %v8222 = vrot.slane %v8221, 4
        %v8224 = vshll.u32 %v7827, 16
        %v8226 = vrot.slane %v8224, 5
        %v8227 = vsel %vm1802, %v8222, %v8226
        %v8229 = vshrl.u32 %v7828, 16
        %v8231 = vrot.slane %v8229, 4
        %v8232 = vshll.u32 %v7828, 16
        %v8234 = vrot.slane %v8232, 5
        %v8235 = vor.u32 %v8231, %v8234
        %v8236 = vrot.slane %v8235, 4
        %v8238 = vshll.u32 %v7829, 16
        %v8240 = vrot.slane %v8238, 5
        %v8241 = vsel %vm1802, %v8236, %v8240
        %v8243 = vshrl.u32 %v7830, 16
        %v8245 = vrot.slane %v8243, 4
        %v8246 = vshll.u32 %v7830, 16
        %v8248 = vrot.slane %v8246, 5
        %v8249 = vor.u32 %v8245, %v8248
        %v8250 = vrot.slane %v8249, 4
        %v8252 = vshll.u32 %v7831, 16
        %v8254 = vrot.slane %v8252, 5
        %v8255 = vsel %vm1802, %v8250, %v8254
        %v8257 = vshrl.u32 %v7832, 16
        %v8259 = vrot.slane %v8257, 4
        %v8260 = vshll.u32 %v7832, 16
        %v8262 = vrot.slane %v8260, 5
        %v8263 = vor.u32 %v8259, %v8262
        %v8264 = vrot.slane %v8263, 4
        %v8266 = vshll.u32 %v7833, 16
        %v8268 = vrot.slane %v8266, 5
        %v8269 = vsel %vm1802, %v8264, %v8268
        %v8271 = vshrl.u32 %v7834, 16
        %v8273 = vrot.slane %v8271, 4
        %v8274 = vshll.u32 %v7834, 16
        %v8276 = vrot.slane %v8274, 5
        %v8277 = vor.u32 %v8273, %v8276
        %v8278 = vrot.slane %v8277, 4
        %v8280 = vshll.u32 %v7835, 16
        %v8282 = vrot.slane %v8280, 5
        %v8283 = vsel %vm1802, %v8278, %v8282
        %v8284 = vld [vmem:[#allocation8 + $0x80] sm:$0xf]
        %v8285 = vld [vmem:[#allocation8 + $0x84] sm:$0xf]
        %v8286 = vld [vmem:[#allocation8 + $0x88] sm:$0xf]
        %v8287 = vld [vmem:[#allocation8 + $0x8c] sm:$0xf]
        %v8288 = vld [vmem:[#allocation8 + $0x90] sm:$0xf]
        %v8289 = vld [vmem:[#allocation8 + $0x94] sm:$0xf]
        %v8290 = vld [vmem:[#allocation8 + $0x98] sm:$0xf]
        %v8291 = vld [vmem:[#allocation8 + $0x9c] sm:$0xf]
        %v8292 = vld [vmem:[#allocation8 + $0xa0] sm:$0xf]
        %v8293 = vld [vmem:[#allocation8 + $0xa4] sm:$0xf]
        %v8294 = vld [vmem:[#allocation8 + $0xa8] sm:$0xf]
        %v8295 = vld [vmem:[#allocation8 + $0xac] sm:$0xf]
        %v8296 = vld [vmem:[#allocation8 + $0xb0] sm:$0xf]
        %v8297 = vld [vmem:[#allocation8 + $0xb4] sm:$0xf]
        %v8298 = vld [vmem:[#allocation8 + $0xb8] sm:$0xf]
        %v8299 = vld [vmem:[#allocation8 + $0xbc] sm:$0xf]
        %v8300 = vunpack.c.l.b16 %v7849
        %v8301 = vunpack.c.l.b16 %v7863
        %v8302 = vunpack.c.l.b16 %v7877
        %v8303 = vunpack.c.l.b16 %v7891
        %v8304 = vunpack.c.l.b16 %v7905
        %v8305 = vunpack.c.l.b16 %v7919
        %v8306 = vunpack.c.l.b16 %v7933
        %v8307 = vunpack.c.l.b16 %v7947
        %v8308 = vunpack.c.l.b16 %v7961
        %v8309 = vunpack.c.l.b16 %v7975
        %v8310 = vunpack.c.l.b16 %v7989
        %v8311 = vunpack.c.l.b16 %v8003
        %v8312 = vunpack.c.l.b16 %v8017
        %v8313 = vunpack.c.l.b16 %v8031
        %v8314 = vunpack.c.l.b16 %v8045
        %v8315 = vunpack.c.l.b16 %v8059
        %v8316 = vunpack.c.l.b16 %v8073
        %v8317 = vunpack.c.l.b16 %v8087
        %v8318 = vunpack.c.l.b16 %v8101
        %v8319 = vunpack.c.l.b16 %v8115
        %v8320 = vunpack.c.l.b16 %v8129
        %v8321 = vunpack.c.l.b16 %v8143
        %v8322 = vunpack.c.l.b16 %v8157
        %v8323 = vunpack.c.l.b16 %v8171
        %v8324 = vunpack.c.l.b16 %v8185
        %v8325 = vunpack.c.l.b16 %v8199
        %v8326 = vunpack.c.l.b16 %v8213
        %v8327 = vunpack.c.l.b16 %v8227
        %v8328 = vunpack.c.l.b16 %v8241
        %v8329 = vunpack.c.l.b16 %v8255
        %v8330 = vunpack.c.l.b16 %v8269
        %v8331 = vunpack.c.l.b16 %v8283
        %v8332 = vpack.c.b16 %v8301, %v8300
        %v8333 = vpack.c.b16 %v8303, %v8302
        %v8334 = vpack.c.b16 %v8305, %v8304
        %v8335 = vpack.c.b16 %v8307, %v8306
        %v8336 = vpack.c.b16 %v8309, %v8308
        %v8337 = vpack.c.b16 %v8311, %v8310
        %v8338 = vpack.c.b16 %v8313, %v8312
        %v8339 = vpack.c.b16 %v8315, %v8314
        %v8340 = vpack.c.b16 %v8317, %v8316
        %v8341 = vpack.c.b16 %v8319, %v8318
        %v8342 = vpack.c.b16 %v8321, %v8320
        %v8343 = vpack.c.b16 %v8323, %v8322
        %v8344 = vpack.c.b16 %v8325, %v8324
        %v8345 = vpack.c.b16 %v8327, %v8326
        %v8346 = vpack.c.b16 %v8329, %v8328
        %v8347 = vpack.c.b16 %v8331, %v8330
        %v8380 = vunpack.c.l.b16 %v8284
        %v8381 = vunpack.c.l.b16 %v8285
        %v8382 = vunpack.c.l.b16 %v8286
        %v8383 = vunpack.c.l.b16 %v8287
        %v8384 = vunpack.c.l.b16 %v8288
        %v8385 = vunpack.c.l.b16 %v8289
        %v8386 = vunpack.c.l.b16 %v8290
        %v8387 = vunpack.c.l.b16 %v8291
        %v8388 = vunpack.c.l.b16 %v8292
        %v8389 = vunpack.c.l.b16 %v8293
        %v8390 = vunpack.c.l.b16 %v8294
        %v8391 = vunpack.c.l.b16 %v8295
        %v8392 = vunpack.c.l.b16 %v8296
        %v8393 = vunpack.c.l.b16 %v8297
        %v8394 = vunpack.c.l.b16 %v8298
        %v8395 = vunpack.c.l.b16 %v8299
        %v8396 = vpack.c.b16 %v8381, %v8380
        %v8397 = vpack.c.b16 %v8383, %v8382
        %v8398 = vpack.c.b16 %v8385, %v8384
        %v8399 = vpack.c.b16 %v8387, %v8386
        %v8400 = vpack.c.b16 %v8389, %v8388
        %v8401 = vpack.c.b16 %v8391, %v8390
        %v8402 = vpack.c.b16 %v8393, %v8392
        %v8403 = vpack.c.b16 %v8395, %v8394
        %8412 = vmatprep.subr.bf16.mxu0 0
        %8413 = vmatpush1.bf16.msra.mxu0 %v8403
        %8414 = vmatprep.subr.bf16.mxu0 0
        %8415 = vmatpush1.bf16.msra.mxu0 %v8402
        %8416 = vmatprep.subr.bf16.mxu0 0
        %8417 = vmatpush1.bf16.msra.mxu0 %v8401
        %8418 = vmatprep.subr.bf16.mxu0 0
        %8419 = vmatpush1.bf16.msra.mxu0 %v8400
        %8420 = vmatprep.subr.bf16.mxu0 0
        %8421 = vmatpush1.bf16.msra.mxu0 %v8399
        %8422 = vmatprep.subr.bf16.mxu0 0
        %8423 = vmatpush1.bf16.msra.mxu0 %v8398
        %8424 = vmatprep.subr.bf16.mxu0 0
        %8425 = vmatpush1.bf16.msra.mxu0 %v8397
        %8426 = vmatprep.subr.bf16.mxu0 0
        %8427 = vmatpush1.bf16.msra.mxu0 %v8396
        %8428 = vmatprep.subr.bf16.mxu0 0
        %8429 = vmatpush2.bf16.msra.mxu0 0
        %8430 = vmatprep.subr.bf16.mxu0 0
        %8431 = vmatpush2.bf16.msra.mxu0 0
        %8432 = vmatprep.subr.bf16.mxu0 0
        %8433 = vmatpush2.bf16.msra.mxu0 0
        %8434 = vmatprep.subr.bf16.mxu0 0
        %8435 = vmatpush2.bf16.msra.mxu0 0
        %8436 = vmatprep.subr.bf16.mxu0 0
        %8437 = vmatpush2.bf16.msra.mxu0 0
        %8438 = vmatprep.subr.bf16.mxu0 0
        %8439 = vmatpush2.bf16.msra.mxu0 0
        %8440 = vmatprep.subr.bf16.mxu0 0
        %8441 = vmatpush2.bf16.msra.mxu0 0
        %8442 = vmatprep.subr.bf16.mxu0 0
        %8443 = vmatpush2.bf16.msra.mxu0 0
        %8444 = vmatprep.mubr.bf16.mxu0 0
        %8445 = vmatmul.mubr.bf16.gmra.mxu0 %v8332
        %v8446 = vpop.f32.mrf.mxu0
        %v8447 = vadd.f32 0.0, %v8446
        %v8448 = vpop.f32.mrf.mxu0
        %v8449 = vpop.f32.mrf.mxu0
        %v8450 = vadd.f32 0.0, %v8449
        %v8451 = vpop.f32.mrf.mxu0
        %8452 = vmatprep.mubr.bf16.mxu0 0
        %8453 = vmatmul.mubr.bf16.gmra.mxu0 %v8333
        %v8454 = vpop.f32.mrf.mxu0
        %v8455 = vadd.f32 0.0, %v8454
        %v8456 = vpop.f32.mrf.mxu0
        %v8457 = vpop.f32.mrf.mxu0
        %v8458 = vadd.f32 0.0, %v8457
        %v8459 = vpop.f32.mrf.mxu0
        %8460 = vmatprep.mubr.bf16.mxu0 0
        %8461 = vmatmul.mubr.bf16.gmra.mxu0 %v8334
        %v8462 = vpop.f32.mrf.mxu0
        %v8463 = vadd.f32 0.0, %v8462
        %v8464 = vpop.f32.mrf.mxu0
        %v8465 = vpop.f32.mrf.mxu0
        %v8466 = vadd.f32 0.0, %v8465
        %v8467 = vpop.f32.mrf.mxu0
        %8468 = vmatprep.mubr.bf16.mxu0 0
        %8469 = vmatmul.mubr.bf16.gmra.mxu0 %v8335
        %v8470 = vpop.f32.mrf.mxu0
        %v8471 = vadd.f32 0.0, %v8470
        %v8472 = vpop.f32.mrf.mxu0
        %v8473 = vpop.f32.mrf.mxu0
        %v8474 = vadd.f32 0.0, %v8473
        %v8475 = vpop.f32.mrf.mxu0
        %8476 = vmatprep.mubr.bf16.mxu0 0
        %8477 = vmatmul.mubr.bf16.gmra.mxu0 %v8336
        %v8478 = vpop.f32.mrf.mxu0
        %v8479 = vadd.f32 0.0, %v8478
        %v8480 = vpop.f32.mrf.mxu0
        %v8481 = vpop.f32.mrf.mxu0
        %v8482 = vadd.f32 0.0, %v8481
        %v8483 = vpop.f32.mrf.mxu0
        %8484 = vmatprep.mubr.bf16.mxu0 0
        %8485 = vmatmul.mubr.bf16.gmra.mxu0 %v8337
        %v8486 = vpop.f32.mrf.mxu0
        %v8487 = vadd.f32 0.0, %v8486
        %v8488 = vpop.f32.mrf.mxu0
        %v8489 = vpop.f32.mrf.mxu0
        %v8490 = vadd.f32 0.0, %v8489
        %v8491 = vpop.f32.mrf.mxu0
        %8492 = vmatprep.mubr.bf16.mxu0 0
        %8493 = vmatmul.mubr.bf16.gmra.mxu0 %v8338
        %v8494 = vpop.f32.mrf.mxu0
        %v8495 = vadd.f32 0.0, %v8494
        %v8496 = vpop.f32.mrf.mxu0
        %v8497 = vpop.f32.mrf.mxu0
        %v8498 = vadd.f32 0.0, %v8497
        %v8499 = vpop.f32.mrf.mxu0
        %8500 = vmatprep.mubr.bf16.mxu0 0
        %8501 = vmatmul.mubr.bf16.gmra.mxu0 %v8339
        %v8502 = vpop.f32.mrf.mxu0
        %v8503 = vadd.f32 0.0, %v8502
        %v8504 = vpop.f32.mrf.mxu0
        %v8505 = vpop.f32.mrf.mxu0
        %v8506 = vadd.f32 0.0, %v8505
        %v8507 = vpop.f32.mrf.mxu0
        %8508 = vmatprep.mubr.bf16.mxu0 0
        %8509 = vmatmul.mubr.bf16.gmra.mxu0 %v8340
        %v8510 = vpop.f32.mrf.mxu0
        %v8511 = vadd.f32 0.0, %v8510
        %v8512 = vpop.f32.mrf.mxu0
        %v8513 = vpop.f32.mrf.mxu0
        %v8514 = vadd.f32 0.0, %v8513
        %v8515 = vpop.f32.mrf.mxu0
        %8516 = vmatprep.mubr.bf16.mxu0 0
        %8517 = vmatmul.mubr.bf16.gmra.mxu0 %v8341
        %v8518 = vpop.f32.mrf.mxu0
        %v8519 = vadd.f32 0.0, %v8518
        %v8520 = vpop.f32.mrf.mxu0
        %v8521 = vpop.f32.mrf.mxu0
        %v8522 = vadd.f32 0.0, %v8521
        %v8523 = vpop.f32.mrf.mxu0
        %8524 = vmatprep.mubr.bf16.mxu0 0
        %8525 = vmatmul.mubr.bf16.gmra.mxu0 %v8342
        %v8526 = vpop.f32.mrf.mxu0
        %v8527 = vadd.f32 0.0, %v8526
        %v8528 = vpop.f32.mrf.mxu0
        %v8529 = vpop.f32.mrf.mxu0
        %v8530 = vadd.f32 0.0, %v8529
        %v8531 = vpop.f32.mrf.mxu0
        %8532 = vmatprep.mubr.bf16.mxu0 0
        %8533 = vmatmul.mubr.bf16.gmra.mxu0 %v8343
        %v8534 = vpop.f32.mrf.mxu0
        %v8535 = vadd.f32 0.0, %v8534
        %v8536 = vpop.f32.mrf.mxu0
        %v8537 = vpop.f32.mrf.mxu0
        %v8538 = vadd.f32 0.0, %v8537
        %v8539 = vpop.f32.mrf.mxu0
        %8540 = vmatprep.mubr.bf16.mxu0 0
        %8541 = vmatmul.mubr.bf16.gmra.mxu0 %v8344
        %v8542 = vpop.f32.mrf.mxu0
        %v8543 = vadd.f32 0.0, %v8542
        %v8544 = vpop.f32.mrf.mxu0
        %v8545 = vpop.f32.mrf.mxu0
        %v8546 = vadd.f32 0.0, %v8545
        %v8547 = vpop.f32.mrf.mxu0
        %8548 = vmatprep.mubr.bf16.mxu0 0
        %8549 = vmatmul.mubr.bf16.gmra.mxu0 %v8345
        %v8550 = vpop.f32.mrf.mxu0
        %v8551 = vadd.f32 0.0, %v8550
        %v8552 = vpop.f32.mrf.mxu0
        %v8553 = vpop.f32.mrf.mxu0
        %v8554 = vadd.f32 0.0, %v8553
        %v8555 = vpop.f32.mrf.mxu0
        %8556 = vmatprep.mubr.bf16.mxu0 0
        %8557 = vmatmul.mubr.bf16.gmra.mxu0 %v8346
        %v8558 = vpop.f32.mrf.mxu0
        %v8559 = vadd.f32 0.0, %v8558
        %v8560 = vpop.f32.mrf.mxu0
        %v8561 = vpop.f32.mrf.mxu0
        %v8562 = vadd.f32 0.0, %v8561
        %v8563 = vpop.f32.mrf.mxu0
        %8564 = vmatprep.mubr.bf16.mxu0 0
        %8565 = vmatmul.mubr.bf16.gmra.mxu0 %v8347
        %v8566 = vpop.f32.mrf.mxu0
        %v8567 = vadd.f32 0.0, %v8566
        %v8568 = vpop.f32.mrf.mxu0
        %v8569 = vpop.f32.mrf.mxu0
        %v8570 = vadd.f32 0.0, %v8569
        %v8571 = vpop.f32.mrf.mxu0
        %8572 = vdwg.mxu0
        %v8573 = vadd.f32 %v7646, %v8447
        %v8574 = vadd.f32 %v7649, %v8450
        %v8575 = vadd.f32 %v7654, %v8455
        %v8576 = vadd.f32 %v7657, %v8458
        %v8577 = vadd.f32 %v7662, %v8463
        %v8578 = vadd.f32 %v7665, %v8466
        %v8579 = vadd.f32 %v7670, %v8471
        %v8580 = vadd.f32 %v7673, %v8474
        %v8581 = vadd.f32 %v7678, %v8479
        %v8582 = vadd.f32 %v7681, %v8482
        %v8583 = vadd.f32 %v7686, %v8487
        %v8584 = vadd.f32 %v7689, %v8490
        %v8585 = vadd.f32 %v7694, %v8495
        %v8586 = vadd.f32 %v7697, %v8498
        %v8587 = vadd.f32 %v7702, %v8503
        %v8588 = vadd.f32 %v7705, %v8506
        %v8589 = vadd.f32 %v7710, %v8511
        %v8590 = vadd.f32 %v7713, %v8514
        %v8591 = vadd.f32 %v7718, %v8519
        %v8592 = vadd.f32 %v7721, %v8522
        %v8593 = vadd.f32 %v7726, %v8527
        %v8594 = vadd.f32 %v7729, %v8530
        %v8595 = vadd.f32 %v7734, %v8535
        %v8596 = vadd.f32 %v7737, %v8538
        %v8597 = vadd.f32 %v7742, %v8543
        %v8598 = vadd.f32 %v7745, %v8546
        %v8599 = vadd.f32 %v7750, %v8551
        %v8600 = vadd.f32 %v7753, %v8554
        %v8601 = vadd.f32 %v7758, %v8559
        %v8602 = vadd.f32 %v7761, %v8562
        %v8603 = vadd.f32 %v7766, %v8567
        %v8604 = vadd.f32 %v7769, %v8570
        %v8605 = vld [vmem:[%s611] sm:$0x8]
        %v8606 = vld [vmem:[%s611 + $0x4] sm:$0xf]
        %v8607 = vld [vmem:[%s611 + $0xc] sm:$0x8]
        %v8608 = vld [vmem:[%s611 + $0x10] sm:$0xf]
        %v8609 = vld [vmem:[%s611 + $0x18] sm:$0x8]
        %v8610 = vld [vmem:[%s611 + $0x1c] sm:$0xf]
        %v8611 = vld [vmem:[%s611 + $0x24] sm:$0x8]
        %v8612 = vld [vmem:[%s611 + $0x28] sm:$0xf]
        %v8613 = vld [vmem:[%s611 + $0x30] sm:$0x8]
        %v8614 = vld [vmem:[%s611 + $0x34] sm:$0xf]
        %v8615 = vld [vmem:[%s611 + $0x3c] sm:$0x8]
        %v8616 = vld [vmem:[%s611 + $0x40] sm:$0xf]
        %v8617 = vld [vmem:[%s611 + $0x48] sm:$0x8]
        %v8618 = vld [vmem:[%s611 + $0x4c] sm:$0xf]
        %v8619 = vld [vmem:[%s611 + $0x54] sm:$0x8]
        %v8620 = vld [vmem:[%s611 + $0x58] sm:$0xf]
        %v8621 = vld [vmem:[%s611 + $0x78] sm:$0x8]
        %v8622 = vld [vmem:[%s611 + $0x7c] sm:$0xf]
        %v8623 = vld [vmem:[%s611 + $0x84] sm:$0x8]
        %v8624 = vld [vmem:[%s611 + $0x88] sm:$0xf]
        %v8625 = vld [vmem:[%s611 + $0x90] sm:$0x8]
        %v8626 = vld [vmem:[%s611 + $0x94] sm:$0xf]
        %v8627 = vld [vmem:[%s611 + $0x9c] sm:$0x8]
        %v8628 = vld [vmem:[%s611 + $0xa0] sm:$0xf]
        %v8629 = vld [vmem:[%s611 + $0xa8] sm:$0x8]
        %v8630 = vld [vmem:[%s611 + $0xac] sm:$0xf]
        %v8631 = vld [vmem:[%s611 + $0xb4] sm:$0x8]
        %v8632 = vld [vmem:[%s611 + $0xb8] sm:$0xf]
        %v8633 = vld [vmem:[%s611 + $0xc0] sm:$0x8]
        %v8634 = vld [vmem:[%s611 + $0xc4] sm:$0xf]
        %v8635 = vld [vmem:[%s611 + $0xcc] sm:$0x8]
        %v8636 = vld [vmem:[%s611 + $0xd0] sm:$0xf]
        %v8637 = vld [vmem:[%s611 + $0xf0] sm:$0x8]
        %v8638 = vld [vmem:[%s611 + $0xf4] sm:$0xf]
        %v8639 = vld [vmem:[%s611 + $0xfc] sm:$0x8]
        %v8640 = vld [vmem:[%s611 + $0x100] sm:$0xf]
        %v8641 = vld [vmem:[%s611 + $0x108] sm:$0x8]
        %v8642 = vld [vmem:[%s611 + $0x10c] sm:$0xf]
        %v8643 = vld [vmem:[%s611 + $0x114] sm:$0x8]
        %v8644 = vld [vmem:[%s611 + $0x118] sm:$0xf]
        %v8645 = vld [vmem:[%s611 + $0x120] sm:$0x8]
        %v8646 = vld [vmem:[%s611 + $0x124] sm:$0xf]
        %v8647 = vld [vmem:[%s611 + $0x12c] sm:$0x8]
        %v8648 = vld [vmem:[%s611 + $0x130] sm:$0xf]
        %v8649 = vld [vmem:[%s611 + $0x138] sm:$0x8]
        %v8650 = vld [vmem:[%s611 + $0x13c] sm:$0xf]
        %v8651 = vld [vmem:[%s611 + $0x144] sm:$0x8]
        %v8652 = vld [vmem:[%s611 + $0x148] sm:$0xf]
        %v8653 = vld [vmem:[%s611 + $0x168] sm:$0x8]
        %v8654 = vld [vmem:[%s611 + $0x16c] sm:$0xf]
        %v8655 = vld [vmem:[%s611 + $0x174] sm:$0x8]
        %v8656 = vld [vmem:[%s611 + $0x178] sm:$0xf]
        %v8657 = vld [vmem:[%s611 + $0x180] sm:$0x8]
        %v8658 = vld [vmem:[%s611 + $0x184] sm:$0xf]
        %v8659 = vld [vmem:[%s611 + $0x18c] sm:$0x8]
        %v8660 = vld [vmem:[%s611 + $0x190] sm:$0xf]
        %v8661 = vld [vmem:[%s611 + $0x198] sm:$0x8]
        %v8662 = vld [vmem:[%s611 + $0x19c] sm:$0xf]
        %v8663 = vld [vmem:[%s611 + $0x1a4] sm:$0x8]
        %v8664 = vld [vmem:[%s611 + $0x1a8] sm:$0xf]
        %v8665 = vld [vmem:[%s611 + $0x1b0] sm:$0x8]
        %v8666 = vld [vmem:[%s611 + $0x1b4] sm:$0xf]
        %v8667 = vld [vmem:[%s611 + $0x1bc] sm:$0x8]
        %v8668 = vld [vmem:[%s611 + $0x1c0] sm:$0xf]
        %v8670 = vshrl.u32 %v8605, 16
        %v8672 = vrot.slane %v8670, 7
        %v8673 = vrot.slane %v8672, 4
        %v8675 = vshrl.u32 %v8606, 16
        %v8677 = vrot.slane %v8675, 7
        %v8678 = vshll.u32 %v8606, 16
        %v8680 = vor.u32 %v8677, %v8678
        %v8681 = vsel %vm709, %v8673, %v8680
        %v8683 = vshrl.u32 %v8607, 16
        %v8685 = vrot.slane %v8683, 7
        %v8686 = vrot.slane %v8685, 4
        %v8688 = vshrl.u32 %v8608, 16
        %v8690 = vrot.slane %v8688, 7
        %v8691 = vshll.u32 %v8608, 16
        %v8693 = vor.u32 %v8690, %v8691
        %v8694 = vsel %vm709, %v8686, %v8693
        %v8696 = vshrl.u32 %v8609, 16
        %v8698 = vrot.slane %v8696, 7
        %v8699 = vrot.slane %v8698, 4
        %v8701 = vshrl.u32 %v8610, 16
        %v8703 = vrot.slane %v8701, 7
        %v8704 = vshll.u32 %v8610, 16
        %v8706 = vor.u32 %v8703, %v8704
        %v8707 = vsel %vm709, %v8699, %v8706
        %v8709 = vshrl.u32 %v8611, 16
        %v8711 = vrot.slane %v8709, 7
        %v8712 = vrot.slane %v8711, 4
        %v8714 = vshrl.u32 %v8612, 16
        %v8716 = vrot.slane %v8714, 7
        %v8717 = vshll.u32 %v8612, 16
        %v8719 = vor.u32 %v8716, %v8717
        %v8720 = vsel %vm709, %v8712, %v8719
        %v8722 = vshrl.u32 %v8613, 16
        %v8724 = vrot.slane %v8722, 7
        %v8725 = vrot.slane %v8724, 4
        %v8727 = vshrl.u32 %v8614, 16
        %v8729 = vrot.slane %v8727, 7
        %v8730 = vshll.u32 %v8614, 16
        %v8732 = vor.u32 %v8729, %v8730
        %v8733 = vsel %vm709, %v8725, %v8732
        %v8735 = vshrl.u32 %v8615, 16
        %v8737 = vrot.slane %v8735, 7
        %v8738 = vrot.slane %v8737, 4
        %v8740 = vshrl.u32 %v8616, 16
        %v8742 = vrot.slane %v8740, 7
        %v8743 = vshll.u32 %v8616, 16
        %v8745 = vor.u32 %v8742, %v8743
        %v8746 = vsel %vm709, %v8738, %v8745
        %v8748 = vshrl.u32 %v8617, 16
        %v8750 = vrot.slane %v8748, 7
        %v8751 = vrot.slane %v8750, 4
        %v8753 = vshrl.u32 %v8618, 16
        %v8755 = vrot.slane %v8753, 7
        %v8756 = vshll.u32 %v8618, 16
        %v8758 = vor.u32 %v8755, %v8756
        %v8759 = vsel %vm709, %v8751, %v8758
        %v8761 = vshrl.u32 %v8619, 16
        %v8763 = vrot.slane %v8761, 7
        %v8764 = vrot.slane %v8763, 4
        %v8766 = vshrl.u32 %v8620, 16
        %v8768 = vrot.slane %v8766, 7
        %v8769 = vshll.u32 %v8620, 16
        %v8771 = vor.u32 %v8768, %v8769
        %v8772 = vsel %vm709, %v8764, %v8771
        %v8774 = vshrl.u32 %v8621, 16
        %v8776 = vrot.slane %v8774, 7
        %v8777 = vrot.slane %v8776, 4
        %v8779 = vshrl.u32 %v8622, 16
        %v8781 = vrot.slane %v8779, 7
        %v8782 = vshll.u32 %v8622, 16
        %v8784 = vor.u32 %v8781, %v8782
        %v8785 = vsel %vm709, %v8777, %v8784
        %v8787 = vshrl.u32 %v8623, 16
        %v8789 = vrot.slane %v8787, 7
        %v8790 = vrot.slane %v8789, 4
        %v8792 = vshrl.u32 %v8624, 16
        %v8794 = vrot.slane %v8792, 7
        %v8795 = vshll.u32 %v8624, 16
        %v8797 = vor.u32 %v8794, %v8795
        %v8798 = vsel %vm709, %v8790, %v8797
        %v8800 = vshrl.u32 %v8625, 16
        %v8802 = vrot.slane %v8800, 7
        %v8803 = vrot.slane %v8802, 4
        %v8805 = vshrl.u32 %v8626, 16
        %v8807 = vrot.slane %v8805, 7
        %v8808 = vshll.u32 %v8626, 16
        %v8810 = vor.u32 %v8807, %v8808
        %v8811 = vsel %vm709, %v8803, %v8810
        %v8813 = vshrl.u32 %v8627, 16
        %v8815 = vrot.slane %v8813, 7
        %v8816 = vrot.slane %v8815, 4
        %v8818 = vshrl.u32 %v8628, 16
        %v8820 = vrot.slane %v8818, 7
        %v8821 = vshll.u32 %v8628, 16
        %v8823 = vor.u32 %v8820, %v8821
        %v8824 = vsel %vm709, %v8816, %v8823
        %v8826 = vshrl.u32 %v8629, 16
        %v8828 = vrot.slane %v8826, 7
        %v8829 = vrot.slane %v8828, 4
        %v8831 = vshrl.u32 %v8630, 16
        %v8833 = vrot.slane %v8831, 7
        %v8834 = vshll.u32 %v8630, 16
        %v8836 = vor.u32 %v8833, %v8834
        %v8837 = vsel %vm709, %v8829, %v8836
        %v8839 = vshrl.u32 %v8631, 16
        %v8841 = vrot.slane %v8839, 7
        %v8842 = vrot.slane %v8841, 4
        %v8844 = vshrl.u32 %v8632, 16
        %v8846 = vrot.slane %v8844, 7
        %v8847 = vshll.u32 %v8632, 16
        %v8849 = vor.u32 %v8846, %v8847
        %v8850 = vsel %vm709, %v8842, %v8849
        %v8852 = vshrl.u32 %v8633, 16
        %v8854 = vrot.slane %v8852, 7
        %v8855 = vrot.slane %v8854, 4
        %v8857 = vshrl.u32 %v8634, 16
        %v8859 = vrot.slane %v8857, 7
        %v8860 = vshll.u32 %v8634, 16
        %v8862 = vor.u32 %v8859, %v8860
        %v8863 = vsel %vm709, %v8855, %v8862
        %v8865 = vshrl.u32 %v8635, 16
        %v8867 = vrot.slane %v8865, 7
        %v8868 = vrot.slane %v8867, 4
        %v8870 = vshrl.u32 %v8636, 16
        %v8872 = vrot.slane %v8870, 7
        %v8873 = vshll.u32 %v8636, 16
        %v8875 = vor.u32 %v8872, %v8873
        %v8876 = vsel %vm709, %v8868, %v8875
        %v8878 = vshrl.u32 %v8637, 16
        %v8880 = vrot.slane %v8878, 7
        %v8881 = vrot.slane %v8880, 4
        %v8883 = vshrl.u32 %v8638, 16
        %v8885 = vrot.slane %v8883, 7
        %v8886 = vshll.u32 %v8638, 16
        %v8888 = vor.u32 %v8885, %v8886
        %v8889 = vsel %vm709, %v8881, %v8888
        %v8891 = vshrl.u32 %v8639, 16
        %v8893 = vrot.slane %v8891, 7
        %v8894 = vrot.slane %v8893, 4
        %v8896 = vshrl.u32 %v8640, 16
        %v8898 = vrot.slane %v8896, 7
        %v8899 = vshll.u32 %v8640, 16
        %v8901 = vor.u32 %v8898, %v8899
        %v8902 = vsel %vm709, %v8894, %v8901
        %v8904 = vshrl.u32 %v8641, 16
        %v8906 = vrot.slane %v8904, 7
        %v8907 = vrot.slane %v8906, 4
        %v8909 = vshrl.u32 %v8642, 16
        %v8911 = vrot.slane %v8909, 7
        %v8912 = vshll.u32 %v8642, 16
        %v8914 = vor.u32 %v8911, %v8912
        %v8915 = vsel %vm709, %v8907, %v8914
        %v8917 = vshrl.u32 %v8643, 16
        %v8919 = vrot.slane %v8917, 7
        %v8920 = vrot.slane %v8919, 4
        %v8922 = vshrl.u32 %v8644, 16
        %v8924 = vrot.slane %v8922, 7
        %v8925 = vshll.u32 %v8644, 16
        %v8927 = vor.u32 %v8924, %v8925
        %v8928 = vsel %vm709, %v8920, %v8927
        %v8930 = vshrl.u32 %v8645, 16
        %v8932 = vrot.slane %v8930, 7
        %v8933 = vrot.slane %v8932, 4
        %v8935 = vshrl.u32 %v8646, 16
        %v8937 = vrot.slane %v8935, 7
        %v8938 = vshll.u32 %v8646, 16
        %v8940 = vor.u32 %v8937, %v8938
        %v8941 = vsel %vm709, %v8933, %v8940
        %v8943 = vshrl.u32 %v8647, 16
        %v8945 = vrot.slane %v8943, 7
        %v8946 = vrot.slane %v8945, 4
        %v8948 = vshrl.u32 %v8648, 16
        %v8950 = vrot.slane %v8948, 7
        %v8951 = vshll.u32 %v8648, 16
        %v8953 = vor.u32 %v8950, %v8951
        %v8954 = vsel %vm709, %v8946, %v8953
        %v8956 = vshrl.u32 %v8649, 16
        %v8958 = vrot.slane %v8956, 7
        %v8959 = vrot.slane %v8958, 4
        %v8961 = vshrl.u32 %v8650, 16
        %v8963 = vrot.slane %v8961, 7
        %v8964 = vshll.u32 %v8650, 16
        %v8966 = vor.u32 %v8963, %v8964
        %v8967 = vsel %vm709, %v8959, %v8966
        %v8969 = vshrl.u32 %v8651, 16
        %v8971 = vrot.slane %v8969, 7
        %v8972 = vrot.slane %v8971, 4
        %v8974 = vshrl.u32 %v8652, 16
        %v8976 = vrot.slane %v8974, 7
        %v8977 = vshll.u32 %v8652, 16
        %v8979 = vor.u32 %v8976, %v8977
        %v8980 = vsel %vm709, %v8972, %v8979
        %v8982 = vshrl.u32 %v8653, 16
        %v8984 = vrot.slane %v8982, 7
        %v8985 = vrot.slane %v8984, 4
        %v8987 = vshrl.u32 %v8654, 16
        %v8989 = vrot.slane %v8987, 7
        %v8990 = vshll.u32 %v8654, 16
        %v8992 = vor.u32 %v8989, %v8990
        %v8993 = vsel %vm709, %v8985, %v8992
        %v8995 = vshrl.u32 %v8655, 16
        %v8997 = vrot.slane %v8995, 7
        %v8998 = vrot.slane %v8997, 4
        %v9000 = vshrl.u32 %v8656, 16
        %v9002 = vrot.slane %v9000, 7
        %v9003 = vshll.u32 %v8656, 16
        %v9005 = vor.u32 %v9002, %v9003
        %v9006 = vsel %vm709, %v8998, %v9005
        %v9008 = vshrl.u32 %v8657, 16
        %v9010 = vrot.slane %v9008, 7
        %v9011 = vrot.slane %v9010, 4
        %v9013 = vshrl.u32 %v8658, 16
        %v9015 = vrot.slane %v9013, 7
        %v9016 = vshll.u32 %v8658, 16
        %v9018 = vor.u32 %v9015, %v9016
        %v9019 = vsel %vm709, %v9011, %v9018
        %v9021 = vshrl.u32 %v8659, 16
        %v9023 = vrot.slane %v9021, 7
        %v9024 = vrot.slane %v9023, 4
        %v9026 = vshrl.u32 %v8660, 16
        %v9028 = vrot.slane %v9026, 7
        %v9029 = vshll.u32 %v8660, 16
        %v9031 = vor.u32 %v9028, %v9029
        %v9032 = vsel %vm709, %v9024, %v9031
        %v9034 = vshrl.u32 %v8661, 16
        %v9036 = vrot.slane %v9034, 7
        %v9037 = vrot.slane %v9036, 4
        %v9039 = vshrl.u32 %v8662, 16
        %v9041 = vrot.slane %v9039, 7
        %v9042 = vshll.u32 %v8662, 16
        %v9044 = vor.u32 %v9041, %v9042
        %v9045 = vsel %vm709, %v9037, %v9044
        %v9047 = vshrl.u32 %v8663, 16
        %v9049 = vrot.slane %v9047, 7
        %v9050 = vrot.slane %v9049, 4
        %v9052 = vshrl.u32 %v8664, 16
        %v9054 = vrot.slane %v9052, 7
        %v9055 = vshll.u32 %v8664, 16
        %v9057 = vor.u32 %v9054, %v9055
        %v9058 = vsel %vm709, %v9050, %v9057
        %v9060 = vshrl.u32 %v8665, 16
        %v9062 = vrot.slane %v9060, 7
        %v9063 = vrot.slane %v9062, 4
        %v9065 = vshrl.u32 %v8666, 16
        %v9067 = vrot.slane %v9065, 7
        %v9068 = vshll.u32 %v8666, 16
        %v9070 = vor.u32 %v9067, %v9068
        %v9071 = vsel %vm709, %v9063, %v9070
        %v9073 = vshrl.u32 %v8667, 16
        %v9075 = vrot.slane %v9073, 7
        %v9076 = vrot.slane %v9075, 4
        %v9078 = vshrl.u32 %v8668, 16
        %v9080 = vrot.slane %v9078, 7
        %v9081 = vshll.u32 %v8668, 16
        %v9083 = vor.u32 %v9080, %v9081
        %v9084 = vsel %vm709, %v9076, %v9083
        %v9085 = vld [vmem:[#allocation8 + $0xc0] sm:$0xf]
        %v9086 = vld [vmem:[#allocation8 + $0xc4] sm:$0xf]
        %v9087 = vld [vmem:[#allocation8 + $0xc8] sm:$0xf]
        %v9088 = vld [vmem:[#allocation8 + $0xcc] sm:$0xf]
        %v9089 = vld [vmem:[#allocation8 + $0xd0] sm:$0xf]
        %v9090 = vld [vmem:[#allocation8 + $0xd4] sm:$0xf]
        %v9091 = vld [vmem:[#allocation8 + $0xd8] sm:$0xf]
        %v9092 = vld [vmem:[#allocation8 + $0xdc] sm:$0xf]
        %v9093 = vld [vmem:[#allocation8 + $0xe0] sm:$0xf]
        %v9094 = vld [vmem:[#allocation8 + $0xe4] sm:$0xf]
        %v9095 = vld [vmem:[#allocation8 + $0xe8] sm:$0xf]
        %v9096 = vld [vmem:[#allocation8 + $0xec] sm:$0xf]
        %v9097 = vld [vmem:[#allocation8 + $0xf0] sm:$0xf]
        %v9098 = vld [vmem:[#allocation8 + $0xf4] sm:$0xf]
        %v9099 = vld [vmem:[#allocation8 + $0xf8] sm:$0xf]
        %v9100 = vld [vmem:[#allocation8 + $0xfc] sm:$0xf]
        %v9101 = vunpack.c.l.b16 %v8681
        %v9102 = vunpack.c.l.b16 %v8694
        %v9103 = vunpack.c.l.b16 %v8707
        %v9104 = vunpack.c.l.b16 %v8720
        %v9105 = vunpack.c.l.b16 %v8733
        %v9106 = vunpack.c.l.b16 %v8746
        %v9107 = vunpack.c.l.b16 %v8759
        %v9108 = vunpack.c.l.b16 %v8772
        %v9109 = vunpack.c.l.b16 %v8785
        %v9110 = vunpack.c.l.b16 %v8798
        %v9111 = vunpack.c.l.b16 %v8811
        %v9112 = vunpack.c.l.b16 %v8824
        %v9113 = vunpack.c.l.b16 %v8837
        %v9114 = vunpack.c.l.b16 %v8850
        %v9115 = vunpack.c.l.b16 %v8863
        %v9116 = vunpack.c.l.b16 %v8876
        %v9117 = vunpack.c.l.b16 %v8889
        %v9118 = vunpack.c.l.b16 %v8902
        %v9119 = vunpack.c.l.b16 %v8915
        %v9120 = vunpack.c.l.b16 %v8928
        %v9121 = vunpack.c.l.b16 %v8941
        %v9122 = vunpack.c.l.b16 %v8954
        %v9123 = vunpack.c.l.b16 %v8967
        %v9124 = vunpack.c.l.b16 %v8980
        %v9125 = vunpack.c.l.b16 %v8993
        %v9126 = vunpack.c.l.b16 %v9006
        %v9127 = vunpack.c.l.b16 %v9019
        %v9128 = vunpack.c.l.b16 %v9032
        %v9129 = vunpack.c.l.b16 %v9045
        %v9130 = vunpack.c.l.b16 %v9058
        %v9131 = vunpack.c.l.b16 %v9071
        %v9132 = vunpack.c.l.b16 %v9084
        %v9133 = vpack.c.b16 %v9102, %v9101
        %v9134 = vpack.c.b16 %v9104, %v9103
        %v9135 = vpack.c.b16 %v9106, %v9105
        %v9136 = vpack.c.b16 %v9108, %v9107
        %v9137 = vpack.c.b16 %v9110, %v9109
        %v9138 = vpack.c.b16 %v9112, %v9111
        %v9139 = vpack.c.b16 %v9114, %v9113
        %v9140 = vpack.c.b16 %v9116, %v9115
        %v9141 = vpack.c.b16 %v9118, %v9117
        %v9142 = vpack.c.b16 %v9120, %v9119
        %v9143 = vpack.c.b16 %v9122, %v9121
        %v9144 = vpack.c.b16 %v9124, %v9123
        %v9145 = vpack.c.b16 %v9126, %v9125
        %v9146 = vpack.c.b16 %v9128, %v9127
        %v9147 = vpack.c.b16 %v9130, %v9129
        %v9148 = vpack.c.b16 %v9132, %v9131
        %v9181 = vunpack.c.l.b16 %v9085
        %v9182 = vunpack.c.l.b16 %v9086
        %v9183 = vunpack.c.l.b16 %v9087
        %v9184 = vunpack.c.l.b16 %v9088
        %v9185 = vunpack.c.l.b16 %v9089
        %v9186 = vunpack.c.l.b16 %v9090
        %v9187 = vunpack.c.l.b16 %v9091
        %v9188 = vunpack.c.l.b16 %v9092
        %v9189 = vunpack.c.l.b16 %v9093
        %v9190 = vunpack.c.l.b16 %v9094
        %v9191 = vunpack.c.l.b16 %v9095
        %v9192 = vunpack.c.l.b16 %v9096
        %v9193 = vunpack.c.l.b16 %v9097
        %v9194 = vunpack.c.l.b16 %v9098
        %v9195 = vunpack.c.l.b16 %v9099
        %v9196 = vunpack.c.l.b16 %v9100
        %v9197 = vpack.c.b16 %v9182, %v9181
        %v9198 = vpack.c.b16 %v9184, %v9183
        %v9199 = vpack.c.b16 %v9186, %v9185
        %v9200 = vpack.c.b16 %v9188, %v9187
        %v9201 = vpack.c.b16 %v9190, %v9189
        %v9202 = vpack.c.b16 %v9192, %v9191
        %v9203 = vpack.c.b16 %v9194, %v9193
        %v9204 = vpack.c.b16 %v9196, %v9195
        %9213 = vmatprep.subr.bf16.mxu0 0
        %9214 = vmatpush1.bf16.msra.mxu0 %v9204
        %9215 = vmatprep.subr.bf16.mxu0 0
        %9216 = vmatpush1.bf16.msra.mxu0 %v9203
        %9217 = vmatprep.subr.bf16.mxu0 0
        %9218 = vmatpush1.bf16.msra.mxu0 %v9202
        %9219 = vmatprep.subr.bf16.mxu0 0
        %9220 = vmatpush1.bf16.msra.mxu0 %v9201
        %9221 = vmatprep.subr.bf16.mxu0 0
        %9222 = vmatpush1.bf16.msra.mxu0 %v9200
        %9223 = vmatprep.subr.bf16.mxu0 0
        %9224 = vmatpush1.bf16.msra.mxu0 %v9199
        %9225 = vmatprep.subr.bf16.mxu0 0
        %9226 = vmatpush1.bf16.msra.mxu0 %v9198
        %9227 = vmatprep.subr.bf16.mxu0 0
        %9228 = vmatpush1.bf16.msra.mxu0 %v9197
        %9229 = vmatprep.subr.bf16.mxu0 0
        %9230 = vmatpush2.bf16.msra.mxu0 0
        %9231 = vmatprep.subr.bf16.mxu0 0
        %9232 = vmatpush2.bf16.msra.mxu0 0
        %9233 = vmatprep.subr.bf16.mxu0 0
        %9234 = vmatpush2.bf16.msra.mxu0 0
        %9235 = vmatprep.subr.bf16.mxu0 0
        %9236 = vmatpush2.bf16.msra.mxu0 0
        %9237 = vmatprep.subr.bf16.mxu0 0
        %9238 = vmatpush2.bf16.msra.mxu0 0
        %9239 = vmatprep.subr.bf16.mxu0 0
        %9240 = vmatpush2.bf16.msra.mxu0 0
        %9241 = vmatprep.subr.bf16.mxu0 0
        %9242 = vmatpush2.bf16.msra.mxu0 0
        %9243 = vmatprep.subr.bf16.mxu0 0
        %9244 = vmatpush2.bf16.msra.mxu0 0
        %9245 = vmatprep.mubr.bf16.mxu0 0
        %9246 = vmatmul.mubr.bf16.gmra.mxu0 %v9133
        %v9247 = vpop.f32.mrf.mxu0
        %v9248 = vadd.f32 0.0, %v9247
        %v9249 = vpop.f32.mrf.mxu0
        %v9250 = vpop.f32.mrf.mxu0
        %v9251 = vadd.f32 0.0, %v9250
        %v9252 = vpop.f32.mrf.mxu0
        %9253 = vmatprep.mubr.bf16.mxu0 0
        %9254 = vmatmul.mubr.bf16.gmra.mxu0 %v9134
        %v9255 = vpop.f32.mrf.mxu0
        %v9256 = vadd.f32 0.0, %v9255
        %v9257 = vpop.f32.mrf.mxu0
        %v9258 = vpop.f32.mrf.mxu0
        %v9259 = vadd.f32 0.0, %v9258
        %v9260 = vpop.f32.mrf.mxu0
        %9261 = vmatprep.mubr.bf16.mxu0 0
        %9262 = vmatmul.mubr.bf16.gmra.mxu0 %v9135
        %v9263 = vpop.f32.mrf.mxu0
        %v9264 = vadd.f32 0.0, %v9263
        %v9265 = vpop.f32.mrf.mxu0
        %v9266 = vpop.f32.mrf.mxu0
        %v9267 = vadd.f32 0.0, %v9266
        %v9268 = vpop.f32.mrf.mxu0
        %9269 = vmatprep.mubr.bf16.mxu0 0
        %9270 = vmatmul.mubr.bf16.gmra.mxu0 %v9136
        %v9271 = vpop.f32.mrf.mxu0
        %v9272 = vadd.f32 0.0, %v9271
        %v9273 = vpop.f32.mrf.mxu0
        %v9274 = vpop.f32.mrf.mxu0
        %v9275 = vadd.f32 0.0, %v9274
        %v9276 = vpop.f32.mrf.mxu0
        %9277 = vmatprep.mubr.bf16.mxu0 0
        %9278 = vmatmul.mubr.bf16.gmra.mxu0 %v9137
        %v9279 = vpop.f32.mrf.mxu0
        %v9280 = vadd.f32 0.0, %v9279
        %v9281 = vpop.f32.mrf.mxu0
        %v9282 = vpop.f32.mrf.mxu0
        %v9283 = vadd.f32 0.0, %v9282
        %v9284 = vpop.f32.mrf.mxu0
        %9285 = vmatprep.mubr.bf16.mxu0 0
        %9286 = vmatmul.mubr.bf16.gmra.mxu0 %v9138
        %v9287 = vpop.f32.mrf.mxu0
        %v9288 = vadd.f32 0.0, %v9287
        %v9289 = vpop.f32.mrf.mxu0
        %v9290 = vpop.f32.mrf.mxu0
        %v9291 = vadd.f32 0.0, %v9290
        %v9292 = vpop.f32.mrf.mxu0
        %9293 = vmatprep.mubr.bf16.mxu0 0
        %9294 = vmatmul.mubr.bf16.gmra.mxu0 %v9139
        %v9295 = vpop.f32.mrf.mxu0
        %v9296 = vadd.f32 0.0, %v9295
        %v9297 = vpop.f32.mrf.mxu0
        %v9298 = vpop.f32.mrf.mxu0
        %v9299 = vadd.f32 0.0, %v9298
        %v9300 = vpop.f32.mrf.mxu0
        %9301 = vmatprep.mubr.bf16.mxu0 0
        %9302 = vmatmul.mubr.bf16.gmra.mxu0 %v9140
        %v9303 = vpop.f32.mrf.mxu0
        %v9304 = vadd.f32 0.0, %v9303
        %v9305 = vpop.f32.mrf.mxu0
        %v9306 = vpop.f32.mrf.mxu0
        %v9307 = vadd.f32 0.0, %v9306
        %v9308 = vpop.f32.mrf.mxu0
        %9309 = vmatprep.mubr.bf16.mxu0 0
        %9310 = vmatmul.mubr.bf16.gmra.mxu0 %v9141
        %v9311 = vpop.f32.mrf.mxu0
        %v9312 = vadd.f32 0.0, %v9311
        %v9313 = vpop.f32.mrf.mxu0
        %v9314 = vpop.f32.mrf.mxu0
        %v9315 = vadd.f32 0.0, %v9314
        %v9316 = vpop.f32.mrf.mxu0
        %9317 = vmatprep.mubr.bf16.mxu0 0
        %9318 = vmatmul.mubr.bf16.gmra.mxu0 %v9142
        %v9319 = vpop.f32.mrf.mxu0
        %v9320 = vadd.f32 0.0, %v9319
        %v9321 = vpop.f32.mrf.mxu0
        %v9322 = vpop.f32.mrf.mxu0
        %v9323 = vadd.f32 0.0, %v9322
        %v9324 = vpop.f32.mrf.mxu0
        %9325 = vmatprep.mubr.bf16.mxu0 0
        %9326 = vmatmul.mubr.bf16.gmra.mxu0 %v9143
        %v9327 = vpop.f32.mrf.mxu0
        %v9328 = vadd.f32 0.0, %v9327
        %v9329 = vpop.f32.mrf.mxu0
        %v9330 = vpop.f32.mrf.mxu0
        %v9331 = vadd.f32 0.0, %v9330
        %v9332 = vpop.f32.mrf.mxu0
        %9333 = vmatprep.mubr.bf16.mxu0 0
        %9334 = vmatmul.mubr.bf16.gmra.mxu0 %v9144
        %v9335 = vpop.f32.mrf.mxu0
        %v9336 = vadd.f32 0.0, %v9335
        %v9337 = vpop.f32.mrf.mxu0
        %v9338 = vpop.f32.mrf.mxu0
        %v9339 = vadd.f32 0.0, %v9338
        %v9340 = vpop.f32.mrf.mxu0
        %9341 = vmatprep.mubr.bf16.mxu0 0
        %9342 = vmatmul.mubr.bf16.gmra.mxu0 %v9145
        %v9343 = vpop.f32.mrf.mxu0
        %v9344 = vadd.f32 0.0, %v9343
        %v9345 = vpop.f32.mrf.mxu0
        %v9346 = vpop.f32.mrf.mxu0
        %v9347 = vadd.f32 0.0, %v9346
        %v9348 = vpop.f32.mrf.mxu0
        %9349 = vmatprep.mubr.bf16.mxu0 0
        %9350 = vmatmul.mubr.bf16.gmra.mxu0 %v9146
        %v9351 = vpop.f32.mrf.mxu0
        %v9352 = vadd.f32 0.0, %v9351
        %v9353 = vpop.f32.mrf.mxu0
        %v9354 = vpop.f32.mrf.mxu0
        %v9355 = vadd.f32 0.0, %v9354
        %v9356 = vpop.f32.mrf.mxu0
        %9357 = vmatprep.mubr.bf16.mxu0 0
        %9358 = vmatmul.mubr.bf16.gmra.mxu0 %v9147
        %v9359 = vpop.f32.mrf.mxu0
        %v9360 = vadd.f32 0.0, %v9359
        %v9361 = vpop.f32.mrf.mxu0
        %v9362 = vpop.f32.mrf.mxu0
        %v9363 = vadd.f32 0.0, %v9362
        %v9364 = vpop.f32.mrf.mxu0
        %9365 = vmatprep.mubr.bf16.mxu0 0
        %9366 = vmatmul.mubr.bf16.gmra.mxu0 %v9148
        %v9367 = vpop.f32.mrf.mxu0
        %v9368 = vadd.f32 0.0, %v9367
        %v9369 = vpop.f32.mrf.mxu0
        %v9370 = vpop.f32.mrf.mxu0
        %v9371 = vadd.f32 0.0, %v9370
        %v9372 = vpop.f32.mrf.mxu0
        %9373 = vdwg.mxu0
        %v9374 = vadd.f32 %v8573, %v9248
        %v9375 = vadd.f32 %v8574, %v9251
        %v9376 = vadd.f32 %v8575, %v9256
        %v9377 = vadd.f32 %v8576, %v9259
        %v9378 = vadd.f32 %v8577, %v9264
        %v9379 = vadd.f32 %v8578, %v9267
        %v9380 = vadd.f32 %v8579, %v9272
        %v9381 = vadd.f32 %v8580, %v9275
        %v9382 = vadd.f32 %v8581, %v9280
        %v9383 = vadd.f32 %v8582, %v9283
        %v9384 = vadd.f32 %v8583, %v9288
        %v9385 = vadd.f32 %v8584, %v9291
        %v9386 = vadd.f32 %v8585, %v9296
        %v9387 = vadd.f32 %v8586, %v9299
        %v9388 = vadd.f32 %v8587, %v9304
        %v9389 = vadd.f32 %v8588, %v9307
        %v9390 = vadd.f32 %v8589, %v9312
        %v9391 = vadd.f32 %v8590, %v9315
        %v9392 = vadd.f32 %v8591, %v9320
        %v9393 = vadd.f32 %v8592, %v9323
        %v9394 = vadd.f32 %v8593, %v9328
        %v9395 = vadd.f32 %v8594, %v9331
        %v9396 = vadd.f32 %v8595, %v9336
        %v9397 = vadd.f32 %v8596, %v9339
        %v9398 = vadd.f32 %v8597, %v9344
        %v9399 = vadd.f32 %v8598, %v9347
        %v9400 = vadd.f32 %v8599, %v9352
        %v9401 = vadd.f32 %v8600, %v9355
        %v9402 = vadd.f32 %v8601, %v9360
        %v9403 = vadd.f32 %v8602, %v9363
        %v9404 = vadd.f32 %v8603, %v9368
        %v9405 = vadd.f32 %v8604, %v9371
        %v9406 = vld [vmem:[#allocation8 + $0x100] sm:$0xf]
        %v9407 = vld [vmem:[#allocation8 + $0x104] sm:$0xf]
        %v9408 = vld [vmem:[#allocation8 + $0x108] sm:$0xf]
        %v9409 = vld [vmem:[#allocation8 + $0x10c] sm:$0xf]
        %v9410 = vld [vmem:[#allocation8 + $0x110] sm:$0xf]
        %v9411 = vld [vmem:[#allocation8 + $0x114] sm:$0xf]
        %v9412 = vld [vmem:[#allocation8 + $0x118] sm:$0xf]
        %v9413 = vld [vmem:[#allocation8 + $0x11c] sm:$0xf]
        %v9414 = vld [vmem:[#allocation8 + $0x120] sm:$0xf]
        %v9415 = vld [vmem:[#allocation8 + $0x124] sm:$0xf]
        %v9416 = vld [vmem:[#allocation8 + $0x128] sm:$0xf]
        %v9417 = vld [vmem:[#allocation8 + $0x12c] sm:$0xf]
        %v9418 = vld [vmem:[#allocation8 + $0x130] sm:$0xf]
        %v9419 = vld [vmem:[#allocation8 + $0x134] sm:$0xf]
        %v9420 = vld [vmem:[#allocation8 + $0x138] sm:$0xf]
        %v9421 = vld [vmem:[#allocation8 + $0x13c] sm:$0xf]
        %v9454 = vunpack.c.l.b16 %v8606
        %v9455 = vunpack.c.l.b16 %v8608
        %v9456 = vunpack.c.l.b16 %v8610
        %v9457 = vunpack.c.l.b16 %v8612
        %v9458 = vunpack.c.l.b16 %v8614
        %v9459 = vunpack.c.l.b16 %v8616
        %v9460 = vunpack.c.l.b16 %v8618
        %v9461 = vunpack.c.l.b16 %v8620
        %v9462 = vunpack.c.l.b16 %v8622
        %v9463 = vunpack.c.l.b16 %v8624
        %v9464 = vunpack.c.l.b16 %v8626
        %v9465 = vunpack.c.l.b16 %v8628
        %v9466 = vunpack.c.l.b16 %v8630
        %v9467 = vunpack.c.l.b16 %v8632
        %v9468 = vunpack.c.l.b16 %v8634
        %v9469 = vunpack.c.l.b16 %v8636
        %v9470 = vunpack.c.l.b16 %v8638
        %v9471 = vunpack.c.l.b16 %v8640
        %v9472 = vunpack.c.l.b16 %v8642
        %v9473 = vunpack.c.l.b16 %v8644
        %v9474 = vunpack.c.l.b16 %v8646
        %v9475 = vunpack.c.l.b16 %v8648
        %v9476 = vunpack.c.l.b16 %v8650
        %v9477 = vunpack.c.l.b16 %v8652
        %v9478 = vunpack.c.l.b16 %v8654
        %v9479 = vunpack.c.l.b16 %v8656
        %v9480 = vunpack.c.l.b16 %v8658
        %v9481 = vunpack.c.l.b16 %v8660
        %v9482 = vunpack.c.l.b16 %v8662
        %v9483 = vunpack.c.l.b16 %v8664
        %v9484 = vunpack.c.l.b16 %v8666
        %v9485 = vunpack.c.l.b16 %v8668
        %v9486 = vpack.c.b16 %v9455, %v9454
        %v9487 = vpack.c.b16 %v9457, %v9456
        %v9488 = vpack.c.b16 %v9459, %v9458
        %v9489 = vpack.c.b16 %v9461, %v9460
        %v9490 = vpack.c.b16 %v9463, %v9462
        %v9491 = vpack.c.b16 %v9465, %v9464
        %v9492 = vpack.c.b16 %v9467, %v9466
        %v9493 = vpack.c.b16 %v9469, %v9468
        %v9494 = vpack.c.b16 %v9471, %v9470
        %v9495 = vpack.c.b16 %v9473, %v9472
        %v9496 = vpack.c.b16 %v9475, %v9474
        %v9497 = vpack.c.b16 %v9477, %v9476
        %v9498 = vpack.c.b16 %v9479, %v9478
        %v9499 = vpack.c.b16 %v9481, %v9480
        %v9500 = vpack.c.b16 %v9483, %v9482
        %v9501 = vpack.c.b16 %v9485, %v9484
        %v9534 = vunpack.c.l.b16 %v9406
        %v9535 = vunpack.c.l.b16 %v9407
        %v9536 = vunpack.c.l.b16 %v9408
        %v9537 = vunpack.c.l.b16 %v9409
        %v9538 = vunpack.c.l.b16 %v9410
        %v9539 = vunpack.c.l.b16 %v9411
        %v9540 = vunpack.c.l.b16 %v9412
        %v9541 = vunpack.c.l.b16 %v9413
        %v9542 = vunpack.c.l.b16 %v9414
        %v9543 = vunpack.c.l.b16 %v9415
        %v9544 = vunpack.c.l.b16 %v9416
        %v9545 = vunpack.c.l.b16 %v9417
        %v9546 = vunpack.c.l.b16 %v9418
        %v9547 = vunpack.c.l.b16 %v9419
        %v9548 = vunpack.c.l.b16 %v9420
        %v9549 = vunpack.c.l.b16 %v9421
        %v9550 = vpack.c.b16 %v9535, %v9534
        %v9551 = vpack.c.b16 %v9537, %v9536
        %v9552 = vpack.c.b16 %v9539, %v9538
        %v9553 = vpack.c.b16 %v9541, %v9540
        %v9554 = vpack.c.b16 %v9543, %v9542
        %v9555 = vpack.c.b16 %v9545, %v9544
        %v9556 = vpack.c.b16 %v9547, %v9546
        %v9557 = vpack.c.b16 %v9549, %v9548
        %9566 = vmatprep.subr.bf16.mxu0 0
        %9567 = vmatpush1.bf16.msra.mxu0 %v9557
        %9568 = vmatprep.subr.bf16.mxu0 0
        %9569 = vmatpush1.bf16.msra.mxu0 %v9556
        %9570 = vmatprep.subr.bf16.mxu0 0
        %9571 = vmatpush1.bf16.msra.mxu0 %v9555
        %9572 = vmatprep.subr.bf16.mxu0 0
        %9573 = vmatpush1.bf16.msra.mxu0 %v9554
        %9574 = vmatprep.subr.bf16.mxu0 0
        %9575 = vmatpush1.bf16.msra.mxu0 %v9553
        %9576 = vmatprep.subr.bf16.mxu0 0
        %9577 = vmatpush1.bf16.msra.mxu0 %v9552
        %9578 = vmatprep.subr.bf16.mxu0 0
        %9579 = vmatpush1.bf16.msra.mxu0 %v9551
        %9580 = vmatprep.subr.bf16.mxu0 0
        %9581 = vmatpush1.bf16.msra.mxu0 %v9550
        %9582 = vmatprep.subr.bf16.mxu0 0
        %9583 = vmatpush2.bf16.msra.mxu0 0
        %9584 = vmatprep.subr.bf16.mxu0 0
        %9585 = vmatpush2.bf16.msra.mxu0 0
        %9586 = vmatprep.subr.bf16.mxu0 0
        %9587 = vmatpush2.bf16.msra.mxu0 0
        %9588 = vmatprep.subr.bf16.mxu0 0
        %9589 = vmatpush2.bf16.msra.mxu0 0
        %9590 = vmatprep.subr.bf16.mxu0 0
        %9591 = vmatpush2.bf16.msra.mxu0 0
        %9592 = vmatprep.subr.bf16.mxu0 0
        %9593 = vmatpush2.bf16.msra.mxu0 0
        %9594 = vmatprep.subr.bf16.mxu0 0
        %9595 = vmatpush2.bf16.msra.mxu0 0
        %9596 = vmatprep.subr.bf16.mxu0 0
        %9597 = vmatpush2.bf16.msra.mxu0 0
        %9598 = vmatprep.mubr.bf16.mxu0 0
        %9599 = vmatmul.mubr.bf16.gmra.mxu0 %v9486
        %v9600 = vpop.f32.mrf.mxu0
        %v9601 = vadd.f32 0.0, %v9600
        %v9602 = vpop.f32.mrf.mxu0
        %v9603 = vpop.f32.mrf.mxu0
        %v9604 = vadd.f32 0.0, %v9603
        %v9605 = vpop.f32.mrf.mxu0
        %9606 = vmatprep.mubr.bf16.mxu0 0
        %9607 = vmatmul.mubr.bf16.gmra.mxu0 %v9487
        %v9608 = vpop.f32.mrf.mxu0
        %v9609 = vadd.f32 0.0, %v9608
        %v9610 = vpop.f32.mrf.mxu0
        %v9611 = vpop.f32.mrf.mxu0
        %v9612 = vadd.f32 0.0, %v9611
        %v9613 = vpop.f32.mrf.mxu0
        %9614 = vmatprep.mubr.bf16.mxu0 0
        %9615 = vmatmul.mubr.bf16.gmra.mxu0 %v9488
        %v9616 = vpop.f32.mrf.mxu0
        %v9617 = vadd.f32 0.0, %v9616
        %v9618 = vpop.f32.mrf.mxu0
        %v9619 = vpop.f32.mrf.mxu0
        %v9620 = vadd.f32 0.0, %v9619
        %v9621 = vpop.f32.mrf.mxu0
        %9622 = vmatprep.mubr.bf16.mxu0 0
        %9623 = vmatmul.mubr.bf16.gmra.mxu0 %v9489
        %v9624 = vpop.f32.mrf.mxu0
        %v9625 = vadd.f32 0.0, %v9624
        %v9626 = vpop.f32.mrf.mxu0
        %v9627 = vpop.f32.mrf.mxu0
        %v9628 = vadd.f32 0.0, %v9627
        %v9629 = vpop.f32.mrf.mxu0
        %9630 = vmatprep.mubr.bf16.mxu0 0
        %9631 = vmatmul.mubr.bf16.gmra.mxu0 %v9490
        %v9632 = vpop.f32.mrf.mxu0
        %v9633 = vadd.f32 0.0, %v9632
        %v9634 = vpop.f32.mrf.mxu0
        %v9635 = vpop.f32.mrf.mxu0
        %v9636 = vadd.f32 0.0, %v9635
        %v9637 = vpop.f32.mrf.mxu0
        %9638 = vmatprep.mubr.bf16.mxu0 0
        %9639 = vmatmul.mubr.bf16.gmra.mxu0 %v9491
        %v9640 = vpop.f32.mrf.mxu0
        %v9641 = vadd.f32 0.0, %v9640
        %v9642 = vpop.f32.mrf.mxu0
        %v9643 = vpop.f32.mrf.mxu0
        %v9644 = vadd.f32 0.0, %v9643
        %v9645 = vpop.f32.mrf.mxu0
        %9646 = vmatprep.mubr.bf16.mxu0 0
        %9647 = vmatmul.mubr.bf16.gmra.mxu0 %v9492
        %v9648 = vpop.f32.mrf.mxu0
        %v9649 = vadd.f32 0.0, %v9648
        %v9650 = vpop.f32.mrf.mxu0
        %v9651 = vpop.f32.mrf.mxu0
        %v9652 = vadd.f32 0.0, %v9651
        %v9653 = vpop.f32.mrf.mxu0
        %9654 = vmatprep.mubr.bf16.mxu0 0
        %9655 = vmatmul.mubr.bf16.gmra.mxu0 %v9493
        %v9656 = vpop.f32.mrf.mxu0
        %v9657 = vadd.f32 0.0, %v9656
        %v9658 = vpop.f32.mrf.mxu0
        %v9659 = vpop.f32.mrf.mxu0
        %v9660 = vadd.f32 0.0, %v9659
        %v9661 = vpop.f32.mrf.mxu0
        %9662 = vmatprep.mubr.bf16.mxu0 0
        %9663 = vmatmul.mubr.bf16.gmra.mxu0 %v9494
        %v9664 = vpop.f32.mrf.mxu0
        %v9665 = vadd.f32 0.0, %v9664
        %v9666 = vpop.f32.mrf.mxu0
        %v9667 = vpop.f32.mrf.mxu0
        %v9668 = vadd.f32 0.0, %v9667
        %v9669 = vpop.f32.mrf.mxu0
        %9670 = vmatprep.mubr.bf16.mxu0 0
        %9671 = vmatmul.mubr.bf16.gmra.mxu0 %v9495
        %v9672 = vpop.f32.mrf.mxu0
        %v9673 = vadd.f32 0.0, %v9672
        %v9674 = vpop.f32.mrf.mxu0
        %v9675 = vpop.f32.mrf.mxu0
        %v9676 = vadd.f32 0.0, %v9675
        %v9677 = vpop.f32.mrf.mxu0
        %9678 = vmatprep.mubr.bf16.mxu0 0
        %9679 = vmatmul.mubr.bf16.gmra.mxu0 %v9496
        %v9680 = vpop.f32.mrf.mxu0
        %v9681 = vadd.f32 0.0, %v9680
        %v9682 = vpop.f32.mrf.mxu0
        %v9683 = vpop.f32.mrf.mxu0
        %v9684 = vadd.f32 0.0, %v9683
        %v9685 = vpop.f32.mrf.mxu0
        %9686 = vmatprep.mubr.bf16.mxu0 0
        %9687 = vmatmul.mubr.bf16.gmra.mxu0 %v9497
        %v9688 = vpop.f32.mrf.mxu0
        %v9689 = vadd.f32 0.0, %v9688
        %v9690 = vpop.f32.mrf.mxu0
        %v9691 = vpop.f32.mrf.mxu0
        %v9692 = vadd.f32 0.0, %v9691
        %v9693 = vpop.f32.mrf.mxu0
        %9694 = vmatprep.mubr.bf16.mxu0 0
        %9695 = vmatmul.mubr.bf16.gmra.mxu0 %v9498
        %v9696 = vpop.f32.mrf.mxu0
        %v9697 = vadd.f32 0.0, %v9696
        %v9698 = vpop.f32.mrf.mxu0
        %v9699 = vpop.f32.mrf.mxu0
        %v9700 = vadd.f32 0.0, %v9699
        %v9701 = vpop.f32.mrf.mxu0
        %9702 = vmatprep.mubr.bf16.mxu0 0
        %9703 = vmatmul.mubr.bf16.gmra.mxu0 %v9499
        %v9704 = vpop.f32.mrf.mxu0
        %v9705 = vadd.f32 0.0, %v9704
        %v9706 = vpop.f32.mrf.mxu0
        %v9707 = vpop.f32.mrf.mxu0
        %v9708 = vadd.f32 0.0, %v9707
        %v9709 = vpop.f32.mrf.mxu0
        %9710 = vmatprep.mubr.bf16.mxu0 0
        %9711 = vmatmul.mubr.bf16.gmra.mxu0 %v9500
        %v9712 = vpop.f32.mrf.mxu0
        %v9713 = vadd.f32 0.0, %v9712
        %v9714 = vpop.f32.mrf.mxu0
        %v9715 = vpop.f32.mrf.mxu0
        %v9716 = vadd.f32 0.0, %v9715
        %v9717 = vpop.f32.mrf.mxu0
        %9718 = vmatprep.mubr.bf16.mxu0 0
        %9719 = vmatmul.mubr.bf16.gmra.mxu0 %v9501
        %v9720 = vpop.f32.mrf.mxu0
        %v9721 = vadd.f32 0.0, %v9720
        %v9722 = vpop.f32.mrf.mxu0
        %v9723 = vpop.f32.mrf.mxu0
        %v9724 = vadd.f32 0.0, %v9723
        %v9725 = vpop.f32.mrf.mxu0
        %9726 = vdwg.mxu0
        %v9727 = vadd.f32 %v9374, %v9601
        %v9728 = vadd.f32 %v9375, %v9604
        %v9729 = vadd.f32 %v9376, %v9609
        %v9730 = vadd.f32 %v9377, %v9612
        %v9731 = vadd.f32 %v9378, %v9617
        %v9732 = vadd.f32 %v9379, %v9620
        %v9733 = vadd.f32 %v9380, %v9625
        %v9734 = vadd.f32 %v9381, %v9628
        %v9735 = vadd.f32 %v9382, %v9633
        %v9736 = vadd.f32 %v9383, %v9636
        %v9737 = vadd.f32 %v9384, %v9641
        %v9738 = vadd.f32 %v9385, %v9644
        %v9739 = vadd.f32 %v9386, %v9649
        %v9740 = vadd.f32 %v9387, %v9652
        %v9741 = vadd.f32 %v9388, %v9657
        %v9742 = vadd.f32 %v9389, %v9660
        %v9743 = vadd.f32 %v9390, %v9665
        %v9744 = vadd.f32 %v9391, %v9668
        %v9745 = vadd.f32 %v9392, %v9673
        %v9746 = vadd.f32 %v9393, %v9676
        %v9747 = vadd.f32 %v9394, %v9681
        %v9748 = vadd.f32 %v9395, %v9684
        %v9749 = vadd.f32 %v9396, %v9689
        %v9750 = vadd.f32 %v9397, %v9692
        %v9751 = vadd.f32 %v9398, %v9697
        %v9752 = vadd.f32 %v9399, %v9700
        %v9753 = vadd.f32 %v9400, %v9705
        %v9754 = vadd.f32 %v9401, %v9708
        %v9755 = vadd.f32 %v9402, %v9713
        %v9756 = vadd.f32 %v9403, %v9716
        %v9757 = vadd.f32 %v9404, %v9721
        %v9758 = vadd.f32 %v9405, %v9724
        %v9759 = vld [vmem:[%s611 + $0x4] sm:$0xf]
        %v9760 = vld [vmem:[%s611 + $0x8] sm:$0x1]
        %v9761 = vld [vmem:[%s611 + $0x10] sm:$0xf]
        %v9762 = vld [vmem:[%s611 + $0x14] sm:$0x1]
        %v9763 = vld [vmem:[%s611 + $0x1c] sm:$0xf]
        %v9764 = vld [vmem:[%s611 + $0x20] sm:$0x1]
        %v9765 = vld [vmem:[%s611 + $0x28] sm:$0xf]
        %v9766 = vld [vmem:[%s611 + $0x2c] sm:$0x1]
        %v9767 = vld [vmem:[%s611 + $0x34] sm:$0xf]
        %v9768 = vld [vmem:[%s611 + $0x38] sm:$0x1]
        %v9769 = vld [vmem:[%s611 + $0x40] sm:$0xf]
        %v9770 = vld [vmem:[%s611 + $0x44] sm:$0x1]
        %v9771 = vld [vmem:[%s611 + $0x4c] sm:$0xf]
        %v9772 = vld [vmem:[%s611 + $0x50] sm:$0x1]
        %v9773 = vld [vmem:[%s611 + $0x58] sm:$0xf]
        %v9774 = vld [vmem:[%s611 + $0x5c] sm:$0x1]
        %v9775 = vld [vmem:[%s611 + $0x7c] sm:$0xf]
        %v9776 = vld [vmem:[%s611 + $0x80] sm:$0x1]
        %v9777 = vld [vmem:[%s611 + $0x88] sm:$0xf]
        %v9778 = vld [vmem:[%s611 + $0x8c] sm:$0x1]
        %v9779 = vld [vmem:[%s611 + $0x94] sm:$0xf]
        %v9780 = vld [vmem:[%s611 + $0x98] sm:$0x1]
        %v9781 = vld [vmem:[%s611 + $0xa0] sm:$0xf]
        %v9782 = vld [vmem:[%s611 + $0xa4] sm:$0x1]
        %v9783 = vld [vmem:[%s611 + $0xac] sm:$0xf]
        %v9784 = vld [vmem:[%s611 + $0xb0] sm:$0x1]
        %v9785 = vld [vmem:[%s611 + $0xb8] sm:$0xf]
        %v9786 = vld [vmem:[%s611 + $0xbc] sm:$0x1]
        %v9787 = vld [vmem:[%s611 + $0xc4] sm:$0xf]
        %v9788 = vld [vmem:[%s611 + $0xc8] sm:$0x1]
        %v9789 = vld [vmem:[%s611 + $0xd0] sm:$0xf]
        %v9790 = vld [vmem:[%s611 + $0xd4] sm:$0x1]
        %v9791 = vld [vmem:[%s611 + $0xf4] sm:$0xf]
        %v9792 = vld [vmem:[%s611 + $0xf8] sm:$0x1]
        %v9793 = vld [vmem:[%s611 + $0x100] sm:$0xf]
        %v9794 = vld [vmem:[%s611 + $0x104] sm:$0x1]
        %v9795 = vld [vmem:[%s611 + $0x10c] sm:$0xf]
        %v9796 = vld [vmem:[%s611 + $0x110] sm:$0x1]
        %v9797 = vld [vmem:[%s611 + $0x118] sm:$0xf]
        %v9798 = vld [vmem:[%s611 + $0x11c] sm:$0x1]
        %v9799 = vld [vmem:[%s611 + $0x124] sm:$0xf]
        %v9800 = vld [vmem:[%s611 + $0x128] sm:$0x1]
        %v9801 = vld [vmem:[%s611 + $0x130] sm:$0xf]
        %v9802 = vld [vmem:[%s611 + $0x134] sm:$0x1]
        %v9803 = vld [vmem:[%s611 + $0x13c] sm:$0xf]
        %v9804 = vld [vmem:[%s611 + $0x140] sm:$0x1]
        %v9805 = vld [vmem:[%s611 + $0x148] sm:$0xf]
        %v9806 = vld [vmem:[%s611 + $0x14c] sm:$0x1]
        %v9807 = vld [vmem:[%s611 + $0x16c] sm:$0xf]
        %v9808 = vld [vmem:[%s611 + $0x170] sm:$0x1]
        %v9809 = vld [vmem:[%s611 + $0x178] sm:$0xf]
        %v9810 = vld [vmem:[%s611 + $0x17c] sm:$0x1]
        %v9811 = vld [vmem:[%s611 + $0x184] sm:$0xf]
        %v9812 = vld [vmem:[%s611 + $0x188] sm:$0x1]
        %v9813 = vld [vmem:[%s611 + $0x190] sm:$0xf]
        %v9814 = vld [vmem:[%s611 + $0x194] sm:$0x1]
        %v9815 = vld [vmem:[%s611 + $0x19c] sm:$0xf]
        %v9816 = vld [vmem:[%s611 + $0x1a0] sm:$0x1]
        %v9817 = vld [vmem:[%s611 + $0x1a8] sm:$0xf]
        %v9818 = vld [vmem:[%s611 + $0x1ac] sm:$0x1]
        %v9819 = vld [vmem:[%s611 + $0x1b4] sm:$0xf]
        %v9820 = vld [vmem:[%s611 + $0x1b8] sm:$0x1]
        %v9821 = vld [vmem:[%s611 + $0x1c0] sm:$0xf]
        %v9822 = vld [vmem:[%s611 + $0x1c4] sm:$0x1]
        %v9824 = vshrl.u32 %v9759, 16
        %v9826 = vrot.slane %v9824, 4
        %v9827 = vshll.u32 %v9759, 16
        %v9829 = vrot.slane %v9827, 5
        %v9830 = vor.u32 %v9826, %v9829
        %v9831 = vrot.slane %v9830, 4
        %v9833 = vshll.u32 %v9760, 16
        %v9835 = vrot.slane %v9833, 5
        %v9836 = vsel %vm1802, %v9831, %v9835
        %v9838 = vshrl.u32 %v9761, 16
        %v9840 = vrot.slane %v9838, 4
        %v9841 = vshll.u32 %v9761, 16
        %v9843 = vrot.slane %v9841, 5
        %v9844 = vor.u32 %v9840, %v9843
        %v9845 = vrot.slane %v9844, 4
        %v9847 = vshll.u32 %v9762, 16
        %v9849 = vrot.slane %v9847, 5
        %v9850 = vsel %vm1802, %v9845, %v9849
        %v9852 = vshrl.u32 %v9763, 16
        %v9854 = vrot.slane %v9852, 4
        %v9855 = vshll.u32 %v9763, 16
        %v9857 = vrot.slane %v9855, 5
        %v9858 = vor.u32 %v9854, %v9857
        %v9859 = vrot.slane %v9858, 4
        %v9861 = vshll.u32 %v9764, 16
        %v9863 = vrot.slane %v9861, 5
        %v9864 = vsel %vm1802, %v9859, %v9863
        %v9866 = vshrl.u32 %v9765, 16
        %v9868 = vrot.slane %v9866, 4
        %v9869 = vshll.u32 %v9765, 16
        %v9871 = vrot.slane %v9869, 5
        %v9872 = vor.u32 %v9868, %v9871
        %v9873 = vrot.slane %v9872, 4
        %v9875 = vshll.u32 %v9766, 16
        %v9877 = vrot.slane %v9875, 5
        %v9878 = vsel %vm1802, %v9873, %v9877
        %v9880 = vshrl.u32 %v9767, 16
        %v9882 = vrot.slane %v9880, 4
        %v9883 = vshll.u32 %v9767, 16
        %v9885 = vrot.slane %v9883, 5
        %v9886 = vor.u32 %v9882, %v9885
        %v9887 = vrot.slane %v9886, 4
        %v9889 = vshll.u32 %v9768, 16
        %v9891 = vrot.slane %v9889, 5
        %v9892 = vsel %vm1802, %v9887, %v9891
        %v9894 = vshrl.u32 %v9769, 16
        %v9896 = vrot.slane %v9894, 4
        %v9897 = vshll.u32 %v9769, 16
        %v9899 = vrot.slane %v9897, 5
        %v9900 = vor.u32 %v9896, %v9899
        %v9901 = vrot.slane %v9900, 4
        %v9903 = vshll.u32 %v9770, 16
        %v9905 = vrot.slane %v9903, 5
        %v9906 = vsel %vm1802, %v9901, %v9905
        %v9908 = vshrl.u32 %v9771, 16
        %v9910 = vrot.slane %v9908, 4
        %v9911 = vshll.u32 %v9771, 16
        %v9913 = vrot.slane %v9911, 5
        %v9914 = vor.u32 %v9910, %v9913
        %v9915 = vrot.slane %v9914, 4
        %v9917 = vshll.u32 %v9772, 16
        %v9919 = vrot.slane %v9917, 5
        %v9920 = vsel %vm1802, %v9915, %v9919
        %v9922 = vshrl.u32 %v9773, 16
        %v9924 = vrot.slane %v9922, 4
        %v9925 = vshll.u32 %v9773, 16
        %v9927 = vrot.slane %v9925, 5
        %v9928 = vor.u32 %v9924, %v9927
        %v9929 = vrot.slane %v9928, 4
        %v9931 = vshll.u32 %v9774, 16
        %v9933 = vrot.slane %v9931, 5
        %v9934 = vsel %vm1802, %v9929, %v9933
        %v9936 = vshrl.u32 %v9775, 16
        %v9938 = vrot.slane %v9936, 4
        %v9939 = vshll.u32 %v9775, 16
        %v9941 = vrot.slane %v9939, 5
        %v9942 = vor.u32 %v9938, %v9941
        %v9943 = vrot.slane %v9942, 4
        %v9945 = vshll.u32 %v9776, 16
        %v9947 = vrot.slane %v9945, 5
        %v9948 = vsel %vm1802, %v9943, %v9947
        %v9950 = vshrl.u32 %v9777, 16
        %v9952 = vrot.slane %v9950, 4
        %v9953 = vshll.u32 %v9777, 16
        %v9955 = vrot.slane %v9953, 5
        %v9956 = vor.u32 %v9952, %v9955
        %v9957 = vrot.slane %v9956, 4
        %v9959 = vshll.u32 %v9778, 16
        %v9961 = vrot.slane %v9959, 5
        %v9962 = vsel %vm1802, %v9957, %v9961
        %v9964 = vshrl.u32 %v9779, 16
        %v9966 = vrot.slane %v9964, 4
        %v9967 = vshll.u32 %v9779, 16
        %v9969 = vrot.slane %v9967, 5
        %v9970 = vor.u32 %v9966, %v9969
        %v9971 = vrot.slane %v9970, 4
        %v9973 = vshll.u32 %v9780, 16
        %v9975 = vrot.slane %v9973, 5
        %v9976 = vsel %vm1802, %v9971, %v9975
        %v9978 = vshrl.u32 %v9781, 16
        %v9980 = vrot.slane %v9978, 4
        %v9981 = vshll.u32 %v9781, 16
        %v9983 = vrot.slane %v9981, 5
        %v9984 = vor.u32 %v9980, %v9983
        %v9985 = vrot.slane %v9984, 4
        %v9987 = vshll.u32 %v9782, 16
        %v9989 = vrot.slane %v9987, 5
        %v9990 = vsel %vm1802, %v9985, %v9989
        %v9992 = vshrl.u32 %v9783, 16
        %v9994 = vrot.slane %v9992, 4
        %v9995 = vshll.u32 %v9783, 16
        %v9997 = vrot.slane %v9995, 5
        %v9998 = vor.u32 %v9994, %v9997
        %v9999 = vrot.slane %v9998, 4
        %v10001 = vshll.u32 %v9784, 16
        %v10003 = vrot.slane %v10001, 5
        %v10004 = vsel %vm1802, %v9999, %v10003
        %v10006 = vshrl.u32 %v9785, 16
        %v10008 = vrot.slane %v10006, 4
        %v10009 = vshll.u32 %v9785, 16
        %v10011 = vrot.slane %v10009, 5
        %v10012 = vor.u32 %v10008, %v10011
        %v10013 = vrot.slane %v10012, 4
        %v10015 = vshll.u32 %v9786, 16
        %v10017 = vrot.slane %v10015, 5
        %v10018 = vsel %vm1802, %v10013, %v10017
        %v10020 = vshrl.u32 %v9787, 16
        %v10022 = vrot.slane %v10020, 4
        %v10023 = vshll.u32 %v9787, 16
        %v10025 = vrot.slane %v10023, 5
        %v10026 = vor.u32 %v10022, %v10025
        %v10027 = vrot.slane %v10026, 4
        %v10029 = vshll.u32 %v9788, 16
        %v10031 = vrot.slane %v10029, 5
        %v10032 = vsel %vm1802, %v10027, %v10031
        %v10034 = vshrl.u32 %v9789, 16
        %v10036 = vrot.slane %v10034, 4
        %v10037 = vshll.u32 %v9789, 16
        %v10039 = vrot.slane %v10037, 5
        %v10040 = vor.u32 %v10036, %v10039
        %v10041 = vrot.slane %v10040, 4
        %v10043 = vshll.u32 %v9790, 16
        %v10045 = vrot.slane %v10043, 5
        %v10046 = vsel %vm1802, %v10041, %v10045
        %v10048 = vshrl.u32 %v9791, 16
        %v10050 = vrot.slane %v10048, 4
        %v10051 = vshll.u32 %v9791, 16
        %v10053 = vrot.slane %v10051, 5
        %v10054 = vor.u32 %v10050, %v10053
        %v10055 = vrot.slane %v10054, 4
        %v10057 = vshll.u32 %v9792, 16
        %v10059 = vrot.slane %v10057, 5
        %v10060 = vsel %vm1802, %v10055, %v10059
        %v10062 = vshrl.u32 %v9793, 16
        %v10064 = vrot.slane %v10062, 4
        %v10065 = vshll.u32 %v9793, 16
        %v10067 = vrot.slane %v10065, 5
        %v10068 = vor.u32 %v10064, %v10067
        %v10069 = vrot.slane %v10068, 4
        %v10071 = vshll.u32 %v9794, 16
        %v10073 = vrot.slane %v10071, 5
        %v10074 = vsel %vm1802, %v10069, %v10073
        %v10076 = vshrl.u32 %v9795, 16
        %v10078 = vrot.slane %v10076, 4
        %v10079 = vshll.u32 %v9795, 16
        %v10081 = vrot.slane %v10079, 5
        %v10082 = vor.u32 %v10078, %v10081
        %v10083 = vrot.slane %v10082, 4
        %v10085 = vshll.u32 %v9796, 16
        %v10087 = vrot.slane %v10085, 5
        %v10088 = vsel %vm1802, %v10083, %v10087
        %v10090 = vshrl.u32 %v9797, 16
        %v10092 = vrot.slane %v10090, 4
        %v10093 = vshll.u32 %v9797, 16
        %v10095 = vrot.slane %v10093, 5
        %v10096 = vor.u32 %v10092, %v10095
        %v10097 = vrot.slane %v10096, 4
        %v10099 = vshll.u32 %v9798, 16
        %v10101 = vrot.slane %v10099, 5
        %v10102 = vsel %vm1802, %v10097, %v10101
        %v10104 = vshrl.u32 %v9799, 16
        %v10106 = vrot.slane %v10104, 4
        %v10107 = vshll.u32 %v9799, 16
        %v10109 = vrot.slane %v10107, 5
        %v10110 = vor.u32 %v10106, %v10109
        %v10111 = vrot.slane %v10110, 4
        %v10113 = vshll.u32 %v9800, 16
        %v10115 = vrot.slane %v10113, 5
        %v10116 = vsel %vm1802, %v10111, %v10115
        %v10118 = vshrl.u32 %v9801, 16
        %v10120 = vrot.slane %v10118, 4
        %v10121 = vshll.u32 %v9801, 16
        %v10123 = vrot.slane %v10121, 5
        %v10124 = vor.u32 %v10120, %v10123
        %v10125 = vrot.slane %v10124, 4
        %v10127 = vshll.u32 %v9802, 16
        %v10129 = vrot.slane %v10127, 5
        %v10130 = vsel %vm1802, %v10125, %v10129
        %v10132 = vshrl.u32 %v9803, 16
        %v10134 = vrot.slane %v10132, 4
        %v10135 = vshll.u32 %v9803, 16
        %v10137 = vrot.slane %v10135, 5
        %v10138 = vor.u32 %v10134, %v10137
        %v10139 = vrot.slane %v10138, 4
        %v10141 = vshll.u32 %v9804, 16
        %v10143 = vrot.slane %v10141, 5
        %v10144 = vsel %vm1802, %v10139, %v10143
        %v10146 = vshrl.u32 %v9805, 16
        %v10148 = vrot.slane %v10146, 4
        %v10149 = vshll.u32 %v9805, 16
        %v10151 = vrot.slane %v10149, 5
        %v10152 = vor.u32 %v10148, %v10151
        %v10153 = vrot.slane %v10152, 4
        %v10155 = vshll.u32 %v9806, 16
        %v10157 = vrot.slane %v10155, 5
        %v10158 = vsel %vm1802, %v10153, %v10157
        %v10160 = vshrl.u32 %v9807, 16
        %v10162 = vrot.slane %v10160, 4
        %v10163 = vshll.u32 %v9807, 16
        %v10165 = vrot.slane %v10163, 5
        %v10166 = vor.u32 %v10162, %v10165
        %v10167 = vrot.slane %v10166, 4
        %v10169 = vshll.u32 %v9808, 16
        %v10171 = vrot.slane %v10169, 5
        %v10172 = vsel %vm1802, %v10167, %v10171
        %v10174 = vshrl.u32 %v9809, 16
        %v10176 = vrot.slane %v10174, 4
        %v10177 = vshll.u32 %v9809, 16
        %v10179 = vrot.slane %v10177, 5
        %v10180 = vor.u32 %v10176, %v10179
        %v10181 = vrot.slane %v10180, 4
        %v10183 = vshll.u32 %v9810, 16
        %v10185 = vrot.slane %v10183, 5
        %v10186 = vsel %vm1802, %v10181, %v10185
        %v10188 = vshrl.u32 %v9811, 16
        %v10190 = vrot.slane %v10188, 4
        %v10191 = vshll.u32 %v9811, 16
        %v10193 = vrot.slane %v10191, 5
        %v10194 = vor.u32 %v10190, %v10193
        %v10195 = vrot.slane %v10194, 4
        %v10197 = vshll.u32 %v9812, 16
        %v10199 = vrot.slane %v10197, 5
        %v10200 = vsel %vm1802, %v10195, %v10199
        %v10202 = vshrl.u32 %v9813, 16
        %v10204 = vrot.slane %v10202, 4
        %v10205 = vshll.u32 %v9813, 16
        %v10207 = vrot.slane %v10205, 5
        %v10208 = vor.u32 %v10204, %v10207
        %v10209 = vrot.slane %v10208, 4
        %v10211 = vshll.u32 %v9814, 16
        %v10213 = vrot.slane %v10211, 5
        %v10214 = vsel %vm1802, %v10209, %v10213
        %v10216 = vshrl.u32 %v9815, 16
        %v10218 = vrot.slane %v10216, 4
        %v10219 = vshll.u32 %v9815, 16
        %v10221 = vrot.slane %v10219, 5
        %v10222 = vor.u32 %v10218, %v10221
        %v10223 = vrot.slane %v10222, 4
        %v10225 = vshll.u32 %v9816, 16
        %v10227 = vrot.slane %v10225, 5
        %v10228 = vsel %vm1802, %v10223, %v10227
        %v10230 = vshrl.u32 %v9817, 16
        %v10232 = vrot.slane %v10230, 4
        %v10233 = vshll.u32 %v9817, 16
        %v10235 = vrot.slane %v10233, 5
        %v10236 = vor.u32 %v10232, %v10235
        %v10237 = vrot.slane %v10236, 4
        %v10239 = vshll.u32 %v9818, 16
        %v10241 = vrot.slane %v10239, 5
        %v10242 = vsel %vm1802, %v10237, %v10241
        %v10244 = vshrl.u32 %v9819, 16
        %v10246 = vrot.slane %v10244, 4
        %v10247 = vshll.u32 %v9819, 16
        %v10249 = vrot.slane %v10247, 5
        %v10250 = vor.u32 %v10246, %v10249
        %v10251 = vrot.slane %v10250, 4
        %v10253 = vshll.u32 %v9820, 16
        %v10255 = vrot.slane %v10253, 5
        %v10256 = vsel %vm1802, %v10251, %v10255
        %v10258 = vshrl.u32 %v9821, 16
        %v10260 = vrot.slane %v10258, 4
        %v10261 = vshll.u32 %v9821, 16
        %v10263 = vrot.slane %v10261, 5
        %v10264 = vor.u32 %v10260, %v10263
        %v10265 = vrot.slane %v10264, 4
        %v10267 = vshll.u32 %v9822, 16
        %v10269 = vrot.slane %v10267, 5
        %v10270 = vsel %vm1802, %v10265, %v10269
        %v10271 = vld [vmem:[#allocation8 + $0x140] sm:$0xf]
        %v10272 = vld [vmem:[#allocation8 + $0x144] sm:$0xf]
        %v10273 = vld [vmem:[#allocation8 + $0x148] sm:$0xf]
        %v10274 = vld [vmem:[#allocation8 + $0x14c] sm:$0xf]
        %v10275 = vld [vmem:[#allocation8 + $0x150] sm:$0xf]
        %v10276 = vld [vmem:[#allocation8 + $0x154] sm:$0xf]
        %v10277 = vld [vmem:[#allocation8 + $0x158] sm:$0xf]
        %v10278 = vld [vmem:[#allocation8 + $0x15c] sm:$0xf]
        %v10279 = vld [vmem:[#allocation8 + $0x160] sm:$0xf]
        %v10280 = vld [vmem:[#allocation8 + $0x164] sm:$0xf]
        %v10281 = vld [vmem:[#allocation8 + $0x168] sm:$0xf]
        %v10282 = vld [vmem:[#allocation8 + $0x16c] sm:$0xf]
        %v10283 = vld [vmem:[#allocation8 + $0x170] sm:$0xf]
        %v10284 = vld [vmem:[#allocation8 + $0x174] sm:$0xf]
        %v10285 = vld [vmem:[#allocation8 + $0x178] sm:$0xf]
        %v10286 = vld [vmem:[#allocation8 + $0x17c] sm:$0xf]
        %v10287 = vunpack.c.l.b16 %v9836
        %v10288 = vunpack.c.l.b16 %v9850
        %v10289 = vunpack.c.l.b16 %v9864
        %v10290 = vunpack.c.l.b16 %v9878
        %v10291 = vunpack.c.l.b16 %v9892
        %v10292 = vunpack.c.l.b16 %v9906
        %v10293 = vunpack.c.l.b16 %v9920
        %v10294 = vunpack.c.l.b16 %v9934
        %v10295 = vunpack.c.l.b16 %v9948
        %v10296 = vunpack.c.l.b16 %v9962
        %v10297 = vunpack.c.l.b16 %v9976
        %v10298 = vunpack.c.l.b16 %v9990
        %v10299 = vunpack.c.l.b16 %v10004
        %v10300 = vunpack.c.l.b16 %v10018
        %v10301 = vunpack.c.l.b16 %v10032
        %v10302 = vunpack.c.l.b16 %v10046
        %v10303 = vunpack.c.l.b16 %v10060
        %v10304 = vunpack.c.l.b16 %v10074
        %v10305 = vunpack.c.l.b16 %v10088
        %v10306 = vunpack.c.l.b16 %v10102
        %v10307 = vunpack.c.l.b16 %v10116
        %v10308 = vunpack.c.l.b16 %v10130
        %v10309 = vunpack.c.l.b16 %v10144
        %v10310 = vunpack.c.l.b16 %v10158
        %v10311 = vunpack.c.l.b16 %v10172
        %v10312 = vunpack.c.l.b16 %v10186
        %v10313 = vunpack.c.l.b16 %v10200
        %v10314 = vunpack.c.l.b16 %v10214
        %v10315 = vunpack.c.l.b16 %v10228
        %v10316 = vunpack.c.l.b16 %v10242
        %v10317 = vunpack.c.l.b16 %v10256
        %v10318 = vunpack.c.l.b16 %v10270
        %v10319 = vpack.c.b16 %v10288, %v10287
        %v10320 = vpack.c.b16 %v10290, %v10289
        %v10321 = vpack.c.b16 %v10292, %v10291
        %v10322 = vpack.c.b16 %v10294, %v10293
        %v10323 = vpack.c.b16 %v10296, %v10295
        %v10324 = vpack.c.b16 %v10298, %v10297
        %v10325 = vpack.c.b16 %v10300, %v10299
        %v10326 = vpack.c.b16 %v10302, %v10301
        %v10327 = vpack.c.b16 %v10304, %v10303
        %v10328 = vpack.c.b16 %v10306, %v10305
        %v10329 = vpack.c.b16 %v10308, %v10307
        %v10330 = vpack.c.b16 %v10310, %v10309
        %v10331 = vpack.c.b16 %v10312, %v10311
        %v10332 = vpack.c.b16 %v10314, %v10313
        %v10333 = vpack.c.b16 %v10316, %v10315
        %v10334 = vpack.c.b16 %v10318, %v10317
        %v10367 = vunpack.c.l.b16 %v10271
        %v10368 = vunpack.c.l.b16 %v10272
        %v10369 = vunpack.c.l.b16 %v10273
        %v10370 = vunpack.c.l.b16 %v10274
        %v10371 = vunpack.c.l.b16 %v10275
        %v10372 = vunpack.c.l.b16 %v10276
        %v10373 = vunpack.c.l.b16 %v10277
        %v10374 = vunpack.c.l.b16 %v10278
        %v10375 = vunpack.c.l.b16 %v10279
        %v10376 = vunpack.c.l.b16 %v10280
        %v10377 = vunpack.c.l.b16 %v10281
        %v10378 = vunpack.c.l.b16 %v10282
        %v10379 = vunpack.c.l.b16 %v10283
        %v10380 = vunpack.c.l.b16 %v10284
        %v10381 = vunpack.c.l.b16 %v10285
        %v10382 = vunpack.c.l.b16 %v10286
        %v10383 = vpack.c.b16 %v10368, %v10367
        %v10384 = vpack.c.b16 %v10370, %v10369
        %v10385 = vpack.c.b16 %v10372, %v10371
        %v10386 = vpack.c.b16 %v10374, %v10373
        %v10387 = vpack.c.b16 %v10376, %v10375
        %v10388 = vpack.c.b16 %v10378, %v10377
        %v10389 = vpack.c.b16 %v10380, %v10379
        %v10390 = vpack.c.b16 %v10382, %v10381
        %10399 = vmatprep.subr.bf16.mxu0 0
        %10400 = vmatpush1.bf16.msra.mxu0 %v10390
        %10401 = vmatprep.subr.bf16.mxu0 0
        %10402 = vmatpush1.bf16.msra.mxu0 %v10389
        %10403 = vmatprep.subr.bf16.mxu0 0
        %10404 = vmatpush1.bf16.msra.mxu0 %v10388
        %10405 = vmatprep.subr.bf16.mxu0 0
        %10406 = vmatpush1.bf16.msra.mxu0 %v10387
        %10407 = vmatprep.subr.bf16.mxu0 0
        %10408 = vmatpush1.bf16.msra.mxu0 %v10386
        %10409 = vmatprep.subr.bf16.mxu0 0
        %10410 = vmatpush1.bf16.msra.mxu0 %v10385
        %10411 = vmatprep.subr.bf16.mxu0 0
        %10412 = vmatpush1.bf16.msra.mxu0 %v10384
        %10413 = vmatprep.subr.bf16.mxu0 0
        %10414 = vmatpush1.bf16.msra.mxu0 %v10383
        %10415 = vmatprep.subr.bf16.mxu0 0
        %10416 = vmatpush2.bf16.msra.mxu0 0
        %10417 = vmatprep.subr.bf16.mxu0 0
        %10418 = vmatpush2.bf16.msra.mxu0 0
        %10419 = vmatprep.subr.bf16.mxu0 0
        %10420 = vmatpush2.bf16.msra.mxu0 0
        %10421 = vmatprep.subr.bf16.mxu0 0
        %10422 = vmatpush2.bf16.msra.mxu0 0
        %10423 = vmatprep.subr.bf16.mxu0 0
        %10424 = vmatpush2.bf16.msra.mxu0 0
        %10425 = vmatprep.subr.bf16.mxu0 0
        %10426 = vmatpush2.bf16.msra.mxu0 0
        %10427 = vmatprep.subr.bf16.mxu0 0
        %10428 = vmatpush2.bf16.msra.mxu0 0
        %10429 = vmatprep.subr.bf16.mxu0 0
        %10430 = vmatpush2.bf16.msra.mxu0 0
        %10431 = vmatprep.mubr.bf16.mxu0 0
        %10432 = vmatmul.mubr.bf16.gmra.mxu0 %v10319
        %v10433 = vpop.f32.mrf.mxu0
        %v10434 = vadd.f32 0.0, %v10433
        %v10435 = vpop.f32.mrf.mxu0
        %v10436 = vpop.f32.mrf.mxu0
        %v10437 = vadd.f32 0.0, %v10436
        %v10438 = vpop.f32.mrf.mxu0
        %10439 = vmatprep.mubr.bf16.mxu0 0
        %10440 = vmatmul.mubr.bf16.gmra.mxu0 %v10320
        %v10441 = vpop.f32.mrf.mxu0
        %v10442 = vadd.f32 0.0, %v10441
        %v10443 = vpop.f32.mrf.mxu0
        %v10444 = vpop.f32.mrf.mxu0
        %v10445 = vadd.f32 0.0, %v10444
        %v10446 = vpop.f32.mrf.mxu0
        %10447 = vmatprep.mubr.bf16.mxu0 0
        %10448 = vmatmul.mubr.bf16.gmra.mxu0 %v10321
        %v10449 = vpop.f32.mrf.mxu0
        %v10450 = vadd.f32 0.0, %v10449
        %v10451 = vpop.f32.mrf.mxu0
        %v10452 = vpop.f32.mrf.mxu0
        %v10453 = vadd.f32 0.0, %v10452
        %v10454 = vpop.f32.mrf.mxu0
        %10455 = vmatprep.mubr.bf16.mxu0 0
        %10456 = vmatmul.mubr.bf16.gmra.mxu0 %v10322
        %v10457 = vpop.f32.mrf.mxu0
        %v10458 = vadd.f32 0.0, %v10457
        %v10459 = vpop.f32.mrf.mxu0
        %v10460 = vpop.f32.mrf.mxu0
        %v10461 = vadd.f32 0.0, %v10460
        %v10462 = vpop.f32.mrf.mxu0
        %10463 = vmatprep.mubr.bf16.mxu0 0
        %10464 = vmatmul.mubr.bf16.gmra.mxu0 %v10323
        %v10465 = vpop.f32.mrf.mxu0
        %v10466 = vadd.f32 0.0, %v10465
        %v10467 = vpop.f32.mrf.mxu0
        %v10468 = vpop.f32.mrf.mxu0
        %v10469 = vadd.f32 0.0, %v10468
        %v10470 = vpop.f32.mrf.mxu0
        %10471 = vmatprep.mubr.bf16.mxu0 0
        %10472 = vmatmul.mubr.bf16.gmra.mxu0 %v10324
        %v10473 = vpop.f32.mrf.mxu0
        %v10474 = vadd.f32 0.0, %v10473
        %v10475 = vpop.f32.mrf.mxu0
        %v10476 = vpop.f32.mrf.mxu0
        %v10477 = vadd.f32 0.0, %v10476
        %v10478 = vpop.f32.mrf.mxu0
        %10479 = vmatprep.mubr.bf16.mxu0 0
        %10480 = vmatmul.mubr.bf16.gmra.mxu0 %v10325
        %v10481 = vpop.f32.mrf.mxu0
        %v10482 = vadd.f32 0.0, %v10481
        %v10483 = vpop.f32.mrf.mxu0
        %v10484 = vpop.f32.mrf.mxu0
        %v10485 = vadd.f32 0.0, %v10484
        %v10486 = vpop.f32.mrf.mxu0
        %10487 = vmatprep.mubr.bf16.mxu0 0
        %10488 = vmatmul.mubr.bf16.gmra.mxu0 %v10326
        %v10489 = vpop.f32.mrf.mxu0
        %v10490 = vadd.f32 0.0, %v10489
        %v10491 = vpop.f32.mrf.mxu0
        %v10492 = vpop.f32.mrf.mxu0
        %v10493 = vadd.f32 0.0, %v10492
        %v10494 = vpop.f32.mrf.mxu0
        %10495 = vmatprep.mubr.bf16.mxu0 0
        %10496 = vmatmul.mubr.bf16.gmra.mxu0 %v10327
        %v10497 = vpop.f32.mrf.mxu0
        %v10498 = vadd.f32 0.0, %v10497
        %v10499 = vpop.f32.mrf.mxu0
        %v10500 = vpop.f32.mrf.mxu0
        %v10501 = vadd.f32 0.0, %v10500
        %v10502 = vpop.f32.mrf.mxu0
        %10503 = vmatprep.mubr.bf16.mxu0 0
        %10504 = vmatmul.mubr.bf16.gmra.mxu0 %v10328
        %v10505 = vpop.f32.mrf.mxu0
        %v10506 = vadd.f32 0.0, %v10505
        %v10507 = vpop.f32.mrf.mxu0
        %v10508 = vpop.f32.mrf.mxu0
        %v10509 = vadd.f32 0.0, %v10508
        %v10510 = vpop.f32.mrf.mxu0
        %10511 = vmatprep.mubr.bf16.mxu0 0
        %10512 = vmatmul.mubr.bf16.gmra.mxu0 %v10329
        %v10513 = vpop.f32.mrf.mxu0
        %v10514 = vadd.f32 0.0, %v10513
        %v10515 = vpop.f32.mrf.mxu0
        %v10516 = vpop.f32.mrf.mxu0
        %v10517 = vadd.f32 0.0, %v10516
        %v10518 = vpop.f32.mrf.mxu0
        %10519 = vmatprep.mubr.bf16.mxu0 0
        %10520 = vmatmul.mubr.bf16.gmra.mxu0 %v10330
        %v10521 = vpop.f32.mrf.mxu0
        %v10522 = vadd.f32 0.0, %v10521
        %v10523 = vpop.f32.mrf.mxu0
        %v10524 = vpop.f32.mrf.mxu0
        %v10525 = vadd.f32 0.0, %v10524
        %v10526 = vpop.f32.mrf.mxu0
        %10527 = vmatprep.mubr.bf16.mxu0 0
        %10528 = vmatmul.mubr.bf16.gmra.mxu0 %v10331
        %v10529 = vpop.f32.mrf.mxu0
        %v10530 = vadd.f32 0.0, %v10529
        %v10531 = vpop.f32.mrf.mxu0
        %v10532 = vpop.f32.mrf.mxu0
        %v10533 = vadd.f32 0.0, %v10532
        %v10534 = vpop.f32.mrf.mxu0
        %10535 = vmatprep.mubr.bf16.mxu0 0
        %10536 = vmatmul.mubr.bf16.gmra.mxu0 %v10332
        %v10537 = vpop.f32.mrf.mxu0
        %v10538 = vadd.f32 0.0, %v10537
        %v10539 = vpop.f32.mrf.mxu0
        %v10540 = vpop.f32.mrf.mxu0
        %v10541 = vadd.f32 0.0, %v10540
        %v10542 = vpop.f32.mrf.mxu0
        %10543 = vmatprep.mubr.bf16.mxu0 0
        %10544 = vmatmul.mubr.bf16.gmra.mxu0 %v10333
        %v10545 = vpop.f32.mrf.mxu0
        %v10546 = vadd.f32 0.0, %v10545
        %v10547 = vpop.f32.mrf.mxu0
        %v10548 = vpop.f32.mrf.mxu0
        %v10549 = vadd.f32 0.0, %v10548
        %v10550 = vpop.f32.mrf.mxu0
        %10551 = vmatprep.mubr.bf16.mxu0 0
        %10552 = vmatmul.mubr.bf16.gmra.mxu0 %v10334
        %v10553 = vpop.f32.mrf.mxu0
        %v10554 = vadd.f32 0.0, %v10553
        %v10555 = vpop.f32.mrf.mxu0
        %v10556 = vpop.f32.mrf.mxu0
        %v10557 = vadd.f32 0.0, %v10556
        %v10558 = vpop.f32.mrf.mxu0
        %10559 = vdwg.mxu0
        %v10560 = vadd.f32 %v9727, %v10434
        %v10561 = vadd.f32 %v9728, %v10437
        %v10562 = vadd.f32 %v9729, %v10442
        %v10563 = vadd.f32 %v9730, %v10445
        %v10564 = vadd.f32 %v9731, %v10450
        %v10565 = vadd.f32 %v9732, %v10453
        %v10566 = vadd.f32 %v9733, %v10458
        %v10567 = vadd.f32 %v9734, %v10461
        %v10568 = vadd.f32 %v9735, %v10466
        %v10569 = vadd.f32 %v9736, %v10469
        %v10570 = vadd.f32 %v9737, %v10474
        %v10571 = vadd.f32 %v9738, %v10477
        %v10572 = vadd.f32 %v9739, %v10482
        %v10573 = vadd.f32 %v9740, %v10485
        %v10574 = vadd.f32 %v9741, %v10490
        %v10575 = vadd.f32 %v9742, %v10493
        %v10576 = vadd.f32 %v9743, %v10498
        %v10577 = vadd.f32 %v9744, %v10501
        %v10578 = vadd.f32 %v9745, %v10506
        %v10579 = vadd.f32 %v9746, %v10509
        %v10580 = vadd.f32 %v9747, %v10514
        %v10581 = vadd.f32 %v9748, %v10517
        %v10582 = vadd.f32 %v9749, %v10522
        %v10583 = vadd.f32 %v9750, %v10525
        %v10584 = vadd.f32 %v9751, %v10530
        %v10585 = vadd.f32 %v9752, %v10533
        %v10586 = vadd.f32 %v9753, %v10538
        %v10587 = vadd.f32 %v9754, %v10541
        %v10588 = vadd.f32 %v9755, %v10546
        %v10589 = vadd.f32 %v9756, %v10549
        %v10590 = vadd.f32 %v9757, %v10554
        %v10591 = vadd.f32 %v9758, %v10557
        %v10592 = vld [vmem:[%s4559] sm:$0x8]
        %v10593 = vld [vmem:[%s4559 + $0x4] sm:$0xf]
        %v10594 = vld [vmem:[%s4559 + $0xc] sm:$0x8]
        %v10595 = vld [vmem:[%s4559 + $0x10] sm:$0xf]
        %v10596 = vld [vmem:[%s4559 + $0x18] sm:$0x8]
        %v10597 = vld [vmem:[%s4559 + $0x1c] sm:$0xf]
        %v10598 = vld [vmem:[%s4559 + $0x24] sm:$0x8]
        %v10599 = vld [vmem:[%s4559 + $0x28] sm:$0xf]
        %v10600 = vld [vmem:[%s4559 + $0x30] sm:$0x8]
        %v10601 = vld [vmem:[%s4559 + $0x34] sm:$0xf]
        %v10602 = vld [vmem:[%s4559 + $0x3c] sm:$0x8]
        %v10603 = vld [vmem:[%s4559 + $0x40] sm:$0xf]
        %v10604 = vld [vmem:[%s4559 + $0x48] sm:$0x8]
        %v10605 = vld [vmem:[%s4559 + $0x4c] sm:$0xf]
        %v10606 = vld [vmem:[%s4559 + $0x54] sm:$0x8]
        %v10607 = vld [vmem:[%s4559 + $0x58] sm:$0xf]
        %v10608 = vld [vmem:[%s4559 + $0x78] sm:$0x8]
        %v10609 = vld [vmem:[%s4559 + $0x7c] sm:$0xf]
        %v10610 = vld [vmem:[%s4559 + $0x84] sm:$0x8]
        %v10611 = vld [vmem:[%s4559 + $0x88] sm:$0xf]
        %v10612 = vld [vmem:[%s4559 + $0x90] sm:$0x8]
        %v10613 = vld [vmem:[%s4559 + $0x94] sm:$0xf]
        %v10614 = vld [vmem:[%s4559 + $0x9c] sm:$0x8]
        %v10615 = vld [vmem:[%s4559 + $0xa0] sm:$0xf]
        %v10616 = vld [vmem:[%s4559 + $0xa8] sm:$0x8]
        %v10617 = vld [vmem:[%s4559 + $0xac] sm:$0xf]
        %v10618 = vld [vmem:[%s4559 + $0xb4] sm:$0x8]
        %v10619 = vld [vmem:[%s4559 + $0xb8] sm:$0xf]
        %v10620 = vld [vmem:[%s4559 + $0xc0] sm:$0x8]
        %v10621 = vld [vmem:[%s4559 + $0xc4] sm:$0xf]
        %v10622 = vld [vmem:[%s4559 + $0xcc] sm:$0x8]
        %v10623 = vld [vmem:[%s4559 + $0xd0] sm:$0xf]
        %v10624 = vld [vmem:[%s4559 + $0xf0] sm:$0x8]
        %v10625 = vld [vmem:[%s4559 + $0xf4] sm:$0xf]
        %v10626 = vld [vmem:[%s4559 + $0xfc] sm:$0x8]
        %v10627 = vld [vmem:[%s4559 + $0x100] sm:$0xf]
        %v10628 = vld [vmem:[%s4559 + $0x108] sm:$0x8]
        %v10629 = vld [vmem:[%s4559 + $0x10c] sm:$0xf]
        %v10630 = vld [vmem:[%s4559 + $0x114] sm:$0x8]
        %v10631 = vld [vmem:[%s4559 + $0x118] sm:$0xf]
        %v10632 = vld [vmem:[%s4559 + $0x120] sm:$0x8]
        %v10633 = vld [vmem:[%s4559 + $0x124] sm:$0xf]
        %v10634 = vld [vmem:[%s4559 + $0x12c] sm:$0x8]
        %v10635 = vld [vmem:[%s4559 + $0x130] sm:$0xf]
        %v10636 = vld [vmem:[%s4559 + $0x138] sm:$0x8]
        %v10637 = vld [vmem:[%s4559 + $0x13c] sm:$0xf]
        %v10638 = vld [vmem:[%s4559 + $0x144] sm:$0x8]
        %v10639 = vld [vmem:[%s4559 + $0x148] sm:$0xf]
        %v10640 = vld [vmem:[%s4559 + $0x168] sm:$0x8]
        %v10641 = vld [vmem:[%s4559 + $0x16c] sm:$0xf]
        %v10642 = vld [vmem:[%s4559 + $0x174] sm:$0x8]
        %v10643 = vld [vmem:[%s4559 + $0x178] sm:$0xf]
        %v10644 = vld [vmem:[%s4559 + $0x180] sm:$0x8]
        %v10645 = vld [vmem:[%s4559 + $0x184] sm:$0xf]
        %v10646 = vld [vmem:[%s4559 + $0x18c] sm:$0x8]
        %v10647 = vld [vmem:[%s4559 + $0x190] sm:$0xf]
        %v10648 = vld [vmem:[%s4559 + $0x198] sm:$0x8]
        %v10649 = vld [vmem:[%s4559 + $0x19c] sm:$0xf]
        %v10650 = vld [vmem:[%s4559 + $0x1a4] sm:$0x8]
        %v10651 = vld [vmem:[%s4559 + $0x1a8] sm:$0xf]
        %v10652 = vld [vmem:[%s4559 + $0x1b0] sm:$0x8]
        %v10653 = vld [vmem:[%s4559 + $0x1b4] sm:$0xf]
        %v10654 = vld [vmem:[%s4559 + $0x1bc] sm:$0x8]
        %v10655 = vld [vmem:[%s4559 + $0x1c0] sm:$0xf]
        %v10657 = vshrl.u32 %v10592, 16
        %v10659 = vrot.slane %v10657, 7
        %v10660 = vrot.slane %v10659, 4
        %v10662 = vshrl.u32 %v10593, 16
        %v10664 = vrot.slane %v10662, 7
        %v10665 = vshll.u32 %v10593, 16
        %v10667 = vor.u32 %v10664, %v10665
        %v10668 = vsel %vm709, %v10660, %v10667
        %v10670 = vshrl.u32 %v10594, 16
        %v10672 = vrot.slane %v10670, 7
        %v10673 = vrot.slane %v10672, 4
        %v10675 = vshrl.u32 %v10595, 16
        %v10677 = vrot.slane %v10675, 7
        %v10678 = vshll.u32 %v10595, 16
        %v10680 = vor.u32 %v10677, %v10678
        %v10681 = vsel %vm709, %v10673, %v10680
        %v10683 = vshrl.u32 %v10596, 16
        %v10685 = vrot.slane %v10683, 7
        %v10686 = vrot.slane %v10685, 4
        %v10688 = vshrl.u32 %v10597, 16
        %v10690 = vrot.slane %v10688, 7
        %v10691 = vshll.u32 %v10597, 16
        %v10693 = vor.u32 %v10690, %v10691
        %v10694 = vsel %vm709, %v10686, %v10693
        %v10696 = vshrl.u32 %v10598, 16
        %v10698 = vrot.slane %v10696, 7
        %v10699 = vrot.slane %v10698, 4
        %v10701 = vshrl.u32 %v10599, 16
        %v10703 = vrot.slane %v10701, 7
        %v10704 = vshll.u32 %v10599, 16
        %v10706 = vor.u32 %v10703, %v10704
        %v10707 = vsel %vm709, %v10699, %v10706
        %v10709 = vshrl.u32 %v10600, 16
        %v10711 = vrot.slane %v10709, 7
        %v10712 = vrot.slane %v10711, 4
        %v10714 = vshrl.u32 %v10601, 16
        %v10716 = vrot.slane %v10714, 7
        %v10717 = vshll.u32 %v10601, 16
        %v10719 = vor.u32 %v10716, %v10717
        %v10720 = vsel %vm709, %v10712, %v10719
        %v10722 = vshrl.u32 %v10602, 16
        %v10724 = vrot.slane %v10722, 7
        %v10725 = vrot.slane %v10724, 4
        %v10727 = vshrl.u32 %v10603, 16
        %v10729 = vrot.slane %v10727, 7
        %v10730 = vshll.u32 %v10603, 16
        %v10732 = vor.u32 %v10729, %v10730
        %v10733 = vsel %vm709, %v10725, %v10732
        %v10735 = vshrl.u32 %v10604, 16
        %v10737 = vrot.slane %v10735, 7
        %v10738 = vrot.slane %v10737, 4
        %v10740 = vshrl.u32 %v10605, 16
        %v10742 = vrot.slane %v10740, 7
        %v10743 = vshll.u32 %v10605, 16
        %v10745 = vor.u32 %v10742, %v10743
        %v10746 = vsel %vm709, %v10738, %v10745
        %v10748 = vshrl.u32 %v10606, 16
        %v10750 = vrot.slane %v10748, 7
        %v10751 = vrot.slane %v10750, 4
        %v10753 = vshrl.u32 %v10607, 16
        %v10755 = vrot.slane %v10753, 7
        %v10756 = vshll.u32 %v10607, 16
        %v10758 = vor.u32 %v10755, %v10756
        %v10759 = vsel %vm709, %v10751, %v10758
        %v10761 = vshrl.u32 %v10608, 16
        %v10763 = vrot.slane %v10761, 7
        %v10764 = vrot.slane %v10763, 4
        %v10766 = vshrl.u32 %v10609, 16
        %v10768 = vrot.slane %v10766, 7
        %v10769 = vshll.u32 %v10609, 16
        %v10771 = vor.u32 %v10768, %v10769
        %v10772 = vsel %vm709, %v10764, %v10771
        %v10774 = vshrl.u32 %v10610, 16
        %v10776 = vrot.slane %v10774, 7
        %v10777 = vrot.slane %v10776, 4
        %v10779 = vshrl.u32 %v10611, 16
        %v10781 = vrot.slane %v10779, 7
        %v10782 = vshll.u32 %v10611, 16
        %v10784 = vor.u32 %v10781, %v10782
        %v10785 = vsel %vm709, %v10777, %v10784
        %v10787 = vshrl.u32 %v10612, 16
        %v10789 = vrot.slane %v10787, 7
        %v10790 = vrot.slane %v10789, 4
        %v10792 = vshrl.u32 %v10613, 16
        %v10794 = vrot.slane %v10792, 7
        %v10795 = vshll.u32 %v10613, 16
        %v10797 = vor.u32 %v10794, %v10795
        %v10798 = vsel %vm709, %v10790, %v10797
        %v10800 = vshrl.u32 %v10614, 16
        %v10802 = vrot.slane %v10800, 7
        %v10803 = vrot.slane %v10802, 4
        %v10805 = vshrl.u32 %v10615, 16
        %v10807 = vrot.slane %v10805, 7
        %v10808 = vshll.u32 %v10615, 16
        %v10810 = vor.u32 %v10807, %v10808
        %v10811 = vsel %vm709, %v10803, %v10810
        %v10813 = vshrl.u32 %v10616, 16
        %v10815 = vrot.slane %v10813, 7
        %v10816 = vrot.slane %v10815, 4
        %v10818 = vshrl.u32 %v10617, 16
        %v10820 = vrot.slane %v10818, 7
        %v10821 = vshll.u32 %v10617, 16
        %v10823 = vor.u32 %v10820, %v10821
        %v10824 = vsel %vm709, %v10816, %v10823
        %v10826 = vshrl.u32 %v10618, 16
        %v10828 = vrot.slane %v10826, 7
        %v10829 = vrot.slane %v10828, 4
        %v10831 = vshrl.u32 %v10619, 16
        %v10833 = vrot.slane %v10831, 7
        %v10834 = vshll.u32 %v10619, 16
        %v10836 = vor.u32 %v10833, %v10834
        %v10837 = vsel %vm709, %v10829, %v10836
        %v10839 = vshrl.u32 %v10620, 16
        %v10841 = vrot.slane %v10839, 7
        %v10842 = vrot.slane %v10841, 4
        %v10844 = vshrl.u32 %v10621, 16
        %v10846 = vrot.slane %v10844, 7
        %v10847 = vshll.u32 %v10621, 16
        %v10849 = vor.u32 %v10846, %v10847
        %v10850 = vsel %vm709, %v10842, %v10849
        %v10852 = vshrl.u32 %v10622, 16
        %v10854 = vrot.slane %v10852, 7
        %v10855 = vrot.slane %v10854, 4
        %v10857 = vshrl.u32 %v10623, 16
        %v10859 = vrot.slane %v10857, 7
        %v10860 = vshll.u32 %v10623, 16
        %v10862 = vor.u32 %v10859, %v10860
        %v10863 = vsel %vm709, %v10855, %v10862
        %v10865 = vshrl.u32 %v10624, 16
        %v10867 = vrot.slane %v10865, 7
        %v10868 = vrot.slane %v10867, 4
        %v10870 = vshrl.u32 %v10625, 16
        %v10872 = vrot.slane %v10870, 7
        %v10873 = vshll.u32 %v10625, 16
        %v10875 = vor.u32 %v10872, %v10873
        %v10876 = vsel %vm709, %v10868, %v10875
        %v10878 = vshrl.u32 %v10626, 16
        %v10880 = vrot.slane %v10878, 7
        %v10881 = vrot.slane %v10880, 4
        %v10883 = vshrl.u32 %v10627, 16
        %v10885 = vrot.slane %v10883, 7
        %v10886 = vshll.u32 %v10627, 16
        %v10888 = vor.u32 %v10885, %v10886
        %v10889 = vsel %vm709, %v10881, %v10888
        %v10891 = vshrl.u32 %v10628, 16
        %v10893 = vrot.slane %v10891, 7
        %v10894 = vrot.slane %v10893, 4
        %v10896 = vshrl.u32 %v10629, 16
        %v10898 = vrot.slane %v10896, 7
        %v10899 = vshll.u32 %v10629, 16
        %v10901 = vor.u32 %v10898, %v10899
        %v10902 = vsel %vm709, %v10894, %v10901
        %v10904 = vshrl.u32 %v10630, 16
        %v10906 = vrot.slane %v10904, 7
        %v10907 = vrot.slane %v10906, 4
        %v10909 = vshrl.u32 %v10631, 16
        %v10911 = vrot.slane %v10909, 7
        %v10912 = vshll.u32 %v10631, 16
        %v10914 = vor.u32 %v10911, %v10912
        %v10915 = vsel %vm709, %v10907, %v10914
        %v10917 = vshrl.u32 %v10632, 16
        %v10919 = vrot.slane %v10917, 7
        %v10920 = vrot.slane %v10919, 4
        %v10922 = vshrl.u32 %v10633, 16
        %v10924 = vrot.slane %v10922, 7
        %v10925 = vshll.u32 %v10633, 16
        %v10927 = vor.u32 %v10924, %v10925
        %v10928 = vsel %vm709, %v10920, %v10927
        %v10930 = vshrl.u32 %v10634, 16
        %v10932 = vrot.slane %v10930, 7
        %v10933 = vrot.slane %v10932, 4
        %v10935 = vshrl.u32 %v10635, 16
        %v10937 = vrot.slane %v10935, 7
        %v10938 = vshll.u32 %v10635, 16
        %v10940 = vor.u32 %v10937, %v10938
        %v10941 = vsel %vm709, %v10933, %v10940
        %v10943 = vshrl.u32 %v10636, 16
        %v10945 = vrot.slane %v10943, 7
        %v10946 = vrot.slane %v10945, 4
        %v10948 = vshrl.u32 %v10637, 16
        %v10950 = vrot.slane %v10948, 7
        %v10951 = vshll.u32 %v10637, 16
        %v10953 = vor.u32 %v10950, %v10951
        %v10954 = vsel %vm709, %v10946, %v10953
        %v10956 = vshrl.u32 %v10638, 16
        %v10958 = vrot.slane %v10956, 7
        %v10959 = vrot.slane %v10958, 4
        %v10961 = vshrl.u32 %v10639, 16
        %v10963 = vrot.slane %v10961, 7
        %v10964 = vshll.u32 %v10639, 16
        %v10966 = vor.u32 %v10963, %v10964
        %v10967 = vsel %vm709, %v10959, %v10966
        %v10969 = vshrl.u32 %v10640, 16
        %v10971 = vrot.slane %v10969, 7
        %v10972 = vrot.slane %v10971, 4
        %v10974 = vshrl.u32 %v10641, 16
        %v10976 = vrot.slane %v10974, 7
        %v10977 = vshll.u32 %v10641, 16
        %v10979 = vor.u32 %v10976, %v10977
        %v10980 = vsel %vm709, %v10972, %v10979
        %v10982 = vshrl.u32 %v10642, 16
        %v10984 = vrot.slane %v10982, 7
        %v10985 = vrot.slane %v10984, 4
        %v10987 = vshrl.u32 %v10643, 16
        %v10989 = vrot.slane %v10987, 7
        %v10990 = vshll.u32 %v10643, 16
        %v10992 = vor.u32 %v10989, %v10990
        %v10993 = vsel %vm709, %v10985, %v10992
        %v10995 = vshrl.u32 %v10644, 16
        %v10997 = vrot.slane %v10995, 7
        %v10998 = vrot.slane %v10997, 4
        %v11000 = vshrl.u32 %v10645, 16
        %v11002 = vrot.slane %v11000, 7
        %v11003 = vshll.u32 %v10645, 16
        %v11005 = vor.u32 %v11002, %v11003
        %v11006 = vsel %vm709, %v10998, %v11005
        %v11008 = vshrl.u32 %v10646, 16
        %v11010 = vrot.slane %v11008, 7
        %v11011 = vrot.slane %v11010, 4
        %v11013 = vshrl.u32 %v10647, 16
        %v11015 = vrot.slane %v11013, 7
        %v11016 = vshll.u32 %v10647, 16
        %v11018 = vor.u32 %v11015, %v11016
        %v11019 = vsel %vm709, %v11011, %v11018
        %v11021 = vshrl.u32 %v10648, 16
        %v11023 = vrot.slane %v11021, 7
        %v11024 = vrot.slane %v11023, 4
        %v11026 = vshrl.u32 %v10649, 16
        %v11028 = vrot.slane %v11026, 7
        %v11029 = vshll.u32 %v10649, 16
        %v11031 = vor.u32 %v11028, %v11029
        %v11032 = vsel %vm709, %v11024, %v11031
        %v11034 = vshrl.u32 %v10650, 16
        %v11036 = vrot.slane %v11034, 7
        %v11037 = vrot.slane %v11036, 4
        %v11039 = vshrl.u32 %v10651, 16
        %v11041 = vrot.slane %v11039, 7
        %v11042 = vshll.u32 %v10651, 16
        %v11044 = vor.u32 %v11041, %v11042
        %v11045 = vsel %vm709, %v11037, %v11044
        %v11047 = vshrl.u32 %v10652, 16
        %v11049 = vrot.slane %v11047, 7
        %v11050 = vrot.slane %v11049, 4
        %v11052 = vshrl.u32 %v10653, 16
        %v11054 = vrot.slane %v11052, 7
        %v11055 = vshll.u32 %v10653, 16
        %v11057 = vor.u32 %v11054, %v11055
        %v11058 = vsel %vm709, %v11050, %v11057
        %v11060 = vshrl.u32 %v10654, 16
        %v11062 = vrot.slane %v11060, 7
        %v11063 = vrot.slane %v11062, 4
        %v11065 = vshrl.u32 %v10655, 16
        %v11067 = vrot.slane %v11065, 7
        %v11068 = vshll.u32 %v10655, 16
        %v11070 = vor.u32 %v11067, %v11068
        %v11071 = vsel %vm709, %v11063, %v11070
        %v11072 = vld [vmem:[#allocation8 + $0x180] sm:$0xf]
        %v11073 = vld [vmem:[#allocation8 + $0x184] sm:$0xf]
        %v11074 = vld [vmem:[#allocation8 + $0x188] sm:$0xf]
        %v11075 = vld [vmem:[#allocation8 + $0x18c] sm:$0xf]
        %v11076 = vld [vmem:[#allocation8 + $0x190] sm:$0xf]
        %v11077 = vld [vmem:[#allocation8 + $0x194] sm:$0xf]
        %v11078 = vld [vmem:[#allocation8 + $0x198] sm:$0xf]
        %v11079 = vld [vmem:[#allocation8 + $0x19c] sm:$0xf]
        %v11080 = vld [vmem:[#allocation8 + $0x1a0] sm:$0xf]
        %v11081 = vld [vmem:[#allocation8 + $0x1a4] sm:$0xf]
        %v11082 = vld [vmem:[#allocation8 + $0x1a8] sm:$0xf]
        %v11083 = vld [vmem:[#allocation8 + $0x1ac] sm:$0xf]
        %v11084 = vld [vmem:[#allocation8 + $0x1b0] sm:$0xf]
        %v11085 = vld [vmem:[#allocation8 + $0x1b4] sm:$0xf]
        %v11086 = vld [vmem:[#allocation8 + $0x1b8] sm:$0xf]
        %v11087 = vld [vmem:[#allocation8 + $0x1bc] sm:$0xf]
        %v11088 = vunpack.c.l.b16 %v10668
        %v11089 = vunpack.c.l.b16 %v10681
        %v11090 = vunpack.c.l.b16 %v10694
        %v11091 = vunpack.c.l.b16 %v10707
        %v11092 = vunpack.c.l.b16 %v10720
        %v11093 = vunpack.c.l.b16 %v10733
        %v11094 = vunpack.c.l.b16 %v10746
        %v11095 = vunpack.c.l.b16 %v10759
        %v11096 = vunpack.c.l.b16 %v10772
        %v11097 = vunpack.c.l.b16 %v10785
        %v11098 = vunpack.c.l.b16 %v10798
        %v11099 = vunpack.c.l.b16 %v10811
        %v11100 = vunpack.c.l.b16 %v10824
        %v11101 = vunpack.c.l.b16 %v10837
        %v11102 = vunpack.c.l.b16 %v10850
        %v11103 = vunpack.c.l.b16 %v10863
        %v11104 = vunpack.c.l.b16 %v10876
        %v11105 = vunpack.c.l.b16 %v10889
        %v11106 = vunpack.c.l.b16 %v10902
        %v11107 = vunpack.c.l.b16 %v10915
        %v11108 = vunpack.c.l.b16 %v10928
        %v11109 = vunpack.c.l.b16 %v10941
        %v11110 = vunpack.c.l.b16 %v10954
        %v11111 = vunpack.c.l.b16 %v10967
        %v11112 = vunpack.c.l.b16 %v10980
        %v11113 = vunpack.c.l.b16 %v10993
        %v11114 = vunpack.c.l.b16 %v11006
        %v11115 = vunpack.c.l.b16 %v11019
        %v11116 = vunpack.c.l.b16 %v11032
        %v11117 = vunpack.c.l.b16 %v11045
        %v11118 = vunpack.c.l.b16 %v11058
        %v11119 = vunpack.c.l.b16 %v11071
        %v11120 = vpack.c.b16 %v11089, %v11088
        %v11121 = vpack.c.b16 %v11091, %v11090
        %v11122 = vpack.c.b16 %v11093, %v11092
        %v11123 = vpack.c.b16 %v11095, %v11094
        %v11124 = vpack.c.b16 %v11097, %v11096
        %v11125 = vpack.c.b16 %v11099, %v11098
        %v11126 = vpack.c.b16 %v11101, %v11100
        %v11127 = vpack.c.b16 %v11103, %v11102
        %v11128 = vpack.c.b16 %v11105, %v11104
        %v11129 = vpack.c.b16 %v11107, %v11106
        %v11130 = vpack.c.b16 %v11109, %v11108
        %v11131 = vpack.c.b16 %v11111, %v11110
        %v11132 = vpack.c.b16 %v11113, %v11112
        %v11133 = vpack.c.b16 %v11115, %v11114
        %v11134 = vpack.c.b16 %v11117, %v11116
        %v11135 = vpack.c.b16 %v11119, %v11118
        %v11168 = vunpack.c.l.b16 %v11072
        %v11169 = vunpack.c.l.b16 %v11073
        %v11170 = vunpack.c.l.b16 %v11074
        %v11171 = vunpack.c.l.b16 %v11075
        %v11172 = vunpack.c.l.b16 %v11076
        %v11173 = vunpack.c.l.b16 %v11077
        %v11174 = vunpack.c.l.b16 %v11078
        %v11175 = vunpack.c.l.b16 %v11079
        %v11176 = vunpack.c.l.b16 %v11080
        %v11177 = vunpack.c.l.b16 %v11081
        %v11178 = vunpack.c.l.b16 %v11082
        %v11179 = vunpack.c.l.b16 %v11083
        %v11180 = vunpack.c.l.b16 %v11084
        %v11181 = vunpack.c.l.b16 %v11085
        %v11182 = vunpack.c.l.b16 %v11086
        %v11183 = vunpack.c.l.b16 %v11087
        %v11184 = vpack.c.b16 %v11169, %v11168
        %v11185 = vpack.c.b16 %v11171, %v11170
        %v11186 = vpack.c.b16 %v11173, %v11172
        %v11187 = vpack.c.b16 %v11175, %v11174
        %v11188 = vpack.c.b16 %v11177, %v11176
        %v11189 = vpack.c.b16 %v11179, %v11178
        %v11190 = vpack.c.b16 %v11181, %v11180
        %v11191 = vpack.c.b16 %v11183, %v11182
        %11200 = vmatprep.subr.bf16.mxu0 0
        %11201 = vmatpush1.bf16.msra.mxu0 %v11191
        %11202 = vmatprep.subr.bf16.mxu0 0
        %11203 = vmatpush1.bf16.msra.mxu0 %v11190
        %11204 = vmatprep.subr.bf16.mxu0 0
        %11205 = vmatpush1.bf16.msra.mxu0 %v11189
        %11206 = vmatprep.subr.bf16.mxu0 0
        %11207 = vmatpush1.bf16.msra.mxu0 %v11188
        %11208 = vmatprep.subr.bf16.mxu0 0
        %11209 = vmatpush1.bf16.msra.mxu0 %v11187
        %11210 = vmatprep.subr.bf16.mxu0 0
        %11211 = vmatpush1.bf16.msra.mxu0 %v11186
        %11212 = vmatprep.subr.bf16.mxu0 0
        %11213 = vmatpush1.bf16.msra.mxu0 %v11185
        %11214 = vmatprep.subr.bf16.mxu0 0
        %11215 = vmatpush1.bf16.msra.mxu0 %v11184
        %11216 = vmatprep.subr.bf16.mxu0 0
        %11217 = vmatpush2.bf16.msra.mxu0 0
        %11218 = vmatprep.subr.bf16.mxu0 0
        %11219 = vmatpush2.bf16.msra.mxu0 0
        %11220 = vmatprep.subr.bf16.mxu0 0
        %11221 = vmatpush2.bf16.msra.mxu0 0
        %11222 = vmatprep.subr.bf16.mxu0 0
        %11223 = vmatpush2.bf16.msra.mxu0 0
        %11224 = vmatprep.subr.bf16.mxu0 0
        %11225 = vmatpush2.bf16.msra.mxu0 0
        %11226 = vmatprep.subr.bf16.mxu0 0
        %11227 = vmatpush2.bf16.msra.mxu0 0
        %11228 = vmatprep.subr.bf16.mxu0 0
        %11229 = vmatpush2.bf16.msra.mxu0 0
        %11230 = vmatprep.subr.bf16.mxu0 0
        %11231 = vmatpush2.bf16.msra.mxu0 0
        %11232 = vmatprep.mubr.bf16.mxu0 0
        %11233 = vmatmul.mubr.bf16.gmra.mxu0 %v11120
        %v11234 = vpop.f32.mrf.mxu0
        %v11235 = vadd.f32 0.0, %v11234
        %v11236 = vpop.f32.mrf.mxu0
        %v11237 = vpop.f32.mrf.mxu0
        %v11238 = vadd.f32 0.0, %v11237
        %v11239 = vpop.f32.mrf.mxu0
        %11240 = vmatprep.mubr.bf16.mxu0 0
        %11241 = vmatmul.mubr.bf16.gmra.mxu0 %v11121
        %v11242 = vpop.f32.mrf.mxu0
        %v11243 = vadd.f32 0.0, %v11242
        %v11244 = vpop.f32.mrf.mxu0
        %v11245 = vpop.f32.mrf.mxu0
        %v11246 = vadd.f32 0.0, %v11245
        %v11247 = vpop.f32.mrf.mxu0
        %11248 = vmatprep.mubr.bf16.mxu0 0
        %11249 = vmatmul.mubr.bf16.gmra.mxu0 %v11122
        %v11250 = vpop.f32.mrf.mxu0
        %v11251 = vadd.f32 0.0, %v11250
        %v11252 = vpop.f32.mrf.mxu0
        %v11253 = vpop.f32.mrf.mxu0
        %v11254 = vadd.f32 0.0, %v11253
        %v11255 = vpop.f32.mrf.mxu0
        %11256 = vmatprep.mubr.bf16.mxu0 0
        %11257 = vmatmul.mubr.bf16.gmra.mxu0 %v11123
        %v11258 = vpop.f32.mrf.mxu0
        %v11259 = vadd.f32 0.0, %v11258
        %v11260 = vpop.f32.mrf.mxu0
        %v11261 = vpop.f32.mrf.mxu0
        %v11262 = vadd.f32 0.0, %v11261
        %v11263 = vpop.f32.mrf.mxu0
        %11264 = vmatprep.mubr.bf16.mxu0 0
        %11265 = vmatmul.mubr.bf16.gmra.mxu0 %v11124
        %v11266 = vpop.f32.mrf.mxu0
        %v11267 = vadd.f32 0.0, %v11266
        %v11268 = vpop.f32.mrf.mxu0
        %v11269 = vpop.f32.mrf.mxu0
        %v11270 = vadd.f32 0.0, %v11269
        %v11271 = vpop.f32.mrf.mxu0
        %11272 = vmatprep.mubr.bf16.mxu0 0
        %11273 = vmatmul.mubr.bf16.gmra.mxu0 %v11125
        %v11274 = vpop.f32.mrf.mxu0
        %v11275 = vadd.f32 0.0, %v11274
        %v11276 = vpop.f32.mrf.mxu0
        %v11277 = vpop.f32.mrf.mxu0
        %v11278 = vadd.f32 0.0, %v11277
        %v11279 = vpop.f32.mrf.mxu0
        %11280 = vmatprep.mubr.bf16.mxu0 0
        %11281 = vmatmul.mubr.bf16.gmra.mxu0 %v11126
        %v11282 = vpop.f32.mrf.mxu0
        %v11283 = vadd.f32 0.0, %v11282
        %v11284 = vpop.f32.mrf.mxu0
        %v11285 = vpop.f32.mrf.mxu0
        %v11286 = vadd.f32 0.0, %v11285
        %v11287 = vpop.f32.mrf.mxu0
        %11288 = vmatprep.mubr.bf16.mxu0 0
        %11289 = vmatmul.mubr.bf16.gmra.mxu0 %v11127
        %v11290 = vpop.f32.mrf.mxu0
        %v11291 = vadd.f32 0.0, %v11290
        %v11292 = vpop.f32.mrf.mxu0
        %v11293 = vpop.f32.mrf.mxu0
        %v11294 = vadd.f32 0.0, %v11293
        %v11295 = vpop.f32.mrf.mxu0
        %11296 = vmatprep.mubr.bf16.mxu0 0
        %11297 = vmatmul.mubr.bf16.gmra.mxu0 %v11128
        %v11298 = vpop.f32.mrf.mxu0
        %v11299 = vadd.f32 0.0, %v11298
        %v11300 = vpop.f32.mrf.mxu0
        %v11301 = vpop.f32.mrf.mxu0
        %v11302 = vadd.f32 0.0, %v11301
        %v11303 = vpop.f32.mrf.mxu0
        %11304 = vmatprep.mubr.bf16.mxu0 0
        %11305 = vmatmul.mubr.bf16.gmra.mxu0 %v11129
        %v11306 = vpop.f32.mrf.mxu0
        %v11307 = vadd.f32 0.0, %v11306
        %v11308 = vpop.f32.mrf.mxu0
        %v11309 = vpop.f32.mrf.mxu0
        %v11310 = vadd.f32 0.0, %v11309
        %v11311 = vpop.f32.mrf.mxu0
        %11312 = vmatprep.mubr.bf16.mxu0 0
        %11313 = vmatmul.mubr.bf16.gmra.mxu0 %v11130
        %v11314 = vpop.f32.mrf.mxu0
        %v11315 = vadd.f32 0.0, %v11314
        %v11316 = vpop.f32.mrf.mxu0
        %v11317 = vpop.f32.mrf.mxu0
        %v11318 = vadd.f32 0.0, %v11317
        %v11319 = vpop.f32.mrf.mxu0
        %11320 = vmatprep.mubr.bf16.mxu0 0
        %11321 = vmatmul.mubr.bf16.gmra.mxu0 %v11131
        %v11322 = vpop.f32.mrf.mxu0
        %v11323 = vadd.f32 0.0, %v11322
        %v11324 = vpop.f32.mrf.mxu0
        %v11325 = vpop.f32.mrf.mxu0
        %v11326 = vadd.f32 0.0, %v11325
        %v11327 = vpop.f32.mrf.mxu0
        %11328 = vmatprep.mubr.bf16.mxu0 0
        %11329 = vmatmul.mubr.bf16.gmra.mxu0 %v11132
        %v11330 = vpop.f32.mrf.mxu0
        %v11331 = vadd.f32 0.0, %v11330
        %v11332 = vpop.f32.mrf.mxu0
        %v11333 = vpop.f32.mrf.mxu0
        %v11334 = vadd.f32 0.0, %v11333
        %v11335 = vpop.f32.mrf.mxu0
        %11336 = vmatprep.mubr.bf16.mxu0 0
        %11337 = vmatmul.mubr.bf16.gmra.mxu0 %v11133
        %v11338 = vpop.f32.mrf.mxu0
        %v11339 = vadd.f32 0.0, %v11338
        %v11340 = vpop.f32.mrf.mxu0
        %v11341 = vpop.f32.mrf.mxu0
        %v11342 = vadd.f32 0.0, %v11341
        %v11343 = vpop.f32.mrf.mxu0
        %11344 = vmatprep.mubr.bf16.mxu0 0
        %11345 = vmatmul.mubr.bf16.gmra.mxu0 %v11134
        %v11346 = vpop.f32.mrf.mxu0
        %v11347 = vadd.f32 0.0, %v11346
        %v11348 = vpop.f32.mrf.mxu0
        %v11349 = vpop.f32.mrf.mxu0
        %v11350 = vadd.f32 0.0, %v11349
        %v11351 = vpop.f32.mrf.mxu0
        %11352 = vmatprep.mubr.bf16.mxu0 0
        %11353 = vmatmul.mubr.bf16.gmra.mxu0 %v11135
        %v11354 = vpop.f32.mrf.mxu0
        %v11355 = vadd.f32 0.0, %v11354
        %v11356 = vpop.f32.mrf.mxu0
        %v11357 = vpop.f32.mrf.mxu0
        %v11358 = vadd.f32 0.0, %v11357
        %v11359 = vpop.f32.mrf.mxu0
        %11360 = vdwg.mxu0
        %v11361 = vadd.f32 %v10560, %v11235
        %v11362 = vadd.f32 %v10561, %v11238
        %v11363 = vadd.f32 %v10562, %v11243
        %v11364 = vadd.f32 %v10563, %v11246
        %v11365 = vadd.f32 %v10564, %v11251
        %v11366 = vadd.f32 %v10565, %v11254
        %v11367 = vadd.f32 %v10566, %v11259
        %v11368 = vadd.f32 %v10567, %v11262
        %v11369 = vadd.f32 %v10568, %v11267
        %v11370 = vadd.f32 %v10569, %v11270
        %v11371 = vadd.f32 %v10570, %v11275
        %v11372 = vadd.f32 %v10571, %v11278
        %v11373 = vadd.f32 %v10572, %v11283
        %v11374 = vadd.f32 %v10573, %v11286
        %v11375 = vadd.f32 %v10574, %v11291
        %v11376 = vadd.f32 %v10575, %v11294
        %v11377 = vadd.f32 %v10576, %v11299
        %v11378 = vadd.f32 %v10577, %v11302
        %v11379 = vadd.f32 %v10578, %v11307
        %v11380 = vadd.f32 %v10579, %v11310
        %v11381 = vadd.f32 %v10580, %v11315
        %v11382 = vadd.f32 %v10581, %v11318
        %v11383 = vadd.f32 %v10582, %v11323
        %v11384 = vadd.f32 %v10583, %v11326
        %v11385 = vadd.f32 %v10584, %v11331
        %v11386 = vadd.f32 %v10585, %v11334
        %v11387 = vadd.f32 %v10586, %v11339
        %v11388 = vadd.f32 %v10587, %v11342
        %v11389 = vadd.f32 %v10588, %v11347
        %v11390 = vadd.f32 %v10589, %v11350
        %v11391 = vadd.f32 %v10590, %v11355
        %v11392 = vadd.f32 %v10591, %v11358
        %v11393 = vld [vmem:[#allocation8 + $0x1c0] sm:$0xf]
        %v11394 = vld [vmem:[#allocation8 + $0x1c4] sm:$0xf]
        %v11395 = vld [vmem:[#allocation8 + $0x1c8] sm:$0xf]
        %v11396 = vld [vmem:[#allocation8 + $0x1cc] sm:$0xf]
        %v11397 = vld [vmem:[#allocation8 + $0x1d0] sm:$0xf]
        %v11398 = vld [vmem:[#allocation8 + $0x1d4] sm:$0xf]
        %v11399 = vld [vmem:[#allocation8 + $0x1d8] sm:$0xf]
        %v11400 = vld [vmem:[#allocation8 + $0x1dc] sm:$0xf]
        %v11401 = vld [vmem:[#allocation8 + $0x1e0] sm:$0xf]
        %v11402 = vld [vmem:[#allocation8 + $0x1e4] sm:$0xf]
        %v11403 = vld [vmem:[#allocation8 + $0x1e8] sm:$0xf]
        %v11404 = vld [vmem:[#allocation8 + $0x1ec] sm:$0xf]
        %v11405 = vld [vmem:[#allocation8 + $0x1f0] sm:$0xf]
        %v11406 = vld [vmem:[#allocation8 + $0x1f4] sm:$0xf]
        %v11407 = vld [vmem:[#allocation8 + $0x1f8] sm:$0xf]
        %v11408 = vld [vmem:[#allocation8 + $0x1fc] sm:$0xf]
        %v11441 = vunpack.c.l.b16 %v10593
        %v11442 = vunpack.c.l.b16 %v10595
        %v11443 = vunpack.c.l.b16 %v10597
        %v11444 = vunpack.c.l.b16 %v10599
        %v11445 = vunpack.c.l.b16 %v10601
        %v11446 = vunpack.c.l.b16 %v10603
        %v11447 = vunpack.c.l.b16 %v10605
        %v11448 = vunpack.c.l.b16 %v10607
        %v11449 = vunpack.c.l.b16 %v10609
        %v11450 = vunpack.c.l.b16 %v10611
        %v11451 = vunpack.c.l.b16 %v10613
        %v11452 = vunpack.c.l.b16 %v10615
        %v11453 = vunpack.c.l.b16 %v10617
        %v11454 = vunpack.c.l.b16 %v10619
        %v11455 = vunpack.c.l.b16 %v10621
        %v11456 = vunpack.c.l.b16 %v10623
        %v11457 = vunpack.c.l.b16 %v10625
        %v11458 = vunpack.c.l.b16 %v10627
        %v11459 = vunpack.c.l.b16 %v10629
        %v11460 = vunpack.c.l.b16 %v10631
        %v11461 = vunpack.c.l.b16 %v10633
        %v11462 = vunpack.c.l.b16 %v10635
        %v11463 = vunpack.c.l.b16 %v10637
        %v11464 = vunpack.c.l.b16 %v10639
        %v11465 = vunpack.c.l.b16 %v10641
        %v11466 = vunpack.c.l.b16 %v10643
        %v11467 = vunpack.c.l.b16 %v10645
        %v11468 = vunpack.c.l.b16 %v10647
        %v11469 = vunpack.c.l.b16 %v10649
        %v11470 = vunpack.c.l.b16 %v10651
        %v11471 = vunpack.c.l.b16 %v10653
        %v11472 = vunpack.c.l.b16 %v10655
        %v11473 = vpack.c.b16 %v11442, %v11441
        %v11474 = vpack.c.b16 %v11444, %v11443
        %v11475 = vpack.c.b16 %v11446, %v11445
        %v11476 = vpack.c.b16 %v11448, %v11447
        %v11477 = vpack.c.b16 %v11450, %v11449
        %v11478 = vpack.c.b16 %v11452, %v11451
        %v11479 = vpack.c.b16 %v11454, %v11453
        %v11480 = vpack.c.b16 %v11456, %v11455
        %v11481 = vpack.c.b16 %v11458, %v11457
        %v11482 = vpack.c.b16 %v11460, %v11459
        %v11483 = vpack.c.b16 %v11462, %v11461
        %v11484 = vpack.c.b16 %v11464, %v11463
        %v11485 = vpack.c.b16 %v11466, %v11465
        %v11486 = vpack.c.b16 %v11468, %v11467
        %v11487 = vpack.c.b16 %v11470, %v11469
        %v11488 = vpack.c.b16 %v11472, %v11471
        %v11521 = vunpack.c.l.b16 %v11393
        %v11522 = vunpack.c.l.b16 %v11394
        %v11523 = vunpack.c.l.b16 %v11395
        %v11524 = vunpack.c.l.b16 %v11396
        %v11525 = vunpack.c.l.b16 %v11397
        %v11526 = vunpack.c.l.b16 %v11398
        %v11527 = vunpack.c.l.b16 %v11399
        %v11528 = vunpack.c.l.b16 %v11400
        %v11529 = vunpack.c.l.b16 %v11401
        %v11530 = vunpack.c.l.b16 %v11402
        %v11531 = vunpack.c.l.b16 %v11403
        %v11532 = vunpack.c.l.b16 %v11404
        %v11533 = vunpack.c.l.b16 %v11405
        %v11534 = vunpack.c.l.b16 %v11406
        %v11535 = vunpack.c.l.b16 %v11407
        %v11536 = vunpack.c.l.b16 %v11408
        %v11537 = vpack.c.b16 %v11522, %v11521
        %v11538 = vpack.c.b16 %v11524, %v11523
        %v11539 = vpack.c.b16 %v11526, %v11525
        %v11540 = vpack.c.b16 %v11528, %v11527
        %v11541 = vpack.c.b16 %v11530, %v11529
        %v11542 = vpack.c.b16 %v11532, %v11531
        %v11543 = vpack.c.b16 %v11534, %v11533
        %v11544 = vpack.c.b16 %v11536, %v11535
        %11553 = vmatprep.subr.bf16.mxu0 0
        %11554 = vmatpush1.bf16.msra.mxu0 %v11544
        %11555 = vmatprep.subr.bf16.mxu0 0
        %11556 = vmatpush1.bf16.msra.mxu0 %v11543
        %11557 = vmatprep.subr.bf16.mxu0 0
        %11558 = vmatpush1.bf16.msra.mxu0 %v11542
        %11559 = vmatprep.subr.bf16.mxu0 0
        %11560 = vmatpush1.bf16.msra.mxu0 %v11541
        %11561 = vmatprep.subr.bf16.mxu0 0
        %11562 = vmatpush1.bf16.msra.mxu0 %v11540
        %11563 = vmatprep.subr.bf16.mxu0 0
        %11564 = vmatpush1.bf16.msra.mxu0 %v11539
        %11565 = vmatprep.subr.bf16.mxu0 0
        %11566 = vmatpush1.bf16.msra.mxu0 %v11538
        %11567 = vmatprep.subr.bf16.mxu0 0
        %11568 = vmatpush1.bf16.msra.mxu0 %v11537
        %11569 = vmatprep.subr.bf16.mxu0 0
        %11570 = vmatpush2.bf16.msra.mxu0 0
        %11571 = vmatprep.subr.bf16.mxu0 0
        %11572 = vmatpush2.bf16.msra.mxu0 0
        %11573 = vmatprep.subr.bf16.mxu0 0
        %11574 = vmatpush2.bf16.msra.mxu0 0
        %11575 = vmatprep.subr.bf16.mxu0 0
        %11576 = vmatpush2.bf16.msra.mxu0 0
        %11577 = vmatprep.subr.bf16.mxu0 0
        %11578 = vmatpush2.bf16.msra.mxu0 0
        %11579 = vmatprep.subr.bf16.mxu0 0
        %11580 = vmatpush2.bf16.msra.mxu0 0
        %11581 = vmatprep.subr.bf16.mxu0 0
        %11582 = vmatpush2.bf16.msra.mxu0 0
        %11583 = vmatprep.subr.bf16.mxu0 0
        %11584 = vmatpush2.bf16.msra.mxu0 0
        %11585 = vmatprep.mubr.bf16.mxu0 0
        %11586 = vmatmul.mubr.bf16.gmra.mxu0 %v11473
        %v11587 = vpop.f32.mrf.mxu0
        %v11588 = vadd.f32 0.0, %v11587
        %v11589 = vpop.f32.mrf.mxu0
        %v11590 = vpop.f32.mrf.mxu0
        %v11591 = vadd.f32 0.0, %v11590
        %v11592 = vpop.f32.mrf.mxu0
        %11593 = vmatprep.mubr.bf16.mxu0 0
        %11594 = vmatmul.mubr.bf16.gmra.mxu0 %v11474
        %v11595 = vpop.f32.mrf.mxu0
        %v11596 = vadd.f32 0.0, %v11595
        %v11597 = vpop.f32.mrf.mxu0
        %v11598 = vpop.f32.mrf.mxu0
        %v11599 = vadd.f32 0.0, %v11598
        %v11600 = vpop.f32.mrf.mxu0
        %11601 = vmatprep.mubr.bf16.mxu0 0
        %11602 = vmatmul.mubr.bf16.gmra.mxu0 %v11475
        %v11603 = vpop.f32.mrf.mxu0
        %v11604 = vadd.f32 0.0, %v11603
        %v11605 = vpop.f32.mrf.mxu0
        %v11606 = vpop.f32.mrf.mxu0
        %v11607 = vadd.f32 0.0, %v11606
        %v11608 = vpop.f32.mrf.mxu0
        %11609 = vmatprep.mubr.bf16.mxu0 0
        %11610 = vmatmul.mubr.bf16.gmra.mxu0 %v11476
        %v11611 = vpop.f32.mrf.mxu0
        %v11612 = vadd.f32 0.0, %v11611
        %v11613 = vpop.f32.mrf.mxu0
        %v11614 = vpop.f32.mrf.mxu0
        %v11615 = vadd.f32 0.0, %v11614
        %v11616 = vpop.f32.mrf.mxu0
        %11617 = vmatprep.mubr.bf16.mxu0 0
        %11618 = vmatmul.mubr.bf16.gmra.mxu0 %v11477
        %v11619 = vpop.f32.mrf.mxu0
        %v11620 = vadd.f32 0.0, %v11619
        %v11621 = vpop.f32.mrf.mxu0
        %v11622 = vpop.f32.mrf.mxu0
        %v11623 = vadd.f32 0.0, %v11622
        %v11624 = vpop.f32.mrf.mxu0
        %11625 = vmatprep.mubr.bf16.mxu0 0
        %11626 = vmatmul.mubr.bf16.gmra.mxu0 %v11478
        %v11627 = vpop.f32.mrf.mxu0
        %v11628 = vadd.f32 0.0, %v11627
        %v11629 = vpop.f32.mrf.mxu0
        %v11630 = vpop.f32.mrf.mxu0
        %v11631 = vadd.f32 0.0, %v11630
        %v11632 = vpop.f32.mrf.mxu0
        %11633 = vmatprep.mubr.bf16.mxu0 0
        %11634 = vmatmul.mubr.bf16.gmra.mxu0 %v11479
        %v11635 = vpop.f32.mrf.mxu0
        %v11636 = vadd.f32 0.0, %v11635
        %v11637 = vpop.f32.mrf.mxu0
        %v11638 = vpop.f32.mrf.mxu0
        %v11639 = vadd.f32 0.0, %v11638
        %v11640 = vpop.f32.mrf.mxu0
        %11641 = vmatprep.mubr.bf16.mxu0 0
        %11642 = vmatmul.mubr.bf16.gmra.mxu0 %v11480
        %v11643 = vpop.f32.mrf.mxu0
        %v11644 = vadd.f32 0.0, %v11643
        %v11645 = vpop.f32.mrf.mxu0
        %v11646 = vpop.f32.mrf.mxu0
        %v11647 = vadd.f32 0.0, %v11646
        %v11648 = vpop.f32.mrf.mxu0
        %11649 = vmatprep.mubr.bf16.mxu0 0
        %11650 = vmatmul.mubr.bf16.gmra.mxu0 %v11481
        %v11651 = vpop.f32.mrf.mxu0
        %v11652 = vadd.f32 0.0, %v11651
        %v11653 = vpop.f32.mrf.mxu0
        %v11654 = vpop.f32.mrf.mxu0
        %v11655 = vadd.f32 0.0, %v11654
        %v11656 = vpop.f32.mrf.mxu0
        %11657 = vmatprep.mubr.bf16.mxu0 0
        %11658 = vmatmul.mubr.bf16.gmra.mxu0 %v11482
        %v11659 = vpop.f32.mrf.mxu0
        %v11660 = vadd.f32 0.0, %v11659
        %v11661 = vpop.f32.mrf.mxu0
        %v11662 = vpop.f32.mrf.mxu0
        %v11663 = vadd.f32 0.0, %v11662
        %v11664 = vpop.f32.mrf.mxu0
        %11665 = vmatprep.mubr.bf16.mxu0 0
        %11666 = vmatmul.mubr.bf16.gmra.mxu0 %v11483
        %v11667 = vpop.f32.mrf.mxu0
        %v11668 = vadd.f32 0.0, %v11667
        %v11669 = vpop.f32.mrf.mxu0
        %v11670 = vpop.f32.mrf.mxu0
        %v11671 = vadd.f32 0.0, %v11670
        %v11672 = vpop.f32.mrf.mxu0
        %11673 = vmatprep.mubr.bf16.mxu0 0
        %11674 = vmatmul.mubr.bf16.gmra.mxu0 %v11484
        %v11675 = vpop.f32.mrf.mxu0
        %v11676 = vadd.f32 0.0, %v11675
        %v11677 = vpop.f32.mrf.mxu0
        %v11678 = vpop.f32.mrf.mxu0
        %v11679 = vadd.f32 0.0, %v11678
        %v11680 = vpop.f32.mrf.mxu0
        %11681 = vmatprep.mubr.bf16.mxu0 0
        %11682 = vmatmul.mubr.bf16.gmra.mxu0 %v11485
        %v11683 = vpop.f32.mrf.mxu0
        %v11684 = vadd.f32 0.0, %v11683
        %v11685 = vpop.f32.mrf.mxu0
        %v11686 = vpop.f32.mrf.mxu0
        %v11687 = vadd.f32 0.0, %v11686
        %v11688 = vpop.f32.mrf.mxu0
        %11689 = vmatprep.mubr.bf16.mxu0 0
        %11690 = vmatmul.mubr.bf16.gmra.mxu0 %v11486
        %v11691 = vpop.f32.mrf.mxu0
        %v11692 = vadd.f32 0.0, %v11691
        %v11693 = vpop.f32.mrf.mxu0
        %v11694 = vpop.f32.mrf.mxu0
        %v11695 = vadd.f32 0.0, %v11694
        %v11696 = vpop.f32.mrf.mxu0
        %11697 = vmatprep.mubr.bf16.mxu0 0
        %11698 = vmatmul.mubr.bf16.gmra.mxu0 %v11487
        %v11699 = vpop.f32.mrf.mxu0
        %v11700 = vadd.f32 0.0, %v11699
        %v11701 = vpop.f32.mrf.mxu0
        %v11702 = vpop.f32.mrf.mxu0
        %v11703 = vadd.f32 0.0, %v11702
        %v11704 = vpop.f32.mrf.mxu0
        %11705 = vmatprep.mubr.bf16.mxu0 0
        %11706 = vmatmul.mubr.bf16.gmra.mxu0 %v11488
        %v11707 = vpop.f32.mrf.mxu0
        %v11708 = vadd.f32 0.0, %v11707
        %v11709 = vpop.f32.mrf.mxu0
        %v11710 = vpop.f32.mrf.mxu0
        %v11711 = vadd.f32 0.0, %v11710
        %v11712 = vpop.f32.mrf.mxu0
        %11713 = vdwg.mxu0
        %v11714 = vadd.f32 %v11361, %v11588
        %v11715 = vadd.f32 %v11362, %v11591
        %v11716 = vadd.f32 %v11363, %v11596
        %v11717 = vadd.f32 %v11364, %v11599
        %v11718 = vadd.f32 %v11365, %v11604
        %v11719 = vadd.f32 %v11366, %v11607
        %v11720 = vadd.f32 %v11367, %v11612
        %v11721 = vadd.f32 %v11368, %v11615
        %v11722 = vadd.f32 %v11369, %v11620
        %v11723 = vadd.f32 %v11370, %v11623
        %v11724 = vadd.f32 %v11371, %v11628
        %v11725 = vadd.f32 %v11372, %v11631
        %v11726 = vadd.f32 %v11373, %v11636
        %v11727 = vadd.f32 %v11374, %v11639
        %v11728 = vadd.f32 %v11375, %v11644
        %v11729 = vadd.f32 %v11376, %v11647
        %v11730 = vadd.f32 %v11377, %v11652
        %v11731 = vadd.f32 %v11378, %v11655
        %v11732 = vadd.f32 %v11379, %v11660
        %v11733 = vadd.f32 %v11380, %v11663
        %v11734 = vadd.f32 %v11381, %v11668
        %v11735 = vadd.f32 %v11382, %v11671
        %v11736 = vadd.f32 %v11383, %v11676
        %v11737 = vadd.f32 %v11384, %v11679
        %v11738 = vadd.f32 %v11385, %v11684
        %v11739 = vadd.f32 %v11386, %v11687
        %v11740 = vadd.f32 %v11387, %v11692
        %v11741 = vadd.f32 %v11388, %v11695
        %v11742 = vadd.f32 %v11389, %v11700
        %v11743 = vadd.f32 %v11390, %v11703
        %v11744 = vadd.f32 %v11391, %v11708
        %v11745 = vadd.f32 %v11392, %v11711
        %v11746 = vld [vmem:[%s4559 + $0x4] sm:$0xf]
        %v11747 = vld [vmem:[%s4559 + $0x8] sm:$0x1]
        %v11748 = vld [vmem:[%s4559 + $0x10] sm:$0xf]
        %v11749 = vld [vmem:[%s4559 + $0x14] sm:$0x1]
        %v11750 = vld [vmem:[%s4559 + $0x1c] sm:$0xf]
        %v11751 = vld [vmem:[%s4559 + $0x20] sm:$0x1]
        %v11752 = vld [vmem:[%s4559 + $0x28] sm:$0xf]
        %v11753 = vld [vmem:[%s4559 + $0x2c] sm:$0x1]
        %v11754 = vld [vmem:[%s4559 + $0x34] sm:$0xf]
        %v11755 = vld [vmem:[%s4559 + $0x38] sm:$0x1]
        %v11756 = vld [vmem:[%s4559 + $0x40] sm:$0xf]
        %v11757 = vld [vmem:[%s4559 + $0x44] sm:$0x1]
        %v11758 = vld [vmem:[%s4559 + $0x4c] sm:$0xf]
        %v11759 = vld [vmem:[%s4559 + $0x50] sm:$0x1]
        %v11760 = vld [vmem:[%s4559 + $0x58] sm:$0xf]
        %v11761 = vld [vmem:[%s4559 + $0x5c] sm:$0x1]
        %v11762 = vld [vmem:[%s4559 + $0x7c] sm:$0xf]
        %v11763 = vld [vmem:[%s4559 + $0x80] sm:$0x1]
        %v11764 = vld [vmem:[%s4559 + $0x88] sm:$0xf]
        %v11765 = vld [vmem:[%s4559 + $0x8c] sm:$0x1]
        %v11766 = vld [vmem:[%s4559 + $0x94] sm:$0xf]
        %v11767 = vld [vmem:[%s4559 + $0x98] sm:$0x1]
        %v11768 = vld [vmem:[%s4559 + $0xa0] sm:$0xf]
        %v11769 = vld [vmem:[%s4559 + $0xa4] sm:$0x1]
        %v11770 = vld [vmem:[%s4559 + $0xac] sm:$0xf]
        %v11771 = vld [vmem:[%s4559 + $0xb0] sm:$0x1]
        %v11772 = vld [vmem:[%s4559 + $0xb8] sm:$0xf]
        %v11773 = vld [vmem:[%s4559 + $0xbc] sm:$0x1]
        %v11774 = vld [vmem:[%s4559 + $0xc4] sm:$0xf]
        %v11775 = vld [vmem:[%s4559 + $0xc8] sm:$0x1]
        %v11776 = vld [vmem:[%s4559 + $0xd0] sm:$0xf]
        %v11777 = vld [vmem:[%s4559 + $0xd4] sm:$0x1]
        %v11778 = vld [vmem:[%s4559 + $0xf4] sm:$0xf]
        %v11779 = vld [vmem:[%s4559 + $0xf8] sm:$0x1]
        %v11780 = vld [vmem:[%s4559 + $0x100] sm:$0xf]
        %v11781 = vld [vmem:[%s4559 + $0x104] sm:$0x1]
        %v11782 = vld [vmem:[%s4559 + $0x10c] sm:$0xf]
        %v11783 = vld [vmem:[%s4559 + $0x110] sm:$0x1]
        %v11784 = vld [vmem:[%s4559 + $0x118] sm:$0xf]
        %v11785 = vld [vmem:[%s4559 + $0x11c] sm:$0x1]
        %v11786 = vld [vmem:[%s4559 + $0x124] sm:$0xf]
        %v11787 = vld [vmem:[%s4559 + $0x128] sm:$0x1]
        %v11788 = vld [vmem:[%s4559 + $0x130] sm:$0xf]
        %v11789 = vld [vmem:[%s4559 + $0x134] sm:$0x1]
        %v11790 = vld [vmem:[%s4559 + $0x13c] sm:$0xf]
        %v11791 = vld [vmem:[%s4559 + $0x140] sm:$0x1]
        %v11792 = vld [vmem:[%s4559 + $0x148] sm:$0xf]
        %v11793 = vld [vmem:[%s4559 + $0x14c] sm:$0x1]
        %v11794 = vld [vmem:[%s4559 + $0x16c] sm:$0xf]
        %v11795 = vld [vmem:[%s4559 + $0x170] sm:$0x1]
        %v11796 = vld [vmem:[%s4559 + $0x178] sm:$0xf]
        %v11797 = vld [vmem:[%s4559 + $0x17c] sm:$0x1]
        %v11798 = vld [vmem:[%s4559 + $0x184] sm:$0xf]
        %v11799 = vld [vmem:[%s4559 + $0x188] sm:$0x1]
        %v11800 = vld [vmem:[%s4559 + $0x190] sm:$0xf]
        %v11801 = vld [vmem:[%s4559 + $0x194] sm:$0x1]
        %v11802 = vld [vmem:[%s4559 + $0x19c] sm:$0xf]
        %v11803 = vld [vmem:[%s4559 + $0x1a0] sm:$0x1]
        %v11804 = vld [vmem:[%s4559 + $0x1a8] sm:$0xf]
        %v11805 = vld [vmem:[%s4559 + $0x1ac] sm:$0x1]
        %v11806 = vld [vmem:[%s4559 + $0x1b4] sm:$0xf]
        %v11807 = vld [vmem:[%s4559 + $0x1b8] sm:$0x1]
        %v11808 = vld [vmem:[%s4559 + $0x1c0] sm:$0xf]
        %v11809 = vld [vmem:[%s4559 + $0x1c4] sm:$0x1]
        %v11811 = vshrl.u32 %v11746, 16
        %v11813 = vrot.slane %v11811, 4
        %v11814 = vshll.u32 %v11746, 16
        %v11816 = vrot.slane %v11814, 5
        %v11817 = vor.u32 %v11813, %v11816
        %v11818 = vrot.slane %v11817, 4
        %v11820 = vshll.u32 %v11747, 16
        %v11822 = vrot.slane %v11820, 5
        %v11823 = vsel %vm1802, %v11818, %v11822
        %v11825 = vshrl.u32 %v11748, 16
        %v11827 = vrot.slane %v11825, 4
        %v11828 = vshll.u32 %v11748, 16
        %v11830 = vrot.slane %v11828, 5
        %v11831 = vor.u32 %v11827, %v11830
        %v11832 = vrot.slane %v11831, 4
        %v11834 = vshll.u32 %v11749, 16
        %v11836 = vrot.slane %v11834, 5
        %v11837 = vsel %vm1802, %v11832, %v11836
        %v11839 = vshrl.u32 %v11750, 16
        %v11841 = vrot.slane %v11839, 4
        %v11842 = vshll.u32 %v11750, 16
        %v11844 = vrot.slane %v11842, 5
        %v11845 = vor.u32 %v11841, %v11844
        %v11846 = vrot.slane %v11845, 4
        %v11848 = vshll.u32 %v11751, 16
        %v11850 = vrot.slane %v11848, 5
        %v11851 = vsel %vm1802, %v11846, %v11850
        %v11853 = vshrl.u32 %v11752, 16
        %v11855 = vrot.slane %v11853, 4
        %v11856 = vshll.u32 %v11752, 16
        %v11858 = vrot.slane %v11856, 5
        %v11859 = vor.u32 %v11855, %v11858
        %v11860 = vrot.slane %v11859, 4
        %v11862 = vshll.u32 %v11753, 16
        %v11864 = vrot.slane %v11862, 5
        %v11865 = vsel %vm1802, %v11860, %v11864
        %v11867 = vshrl.u32 %v11754, 16
        %v11869 = vrot.slane %v11867, 4
        %v11870 = vshll.u32 %v11754, 16
        %v11872 = vrot.slane %v11870, 5
        %v11873 = vor.u32 %v11869, %v11872
        %v11874 = vrot.slane %v11873, 4
        %v11876 = vshll.u32 %v11755, 16
        %v11878 = vrot.slane %v11876, 5
        %v11879 = vsel %vm1802, %v11874, %v11878
        %v11881 = vshrl.u32 %v11756, 16
        %v11883 = vrot.slane %v11881, 4
        %v11884 = vshll.u32 %v11756, 16
        %v11886 = vrot.slane %v11884, 5
        %v11887 = vor.u32 %v11883, %v11886
        %v11888 = vrot.slane %v11887, 4
        %v11890 = vshll.u32 %v11757, 16
        %v11892 = vrot.slane %v11890, 5
        %v11893 = vsel %vm1802, %v11888, %v11892
        %v11895 = vshrl.u32 %v11758, 16
        %v11897 = vrot.slane %v11895, 4
        %v11898 = vshll.u32 %v11758, 16
        %v11900 = vrot.slane %v11898, 5
        %v11901 = vor.u32 %v11897, %v11900
        %v11902 = vrot.slane %v11901, 4
        %v11904 = vshll.u32 %v11759, 16
        %v11906 = vrot.slane %v11904, 5
        %v11907 = vsel %vm1802, %v11902, %v11906
        %v11909 = vshrl.u32 %v11760, 16
        %v11911 = vrot.slane %v11909, 4
        %v11912 = vshll.u32 %v11760, 16
        %v11914 = vrot.slane %v11912, 5
        %v11915 = vor.u32 %v11911, %v11914
        %v11916 = vrot.slane %v11915, 4
        %v11918 = vshll.u32 %v11761, 16
        %v11920 = vrot.slane %v11918, 5
        %v11921 = vsel %vm1802, %v11916, %v11920
        %v11923 = vshrl.u32 %v11762, 16
        %v11925 = vrot.slane %v11923, 4
        %v11926 = vshll.u32 %v11762, 16
        %v11928 = vrot.slane %v11926, 5
        %v11929 = vor.u32 %v11925, %v11928
        %v11930 = vrot.slane %v11929, 4
        %v11932 = vshll.u32 %v11763, 16
        %v11934 = vrot.slane %v11932, 5
        %v11935 = vsel %vm1802, %v11930, %v11934
        %v11937 = vshrl.u32 %v11764, 16
        %v11939 = vrot.slane %v11937, 4
        %v11940 = vshll.u32 %v11764, 16
        %v11942 = vrot.slane %v11940, 5
        %v11943 = vor.u32 %v11939, %v11942
        %v11944 = vrot.slane %v11943, 4
        %v11946 = vshll.u32 %v11765, 16
        %v11948 = vrot.slane %v11946, 5
        %v11949 = vsel %vm1802, %v11944, %v11948
        %v11951 = vshrl.u32 %v11766, 16
        %v11953 = vrot.slane %v11951, 4
        %v11954 = vshll.u32 %v11766, 16
        %v11956 = vrot.slane %v11954, 5
        %v11957 = vor.u32 %v11953, %v11956
        %v11958 = vrot.slane %v11957, 4
        %v11960 = vshll.u32 %v11767, 16
        %v11962 = vrot.slane %v11960, 5
        %v11963 = vsel %vm1802, %v11958, %v11962
        %v11965 = vshrl.u32 %v11768, 16
        %v11967 = vrot.slane %v11965, 4
        %v11968 = vshll.u32 %v11768, 16
        %v11970 = vrot.slane %v11968, 5
        %v11971 = vor.u32 %v11967, %v11970
        %v11972 = vrot.slane %v11971, 4
        %v11974 = vshll.u32 %v11769, 16
        %v11976 = vrot.slane %v11974, 5
        %v11977 = vsel %vm1802, %v11972, %v11976
        %v11979 = vshrl.u32 %v11770, 16
        %v11981 = vrot.slane %v11979, 4
        %v11982 = vshll.u32 %v11770, 16
        %v11984 = vrot.slane %v11982, 5
        %v11985 = vor.u32 %v11981, %v11984
        %v11986 = vrot.slane %v11985, 4
        %v11988 = vshll.u32 %v11771, 16
        %v11990 = vrot.slane %v11988, 5
        %v11991 = vsel %vm1802, %v11986, %v11990
        %v11993 = vshrl.u32 %v11772, 16
        %v11995 = vrot.slane %v11993, 4
        %v11996 = vshll.u32 %v11772, 16
        %v11998 = vrot.slane %v11996, 5
        %v11999 = vor.u32 %v11995, %v11998
        %v12000 = vrot.slane %v11999, 4
        %v12002 = vshll.u32 %v11773, 16
        %v12004 = vrot.slane %v12002, 5
        %v12005 = vsel %vm1802, %v12000, %v12004
        %v12007 = vshrl.u32 %v11774, 16
        %v12009 = vrot.slane %v12007, 4
        %v12010 = vshll.u32 %v11774, 16
        %v12012 = vrot.slane %v12010, 5
        %v12013 = vor.u32 %v12009, %v12012
        %v12014 = vrot.slane %v12013, 4
        %v12016 = vshll.u32 %v11775, 16
        %v12018 = vrot.slane %v12016, 5
        %v12019 = vsel %vm1802, %v12014, %v12018
        %v12021 = vshrl.u32 %v11776, 16
        %v12023 = vrot.slane %v12021, 4
        %v12024 = vshll.u32 %v11776, 16
        %v12026 = vrot.slane %v12024, 5
        %v12027 = vor.u32 %v12023, %v12026
        %v12028 = vrot.slane %v12027, 4
        %v12030 = vshll.u32 %v11777, 16
        %v12032 = vrot.slane %v12030, 5
        %v12033 = vsel %vm1802, %v12028, %v12032
        %v12035 = vshrl.u32 %v11778, 16
        %v12037 = vrot.slane %v12035, 4
        %v12038 = vshll.u32 %v11778, 16
        %v12040 = vrot.slane %v12038, 5
        %v12041 = vor.u32 %v12037, %v12040
        %v12042 = vrot.slane %v12041, 4
        %v12044 = vshll.u32 %v11779, 16
        %v12046 = vrot.slane %v12044, 5
        %v12047 = vsel %vm1802, %v12042, %v12046
        %v12049 = vshrl.u32 %v11780, 16
        %v12051 = vrot.slane %v12049, 4
        %v12052 = vshll.u32 %v11780, 16
        %v12054 = vrot.slane %v12052, 5
        %v12055 = vor.u32 %v12051, %v12054
        %v12056 = vrot.slane %v12055, 4
        %v12058 = vshll.u32 %v11781, 16
        %v12060 = vrot.slane %v12058, 5
        %v12061 = vsel %vm1802, %v12056, %v12060
        %v12063 = vshrl.u32 %v11782, 16
        %v12065 = vrot.slane %v12063, 4
        %v12066 = vshll.u32 %v11782, 16
        %v12068 = vrot.slane %v12066, 5
        %v12069 = vor.u32 %v12065, %v12068
        %v12070 = vrot.slane %v12069, 4
        %v12072 = vshll.u32 %v11783, 16
        %v12074 = vrot.slane %v12072, 5
        %v12075 = vsel %vm1802, %v12070, %v12074
        %v12077 = vshrl.u32 %v11784, 16
        %v12079 = vrot.slane %v12077, 4
        %v12080 = vshll.u32 %v11784, 16
        %v12082 = vrot.slane %v12080, 5
        %v12083 = vor.u32 %v12079, %v12082
        %v12084 = vrot.slane %v12083, 4
        %v12086 = vshll.u32 %v11785, 16
        %v12088 = vrot.slane %v12086, 5
        %v12089 = vsel %vm1802, %v12084, %v12088
        %v12091 = vshrl.u32 %v11786, 16
        %v12093 = vrot.slane %v12091, 4
        %v12094 = vshll.u32 %v11786, 16
        %v12096 = vrot.slane %v12094, 5
        %v12097 = vor.u32 %v12093, %v12096
        %v12098 = vrot.slane %v12097, 4
        %v12100 = vshll.u32 %v11787, 16
        %v12102 = vrot.slane %v12100, 5
        %v12103 = vsel %vm1802, %v12098, %v12102
        %v12105 = vshrl.u32 %v11788, 16
        %v12107 = vrot.slane %v12105, 4
        %v12108 = vshll.u32 %v11788, 16
        %v12110 = vrot.slane %v12108, 5
        %v12111 = vor.u32 %v12107, %v12110
        %v12112 = vrot.slane %v12111, 4
        %v12114 = vshll.u32 %v11789, 16
        %v12116 = vrot.slane %v12114, 5
        %v12117 = vsel %vm1802, %v12112, %v12116
        %v12119 = vshrl.u32 %v11790, 16
        %v12121 = vrot.slane %v12119, 4
        %v12122 = vshll.u32 %v11790, 16
        %v12124 = vrot.slane %v12122, 5
        %v12125 = vor.u32 %v12121, %v12124
        %v12126 = vrot.slane %v12125, 4
        %v12128 = vshll.u32 %v11791, 16
        %v12130 = vrot.slane %v12128, 5
        %v12131 = vsel %vm1802, %v12126, %v12130
        %v12133 = vshrl.u32 %v11792, 16
        %v12135 = vrot.slane %v12133, 4
        %v12136 = vshll.u32 %v11792, 16
        %v12138 = vrot.slane %v12136, 5
        %v12139 = vor.u32 %v12135, %v12138
        %v12140 = vrot.slane %v12139, 4
        %v12142 = vshll.u32 %v11793, 16
        %v12144 = vrot.slane %v12142, 5
        %v12145 = vsel %vm1802, %v12140, %v12144
        %v12147 = vshrl.u32 %v11794, 16
        %v12149 = vrot.slane %v12147, 4
        %v12150 = vshll.u32 %v11794, 16
        %v12152 = vrot.slane %v12150, 5
        %v12153 = vor.u32 %v12149, %v12152
        %v12154 = vrot.slane %v12153, 4
        %v12156 = vshll.u32 %v11795, 16
        %v12158 = vrot.slane %v12156, 5
        %v12159 = vsel %vm1802, %v12154, %v12158
        %v12161 = vshrl.u32 %v11796, 16
        %v12163 = vrot.slane %v12161, 4
        %v12164 = vshll.u32 %v11796, 16
        %v12166 = vrot.slane %v12164, 5
        %v12167 = vor.u32 %v12163, %v12166
        %v12168 = vrot.slane %v12167, 4
        %v12170 = vshll.u32 %v11797, 16
        %v12172 = vrot.slane %v12170, 5
        %v12173 = vsel %vm1802, %v12168, %v12172
        %v12175 = vshrl.u32 %v11798, 16
        %v12177 = vrot.slane %v12175, 4
        %v12178 = vshll.u32 %v11798, 16
        %v12180 = vrot.slane %v12178, 5
        %v12181 = vor.u32 %v12177, %v12180
        %v12182 = vrot.slane %v12181, 4
        %v12184 = vshll.u32 %v11799, 16
        %v12186 = vrot.slane %v12184, 5
        %v12187 = vsel %vm1802, %v12182, %v12186
        %v12189 = vshrl.u32 %v11800, 16
        %v12191 = vrot.slane %v12189, 4
        %v12192 = vshll.u32 %v11800, 16
        %v12194 = vrot.slane %v12192, 5
        %v12195 = vor.u32 %v12191, %v12194
        %v12196 = vrot.slane %v12195, 4
        %v12198 = vshll.u32 %v11801, 16
        %v12200 = vrot.slane %v12198, 5
        %v12201 = vsel %vm1802, %v12196, %v12200
        %v12203 = vshrl.u32 %v11802, 16
        %v12205 = vrot.slane %v12203, 4
        %v12206 = vshll.u32 %v11802, 16
        %v12208 = vrot.slane %v12206, 5
        %v12209 = vor.u32 %v12205, %v12208
        %v12210 = vrot.slane %v12209, 4
        %v12212 = vshll.u32 %v11803, 16
        %v12214 = vrot.slane %v12212, 5
        %v12215 = vsel %vm1802, %v12210, %v12214
        %v12217 = vshrl.u32 %v11804, 16
        %v12219 = vrot.slane %v12217, 4
        %v12220 = vshll.u32 %v11804, 16
        %v12222 = vrot.slane %v12220, 5
        %v12223 = vor.u32 %v12219, %v12222
        %v12224 = vrot.slane %v12223, 4
        %v12226 = vshll.u32 %v11805, 16
        %v12228 = vrot.slane %v12226, 5
        %v12229 = vsel %vm1802, %v12224, %v12228
        %v12231 = vshrl.u32 %v11806, 16
        %v12233 = vrot.slane %v12231, 4
        %v12234 = vshll.u32 %v11806, 16
        %v12236 = vrot.slane %v12234, 5
        %v12237 = vor.u32 %v12233, %v12236
        %v12238 = vrot.slane %v12237, 4
        %v12240 = vshll.u32 %v11807, 16
        %v12242 = vrot.slane %v12240, 5
        %v12243 = vsel %vm1802, %v12238, %v12242
        %v12245 = vshrl.u32 %v11808, 16
        %v12247 = vrot.slane %v12245, 4
        %v12248 = vshll.u32 %v11808, 16
        %v12250 = vrot.slane %v12248, 5
        %v12251 = vor.u32 %v12247, %v12250
        %v12252 = vrot.slane %v12251, 4
        %v12254 = vshll.u32 %v11809, 16
        %v12256 = vrot.slane %v12254, 5
        %v12257 = vsel %vm1802, %v12252, %v12256
        %v12258 = vld [vmem:[#allocation8 + $0x200] sm:$0xf]
        %v12259 = vld [vmem:[#allocation8 + $0x204] sm:$0xf]
        %v12260 = vld [vmem:[#allocation8 + $0x208] sm:$0xf]
        %v12261 = vld [vmem:[#allocation8 + $0x20c] sm:$0xf]
        %v12262 = vld [vmem:[#allocation8 + $0x210] sm:$0xf]
        %v12263 = vld [vmem:[#allocation8 + $0x214] sm:$0xf]
        %v12264 = vld [vmem:[#allocation8 + $0x218] sm:$0xf]
        %v12265 = vld [vmem:[#allocation8 + $0x21c] sm:$0xf]
        %v12266 = vld [vmem:[#allocation8 + $0x220] sm:$0xf]
        %v12267 = vld [vmem:[#allocation8 + $0x224] sm:$0xf]
        %v12268 = vld [vmem:[#allocation8 + $0x228] sm:$0xf]
        %v12269 = vld [vmem:[#allocation8 + $0x22c] sm:$0xf]
        %v12270 = vld [vmem:[#allocation8 + $0x230] sm:$0xf]
        %v12271 = vld [vmem:[#allocation8 + $0x234] sm:$0xf]
        %v12272 = vld [vmem:[#allocation8 + $0x238] sm:$0xf]
        %v12273 = vld [vmem:[#allocation8 + $0x23c] sm:$0xf]
        %v12274 = vunpack.c.l.b16 %v11823
        %v12275 = vunpack.c.l.b16 %v11837
        %v12276 = vunpack.c.l.b16 %v11851
        %v12277 = vunpack.c.l.b16 %v11865
        %v12278 = vunpack.c.l.b16 %v11879
        %v12279 = vunpack.c.l.b16 %v11893
        %v12280 = vunpack.c.l.b16 %v11907
        %v12281 = vunpack.c.l.b16 %v11921
        %v12282 = vunpack.c.l.b16 %v11935
        %v12283 = vunpack.c.l.b16 %v11949
        %v12284 = vunpack.c.l.b16 %v11963
        %v12285 = vunpack.c.l.b16 %v11977
        %v12286 = vunpack.c.l.b16 %v11991
        %v12287 = vunpack.c.l.b16 %v12005
        %v12288 = vunpack.c.l.b16 %v12019
        %v12289 = vunpack.c.l.b16 %v12033
        %v12290 = vunpack.c.l.b16 %v12047
        %v12291 = vunpack.c.l.b16 %v12061
        %v12292 = vunpack.c.l.b16 %v12075
        %v12293 = vunpack.c.l.b16 %v12089
        %v12294 = vunpack.c.l.b16 %v12103
        %v12295 = vunpack.c.l.b16 %v12117
        %v12296 = vunpack.c.l.b16 %v12131
        %v12297 = vunpack.c.l.b16 %v12145
        %v12298 = vunpack.c.l.b16 %v12159
        %v12299 = vunpack.c.l.b16 %v12173
        %v12300 = vunpack.c.l.b16 %v12187
        %v12301 = vunpack.c.l.b16 %v12201
        %v12302 = vunpack.c.l.b16 %v12215
        %v12303 = vunpack.c.l.b16 %v12229
        %v12304 = vunpack.c.l.b16 %v12243
        %v12305 = vunpack.c.l.b16 %v12257
        %v12306 = vpack.c.b16 %v12275, %v12274
        %v12307 = vpack.c.b16 %v12277, %v12276
        %v12308 = vpack.c.b16 %v12279, %v12278
        %v12309 = vpack.c.b16 %v12281, %v12280
        %v12310 = vpack.c.b16 %v12283, %v12282
        %v12311 = vpack.c.b16 %v12285, %v12284
        %v12312 = vpack.c.b16 %v12287, %v12286
        %v12313 = vpack.c.b16 %v12289, %v12288
        %v12314 = vpack.c.b16 %v12291, %v12290
        %v12315 = vpack.c.b16 %v12293, %v12292
        %v12316 = vpack.c.b16 %v12295, %v12294
        %v12317 = vpack.c.b16 %v12297, %v12296
        %v12318 = vpack.c.b16 %v12299, %v12298
        %v12319 = vpack.c.b16 %v12301, %v12300
        %v12320 = vpack.c.b16 %v12303, %v12302
        %v12321 = vpack.c.b16 %v12305, %v12304
        %v12354 = vunpack.c.l.b16 %v12258
        %v12355 = vunpack.c.l.b16 %v12259
        %v12356 = vunpack.c.l.b16 %v12260
        %v12357 = vunpack.c.l.b16 %v12261
        %v12358 = vunpack.c.l.b16 %v12262
        %v12359 = vunpack.c.l.b16 %v12263
        %v12360 = vunpack.c.l.b16 %v12264
        %v12361 = vunpack.c.l.b16 %v12265
        %v12362 = vunpack.c.l.b16 %v12266
        %v12363 = vunpack.c.l.b16 %v12267
        %v12364 = vunpack.c.l.b16 %v12268
        %v12365 = vunpack.c.l.b16 %v12269
        %v12366 = vunpack.c.l.b16 %v12270
        %v12367 = vunpack.c.l.b16 %v12271
        %v12368 = vunpack.c.l.b16 %v12272
        %v12369 = vunpack.c.l.b16 %v12273
        %v12370 = vpack.c.b16 %v12355, %v12354
        %v12371 = vpack.c.b16 %v12357, %v12356
        %v12372 = vpack.c.b16 %v12359, %v12358
        %v12373 = vpack.c.b16 %v12361, %v12360
        %v12374 = vpack.c.b16 %v12363, %v12362
        %v12375 = vpack.c.b16 %v12365, %v12364
        %v12376 = vpack.c.b16 %v12367, %v12366
        %v12377 = vpack.c.b16 %v12369, %v12368
        %12386 = vmatprep.subr.bf16.mxu0 0
        %12387 = vmatpush1.bf16.msra.mxu0 %v12377
        %12388 = vmatprep.subr.bf16.mxu0 0
        %12389 = vmatpush1.bf16.msra.mxu0 %v12376
        %12390 = vmatprep.subr.bf16.mxu0 0
        %12391 = vmatpush1.bf16.msra.mxu0 %v12375
        %12392 = vmatprep.subr.bf16.mxu0 0
        %12393 = vmatpush1.bf16.msra.mxu0 %v12374
        %12394 = vmatprep.subr.bf16.mxu0 0
        %12395 = vmatpush1.bf16.msra.mxu0 %v12373
        %12396 = vmatprep.subr.bf16.mxu0 0
        %12397 = vmatpush1.bf16.msra.mxu0 %v12372
        %12398 = vmatprep.subr.bf16.mxu0 0
        %12399 = vmatpush1.bf16.msra.mxu0 %v12371
        %12400 = vmatprep.subr.bf16.mxu0 0
        %12401 = vmatpush1.bf16.msra.mxu0 %v12370
        %12402 = vmatprep.subr.bf16.mxu0 0
        %12403 = vmatpush2.bf16.msra.mxu0 0
        %12404 = vmatprep.subr.bf16.mxu0 0
        %12405 = vmatpush2.bf16.msra.mxu0 0
        %12406 = vmatprep.subr.bf16.mxu0 0
        %12407 = vmatpush2.bf16.msra.mxu0 0
        %12408 = vmatprep.subr.bf16.mxu0 0
        %12409 = vmatpush2.bf16.msra.mxu0 0
        %12410 = vmatprep.subr.bf16.mxu0 0
        %12411 = vmatpush2.bf16.msra.mxu0 0
        %12412 = vmatprep.subr.bf16.mxu0 0
        %12413 = vmatpush2.bf16.msra.mxu0 0
        %12414 = vmatprep.subr.bf16.mxu0 0
        %12415 = vmatpush2.bf16.msra.mxu0 0
        %12416 = vmatprep.subr.bf16.mxu0 0
        %12417 = vmatpush2.bf16.msra.mxu0 0
        %12418 = vmatprep.mubr.bf16.mxu0 0
        %12419 = vmatmul.mubr.bf16.gmra.mxu0 %v12306
        %v12420 = vpop.f32.mrf.mxu0
        %v12421 = vadd.f32 0.0, %v12420
        %v12422 = vpop.f32.mrf.mxu0
        %v12423 = vpop.f32.mrf.mxu0
        %v12424 = vadd.f32 0.0, %v12423
        %v12425 = vpop.f32.mrf.mxu0
        %12426 = vmatprep.mubr.bf16.mxu0 0
        %12427 = vmatmul.mubr.bf16.gmra.mxu0 %v12307
        %v12428 = vpop.f32.mrf.mxu0
        %v12429 = vadd.f32 0.0, %v12428
        %v12430 = vpop.f32.mrf.mxu0
        %v12431 = vpop.f32.mrf.mxu0
        %v12432 = vadd.f32 0.0, %v12431
        %v12433 = vpop.f32.mrf.mxu0
        %12434 = vmatprep.mubr.bf16.mxu0 0
        %12435 = vmatmul.mubr.bf16.gmra.mxu0 %v12308
        %v12436 = vpop.f32.mrf.mxu0
        %v12437 = vadd.f32 0.0, %v12436
        %v12438 = vpop.f32.mrf.mxu0
        %v12439 = vpop.f32.mrf.mxu0
        %v12440 = vadd.f32 0.0, %v12439
        %v12441 = vpop.f32.mrf.mxu0
        %12442 = vmatprep.mubr.bf16.mxu0 0
        %12443 = vmatmul.mubr.bf16.gmra.mxu0 %v12309
        %v12444 = vpop.f32.mrf.mxu0
        %v12445 = vadd.f32 0.0, %v12444
        %v12446 = vpop.f32.mrf.mxu0
        %v12447 = vpop.f32.mrf.mxu0
        %v12448 = vadd.f32 0.0, %v12447
        %v12449 = vpop.f32.mrf.mxu0
        %12450 = vmatprep.mubr.bf16.mxu0 0
        %12451 = vmatmul.mubr.bf16.gmra.mxu0 %v12310
        %v12452 = vpop.f32.mrf.mxu0
        %v12453 = vadd.f32 0.0, %v12452
        %v12454 = vpop.f32.mrf.mxu0
        %v12455 = vpop.f32.mrf.mxu0
        %v12456 = vadd.f32 0.0, %v12455
        %v12457 = vpop.f32.mrf.mxu0
        %12458 = vmatprep.mubr.bf16.mxu0 0
        %12459 = vmatmul.mubr.bf16.gmra.mxu0 %v12311
        %v12460 = vpop.f32.mrf.mxu0
        %v12461 = vadd.f32 0.0, %v12460
        %v12462 = vpop.f32.mrf.mxu0
        %v12463 = vpop.f32.mrf.mxu0
        %v12464 = vadd.f32 0.0, %v12463
        %v12465 = vpop.f32.mrf.mxu0
        %12466 = vmatprep.mubr.bf16.mxu0 0
        %12467 = vmatmul.mubr.bf16.gmra.mxu0 %v12312
        %v12468 = vpop.f32.mrf.mxu0
        %v12469 = vadd.f32 0.0, %v12468
        %v12470 = vpop.f32.mrf.mxu0
        %v12471 = vpop.f32.mrf.mxu0
        %v12472 = vadd.f32 0.0, %v12471
        %v12473 = vpop.f32.mrf.mxu0
        %12474 = vmatprep.mubr.bf16.mxu0 0
        %12475 = vmatmul.mubr.bf16.gmra.mxu0 %v12313
        %v12476 = vpop.f32.mrf.mxu0
        %v12477 = vadd.f32 0.0, %v12476
        %v12478 = vpop.f32.mrf.mxu0
        %v12479 = vpop.f32.mrf.mxu0
        %v12480 = vadd.f32 0.0, %v12479
        %v12481 = vpop.f32.mrf.mxu0
        %12482 = vmatprep.mubr.bf16.mxu0 0
        %12483 = vmatmul.mubr.bf16.gmra.mxu0 %v12314
        %v12484 = vpop.f32.mrf.mxu0
        %v12485 = vadd.f32 0.0, %v12484
        %v12486 = vpop.f32.mrf.mxu0
        %v12487 = vpop.f32.mrf.mxu0
        %v12488 = vadd.f32 0.0, %v12487
        %v12489 = vpop.f32.mrf.mxu0
        %12490 = vmatprep.mubr.bf16.mxu0 0
        %12491 = vmatmul.mubr.bf16.gmra.mxu0 %v12315
        %v12492 = vpop.f32.mrf.mxu0
        %v12493 = vadd.f32 0.0, %v12492
        %v12494 = vpop.f32.mrf.mxu0
        %v12495 = vpop.f32.mrf.mxu0
        %v12496 = vadd.f32 0.0, %v12495
        %v12497 = vpop.f32.mrf.mxu0
        %12498 = vmatprep.mubr.bf16.mxu0 0
        %12499 = vmatmul.mubr.bf16.gmra.mxu0 %v12316
        %v12500 = vpop.f32.mrf.mxu0
        %v12501 = vadd.f32 0.0, %v12500
        %v12502 = vpop.f32.mrf.mxu0
        %v12503 = vpop.f32.mrf.mxu0
        %v12504 = vadd.f32 0.0, %v12503
        %v12505 = vpop.f32.mrf.mxu0
        %12506 = vmatprep.mubr.bf16.mxu0 0
        %12507 = vmatmul.mubr.bf16.gmra.mxu0 %v12317
        %v12508 = vpop.f32.mrf.mxu0
        %v12509 = vadd.f32 0.0, %v12508
        %v12510 = vpop.f32.mrf.mxu0
        %v12511 = vpop.f32.mrf.mxu0
        %v12512 = vadd.f32 0.0, %v12511
        %v12513 = vpop.f32.mrf.mxu0
        %12514 = vmatprep.mubr.bf16.mxu0 0
        %12515 = vmatmul.mubr.bf16.gmra.mxu0 %v12318
        %v12516 = vpop.f32.mrf.mxu0
        %v12517 = vadd.f32 0.0, %v12516
        %v12518 = vpop.f32.mrf.mxu0
        %v12519 = vpop.f32.mrf.mxu0
        %v12520 = vadd.f32 0.0, %v12519
        %v12521 = vpop.f32.mrf.mxu0
        %12522 = vmatprep.mubr.bf16.mxu0 0
        %12523 = vmatmul.mubr.bf16.gmra.mxu0 %v12319
        %v12524 = vpop.f32.mrf.mxu0
        %v12525 = vadd.f32 0.0, %v12524
        %v12526 = vpop.f32.mrf.mxu0
        %v12527 = vpop.f32.mrf.mxu0
        %v12528 = vadd.f32 0.0, %v12527
        %v12529 = vpop.f32.mrf.mxu0
        %12530 = vmatprep.mubr.bf16.mxu0 0
        %12531 = vmatmul.mubr.bf16.gmra.mxu0 %v12320
        %v12532 = vpop.f32.mrf.mxu0
        %v12533 = vadd.f32 0.0, %v12532
        %v12534 = vpop.f32.mrf.mxu0
        %v12535 = vpop.f32.mrf.mxu0
        %v12536 = vadd.f32 0.0, %v12535
        %v12537 = vpop.f32.mrf.mxu0
        %12538 = vmatprep.mubr.bf16.mxu0 0
        %12539 = vmatmul.mubr.bf16.gmra.mxu0 %v12321
        %v12540 = vpop.f32.mrf.mxu0
        %v12541 = vadd.f32 0.0, %v12540
        %v12542 = vpop.f32.mrf.mxu0
        %v12543 = vpop.f32.mrf.mxu0
        %v12544 = vadd.f32 0.0, %v12543
        %v12545 = vpop.f32.mrf.mxu0
        %12546 = vdwg.mxu0
        %v12547 = vadd.f32 %v11714, %v12421
        %v12548 = vadd.f32 %v11715, %v12424
        %v12549 = vadd.f32 %v11716, %v12429
        %v12550 = vadd.f32 %v11717, %v12432
        %v12551 = vadd.f32 %v11718, %v12437
        %v12552 = vadd.f32 %v11719, %v12440
        %v12553 = vadd.f32 %v11720, %v12445
        %v12554 = vadd.f32 %v11721, %v12448
        %v12555 = vadd.f32 %v11722, %v12453
        %v12556 = vadd.f32 %v11723, %v12456
        %v12557 = vadd.f32 %v11724, %v12461
        %v12558 = vadd.f32 %v11725, %v12464
        %v12559 = vadd.f32 %v11726, %v12469
        %v12560 = vadd.f32 %v11727, %v12472
        %v12561 = vadd.f32 %v11728, %v12477
        %v12562 = vadd.f32 %v11729, %v12480
        %v12563 = vadd.f32 %v11730, %v12485
        %v12564 = vadd.f32 %v11731, %v12488
        %v12565 = vadd.f32 %v11732, %v12493
        %v12566 = vadd.f32 %v11733, %v12496
        %v12567 = vadd.f32 %v11734, %v12501
        %v12568 = vadd.f32 %v11735, %v12504
        %v12569 = vadd.f32 %v11736, %v12509
        %v12570 = vadd.f32 %v11737, %v12512
        %v12571 = vadd.f32 %v11738, %v12517
        %v12572 = vadd.f32 %v11739, %v12520
        %v12573 = vadd.f32 %v11740, %v12525
        %v12574 = vadd.f32 %v11741, %v12528
        %v12575 = vadd.f32 %v11742, %v12533
        %v12576 = vadd.f32 %v11743, %v12536
        %v12577 = vadd.f32 %v11744, %v12541
        %v12578 = vadd.f32 %v11745, %v12544
        %v12579 = vld [vmem:[%s4] sm:$0x1]
        %v12581 = vlaneseq
        %v12582 = vshrl.u32 %v12581, 7
        %v12583 = vsub.s32 0, %v12582
        %v12584 = vrot.slane %v12579, %v12583
        %v12586 = vadd.f32 %v12547, %v12584
        %v12587 = vadd.f32 %v12548, %v12584
        %v12588 = vadd.f32 %v12549, %v12584
        %v12589 = vadd.f32 %v12550, %v12584
        %v12590 = vadd.f32 %v12551, %v12584
        %v12591 = vadd.f32 %v12552, %v12584
        %v12592 = vadd.f32 %v12553, %v12584
        %v12593 = vadd.f32 %v12554, %v12584
        %v12594 = vadd.f32 %v12555, %v12584
        %v12595 = vadd.f32 %v12556, %v12584
        %v12596 = vadd.f32 %v12557, %v12584
        %v12597 = vadd.f32 %v12558, %v12584
        %v12598 = vadd.f32 %v12559, %v12584
        %v12599 = vadd.f32 %v12560, %v12584
        %v12600 = vadd.f32 %v12561, %v12584
        %v12601 = vadd.f32 %v12562, %v12584
        %v12602 = vadd.f32 %v12563, %v12584
        %v12603 = vadd.f32 %v12564, %v12584
        %v12604 = vadd.f32 %v12565, %v12584
        %v12605 = vadd.f32 %v12566, %v12584
        %v12606 = vadd.f32 %v12567, %v12584
        %v12607 = vadd.f32 %v12568, %v12584
        %v12608 = vadd.f32 %v12569, %v12584
        %v12609 = vadd.f32 %v12570, %v12584
        %v12610 = vadd.f32 %v12571, %v12584
        %v12611 = vadd.f32 %v12572, %v12584
        %v12612 = vadd.f32 %v12573, %v12584
        %v12613 = vadd.f32 %v12574, %v12584
        %v12614 = vadd.f32 %v12575, %v12584
        %v12615 = vadd.f32 %v12576, %v12584
        %v12616 = vadd.f32 %v12577, %v12584
        %v12617 = vadd.f32 %v12578, %v12584
        %v12618 = vld [vmem:[%s238] sm:$0xff]
        %v12619 = vld [vmem:[%s238 + $0x8] sm:$0xff]
        %v12620 = vld [vmem:[%s238 + $0x10] sm:$0xff]
        %v12621 = vld [vmem:[%s238 + $0x18] sm:$0xff]
        %v12622 = vld [vmem:[%s238 + $0x20] sm:$0xff]
        %v12623 = vld [vmem:[%s238 + $0x28] sm:$0xff]
        %v12624 = vld [vmem:[%s238 + $0x30] sm:$0xff]
        %v12625 = vld [vmem:[%s238 + $0x38] sm:$0xff]
        %v12626 = vld [vmem:[%s238 + $0x40] sm:$0xff]
        %v12627 = vld [vmem:[%s238 + $0x48] sm:$0xff]
        %v12628 = vld [vmem:[%s238 + $0x50] sm:$0xff]
        %v12629 = vld [vmem:[%s238 + $0x58] sm:$0xff]
        %v12630 = vld [vmem:[%s238 + $0x60] sm:$0xff]
        %v12631 = vld [vmem:[%s238 + $0x68] sm:$0xff]
        %v12632 = vld [vmem:[%s238 + $0x70] sm:$0xff]
        %v12633 = vld [vmem:[%s238 + $0x78] sm:$0xff]
        %v12634 = vld [vmem:[%s238 + $0x80] sm:$0xff]
        %v12635 = vld [vmem:[%s238 + $0x88] sm:$0xff]
        %v12636 = vld [vmem:[%s238 + $0x90] sm:$0xff]
        %v12637 = vld [vmem:[%s238 + $0x98] sm:$0xff]
        %v12638 = vld [vmem:[%s238 + $0xa0] sm:$0xff]
        %v12639 = vld [vmem:[%s238 + $0xa8] sm:$0xff]
        %v12640 = vld [vmem:[%s238 + $0xb0] sm:$0xff]
        %v12641 = vld [vmem:[%s238 + $0xb8] sm:$0xff]
        %v12642 = vld [vmem:[%s238 + $0xc0] sm:$0xff]
        %v12643 = vld [vmem:[%s238 + $0xc8] sm:$0xff]
        %v12644 = vld [vmem:[%s238 + $0xd0] sm:$0xff]
        %v12645 = vld [vmem:[%s238 + $0xd8] sm:$0xff]
        %v12646 = vld [vmem:[%s238 + $0xe0] sm:$0xff]
        %v12647 = vld [vmem:[%s238 + $0xe8] sm:$0xff]
        %v12648 = vld [vmem:[%s238 + $0xf0] sm:$0xff]
        %v12649 = vld [vmem:[%s238 + $0xf8] sm:$0xff]
        %v12650 = vadd.f32 %v12586, %v12618
        %v12651 = vadd.f32 %v12587, %v12619
        %v12652 = vadd.f32 %v12588, %v12620
        %v12653 = vadd.f32 %v12589, %v12621
        %v12654 = vadd.f32 %v12590, %v12622
        %v12655 = vadd.f32 %v12591, %v12623
        %v12656 = vadd.f32 %v12592, %v12624
        %v12657 = vadd.f32 %v12593, %v12625
        %v12658 = vadd.f32 %v12594, %v12626
        %v12659 = vadd.f32 %v12595, %v12627
        %v12660 = vadd.f32 %v12596, %v12628
        %v12661 = vadd.f32 %v12597, %v12629
        %v12662 = vadd.f32 %v12598, %v12630
        %v12663 = vadd.f32 %v12599, %v12631
        %v12664 = vadd.f32 %v12600, %v12632
        %v12665 = vadd.f32 %v12601, %v12633
        %v12666 = vadd.f32 %v12602, %v12634
        %v12667 = vadd.f32 %v12603, %v12635
        %v12668 = vadd.f32 %v12604, %v12636
        %v12669 = vadd.f32 %v12605, %v12637
        %v12670 = vadd.f32 %v12606, %v12638
        %v12671 = vadd.f32 %v12607, %v12639
        %v12672 = vadd.f32 %v12608, %v12640
        %v12673 = vadd.f32 %v12609, %v12641
        %v12674 = vadd.f32 %v12610, %v12642
        %v12675 = vadd.f32 %v12611, %v12643
        %v12676 = vadd.f32 %v12612, %v12644
        %v12677 = vadd.f32 %v12613, %v12645
        %v12678 = vadd.f32 %v12614, %v12646
        %v12679 = vadd.f32 %v12615, %v12647
        %v12680 = vadd.f32 %v12616, %v12648
        %v12681 = vadd.f32 %v12617, %v12649
        %v12682 = vmax.f32 %v12650, 0.0
        %v12683 = vmax.f32 %v12651, 0.0
        %v12684 = vmax.f32 %v12652, 0.0
        %v12685 = vmax.f32 %v12653, 0.0
        %v12686 = vmax.f32 %v12654, 0.0
        %v12687 = vmax.f32 %v12655, 0.0
        %v12688 = vmax.f32 %v12656, 0.0
        %v12689 = vmax.f32 %v12657, 0.0
        %v12690 = vmax.f32 %v12658, 0.0
        %v12691 = vmax.f32 %v12659, 0.0
        %v12692 = vmax.f32 %v12660, 0.0
        %v12693 = vmax.f32 %v12661, 0.0
        %v12694 = vmax.f32 %v12662, 0.0
        %v12695 = vmax.f32 %v12663, 0.0
        %v12696 = vmax.f32 %v12664, 0.0
        %v12697 = vmax.f32 %v12665, 0.0
        %v12698 = vmax.f32 %v12666, 0.0
        %v12699 = vmax.f32 %v12667, 0.0
        %v12700 = vmax.f32 %v12668, 0.0
        %v12701 = vmax.f32 %v12669, 0.0
        %v12702 = vmax.f32 %v12670, 0.0
        %v12703 = vmax.f32 %v12671, 0.0
        %v12704 = vmax.f32 %v12672, 0.0
        %v12705 = vmax.f32 %v12673, 0.0
        %v12706 = vmax.f32 %v12674, 0.0
        %v12707 = vmax.f32 %v12675, 0.0
        %v12708 = vmax.f32 %v12676, 0.0
        %v12709 = vmax.f32 %v12677, 0.0
        %v12710 = vmax.f32 %v12678, 0.0
        %v12711 = vmax.f32 %v12679, 0.0
        %v12712 = vmax.f32 %v12680, 0.0
        %v12713 = vmax.f32 %v12681, 0.0
        %12714 = vst [vmem:[%s272] sm:$0xff] %v12682
        %12715 = vst [vmem:[%s272 + $0x8] sm:$0xff] %v12683
        %12716 = vst [vmem:[%s272 + $0x10] sm:$0xff] %v12684
        %12717 = vst [vmem:[%s272 + $0x18] sm:$0xff] %v12685
        %12718 = vst [vmem:[%s272 + $0x20] sm:$0xff] %v12686
        %12719 = vst [vmem:[%s272 + $0x28] sm:$0xff] %v12687
        %12720 = vst [vmem:[%s272 + $0x30] sm:$0xff] %v12688
        %12721 = vst [vmem:[%s272 + $0x38] sm:$0xff] %v12689
        %12722 = vst [vmem:[%s272 + $0x40] sm:$0xff] %v12690
        %12723 = vst [vmem:[%s272 + $0x48] sm:$0xff] %v12691
        %12724 = vst [vmem:[%s272 + $0x50] sm:$0xff] %v12692
        %12725 = vst [vmem:[%s272 + $0x58] sm:$0xff] %v12693
        %12726 = vst [vmem:[%s272 + $0x60] sm:$0xff] %v12694
        %12727 = vst [vmem:[%s272 + $0x68] sm:$0xff] %v12695
        %12728 = vst [vmem:[%s272 + $0x70] sm:$0xff] %v12696
        %12729 = vst [vmem:[%s272 + $0x78] sm:$0xff] %v12697
        %12730 = vst [vmem:[%s272 + $0x80] sm:$0xff] %v12698
        %12731 = vst [vmem:[%s272 + $0x88] sm:$0xff] %v12699
        %12732 = vst [vmem:[%s272 + $0x90] sm:$0xff] %v12700
        %12733 = vst [vmem:[%s272 + $0x98] sm:$0xff] %v12701
        %12734 = vst [vmem:[%s272 + $0xa0] sm:$0xff] %v12702
        %12735 = vst [vmem:[%s272 + $0xa8] sm:$0xff] %v12703
        %12736 = vst [vmem:[%s272 + $0xb0] sm:$0xff] %v12704
        %12737 = vst [vmem:[%s272 + $0xb8] sm:$0xff] %v12705
        %12738 = vst [vmem:[%s272 + $0xc0] sm:$0xff] %v12706
        %12739 = vst [vmem:[%s272 + $0xc8] sm:$0xff] %v12707
        %12740 = vst [vmem:[%s272 + $0xd0] sm:$0xff] %v12708
        %12741 = vst [vmem:[%s272 + $0xd8] sm:$0xff] %v12709
        %12742 = vst [vmem:[%s272 + $0xe0] sm:$0xff] %v12710
        %12743 = vst [vmem:[%s272 + $0xe8] sm:$0xff] %v12711
        %12744 = vst [vmem:[%s272 + $0xf0] sm:$0xff] %v12712
        %12745 = vst [vmem:[%s272 + $0xf8] sm:$0xff] %v12713
        %s12746 = sand.u32 %s141, 1
        %s12747 = scalar_lea.sflag [#allocation5], %s12746
        %s12748 = sand.u32 %s141, 1
        %s12749 = smul.addr %s12748, 256
        %s12750 = scalar_lea.vmem [#allocation9], %s12749
        // Predicated region
        $region53: #{residual_block.1} parent=39 // pred_check
          %p12751 = pneg %p151
        $region54: #{residual_block.1} parent=39 // pred_check_branch
          %12753 = sbr.rel (%p12751) target = $region56
        $region55: #{residual_block.1} parent=39 // pred_region
          %s12754 = smul.u32 4, %s23
          %s12756 = ssub.s32 4096, 4096
          %12757 = vsyncadd %s12747, %s12756
          %s12758 = smul.addr %s12754, 8
          %s12759 = smul.addr %s12758, 128
          %s12760 = scalar_lea.hbm %s5, %s12759
          %s12761 = sshll.u32 %s12750, 4
          %s12762 = int_to_ptr.vmem [resolvable:$true] %s12761
          %12767 = dma.vmem_to_hbm [thread:$0]  %s12762, 4096, %s12760, %s12747, 128, 128, 8
        $region56: #{residual_block.1} parent=39 // pred_fallthru
          _
      $region40: #{residual_block.1} parent=5 // pred_fallthru
        _
      %p12768 = scmp.le.s32.totalorder 2, %s18
      // Predicated region
      $region57: #{residual_block.1} parent=5 // pred_check
        %p12769 = pneg %p12768
      $region58: #{residual_block.1} parent=5 // pred_check_branch
        %12771 = sbr.rel (%p12769) target = $region60
      $region59: #{residual_block.1} parent=5 // pred_region
        %s12772 = ssub.s32 %s18, 2
        // Predicated region
        $region61: #{residual_block.1} parent=59 // pred_check
          %p12773 = pneg %p157
        $region62: #{residual_block.1} parent=59 // pred_check_branch
          %12775 = sbr.rel (%p12773) target = $region64
        $region63: #{residual_block.1} parent=59 // pred_region
          %s12776 = sand.u32 %s142, 1
          %s12777 = scalar_lea.sflag [#allocation5], %s12776
          %s12778 = sand.u32 %s142, 1
          %s12779 = smul.addr %s12778, 256
          %s12780 = scalar_lea.vmem [#allocation9], %s12779
          %12781 = dma.done %s12777, 4096
        $region64: #{residual_block.1} parent=59 // pred_fallthru
          _
      $region60: #{residual_block.1} parent=5 // pred_fallthru
        _
    $region6: #{residual_block.1} parent=1 // loop_footer
      %s22 = sadd.s32 1, %s18
    $region7: #{residual_block.1} parent=1 // loop_footer_branch
      %17 = sbr.rel target = $region3
    $region8: #{residual_block.1} parent=1 // loop_exit
      _
    %12782 = vsyncpa [#allocation4], 1
    %s12783 = scalar_lea.sflag [#allocation4], 1
    %12784 = vsyncpa %s12783, 1
    %12785 = vsyncpa [#allocation7], 1
    %12786 = vsyncpa [#allocation5], 1
    %s12787 = scalar_lea.sflag [#allocation5], 1
    %12788 = vsyncpa %s12787, 1

</llo_original>
